<compile_context>
chip_gen: v5e
topology: v5e:2x2
jax: 0.10.0
libtpu: 0.0.40
codegen_flags: <defaults>
</compile_context>

<pallas_src>
import functools

import jax
import jax.numpy as jnp
from jax.experimental import pallas as pl
from jax.experimental.pallas import tpu as pltpu

# ----------------------------- configuration --------------------------------
N_MONO_UNITS = 5        # stand-in for len(Glycan.units)
NUM_UNIT = 10           # embedding vocabulary
HIDDEN = 32             # hidden_dim
EDGE_DIM = 8            # edge_input_dim
NUM_HEADS = 4
NUM_LAYERS = 2          # num_blocks (small for the demo)
DH = HIDDEN // NUM_HEADS

N_NODES = 16
N_EDGES = 24
N_GRAPHS = 2
SHORT_CUT = False
# TODO(synk): concat_hidden=True / 'mean' / 'dual' readouts not implemented
#             (module defaults: concat_hidden=False, readout='sum').

# padded, lane-dense kernel shapes (node / feature axes only; head dim is real)
N_PAD = 128
D_PAD = 128
G_PAD = 8
NEG = -1e9


# ----------------------------- fused Pallas kernel ---------------------------
def _pronet_fused_kernel(x0_ref, cross_ref, bias_ref, wq_ref, wk_ref, wv_ref,
                         wo_ref, pool_ref, node_ref, graph_ref,
                         *, num_layers, num_heads, short_cut):
    f32, bf16 = jnp.float32, jnp.bfloat16
    H = num_heads

    x = x0_ref[...]                                   # (N, D) f32 node features
    n, d = x.shape

    # Aggregate(): sum atom-node features into their mono receivers along the
    # cross (atom -> mono) edges.  cross_ref[recv, send] = multiplicity (bf16).
    atom_feat = jnp.dot(cross_ref[...], x.astype(bf16),
                        preferred_element_type=f32)   # (N, D) f32

    for l in range(num_layers):
        # stand-in InteractionBlock input (layer_input + all-atom feature);
        # shared bf16 LHS for every per-head GEMM (no broadcast_to).
        h_bf = (x + atom_feat).astype(bf16)           # (N, D) bf16

        acc = jnp.zeros((n, d), f32)                  # head-summed output
        for h in range(H):
            # per-head projections: true DH=8 output columns, bf16 MXU, f32 acc
            q = jnp.dot(h_bf, wq_ref[l, h],
                        preferred_element_type=f32).astype(bf16)   # (N, DH)
            k = jnp.dot(h_bf, wk_ref[l, h],
                        preferred_element_type=f32).astype(bf16)
            v = jnp.dot(h_bf, wv_ref[l, h],
                        preferred_element_type=f32).astype(bf16)

            # scores (1/sqrt(dh) folded into Wq) + precomputed mask/edge bias
            s = jnp.einsum('nc,mc->nm', q, k,
                           preferred_element_type=f32)              # (N, N)
            s = s + bias_ref[l, h].astype(f32)

            # softmax along the sender axis (f32; EUP reciprocal)
            m = jnp.max(s, axis=-1, keepdims=True)
            p = jnp.exp(s - m)
            p = p * pl.reciprocal(jnp.sum(p, axis=-1, keepdims=True),
                                  approx=True)

            o = jnp.dot(p.astype(bf16), v,
                        preferred_element_type=f32)                 # (N, DH)
            # output projection with the head sum fused into the accumulation
            acc = acc + jnp.dot(o.astype(bf16), wo_ref[l, h],
                                preferred_element_type=f32)         # (N, D)

        if short_cut:
            acc = acc + x
        x = acc

    node_ref[...] = x
    # SumReadout over the mono-node subgraph (pool[g, n] selects mono nodes)
    graph_ref[...] = jnp.dot(pool_ref[...], x.astype(bf16),
                             preferred_element_type=f32)


def pronet_fused(x0, cross_adj, bias, wq, wk, wv, wo, pool):
    kernel = functools.partial(
        _pronet_fused_kernel,
        num_layers=NUM_LAYERS, num_heads=NUM_HEADS, short_cut=SHORT_CUT)

    def vspec(shape):
        return pl.BlockSpec(shape, lambda i, _n=len(shape): (0,) * _n)

    L, H = NUM_LAYERS, NUM_HEADS
    return pl.pallas_call(
        kernel,
        grid=(1,),
        in_specs=[
            vspec((N_PAD, D_PAD)),                 # x0           f32
            vspec((N_PAD, N_PAD)),                 # cross_adj    bf16
            vspec((L, H, N_PAD, N_PAD)),           # bias         bf16
            vspec((L, H, D_PAD, DH)),              # wq           bf16
            vspec((L, H, D_PAD, DH)),              # wk           bf16
            vspec((L, H, D_PAD, DH)),              # wv           bf16
            vspec((L, H, DH, D_PAD)),              # wo           bf16
            vspec((G_PAD, N_PAD)),                 # pool         bf16
        ],
        out_specs=(vspec((N_PAD, D_PAD)), vspec((G_PAD, D_PAD))),
        out_shape=(jax.ShapeDtypeStruct((N_PAD, D_PAD), jnp.float32),
                   jax.ShapeDtypeStruct((G_PAD, D_PAD), jnp.float32)),
        compiler_params=pltpu.CompilerParams(
            dimension_semantics=("arbitrary",),
            # actual resident footprint is ~1 MiB (double-buffered constants +
            # in-kernel intermediates); 8 MiB documents the budget w/ headroom.
            vmem_limit_bytes=8 * 1024 * 1024),
    )(x0, cross_adj, bias, wq, wk, wv, wo, pool)


# ----------------------------- pure-JAX reference ----------------------------
def pronet_reference(x0, cross_adj, bias, wq, wk, wv, wo, pool):
    f32, bf16 = jnp.float32, jnp.bfloat16
    x = x0
    atom_feat = jnp.dot(cross_adj, x.astype(bf16), preferred_element_type=f32)
    for l in range(NUM_LAYERS):
        h_bf = (x + atom_feat).astype(bf16)
        acc = jnp.zeros_like(x)
        for h in range(NUM_HEADS):
            q = jnp.dot(h_bf, wq[l, h], preferred_element_type=f32).astype(bf16)
            k = jnp.dot(h_bf, wk[l, h], preferred_element_type=f32).astype(bf16)
            v = jnp.dot(h_bf, wv[l, h], preferred_element_type=f32).astype(bf16)
            s = jnp.einsum('nc,mc->nm', q, k, preferred_element_type=f32)
            s = s + bias[l, h].astype(f32)
            s = s - jnp.max(s, axis=-1, keepdims=True)
            p = jnp.exp(s)
            p = p / jnp.sum(p, axis=-1, keepdims=True)
            o = jnp.dot(p.astype(bf16), v, preferred_element_type=f32)
            acc = acc + jnp.dot(o.astype(bf16), wo[l, h],
                                preferred_element_type=f32)
        if SHORT_CUT:
            acc = acc + x
        x = acc
    graph = jnp.dot(pool, x.astype(bf16), preferred_element_type=f32)
    return x, graph


# ----------------------------- parameters ------------------------------------
def init_params(key):
    def nrm(k, shape, scale=0.1):
        return scale * jax.random.normal(k, shape, dtype=jnp.float32)

    keys = jax.random.split(key, 1 + NUM_LAYERS)
    params = {"embedding": nrm(keys[0], (NUM_UNIT, HIDDEN)), "layers": []}
    for l in range(NUM_LAYERS):
        lk = jax.random.split(keys[1 + l], 5)
        params["layers"].append({
            "wq": nrm(lk[0], (HIDDEN, HIDDEN)),
            "wk": nrm(lk[1], (HIDDEN, HIDDEN)),
            "wv": nrm(lk[2], (HIDDEN, HIDDEN)),
            "wo": nrm(lk[3], (HIDDEN, HIDDEN)),
            "we": nrm(lk[4], (EDGE_DIM, NUM_HEADS)),
        })
    return params


def _pack_in_proj(w):   # (HIDDEN, HIDDEN) -> (H, D_PAD, DH): pad rows only
    w_h = w.reshape(HIDDEN, NUM_HEADS, DH).transpose(1, 0, 2)   # (H, HIDDEN, DH)
    out = jnp.zeros((NUM_HEADS, D_PAD, DH), jnp.float32)
    return out.at[:, :HIDDEN, :].set(w_h)


def _pack_out_proj(w):  # (HIDDEN, HIDDEN) -> (H, DH, D_PAD): pad cols only
    w_h = w.reshape(NUM_HEADS, DH, HIDDEN)
    out = jnp.zeros((NUM_HEADS, DH, D_PAD), jnp.float32)
    return out.at[:, :, :HIDDEN].set(w_h)


def pack_params(params):
    scale = 1.0 / (DH ** 0.5)   # fold the attention scale into Wq
    wq = jnp.stack([_pack_in_proj(lp["wq"] * scale) for lp in params["layers"]])
    wk = jnp.stack([_pack_in_proj(lp["wk"]) for lp in params["layers"]])
    wv = jnp.stack([_pack_in_proj(lp["wv"]) for lp in params["layers"]])
    wo = jnp.stack([_pack_out_proj(lp["wo"]) for lp in params["layers"]])
    we = jnp.stack([lp["we"] for lp in params["layers"]])        # (L, E, H) f32
    return (wq.astype(jnp.bfloat16), wk.astype(jnp.bfloat16),
            wv.astype(jnp.bfloat16), wo.astype(jnp.bfloat16), we)


# ----------------------------- forward (glue + kernel) -----------------------
def _build_operands(params, unit_type, edge_list, edge_feature, node2graph):
    N = unit_type.shape[0]
    f32, bf16 = jnp.float32, jnp.bfloat16

    is_atom = unit_type >= N_MONO_UNITS
    is_mono = ~is_atom

    # embedding(clamp(min=0)); zero the unit_type == -1 rows (as in reference)
    emb = params["embedding"][jnp.maximum(unit_type, 0)]
    emb = jnp.where((unit_type == -1)[:, None], 0.0, emb)

    node_in, node_out = edge_list[:, 0], edge_list[:, 1]
    in_t, out_t = unit_type[node_in], unit_type[node_out]
    cross_e = ((in_t >= N_MONO_UNITS) & (out_t < N_MONO_UNITS)).astype(f32)
    mono_e = ((in_t < N_MONO_UNITS) & (out_t < N_MONO_UNITS)).astype(f32)

    # padded dense operands (receiver row, sender col)
    x0 = jnp.zeros((N_PAD, D_PAD), f32).at[:N, :HIDDEN].set(emb)
    cross_adj = jnp.zeros((N_PAD, N_PAD), f32).at[node_out, node_in].add(cross_e)
    mono_adj = jnp.eye(N_PAD, dtype=f32).at[node_out, node_in].add(mono_e)
    mask_add = jnp.where(mono_adj > 0, 0.0, NEG).astype(f32)
    dense_e = jnp.zeros((N_PAD, N_PAD, EDGE_DIM), f32).at[node_out, node_in].add(
        edge_feature * mono_e[:, None])
    e_planes = jnp.transpose(dense_e, (2, 0, 1))                  # (E, N, N)

    pool = jnp.zeros((G_PAD, N_PAD), f32).at[:N_GRAPHS, :N].set(
        (node2graph[None, :] == jnp.arange(N_GRAPHS)[:, None]).astype(f32)
        * is_mono[None, :].astype(f32))

    wq, wk, wv, wo, we = pack_params(params)

    # precomputed per-layer, per-head score bias: adjacency mask + edge-feature
    # contraction, stored once as bf16 (replaces the in-kernel scalar loop).
    bias = (mask_add[None, None]
            + jnp.einsum('leh,enm->lhnm', we, e_planes)).astype(bf16)

    ops = (x0, cross_adj.astype(bf16), bias, wq, wk, wv, wo, pool.astype(bf16))
    return ops, is_mono


def pronet_forward(params, unit_type, edge_list, edge_feature, node2graph,
                   *, use_kernel=True):
    N = unit_type.shape[0]
    ops, is_mono = _build_operands(params, unit_type, edge_list, edge_feature,
                                   node2graph)
    if use_kernel:
        node_full, graph_full = pronet_fused(*ops)
    else:
        node_full, graph_full = pronet_reference(*ops)

    node_feature = node_full[:N, :HIDDEN][is_mono]        # mono nodes only
    graph_feature = graph_full[:N_GRAPHS, :HIDDEN]
    return {"graph_feature": graph_feature, "node_feature": node_feature}


# ----------------------------- demo -------------------------------------------
if __name__ == "__main__":
    key = jax.random.PRNGKey(0)
    kp, kt, ks, kd, kf = jax.random.split(key, 5)

    params = init_params(kp)

    # synthetic glycan batch: 2 graphs x 8 nodes, mixed atom/mono unit types
    unit_type = jax.random.randint(kt, (N_NODES,), 0, NUM_UNIT).astype(jnp.int32)
    unit_type = unit_type.at[3].set(-1)            # one padded/unknown node
    node2graph = jnp.concatenate([jnp.zeros(8, jnp.int32), jnp.ones(8, jnp.int32)])

    src0 = jax.random.randint(ks, (N_EDGES // 2,), 0, 8)
    dst0 = jax.random.randint(kd, (N_EDGES // 2,), 0, 8)
    edge_list = jnp.stack(
        [jnp.concatenate([src0, src0 + 8]),
         jnp.concatenate([dst0, dst0 + 8]),
         jnp.zeros((N_EDGES,), jnp.int32)], axis=-1).astype(jnp.int32)
    edge_feature = jax.random.normal(kf, (N_EDGES, EDGE_DIM), dtype=jnp.float32)

    out = pronet_forward(params, unit_type, edge_list, edge_feature, node2graph)
    out = jax.block_until_ready(out)

    ref = pronet_forward(params, unit_type, edge_list, edge_feature, node2graph,
                         use_kernel=False)
    ref = jax.block_until_ready(ref)

    n_mono = int(jnp.sum(unit_type < N_MONO_UNITS))
    assert out["node_feature"].shape == (n_mono, HIDDEN)
    assert out["graph_feature"].shape == (N_GRAPHS, HIDDEN)
    assert bool(jnp.all(jnp.isfinite(out["node_feature"])))
    assert bool(jnp.all(jnp.isfinite(out["graph_feature"])))
    assert bool(jnp.allclose(out["node_feature"], ref["node_feature"],
                             atol=5e-2, rtol=5e-2))
    assert bool(jnp.allclose(out["graph_feature"], ref["graph_feature"],
                             atol=5e-2, rtol=5e-2))
    print("KERNEL_OK")
</pallas_src>

<mosaic_0001>
module attributes {stable_mosaic.version = 11 : i64} {
  func.func @_pronet_fused_kernel(%arg0: i32, %arg1: memref<128x128xf32, #tpu.memory_space<vmem>>, %arg2: memref<128x128xbf16, #tpu.memory_space<vmem>>, %arg3: memref<2x4x128x128xbf16, #tpu.memory_space<vmem>>, %arg4: memref<2x4x128x8xbf16, #tpu.memory_space<vmem>>, %arg5: memref<2x4x128x8xbf16, #tpu.memory_space<vmem>>, %arg6: memref<2x4x128x8xbf16, #tpu.memory_space<vmem>>, %arg7: memref<2x4x8x128xbf16, #tpu.memory_space<vmem>>, %arg8: memref<8x128xbf16, #tpu.memory_space<vmem>>, %arg9: memref<128x128xf32, #tpu.memory_space<vmem>>, %arg10: memref<8x128xf32, #tpu.memory_space<vmem>>) attributes {dimension_semantics = [#tpu.dimension_semantics<arbitrary>], iteration_bounds = array<i64: 1>, scalar_prefetch = 0 : i64, scratch_operands = 0 : i64, tpu.core_type = #tpu.core_type<tc>, window_params = [{pipeline_mode = #tpu.pipeline_mode<synchronous>, transform_indices = @transform_0, window_bounds = array<i64: 128, 128>}, {pipeline_mode = #tpu.pipeline_mode<synchronous>, transform_indices = @transform_1, window_bounds = array<i64: 128, 128>}, {pipeline_mode = #tpu.pipeline_mode<synchronous>, transform_indices = @transform_2, window_bounds = array<i64: 2, 4, 128, 128>}, {pipeline_mode = #tpu.pipeline_mode<synchronous>, transform_indices = @transform_3, window_bounds = array<i64: 2, 4, 128, 8>}, {pipeline_mode = #tpu.pipeline_mode<synchronous>, transform_indices = @transform_4, window_bounds = array<i64: 2, 4, 128, 8>}, {pipeline_mode = #tpu.pipeline_mode<synchronous>, transform_indices = @transform_5, window_bounds = array<i64: 2, 4, 128, 8>}, {pipeline_mode = #tpu.pipeline_mode<synchronous>, transform_indices = @transform_6, window_bounds = array<i64: 2, 4, 8, 128>}, {pipeline_mode = #tpu.pipeline_mode<synchronous>, transform_indices = @transform_7, window_bounds = array<i64: 8, 128>}, {pipeline_mode = #tpu.pipeline_mode<synchronous>, transform_indices = @transform_8, window_bounds = array<i64: 128, 128>}, {pipeline_mode = #tpu.pipeline_mode<synchronous>, transform_indices = @transform_9, window_bounds = array<i64: 8, 128>}]} {
    %c0 = arith.constant 0 : index
    %c0_0 = arith.constant 0 : index
    %0 = vector.load %arg1[%c0, %c0_0] : memref<128x128xf32, #tpu.memory_space<vmem>>, vector<128x128xf32>
    %c0_1 = arith.constant 0 : index
    %c0_2 = arith.constant 0 : index
    %1 = vector.load %arg2[%c0_1, %c0_2] : memref<128x128xbf16, #tpu.memory_space<vmem>>, vector<128x128xbf16>
    %2 = arith.truncf %0 : vector<128x128xf32> to vector<128x128xbf16>
    %cst = arith.constant dense<0.000000e+00> : vector<128x128xf32>
    %3 = tpu.matmul %1, %2, %cst {dimension_numbers = #tpu.dot_dimension_numbers<[1], [0], [0], [1], [0, 0, 1, 1], [], []>} : vector<128x128xbf16>, vector<128x128xbf16>, vector<128x128xf32> -> vector<128x128xf32>
    %4 = arith.addf %0, %3 : vector<128x128xf32>
    %5 = arith.truncf %4 : vector<128x128xf32> to vector<128x128xbf16>
    %cst_3 = arith.constant 0.000000e+00 : f32
    %6 = vector.broadcast %cst_3 : f32 to vector<128x128xf32>
    %c0_4 = arith.constant 0 : index
    %c0_5 = arith.constant 0 : index
    %c0_6 = arith.constant 0 : index
    %c0_7 = arith.constant 0 : index
    %7 = vector.load %arg4[%c0_4, %c0_5, %c0_6, %c0_7] : memref<2x4x128x8xbf16, #tpu.memory_space<vmem>>, vector<1x1x128x8xbf16>
    %8 = vector.shape_cast %7 : vector<1x1x128x8xbf16> to vector<128x8xbf16>
    %cst_8 = arith.constant dense<0.000000e+00> : vector<128x8xf32>
    %9 = tpu.matmul %5, %8, %cst_8 {dimension_numbers = #tpu.dot_dimension_numbers<[1], [0], [0], [1], [0, 0, 1, 1], [], []>} : vector<128x128xbf16>, vector<128x8xbf16>, vector<128x8xf32> -> vector<128x8xf32>
    %10 = arith.truncf %9 : vector<128x8xf32> to vector<128x8xbf16>
    %c0_9 = arith.constant 0 : index
    %c0_10 = arith.constant 0 : index
    %c0_11 = arith.constant 0 : index
    %c0_12 = arith.constant 0 : index
    %11 = vector.load %arg5[%c0_9, %c0_10, %c0_11, %c0_12] : memref<2x4x128x8xbf16, #tpu.memory_space<vmem>>, vector<1x1x128x8xbf16>
    %12 = vector.shape_cast %11 : vector<1x1x128x8xbf16> to vector<128x8xbf16>
    %cst_13 = arith.constant dense<0.000000e+00> : vector<128x8xf32>
    %13 = tpu.matmul %5, %12, %cst_13 {dimension_numbers = #tpu.dot_dimension_numbers<[1], [0], [0], [1], [0, 0, 1, 1], [], []>} : vector<128x128xbf16>, vector<128x8xbf16>, vector<128x8xf32> -> vector<128x8xf32>
    %14 = arith.truncf %13 : vector<128x8xf32> to vector<128x8xbf16>
    %c0_14 = arith.constant 0 : index
    %c0_15 = arith.constant 0 : index
    %c0_16 = arith.constant 0 : index
    %c0_17 = arith.constant 0 : index
    %15 = vector.load %arg6[%c0_14, %c0_15, %c0_16, %c0_17] : memref<2x4x128x8xbf16, #tpu.memory_space<vmem>>, vector<1x1x128x8xbf16>
    %16 = vector.shape_cast %15 : vector<1x1x128x8xbf16> to vector<128x8xbf16>
    %cst_18 = arith.constant dense<0.000000e+00> : vector<128x8xf32>
    %17 = tpu.matmul %5, %16, %cst_18 {dimension_numbers = #tpu.dot_dimension_numbers<[1], [0], [0], [1], [0, 0, 1, 1], [], []>} : vector<128x128xbf16>, vector<128x8xbf16>, vector<128x8xf32> -> vector<128x8xf32>
    %18 = arith.truncf %17 : vector<128x8xf32> to vector<128x8xbf16>
    "tpu.trace_start"() <{level = 10 : i32, message = "nc,mc->nm"}> : () -> ()
    %cst_19 = arith.constant dense<0.000000e+00> : vector<128x128xf32>
    %19 = tpu.matmul %10, %14, %cst_19 {dimension_numbers = #tpu.dot_dimension_numbers<[1], [1], [0], [0], [0, 0, 1, 0], [], []>} : vector<128x8xbf16>, vector<128x8xbf16>, vector<128x128xf32> -> vector<128x128xf32>
    "tpu.trace_stop"() : () -> ()
    %c0_20 = arith.constant 0 : index
    %c0_21 = arith.constant 0 : index
    %c0_22 = arith.constant 0 : index
    %c0_23 = arith.constant 0 : index
    %20 = vector.load %arg3[%c0_20, %c0_21, %c0_22, %c0_23] : memref<2x4x128x128xbf16, #tpu.memory_space<vmem>>, vector<1x1x128x128xbf16>
    %21 = vector.shape_cast %20 : vector<1x1x128x128xbf16> to vector<128x128xbf16>
    %22 = arith.extf %21 : vector<128x128xbf16> to vector<128x128xf32>
    %23 = arith.addf %19, %22 : vector<128x128xf32>
    %cst_24 = arith.constant dense<0xFF800000> : vector<128xf32>
    %24 = vector.multi_reduction <maximumf>, %23, %cst_24 [1] : vector<128x128xf32> to vector<128xf32>
    %25 = vector.shape_cast %24 : vector<128xf32> to vector<128x1xf32>
    %26 = vector.broadcast %25 : vector<128x1xf32> to vector<128x128xf32>
    %27 = arith.subf %23, %26 : vector<128x128xf32>
    %28 = math.exp %27 : vector<128x128xf32>
    %cst_25 = arith.constant dense<0.000000e+00> : vector<128xf32>
    %29 = vector.multi_reduction <add>, %28, %cst_25 [1] : vector<128x128xf32> to vector<128xf32>
    %30 = vector.shape_cast %29 : vector<128xf32> to vector<128x1xf32>
    %31 = tpu.reciprocal %30 {approx = true} : vector<128x1xf32> -> vector<128x1xf32>
    %32 = vector.broadcast %31 : vector<128x1xf32> to vector<128x128xf32>
    %33 = arith.mulf %28, %32 : vector<128x128xf32>
    %34 = arith.truncf %33 : vector<128x128xf32> to vector<128x128xbf16>
    %cst_26 = arith.constant dense<0.000000e+00> : vector<128x8xf32>
    %35 = tpu.matmul %34, %18, %cst_26 {dimension_numbers = #tpu.dot_dimension_numbers<[1], [0], [0], [1], [0, 0, 1, 1], [], []>} : vector<128x128xbf16>, vector<128x8xbf16>, vector<128x8xf32> -> vector<128x8xf32>
    %36 = arith.truncf %35 : vector<128x8xf32> to vector<128x8xbf16>
    %c0_27 = arith.constant 0 : index
    %c0_28 = arith.constant 0 : index
    %c0_29 = arith.constant 0 : index
    %c0_30 = arith.constant 0 : index
    %37 = vector.load %arg7[%c0_27, %c0_28, %c0_29, %c0_30] : memref<2x4x8x128xbf16, #tpu.memory_space<vmem>>, vector<1x1x8x128xbf16>
    %38 = vector.shape_cast %37 : vector<1x1x8x128xbf16> to vector<8x128xbf16>
    %cst_31 = arith.constant dense<0.000000e+00> : vector<128x128xf32>
    %39 = tpu.matmul %36, %38, %cst_31 {dimension_numbers = #tpu.dot_dimension_numbers<[1], [0], [0], [1], [0, 0, 1, 1], [], []>} : vector<128x8xbf16>, vector<8x128xbf16>, vector<128x128xf32> -> vector<128x128xf32>
    %40 = arith.addf %6, %39 : vector<128x128xf32>
    %c0_32 = arith.constant 0 : index
    %c1 = arith.constant 1 : index
    %c0_33 = arith.constant 0 : index
    %c0_34 = arith.constant 0 : index
    %41 = vector.load %arg4[%c0_32, %c1, %c0_33, %c0_34] : memref<2x4x128x8xbf16, #tpu.memory_space<vmem>>, vector<1x1x128x8xbf16>
    %42 = vector.shape_cast %41 : vector<1x1x128x8xbf16> to vector<128x8xbf16>
    %cst_35 = arith.constant dense<0.000000e+00> : vector<128x8xf32>
    %43 = tpu.matmul %5, %42, %cst_35 {dimension_numbers = #tpu.dot_dimension_numbers<[1], [0], [0], [1], [0, 0, 1, 1], [], []>} : vector<128x128xbf16>, vector<128x8xbf16>, vector<128x8xf32> -> vector<128x8xf32>
    %44 = arith.truncf %43 : vector<128x8xf32> to vector<128x8xbf16>
    %c0_36 = arith.constant 0 : index
    %c1_37 = arith.constant 1 : index
    %c0_38 = arith.constant 0 : index
    %c0_39 = arith.constant 0 : index
    %45 = vector.load %arg5[%c0_36, %c1_37, %c0_38, %c0_39] : memref<2x4x128x8xbf16, #tpu.memory_space<vmem>>, vector<1x1x128x8xbf16>
    %46 = vector.shape_cast %45 : vector<1x1x128x8xbf16> to vector<128x8xbf16>
    %cst_40 = arith.constant dense<0.000000e+00> : vector<128x8xf32>
    %47 = tpu.matmul %5, %46, %cst_40 {dimension_numbers = #tpu.dot_dimension_numbers<[1], [0], [0], [1], [0, 0, 1, 1], [], []>} : vector<128x128xbf16>, vector<128x8xbf16>, vector<128x8xf32> -> vector<128x8xf32>
    %48 = arith.truncf %47 : vector<128x8xf32> to vector<128x8xbf16>
    %c0_41 = arith.constant 0 : index
    %c1_42 = arith.constant 1 : index
    %c0_43 = arith.constant 0 : index
    %c0_44 = arith.constant 0 : index
    %49 = vector.load %arg6[%c0_41, %c1_42, %c0_43, %c0_44] : memref<2x4x128x8xbf16, #tpu.memory_space<vmem>>, vector<1x1x128x8xbf16>
    %50 = vector.shape_cast %49 : vector<1x1x128x8xbf16> to vector<128x8xbf16>
    %cst_45 = arith.constant dense<0.000000e+00> : vector<128x8xf32>
    %51 = tpu.matmul %5, %50, %cst_45 {dimension_numbers = #tpu.dot_dimension_numbers<[1], [0], [0], [1], [0, 0, 1, 1], [], []>} : vector<128x128xbf16>, vector<128x8xbf16>, vector<128x8xf32> -> vector<128x8xf32>
    %52 = arith.truncf %51 : vector<128x8xf32> to vector<128x8xbf16>
    "tpu.trace_start"() <{level = 10 : i32, message = "nc,mc->nm"}> : () -> ()
    %cst_46 = arith.constant dense<0.000000e+00> : vector<128x128xf32>
    %53 = tpu.matmul %44, %48, %cst_46 {dimension_numbers = #tpu.dot_dimension_numbers<[1], [1], [0], [0], [0, 0, 1, 0], [], []>} : vector<128x8xbf16>, vector<128x8xbf16>, vector<128x128xf32> -> vector<128x128xf32>
    "tpu.trace_stop"() : () -> ()
    %c0_47 = arith.constant 0 : index
    %c1_48 = arith.constant 1 : index
    %c0_49 = arith.constant 0 : index
    %c0_50 = arith.constant 0 : index
    %54 = vector.load %arg3[%c0_47, %c1_48, %c0_49, %c0_50] : memref<2x4x128x128xbf16, #tpu.memory_space<vmem>>, vector<1x1x128x128xbf16>
    %55 = vector.shape_cast %54 : vector<1x1x128x128xbf16> to vector<128x128xbf16>
    %56 = arith.extf %55 : vector<128x128xbf16> to vector<128x128xf32>
    %57 = arith.addf %53, %56 : vector<128x128xf32>
    %cst_51 = arith.constant dense<0xFF800000> : vector<128xf32>
    %58 = vector.multi_reduction <maximumf>, %57, %cst_51 [1] : vector<128x128xf32> to vector<128xf32>
    %59 = vector.shape_cast %58 : vector<128xf32> to vector<128x1xf32>
    %60 = vector.broadcast %59 : vector<128x1xf32> to vector<128x128xf32>
    %61 = arith.subf %57, %60 : vector<128x128xf32>
    %62 = math.exp %61 : vector<128x128xf32>
    %cst_52 = arith.constant dense<0.000000e+00> : vector<128xf32>
    %63 = vector.multi_reduction <add>, %62, %cst_52 [1] : vector<128x128xf32> to vector<128xf32>
    %64 = vector.shape_cast %63 : vector<128xf32> to vector<128x1xf32>
    %65 = tpu.reciprocal %64 {approx = true} : vector<128x1xf32> -> vector<128x1xf32>
    %66 = vector.broadcast %65 : vector<128x1xf32> to vector<128x128xf32>
    %67 = arith.mulf %62, %66 : vector<128x128xf32>
    %68 = arith.truncf %67 : vector<128x128xf32> to vector<128x128xbf16>
    %cst_53 = arith.constant dense<0.000000e+00> : vector<128x8xf32>
    %69 = tpu.matmul %68, %52, %cst_53 {dimension_numbers = #tpu.dot_dimension_numbers<[1], [0], [0], [1], [0, 0, 1, 1], [], []>} : vector<128x128xbf16>, vector<128x8xbf16>, vector<128x8xf32> -> vector<128x8xf32>
    %70 = arith.truncf %69 : vector<128x8xf32> to vector<128x8xbf16>
    %c0_54 = arith.constant 0 : index
    %c1_55 = arith.constant 1 : index
    %c0_56 = arith.constant 0 : index
    %c0_57 = arith.constant 0 : index
    %71 = vector.load %arg7[%c0_54, %c1_55, %c0_56, %c0_57] : memref<2x4x8x128xbf16, #tpu.memory_space<vmem>>, vector<1x1x8x128xbf16>
    %72 = vector.shape_cast %71 : vector<1x1x8x128xbf16> to vector<8x128xbf16>
    %cst_58 = arith.constant dense<0.000000e+00> : vector<128x128xf32>
    %73 = tpu.matmul %70, %72, %cst_58 {dimension_numbers = #tpu.dot_dimension_numbers<[1], [0], [0], [1], [0, 0, 1, 1], [], []>} : vector<128x8xbf16>, vector<8x128xbf16>, vector<128x128xf32> -> vector<128x128xf32>
    %74 = arith.addf %40, %73 : vector<128x128xf32>
    %c0_59 = arith.constant 0 : index
    %c2 = arith.constant 2 : index
    %c0_60 = arith.constant 0 : index
    %c0_61 = arith.constant 0 : index
    %75 = vector.load %arg4[%c0_59, %c2, %c0_60, %c0_61] : memref<2x4x128x8xbf16, #tpu.memory_space<vmem>>, vector<1x1x128x8xbf16>
    %76 = vector.shape_cast %75 : vector<1x1x128x8xbf16> to vector<128x8xbf16>
    %cst_62 = arith.constant dense<0.000000e+00> : vector<128x8xf32>
    %77 = tpu.matmul %5, %76, %cst_62 {dimension_numbers = #tpu.dot_dimension_numbers<[1], [0], [0], [1], [0, 0, 1, 1], [], []>} : vector<128x128xbf16>, vector<128x8xbf16>, vector<128x8xf32> -> vector<128x8xf32>
    %78 = arith.truncf %77 : vector<128x8xf32> to vector<128x8xbf16>
    %c0_63 = arith.constant 0 : index
    %c2_64 = arith.constant 2 : index
    %c0_65 = arith.constant 0 : index
    %c0_66 = arith.constant 0 : index
    %79 = vector.load %arg5[%c0_63, %c2_64, %c0_65, %c0_66] : memref<2x4x128x8xbf16, #tpu.memory_space<vmem>>, vector<1x1x128x8xbf16>
    %80 = vector.shape_cast %79 : vector<1x1x128x8xbf16> to vector<128x8xbf16>
    %cst_67 = arith.constant dense<0.000000e+00> : vector<128x8xf32>
    %81 = tpu.matmul %5, %80, %cst_67 {dimension_numbers = #tpu.dot_dimension_numbers<[1], [0], [0], [1], [0, 0, 1, 1], [], []>} : vector<128x128xbf16>, vector<128x8xbf16>, vector<128x8xf32> -> vector<128x8xf32>
    %82 = arith.truncf %81 : vector<128x8xf32> to vector<128x8xbf16>
    %c0_68 = arith.constant 0 : index
    %c2_69 = arith.constant 2 : index
    %c0_70 = arith.constant 0 : index
    %c0_71 = arith.constant 0 : index
    %83 = vector.load %arg6[%c0_68, %c2_69, %c0_70, %c0_71] : memref<2x4x128x8xbf16, #tpu.memory_space<vmem>>, vector<1x1x128x8xbf16>
    %84 = vector.shape_cast %83 : vector<1x1x128x8xbf16> to vector<128x8xbf16>
    %cst_72 = arith.constant dense<0.000000e+00> : vector<128x8xf32>
    %85 = tpu.matmul %5, %84, %cst_72 {dimension_numbers = #tpu.dot_dimension_numbers<[1], [0], [0], [1], [0, 0, 1, 1], [], []>} : vector<128x128xbf16>, vector<128x8xbf16>, vector<128x8xf32> -> vector<128x8xf32>
    %86 = arith.truncf %85 : vector<128x8xf32> to vector<128x8xbf16>
    "tpu.trace_start"() <{level = 10 : i32, message = "nc,mc->nm"}> : () -> ()
    %cst_73 = arith.constant dense<0.000000e+00> : vector<128x128xf32>
    %87 = tpu.matmul %78, %82, %cst_73 {dimension_numbers = #tpu.dot_dimension_numbers<[1], [1], [0], [0], [0, 0, 1, 0], [], []>} : vector<128x8xbf16>, vector<128x8xbf16>, vector<128x128xf32> -> vector<128x128xf32>
    "tpu.trace_stop"() : () -> ()
    %c0_74 = arith.constant 0 : index
    %c2_75 = arith.constant 2 : index
    %c0_76 = arith.constant 0 : index
    %c0_77 = arith.constant 0 : index
    %88 = vector.load %arg3[%c0_74, %c2_75, %c0_76, %c0_77] : memref<2x4x128x128xbf16, #tpu.memory_space<vmem>>, vector<1x1x128x128xbf16>
    %89 = vector.shape_cast %88 : vector<1x1x128x128xbf16> to vector<128x128xbf16>
    %90 = arith.extf %89 : vector<128x128xbf16> to vector<128x128xf32>
    %91 = arith.addf %87, %90 : vector<128x128xf32>
    %cst_78 = arith.constant dense<0xFF800000> : vector<128xf32>
    %92 = vector.multi_reduction <maximumf>, %91, %cst_78 [1] : vector<128x128xf32> to vector<128xf32>
    %93 = vector.shape_cast %92 : vector<128xf32> to vector<128x1xf32>
    %94 = vector.broadcast %93 : vector<128x1xf32> to vector<128x128xf32>
    %95 = arith.subf %91, %94 : vector<128x128xf32>
    %96 = math.exp %95 : vector<128x128xf32>
    %cst_79 = arith.constant dense<0.000000e+00> : vector<128xf32>
    %97 = vector.multi_reduction <add>, %96, %cst_79 [1] : vector<128x128xf32> to vector<128xf32>
    %98 = vector.shape_cast %97 : vector<128xf32> to vector<128x1xf32>
    %99 = tpu.reciprocal %98 {approx = true} : vector<128x1xf32> -> vector<128x1xf32>
    %100 = vector.broadcast %99 : vector<128x1xf32> to vector<128x128xf32>
    %101 = arith.mulf %96, %100 : vector<128x128xf32>
    %102 = arith.truncf %101 : vector<128x128xf32> to vector<128x128xbf16>
    %cst_80 = arith.constant dense<0.000000e+00> : vector<128x8xf32>
    %103 = tpu.matmul %102, %86, %cst_80 {dimension_numbers = #tpu.dot_dimension_numbers<[1], [0], [0], [1], [0, 0, 1, 1], [], []>} : vector<128x128xbf16>, vector<128x8xbf16>, vector<128x8xf32> -> vector<128x8xf32>
    %104 = arith.truncf %103 : vector<128x8xf32> to vector<128x8xbf16>
    %c0_81 = arith.constant 0 : index
    %c2_82 = arith.constant 2 : index
    %c0_83 = arith.constant 0 : index
    %c0_84 = arith.constant 0 : index
    %105 = vector.load %arg7[%c0_81, %c2_82, %c0_83, %c0_84] : memref<2x4x8x128xbf16, #tpu.memory_space<vmem>>, vector<1x1x8x128xbf16>
    %106 = vector.shape_cast %105 : vector<1x1x8x128xbf16> to vector<8x128xbf16>
    %cst_85 = arith.constant dense<0.000000e+00> : vector<128x128xf32>
    %107 = tpu.matmul %104, %106, %cst_85 {dimension_numbers = #tpu.dot_dimension_numbers<[1], [0], [0], [1], [0, 0, 1, 1], [], []>} : vector<128x8xbf16>, vector<8x128xbf16>, vector<128x128xf32> -> vector<128x128xf32>
    %108 = arith.addf %74, %107 : vector<128x128xf32>
    %c0_86 = arith.constant 0 : index
    %c3 = arith.constant 3 : index
    %c0_87 = arith.constant 0 : index
    %c0_88 = arith.constant 0 : index
    %109 = vector.load %arg4[%c0_86, %c3, %c0_87, %c0_88] : memref<2x4x128x8xbf16, #tpu.memory_space<vmem>>, vector<1x1x128x8xbf16>
    %110 = vector.shape_cast %109 : vector<1x1x128x8xbf16> to vector<128x8xbf16>
    %cst_89 = arith.constant dense<0.000000e+00> : vector<128x8xf32>
    %111 = tpu.matmul %5, %110, %cst_89 {dimension_numbers = #tpu.dot_dimension_numbers<[1], [0], [0], [1], [0, 0, 1, 1], [], []>} : vector<128x128xbf16>, vector<128x8xbf16>, vector<128x8xf32> -> vector<128x8xf32>
    %112 = arith.truncf %111 : vector<128x8xf32> to vector<128x8xbf16>
    %c0_90 = arith.constant 0 : index
    %c3_91 = arith.constant 3 : index
    %c0_92 = arith.constant 0 : index
    %c0_93 = arith.constant 0 : index
    %113 = vector.load %arg5[%c0_90, %c3_91, %c0_92, %c0_93] : memref<2x4x128x8xbf16, #tpu.memory_space<vmem>>, vector<1x1x128x8xbf16>
    %114 = vector.shape_cast %113 : vector<1x1x128x8xbf16> to vector<128x8xbf16>
    %cst_94 = arith.constant dense<0.000000e+00> : vector<128x8xf32>
    %115 = tpu.matmul %5, %114, %cst_94 {dimension_numbers = #tpu.dot_dimension_numbers<[1], [0], [0], [1], [0, 0, 1, 1], [], []>} : vector<128x128xbf16>, vector<128x8xbf16>, vector<128x8xf32> -> vector<128x8xf32>
    %116 = arith.truncf %115 : vector<128x8xf32> to vector<128x8xbf16>
    %c0_95 = arith.constant 0 : index
    %c3_96 = arith.constant 3 : index
    %c0_97 = arith.constant 0 : index
    %c0_98 = arith.constant 0 : index
    %117 = vector.load %arg6[%c0_95, %c3_96, %c0_97, %c0_98] : memref<2x4x128x8xbf16, #tpu.memory_space<vmem>>, vector<1x1x128x8xbf16>
    %118 = vector.shape_cast %117 : vector<1x1x128x8xbf16> to vector<128x8xbf16>
    %cst_99 = arith.constant dense<0.000000e+00> : vector<128x8xf32>
    %119 = tpu.matmul %5, %118, %cst_99 {dimension_numbers = #tpu.dot_dimension_numbers<[1], [0], [0], [1], [0, 0, 1, 1], [], []>} : vector<128x128xbf16>, vector<128x8xbf16>, vector<128x8xf32> -> vector<128x8xf32>
    %120 = arith.truncf %119 : vector<128x8xf32> to vector<128x8xbf16>
    "tpu.trace_start"() <{level = 10 : i32, message = "nc,mc->nm"}> : () -> ()
    %cst_100 = arith.constant dense<0.000000e+00> : vector<128x128xf32>
    %121 = tpu.matmul %112, %116, %cst_100 {dimension_numbers = #tpu.dot_dimension_numbers<[1], [1], [0], [0], [0, 0, 1, 0], [], []>} : vector<128x8xbf16>, vector<128x8xbf16>, vector<128x128xf32> -> vector<128x128xf32>
    "tpu.trace_stop"() : () -> ()
    %c0_101 = arith.constant 0 : index
    %c3_102 = arith.constant 3 : index
    %c0_103 = arith.constant 0 : index
    %c0_104 = arith.constant 0 : index
    %122 = vector.load %arg3[%c0_101, %c3_102, %c0_103, %c0_104] : memref<2x4x128x128xbf16, #tpu.memory_space<vmem>>, vector<1x1x128x128xbf16>
    %123 = vector.shape_cast %122 : vector<1x1x128x128xbf16> to vector<128x128xbf16>
    %124 = arith.extf %123 : vector<128x128xbf16> to vector<128x128xf32>
    %125 = arith.addf %121, %124 : vector<128x128xf32>
    %cst_105 = arith.constant dense<0xFF800000> : vector<128xf32>
    %126 = vector.multi_reduction <maximumf>, %125, %cst_105 [1] : vector<128x128xf32> to vector<128xf32>
    %127 = vector.shape_cast %126 : vector<128xf32> to vector<128x1xf32>
    %128 = vector.broadcast %127 : vector<128x1xf32> to vector<128x128xf32>
    %129 = arith.subf %125, %128 : vector<128x128xf32>
    %130 = math.exp %129 : vector<128x128xf32>
    %cst_106 = arith.constant dense<0.000000e+00> : vector<128xf32>
    %131 = vector.multi_reduction <add>, %130, %cst_106 [1] : vector<128x128xf32> to vector<128xf32>
    %132 = vector.shape_cast %131 : vector<128xf32> to vector<128x1xf32>
    %133 = tpu.reciprocal %132 {approx = true} : vector<128x1xf32> -> vector<128x1xf32>
    %134 = vector.broadcast %133 : vector<128x1xf32> to vector<128x128xf32>
    %135 = arith.mulf %130, %134 : vector<128x128xf32>
    %136 = arith.truncf %135 : vector<128x128xf32> to vector<128x128xbf16>
    %cst_107 = arith.constant dense<0.000000e+00> : vector<128x8xf32>
    %137 = tpu.matmul %136, %120, %cst_107 {dimension_numbers = #tpu.dot_dimension_numbers<[1], [0], [0], [1], [0, 0, 1, 1], [], []>} : vector<128x128xbf16>, vector<128x8xbf16>, vector<128x8xf32> -> vector<128x8xf32>
    %138 = arith.truncf %137 : vector<128x8xf32> to vector<128x8xbf16>
    %c0_108 = arith.constant 0 : index
    %c3_109 = arith.constant 3 : index
    %c0_110 = arith.constant 0 : index
    %c0_111 = arith.constant 0 : index
    %139 = vector.load %arg7[%c0_108, %c3_109, %c0_110, %c0_111] : memref<2x4x8x128xbf16, #tpu.memory_space<vmem>>, vector<1x1x8x128xbf16>
    %140 = vector.shape_cast %139 : vector<1x1x8x128xbf16> to vector<8x128xbf16>
    %cst_112 = arith.constant dense<0.000000e+00> : vector<128x128xf32>
    %141 = tpu.matmul %138, %140, %cst_112 {dimension_numbers = #tpu.dot_dimension_numbers<[1], [0], [0], [1], [0, 0, 1, 1], [], []>} : vector<128x8xbf16>, vector<8x128xbf16>, vector<128x128xf32> -> vector<128x128xf32>
    %142 = arith.addf %108, %141 : vector<128x128xf32>
    %143 = arith.addf %142, %3 : vector<128x128xf32>
    %144 = arith.truncf %143 : vector<128x128xf32> to vector<128x128xbf16>
    %cst_113 = arith.constant 0.000000e+00 : f32
    %145 = vector.broadcast %cst_113 : f32 to vector<128x128xf32>
    %c1_114 = arith.constant 1 : index
    %c0_115 = arith.constant 0 : index
    %c0_116 = arith.constant 0 : index
    %c0_117 = arith.constant 0 : index
    %146 = vector.load %arg4[%c1_114, %c0_115, %c0_116, %c0_117] : memref<2x4x128x8xbf16, #tpu.memory_space<vmem>>, vector<1x1x128x8xbf16>
    %147 = vector.shape_cast %146 : vector<1x1x128x8xbf16> to vector<128x8xbf16>
    %cst_118 = arith.constant dense<0.000000e+00> : vector<128x8xf32>
    %148 = tpu.matmul %144, %147, %cst_118 {dimension_numbers = #tpu.dot_dimension_numbers<[1], [0], [0], [1], [0, 0, 1, 1], [], []>} : vector<128x128xbf16>, vector<128x8xbf16>, vector<128x8xf32> -> vector<128x8xf32>
    %149 = arith.truncf %148 : vector<128x8xf32> to vector<128x8xbf16>
    %c1_119 = arith.constant 1 : index
    %c0_120 = arith.constant 0 : index
    %c0_121 = arith.constant 0 : index
    %c0_122 = arith.constant 0 : index
    %150 = vector.load %arg5[%c1_119, %c0_120, %c0_121, %c0_122] : memref<2x4x128x8xbf16, #tpu.memory_space<vmem>>, vector<1x1x128x8xbf16>
    %151 = vector.shape_cast %150 : vector<1x1x128x8xbf16> to vector<128x8xbf16>
    %cst_123 = arith.constant dense<0.000000e+00> : vector<128x8xf32>
    %152 = tpu.matmul %144, %151, %cst_123 {dimension_numbers = #tpu.dot_dimension_numbers<[1], [0], [0], [1], [0, 0, 1, 1], [], []>} : vector<128x128xbf16>, vector<128x8xbf16>, vector<128x8xf32> -> vector<128x8xf32>
    %153 = arith.truncf %152 : vector<128x8xf32> to vector<128x8xbf16>
    %c1_124 = arith.constant 1 : index
    %c0_125 = arith.constant 0 : index
    %c0_126 = arith.constant 0 : index
    %c0_127 = arith.constant 0 : index
    %154 = vector.load %arg6[%c1_124, %c0_125, %c0_126, %c0_127] : memref<2x4x128x8xbf16, #tpu.memory_space<vmem>>, vector<1x1x128x8xbf16>
    %155 = vector.shape_cast %154 : vector<1x1x128x8xbf16> to vector<128x8xbf16>
    %cst_128 = arith.constant dense<0.000000e+00> : vector<128x8xf32>
    %156 = tpu.matmul %144, %155, %cst_128 {dimension_numbers = #tpu.dot_dimension_numbers<[1], [0], [0], [1], [0, 0, 1, 1], [], []>} : vector<128x128xbf16>, vector<128x8xbf16>, vector<128x8xf32> -> vector<128x8xf32>
    %157 = arith.truncf %156 : vector<128x8xf32> to vector<128x8xbf16>
    "tpu.trace_start"() <{level = 10 : i32, message = "nc,mc->nm"}> : () -> ()
    %cst_129 = arith.constant dense<0.000000e+00> : vector<128x128xf32>
    %158 = tpu.matmul %149, %153, %cst_129 {dimension_numbers = #tpu.dot_dimension_numbers<[1], [1], [0], [0], [0, 0, 1, 0], [], []>} : vector<128x8xbf16>, vector<128x8xbf16>, vector<128x128xf32> -> vector<128x128xf32>
    "tpu.trace_stop"() : () -> ()
    %c1_130 = arith.constant 1 : index
    %c0_131 = arith.constant 0 : index
    %c0_132 = arith.constant 0 : index
    %c0_133 = arith.constant 0 : index
    %159 = vector.load %arg3[%c1_130, %c0_131, %c0_132, %c0_133] : memref<2x4x128x128xbf16, #tpu.memory_space<vmem>>, vector<1x1x128x128xbf16>
    %160 = vector.shape_cast %159 : vector<1x1x128x128xbf16> to vector<128x128xbf16>
    %161 = arith.extf %160 : vector<128x128xbf16> to vector<128x128xf32>
    %162 = arith.addf %158, %161 : vector<128x128xf32>
    %cst_134 = arith.constant dense<0xFF800000> : vector<128xf32>
    %163 = vector.multi_reduction <maximumf>, %162, %cst_134 [1] : vector<128x128xf32> to vector<128xf32>
    %164 = vector.shape_cast %163 : vector<128xf32> to vector<128x1xf32>
    %165 = vector.broadcast %164 : vector<128x1xf32> to vector<128x128xf32>
    %166 = arith.subf %162, %165 : vector<128x128xf32>
    %167 = math.exp %166 : vector<128x128xf32>
    %cst_135 = arith.constant dense<0.000000e+00> : vector<128xf32>
    %168 = vector.multi_reduction <add>, %167, %cst_135 [1] : vector<128x128xf32> to vector<128xf32>
    %169 = vector.shape_cast %168 : vector<128xf32> to vector<128x1xf32>
    %170 = tpu.reciprocal %169 {approx = true} : vector<128x1xf32> -> vector<128x1xf32>
    %171 = vector.broadcast %170 : vector<128x1xf32> to vector<128x128xf32>
    %172 = arith.mulf %167, %171 : vector<128x128xf32>
    %173 = arith.truncf %172 : vector<128x128xf32> to vector<128x128xbf16>
    %cst_136 = arith.constant dense<0.000000e+00> : vector<128x8xf32>
    %174 = tpu.matmul %173, %157, %cst_136 {dimension_numbers = #tpu.dot_dimension_numbers<[1], [0], [0], [1], [0, 0, 1, 1], [], []>} : vector<128x128xbf16>, vector<128x8xbf16>, vector<128x8xf32> -> vector<128x8xf32>
    %175 = arith.truncf %174 : vector<128x8xf32> to vector<128x8xbf16>
    %c1_137 = arith.constant 1 : index
    %c0_138 = arith.constant 0 : index
    %c0_139 = arith.constant 0 : index
    %c0_140 = arith.constant 0 : index
    %176 = vector.load %arg7[%c1_137, %c0_138, %c0_139, %c0_140] : memref<2x4x8x128xbf16, #tpu.memory_space<vmem>>, vector<1x1x8x128xbf16>
    %177 = vector.shape_cast %176 : vector<1x1x8x128xbf16> to vector<8x128xbf16>
    %cst_141 = arith.constant dense<0.000000e+00> : vector<128x128xf32>
    %178 = tpu.matmul %175, %177, %cst_141 {dimension_numbers = #tpu.dot_dimension_numbers<[1], [0], [0], [1], [0, 0, 1, 1], [], []>} : vector<128x8xbf16>, vector<8x128xbf16>, vector<128x128xf32> -> vector<128x128xf32>
    %179 = arith.addf %145, %178 : vector<128x128xf32>
    %c1_142 = arith.constant 1 : index
    %c1_143 = arith.constant 1 : index
    %c0_144 = arith.constant 0 : index
    %c0_145 = arith.constant 0 : index
    %180 = vector.load %arg4[%c1_142, %c1_143, %c0_144, %c0_145] : memref<2x4x128x8xbf16, #tpu.memory_space<vmem>>, vector<1x1x128x8xbf16>
    %181 = vector.shape_cast %180 : vector<1x1x128x8xbf16> to vector<128x8xbf16>
    %cst_146 = arith.constant dense<0.000000e+00> : vector<128x8xf32>
    %182 = tpu.matmul %144, %181, %cst_146 {dimension_numbers = #tpu.dot_dimension_numbers<[1], [0], [0], [1], [0, 0, 1, 1], [], []>} : vector<128x128xbf16>, vector<128x8xbf16>, vector<128x8xf32> -> vector<128x8xf32>
    %183 = arith.truncf %182 : vector<128x8xf32> to vector<128x8xbf16>
    %c1_147 = arith.constant 1 : index
    %c1_148 = arith.constant 1 : index
    %c0_149 = arith.constant 0 : index
    %c0_150 = arith.constant 0 : index
    %184 = vector.load %arg5[%c1_147, %c1_148, %c0_149, %c0_150] : memref<2x4x128x8xbf16, #tpu.memory_space<vmem>>, vector<1x1x128x8xbf16>
    %185 = vector.shape_cast %184 : vector<1x1x128x8xbf16> to vector<128x8xbf16>
    %cst_151 = arith.constant dense<0.000000e+00> : vector<128x8xf32>
    %186 = tpu.matmul %144, %185, %cst_151 {dimension_numbers = #tpu.dot_dimension_numbers<[1], [0], [0], [1], [0, 0, 1, 1], [], []>} : vector<128x128xbf16>, vector<128x8xbf16>, vector<128x8xf32> -> vector<128x8xf32>
    %187 = arith.truncf %186 : vector<128x8xf32> to vector<128x8xbf16>
    %c1_152 = arith.constant 1 : index
    %c1_153 = arith.constant 1 : index
    %c0_154 = arith.constant 0 : index
    %c0_155 = arith.constant 0 : index
    %188 = vector.load %arg6[%c1_152, %c1_153, %c0_154, %c0_155] : memref<2x4x128x8xbf16, #tpu.memory_space<vmem>>, vector<1x1x128x8xbf16>
    %189 = vector.shape_cast %188 : vector<1x1x128x8xbf16> to vector<128x8xbf16>
    %cst_156 = arith.constant dense<0.000000e+00> : vector<128x8xf32>
    %190 = tpu.matmul %144, %189, %cst_156 {dimension_numbers = #tpu.dot_dimension_numbers<[1], [0], [0], [1], [0, 0, 1, 1], [], []>} : vector<128x128xbf16>, vector<128x8xbf16>, vector<128x8xf32> -> vector<128x8xf32>
    %191 = arith.truncf %190 : vector<128x8xf32> to vector<128x8xbf16>
    "tpu.trace_start"() <{level = 10 : i32, message = "nc,mc->nm"}> : () -> ()
    %cst_157 = arith.constant dense<0.000000e+00> : vector<128x128xf32>
    %192 = tpu.matmul %183, %187, %cst_157 {dimension_numbers = #tpu.dot_dimension_numbers<[1], [1], [0], [0], [0, 0, 1, 0], [], []>} : vector<128x8xbf16>, vector<128x8xbf16>, vector<128x128xf32> -> vector<128x128xf32>
    "tpu.trace_stop"() : () -> ()
    %c1_158 = arith.constant 1 : index
    %c1_159 = arith.constant 1 : index
    %c0_160 = arith.constant 0 : index
    %c0_161 = arith.constant 0 : index
    %193 = vector.load %arg3[%c1_158, %c1_159, %c0_160, %c0_161] : memref<2x4x128x128xbf16, #tpu.memory_space<vmem>>, vector<1x1x128x128xbf16>
    %194 = vector.shape_cast %193 : vector<1x1x128x128xbf16> to vector<128x128xbf16>
    %195 = arith.extf %194 : vector<128x128xbf16> to vector<128x128xf32>
    %196 = arith.addf %192, %195 : vector<128x128xf32>
    %cst_162 = arith.constant dense<0xFF800000> : vector<128xf32>
    %197 = vector.multi_reduction <maximumf>, %196, %cst_162 [1] : vector<128x128xf32> to vector<128xf32>
    %198 = vector.shape_cast %197 : vector<128xf32> to vector<128x1xf32>
    %199 = vector.broadcast %198 : vector<128x1xf32> to vector<128x128xf32>
    %200 = arith.subf %196, %199 : vector<128x128xf32>
    %201 = math.exp %200 : vector<128x128xf32>
    %cst_163 = arith.constant dense<0.000000e+00> : vector<128xf32>
    %202 = vector.multi_reduction <add>, %201, %cst_163 [1] : vector<128x128xf32> to vector<128xf32>
    %203 = vector.shape_cast %202 : vector<128xf32> to vector<128x1xf32>
    %204 = tpu.reciprocal %203 {approx = true} : vector<128x1xf32> -> vector<128x1xf32>
    %205 = vector.broadcast %204 : vector<128x1xf32> to vector<128x128xf32>
    %206 = arith.mulf %201, %205 : vector<128x128xf32>
    %207 = arith.truncf %206 : vector<128x128xf32> to vector<128x128xbf16>
    %cst_164 = arith.constant dense<0.000000e+00> : vector<128x8xf32>
    %208 = tpu.matmul %207, %191, %cst_164 {dimension_numbers = #tpu.dot_dimension_numbers<[1], [0], [0], [1], [0, 0, 1, 1], [], []>} : vector<128x128xbf16>, vector<128x8xbf16>, vector<128x8xf32> -> vector<128x8xf32>
    %209 = arith.truncf %208 : vector<128x8xf32> to vector<128x8xbf16>
    %c1_165 = arith.constant 1 : index
    %c1_166 = arith.constant 1 : index
    %c0_167 = arith.constant 0 : index
    %c0_168 = arith.constant 0 : index
    %210 = vector.load %arg7[%c1_165, %c1_166, %c0_167, %c0_168] : memref<2x4x8x128xbf16, #tpu.memory_space<vmem>>, vector<1x1x8x128xbf16>
    %211 = vector.shape_cast %210 : vector<1x1x8x128xbf16> to vector<8x128xbf16>
    %cst_169 = arith.constant dense<0.000000e+00> : vector<128x128xf32>
    %212 = tpu.matmul %209, %211, %cst_169 {dimension_numbers = #tpu.dot_dimension_numbers<[1], [0], [0], [1], [0, 0, 1, 1], [], []>} : vector<128x8xbf16>, vector<8x128xbf16>, vector<128x128xf32> -> vector<128x128xf32>
    %213 = arith.addf %179, %212 : vector<128x128xf32>
    %c1_170 = arith.constant 1 : index
    %c2_171 = arith.constant 2 : index
    %c0_172 = arith.constant 0 : index
    %c0_173 = arith.constant 0 : index
    %214 = vector.load %arg4[%c1_170, %c2_171, %c0_172, %c0_173] : memref<2x4x128x8xbf16, #tpu.memory_space<vmem>>, vector<1x1x128x8xbf16>
    %215 = vector.shape_cast %214 : vector<1x1x128x8xbf16> to vector<128x8xbf16>
    %cst_174 = arith.constant dense<0.000000e+00> : vector<128x8xf32>
    %216 = tpu.matmul %144, %215, %cst_174 {dimension_numbers = #tpu.dot_dimension_numbers<[1], [0], [0], [1], [0, 0, 1, 1], [], []>} : vector<128x128xbf16>, vector<128x8xbf16>, vector<128x8xf32> -> vector<128x8xf32>
    %217 = arith.truncf %216 : vector<128x8xf32> to vector<128x8xbf16>
    %c1_175 = arith.constant 1 : index
    %c2_176 = arith.constant 2 : index
    %c0_177 = arith.constant 0 : index
    %c0_178 = arith.constant 0 : index
    %218 = vector.load %arg5[%c1_175, %c2_176, %c0_177, %c0_178] : memref<2x4x128x8xbf16, #tpu.memory_space<vmem>>, vector<1x1x128x8xbf16>
    %219 = vector.shape_cast %218 : vector<1x1x128x8xbf16> to vector<128x8xbf16>
    %cst_179 = arith.constant dense<0.000000e+00> : vector<128x8xf32>
    %220 = tpu.matmul %144, %219, %cst_179 {dimension_numbers = #tpu.dot_dimension_numbers<[1], [0], [0], [1], [0, 0, 1, 1], [], []>} : vector<128x128xbf16>, vector<128x8xbf16>, vector<128x8xf32> -> vector<128x8xf32>
    %221 = arith.truncf %220 : vector<128x8xf32> to vector<128x8xbf16>
    %c1_180 = arith.constant 1 : index
    %c2_181 = arith.constant 2 : index
    %c0_182 = arith.constant 0 : index
    %c0_183 = arith.constant 0 : index
    %222 = vector.load %arg6[%c1_180, %c2_181, %c0_182, %c0_183] : memref<2x4x128x8xbf16, #tpu.memory_space<vmem>>, vector<1x1x128x8xbf16>
    %223 = vector.shape_cast %222 : vector<1x1x128x8xbf16> to vector<128x8xbf16>
    %cst_184 = arith.constant dense<0.000000e+00> : vector<128x8xf32>
    %224 = tpu.matmul %144, %223, %cst_184 {dimension_numbers = #tpu.dot_dimension_numbers<[1], [0], [0], [1], [0, 0, 1, 1], [], []>} : vector<128x128xbf16>, vector<128x8xbf16>, vector<128x8xf32> -> vector<128x8xf32>
    %225 = arith.truncf %224 : vector<128x8xf32> to vector<128x8xbf16>
    "tpu.trace_start"() <{level = 10 : i32, message = "nc,mc->nm"}> : () -> ()
    %cst_185 = arith.constant dense<0.000000e+00> : vector<128x128xf32>
    %226 = tpu.matmul %217, %221, %cst_185 {dimension_numbers = #tpu.dot_dimension_numbers<[1], [1], [0], [0], [0, 0, 1, 0], [], []>} : vector<128x8xbf16>, vector<128x8xbf16>, vector<128x128xf32> -> vector<128x128xf32>
    "tpu.trace_stop"() : () -> ()
    %c1_186 = arith.constant 1 : index
    %c2_187 = arith.constant 2 : index
    %c0_188 = arith.constant 0 : index
    %c0_189 = arith.constant 0 : index
    %227 = vector.load %arg3[%c1_186, %c2_187, %c0_188, %c0_189] : memref<2x4x128x128xbf16, #tpu.memory_space<vmem>>, vector<1x1x128x128xbf16>
    %228 = vector.shape_cast %227 : vector<1x1x128x128xbf16> to vector<128x128xbf16>
    %229 = arith.extf %228 : vector<128x128xbf16> to vector<128x128xf32>
    %230 = arith.addf %226, %229 : vector<128x128xf32>
    %cst_190 = arith.constant dense<0xFF800000> : vector<128xf32>
    %231 = vector.multi_reduction <maximumf>, %230, %cst_190 [1] : vector<128x128xf32> to vector<128xf32>
    %232 = vector.shape_cast %231 : vector<128xf32> to vector<128x1xf32>
    %233 = vector.broadcast %232 : vector<128x1xf32> to vector<128x128xf32>
    %234 = arith.subf %230, %233 : vector<128x128xf32>
    %235 = math.exp %234 : vector<128x128xf32>
    %cst_191 = arith.constant dense<0.000000e+00> : vector<128xf32>
    %236 = vector.multi_reduction <add>, %235, %cst_191 [1] : vector<128x128xf32> to vector<128xf32>
    %237 = vector.shape_cast %236 : vector<128xf32> to vector<128x1xf32>
    %238 = tpu.reciprocal %237 {approx = true} : vector<128x1xf32> -> vector<128x1xf32>
    %239 = vector.broadcast %238 : vector<128x1xf32> to vector<128x128xf32>
    %240 = arith.mulf %235, %239 : vector<128x128xf32>
    %241 = arith.truncf %240 : vector<128x128xf32> to vector<128x128xbf16>
    %cst_192 = arith.constant dense<0.000000e+00> : vector<128x8xf32>
    %242 = tpu.matmul %241, %225, %cst_192 {dimension_numbers = #tpu.dot_dimension_numbers<[1], [0], [0], [1], [0, 0, 1, 1], [], []>} : vector<128x128xbf16>, vector<128x8xbf16>, vector<128x8xf32> -> vector<128x8xf32>
    %243 = arith.truncf %242 : vector<128x8xf32> to vector<128x8xbf16>
    %c1_193 = arith.constant 1 : index
    %c2_194 = arith.constant 2 : index
    %c0_195 = arith.constant 0 : index
    %c0_196 = arith.constant 0 : index
    %244 = vector.load %arg7[%c1_193, %c2_194, %c0_195, %c0_196] : memref<2x4x8x128xbf16, #tpu.memory_space<vmem>>, vector<1x1x8x128xbf16>
    %245 = vector.shape_cast %244 : vector<1x1x8x128xbf16> to vector<8x128xbf16>
    %cst_197 = arith.constant dense<0.000000e+00> : vector<128x128xf32>
    %246 = tpu.matmul %243, %245, %cst_197 {dimension_numbers = #tpu.dot_dimension_numbers<[1], [0], [0], [1], [0, 0, 1, 1], [], []>} : vector<128x8xbf16>, vector<8x128xbf16>, vector<128x128xf32> -> vector<128x128xf32>
    %247 = arith.addf %213, %246 : vector<128x128xf32>
    %c1_198 = arith.constant 1 : index
    %c3_199 = arith.constant 3 : index
    %c0_200 = arith.constant 0 : index
    %c0_201 = arith.constant 0 : index
    %248 = vector.load %arg4[%c1_198, %c3_199, %c0_200, %c0_201] : memref<2x4x128x8xbf16, #tpu.memory_space<vmem>>, vector<1x1x128x8xbf16>
    %249 = vector.shape_cast %248 : vector<1x1x128x8xbf16> to vector<128x8xbf16>
    %cst_202 = arith.constant dense<0.000000e+00> : vector<128x8xf32>
    %250 = tpu.matmul %144, %249, %cst_202 {dimension_numbers = #tpu.dot_dimension_numbers<[1], [0], [0], [1], [0, 0, 1, 1], [], []>} : vector<128x128xbf16>, vector<128x8xbf16>, vector<128x8xf32> -> vector<128x8xf32>
    %251 = arith.truncf %250 : vector<128x8xf32> to vector<128x8xbf16>
    %c1_203 = arith.constant 1 : index
    %c3_204 = arith.constant 3 : index
    %c0_205 = arith.constant 0 : index
    %c0_206 = arith.constant 0 : index
    %252 = vector.load %arg5[%c1_203, %c3_204, %c0_205, %c0_206] : memref<2x4x128x8xbf16, #tpu.memory_space<vmem>>, vector<1x1x128x8xbf16>
    %253 = vector.shape_cast %252 : vector<1x1x128x8xbf16> to vector<128x8xbf16>
    %cst_207 = arith.constant dense<0.000000e+00> : vector<128x8xf32>
    %254 = tpu.matmul %144, %253, %cst_207 {dimension_numbers = #tpu.dot_dimension_numbers<[1], [0], [0], [1], [0, 0, 1, 1], [], []>} : vector<128x128xbf16>, vector<128x8xbf16>, vector<128x8xf32> -> vector<128x8xf32>
    %255 = arith.truncf %254 : vector<128x8xf32> to vector<128x8xbf16>
    %c1_208 = arith.constant 1 : index
    %c3_209 = arith.constant 3 : index
    %c0_210 = arith.constant 0 : index
    %c0_211 = arith.constant 0 : index
    %256 = vector.load %arg6[%c1_208, %c3_209, %c0_210, %c0_211] : memref<2x4x128x8xbf16, #tpu.memory_space<vmem>>, vector<1x1x128x8xbf16>
    %257 = vector.shape_cast %256 : vector<1x1x128x8xbf16> to vector<128x8xbf16>
    %cst_212 = arith.constant dense<0.000000e+00> : vector<128x8xf32>
    %258 = tpu.matmul %144, %257, %cst_212 {dimension_numbers = #tpu.dot_dimension_numbers<[1], [0], [0], [1], [0, 0, 1, 1], [], []>} : vector<128x128xbf16>, vector<128x8xbf16>, vector<128x8xf32> -> vector<128x8xf32>
    %259 = arith.truncf %258 : vector<128x8xf32> to vector<128x8xbf16>
    "tpu.trace_start"() <{level = 10 : i32, message = "nc,mc->nm"}> : () -> ()
    %cst_213 = arith.constant dense<0.000000e+00> : vector<128x128xf32>
    %260 = tpu.matmul %251, %255, %cst_213 {dimension_numbers = #tpu.dot_dimension_numbers<[1], [1], [0], [0], [0, 0, 1, 0], [], []>} : vector<128x8xbf16>, vector<128x8xbf16>, vector<128x128xf32> -> vector<128x128xf32>
    "tpu.trace_stop"() : () -> ()
    %c1_214 = arith.constant 1 : index
    %c3_215 = arith.constant 3 : index
    %c0_216 = arith.constant 0 : index
    %c0_217 = arith.constant 0 : index
    %261 = vector.load %arg3[%c1_214, %c3_215, %c0_216, %c0_217] : memref<2x4x128x128xbf16, #tpu.memory_space<vmem>>, vector<1x1x128x128xbf16>
    %262 = vector.shape_cast %261 : vector<1x1x128x128xbf16> to vector<128x128xbf16>
    %263 = arith.extf %262 : vector<128x128xbf16> to vector<128x128xf32>
    %264 = arith.addf %260, %263 : vector<128x128xf32>
    %cst_218 = arith.constant dense<0xFF800000> : vector<128xf32>
    %265 = vector.multi_reduction <maximumf>, %264, %cst_218 [1] : vector<128x128xf32> to vector<128xf32>
    %266 = vector.shape_cast %265 : vector<128xf32> to vector<128x1xf32>
    %267 = vector.broadcast %266 : vector<128x1xf32> to vector<128x128xf32>
    %268 = arith.subf %264, %267 : vector<128x128xf32>
    %269 = math.exp %268 : vector<128x128xf32>
    %cst_219 = arith.constant dense<0.000000e+00> : vector<128xf32>
    %270 = vector.multi_reduction <add>, %269, %cst_219 [1] : vector<128x128xf32> to vector<128xf32>
    %271 = vector.shape_cast %270 : vector<128xf32> to vector<128x1xf32>
    %272 = tpu.reciprocal %271 {approx = true} : vector<128x1xf32> -> vector<128x1xf32>
    %273 = vector.broadcast %272 : vector<128x1xf32> to vector<128x128xf32>
    %274 = arith.mulf %269, %273 : vector<128x128xf32>
    %275 = arith.truncf %274 : vector<128x128xf32> to vector<128x128xbf16>
    %cst_220 = arith.constant dense<0.000000e+00> : vector<128x8xf32>
    %276 = tpu.matmul %275, %259, %cst_220 {dimension_numbers = #tpu.dot_dimension_numbers<[1], [0], [0], [1], [0, 0, 1, 1], [], []>} : vector<128x128xbf16>, vector<128x8xbf16>, vector<128x8xf32> -> vector<128x8xf32>
    %277 = arith.truncf %276 : vector<128x8xf32> to vector<128x8xbf16>
    %c1_221 = arith.constant 1 : index
    %c3_222 = arith.constant 3 : index
    %c0_223 = arith.constant 0 : index
    %c0_224 = arith.constant 0 : index
    %278 = vector.load %arg7[%c1_221, %c3_222, %c0_223, %c0_224] : memref<2x4x8x128xbf16, #tpu.memory_space<vmem>>, vector<1x1x8x128xbf16>
    %279 = vector.shape_cast %278 : vector<1x1x8x128xbf16> to vector<8x128xbf16>
    %cst_225 = arith.constant dense<0.000000e+00> : vector<128x128xf32>
    %280 = tpu.matmul %277, %279, %cst_225 {dimension_numbers = #tpu.dot_dimension_numbers<[1], [0], [0], [1], [0, 0, 1, 1], [], []>} : vector<128x8xbf16>, vector<8x128xbf16>, vector<128x128xf32> -> vector<128x128xf32>
    %281 = arith.addf %247, %280 : vector<128x128xf32>
    %c0_226 = arith.constant 0 : index
    %c0_227 = arith.constant 0 : index
    %282 = vector.load %arg9[%c0_226, %c0_227] : memref<128x128xf32, #tpu.memory_space<vmem>>, vector<128x128xf32>
    tpu.vector_store %arg9[%c0_226, %c0_227], %281 {strides = array<i32>} : memref<128x128xf32, #tpu.memory_space<vmem>>, vector<128x128xf32>,
    %c0_228 = arith.constant 0 : index
    %c0_229 = arith.constant 0 : index
    %283 = vector.load %arg8[%c0_228, %c0_229] : memref<8x128xbf16, #tpu.memory_space<vmem>>, vector<8x128xbf16>
    %284 = arith.truncf %281 : vector<128x128xf32> to vector<128x128xbf16>
    %cst_230 = arith.constant dense<0.000000e+00> : vector<8x128xf32>
    %285 = tpu.matmul %283, %284, %cst_230 {dimension_numbers = #tpu.dot_dimension_numbers<[1], [0], [0], [1], [0, 0, 1, 1], [], []>} : vector<8x128xbf16>, vector<128x128xbf16>, vector<8x128xf32> -> vector<8x128xf32>
    %c0_231 = arith.constant 0 : index
    %c0_232 = arith.constant 0 : index
    %286 = vector.load %arg10[%c0_231, %c0_232] : memref<8x128xf32, #tpu.memory_space<vmem>>, vector<8x128xf32>
    tpu.vector_store %arg10[%c0_231, %c0_232], %285 {strides = array<i32>} : memref<8x128xf32, #tpu.memory_space<vmem>>, vector<8x128xf32>,
    return
  }
  func.func @transform_0(%arg0: i32) -> (i32, i32) {
    %c0_i32 = arith.constant 0 : i32
    %c0_i32_0 = arith.constant 0 : i32
    %c0_i32_1 = arith.constant 0 : i32
    return %c0_i32, %c0_i32_0 : i32, i32
  }
  func.func @transform_1(%arg0: i32) -> (i32, i32) {
    %c0_i32 = arith.constant 0 : i32
    %c0_i32_0 = arith.constant 0 : i32
    %c0_i32_1 = arith.constant 0 : i32
    return %c0_i32, %c0_i32_0 : i32, i32
  }
  func.func @transform_2(%arg0: i32) -> (i32, i32, i32, i32) {
    %c0_i32 = arith.constant 0 : i32
    %c0_i32_0 = arith.constant 0 : i32
    %c0_i32_1 = arith.constant 0 : i32
    %c0_i32_2 = arith.constant 0 : i32
    %c0_i32_3 = arith.constant 0 : i32
    return %c0_i32, %c0_i32_0, %c0_i32_1, %c0_i32_2 : i32, i32, i32, i32
  }
  func.func @transform_3(%arg0: i32) -> (i32, i32, i32, i32) {
    %c0_i32 = arith.constant 0 : i32
    %c0_i32_0 = arith.constant 0 : i32
    %c0_i32_1 = arith.constant 0 : i32
    %c0_i32_2 = arith.constant 0 : i32
    %c0_i32_3 = arith.constant 0 : i32
    return %c0_i32, %c0_i32_0, %c0_i32_1, %c0_i32_2 : i32, i32, i32, i32
  }
  func.func @transform_4(%arg0: i32) -> (i32, i32, i32, i32) {
    %c0_i32 = arith.constant 0 : i32
    %c0_i32_0 = arith.constant 0 : i32
    %c0_i32_1 = arith.constant 0 : i32
    %c0_i32_2 = arith.constant 0 : i32
    %c0_i32_3 = arith.constant 0 : i32
    return %c0_i32, %c0_i32_0, %c0_i32_1, %c0_i32_2 : i32, i32, i32, i32
  }
  func.func @transform_5(%arg0: i32) -> (i32, i32, i32, i32) {
    %c0_i32 = arith.constant 0 : i32
    %c0_i32_0 = arith.constant 0 : i32
    %c0_i32_1 = arith.constant 0 : i32
    %c0_i32_2 = arith.constant 0 : i32
    %c0_i32_3 = arith.constant 0 : i32
    return %c0_i32, %c0_i32_0, %c0_i32_1, %c0_i32_2 : i32, i32, i32, i32
  }
  func.func @transform_6(%arg0: i32) -> (i32, i32, i32, i32) {
    %c0_i32 = arith.constant 0 : i32
    %c0_i32_0 = arith.constant 0 : i32
    %c0_i32_1 = arith.constant 0 : i32
    %c0_i32_2 = arith.constant 0 : i32
    %c0_i32_3 = arith.constant 0 : i32
    return %c0_i32, %c0_i32_0, %c0_i32_1, %c0_i32_2 : i32, i32, i32, i32
  }
  func.func @transform_7(%arg0: i32) -> (i32, i32) {
    %c0_i32 = arith.constant 0 : i32
    %c0_i32_0 = arith.constant 0 : i32
    %c0_i32_1 = arith.constant 0 : i32
    return %c0_i32, %c0_i32_0 : i32, i32
  }
  func.func @transform_8(%arg0: i32) -> (i32, i32) {
    %c0_i32 = arith.constant 0 : i32
    %c0_i32_0 = arith.constant 0 : i32
    %c0_i32_1 = arith.constant 0 : i32
    return %c0_i32, %c0_i32_0 : i32, i32
  }
  func.func @transform_9(%arg0: i32) -> (i32, i32) {
    %c0_i32 = arith.constant 0 : i32
    %c0_i32_0 = arith.constant 0 : i32
    %c0_i32_1 = arith.constant 0 : i32
    return %c0_i32, %c0_i32_0 : i32, i32
  }
}

</mosaic_0001>

<llo_original>
// kernel: tpu_custom_call.1
$region0: #{tpu_custom_call.1}
  #allocation0 [shape = 'u32[]', space=smem, size = 0x4, offset = 0x4, fixed_abs, tag = 'smem constant byte address 0x4 - core index']
  #allocation1 [shape = 'u32[72,128]{1,0:T(1,128)}', space=vmem, size = 0x9000, scoped, tag = 'internal scratch']
  %s0 = inlined_call_operand.vmem [shape: f32[128,128], index: 0, kind: input, shape index: {}]
  %s1 = inlined_call_operand.vmem [shape: bf16[128,128], index: 1, kind: input, shape index: {}]
  %s2 = inlined_call_operand.vmem [shape: bf16[2,4,128,128], index: 2, kind: input, shape index: {}]
  %s3 = inlined_call_operand.vmem [shape: bf16[2,4,128,8], index: 3, kind: input, shape index: {}]
  %s4 = inlined_call_operand.vmem [shape: bf16[2,4,128,8], index: 4, kind: input, shape index: {}]
  %s5 = inlined_call_operand.vmem [shape: bf16[2,4,128,8], index: 5, kind: input, shape index: {}]
  %s6 = inlined_call_operand.vmem [shape: bf16[2,4,8,128], index: 6, kind: input, shape index: {}]
  %s7 = inlined_call_operand.vmem [shape: bf16[8,128], index: 7, kind: input, shape index: {}]
  %s8 = inlined_call_operand.hbm [shape: f32[128,128], index: 8, kind: output, shape index: {0}]
  %s9 = inlined_call_operand.hbm [shape: f32[8,128], index: 9, kind: output, shape index: {1}]
  %10 = xla_tuple %s8, %s9
  %s11 = sld [smem:[#allocation0]]
  $region50: #{tpu_custom_call.1} parent=0
    _
  %s13 = ssub.s32 1, %s11
  %s14 = scalar_select 0, %s13, %s11
  $region1: #{tpu_custom_call.1} parent=0
    #allocation2 [shape = 'u8[65536]{0}', space=vmem, size = 0x10000, scoped, tag = 'output window, operand 0, single buffered']
    #allocation3 [shape = 's32[1]{0}', space=sflag, size = 0x4, scoped, tag = 'scoped memory for tpu_custom_call.1']
    #allocation4 [shape = 'u8[4096]{0}', space=vmem, size = 0x1000, scoped, tag = 'output window, operand 1, single buffered']
    #allocation5 [shape = 's32[1]{0}', space=sflag, size = 0x4, scoped, tag = 'scoped memory for tpu_custom_call.1']
    %15 = vsyncpa [#allocation3], 0
    %16 = vsyncpa [#allocation5], 0
    // Predicated region
    $region2: #{tpu_custom_call.1} parent=1 // pred_check
      _
    $region3: #{tpu_custom_call.1} parent=1 // pred_check_branch
      %18 = sbr.rel (0) target = $region5
    $region4: #{tpu_custom_call.1} parent=1 // pred_region
      _
    $region5: #{tpu_custom_call.1} parent=1 // pred_fallthru
      _
    // Predicated region
    $region6: #{tpu_custom_call.1} parent=1 // pred_check
      _
    $region7: #{tpu_custom_call.1} parent=1 // pred_check_branch
      %20 = sbr.rel (0) target = $region9
    $region8: #{tpu_custom_call.1} parent=1 // pred_region
      _
    $region9: #{tpu_custom_call.1} parent=1 // pred_fallthru
      _
    // Predicated region
    $region10: #{tpu_custom_call.1} parent=1 // pred_check
      _
    $region11: #{tpu_custom_call.1} parent=1 // pred_check_branch
      %22 = sbr.rel (0) target = $region13
    $region12: #{tpu_custom_call.1} parent=1 // pred_region
      _
    $region13: #{tpu_custom_call.1} parent=1 // pred_fallthru
      _
    // Predicated region
    $region14: #{tpu_custom_call.1} parent=1 // pred_check
      _
    $region15: #{tpu_custom_call.1} parent=1 // pred_check_branch
      %24 = sbr.rel (0) target = $region17
    $region16: #{tpu_custom_call.1} parent=1 // pred_region
      _
    $region17: #{tpu_custom_call.1} parent=1 // pred_fallthru
      _
    // Predicated region
    $region18: #{tpu_custom_call.1} parent=1 // pred_check
      _
    $region19: #{tpu_custom_call.1} parent=1 // pred_check_branch
      %26 = sbr.rel (0) target = $region21
    $region20: #{tpu_custom_call.1} parent=1 // pred_region
      _
    $region21: #{tpu_custom_call.1} parent=1 // pred_fallthru
      _
    // Predicated region
    $region22: #{tpu_custom_call.1} parent=1 // pred_check
      _
    $region23: #{tpu_custom_call.1} parent=1 // pred_check_branch
      %28 = sbr.rel (0) target = $region25
    $region24: #{tpu_custom_call.1} parent=1 // pred_region
      _
    $region25: #{tpu_custom_call.1} parent=1 // pred_fallthru
      _
    // Predicated region
    $region26: #{tpu_custom_call.1} parent=1 // pred_check
      _
    $region27: #{tpu_custom_call.1} parent=1 // pred_check_branch
      %30 = sbr.rel (0) target = $region29
    $region28: #{tpu_custom_call.1} parent=1 // pred_region
      _
    $region29: #{tpu_custom_call.1} parent=1 // pred_fallthru
      _
    // Predicated region
    $region30: #{tpu_custom_call.1} parent=1 // pred_check
      _
    $region31: #{tpu_custom_call.1} parent=1 // pred_check_branch
      %32 = sbr.rel (0) target = $region33
    $region32: #{tpu_custom_call.1} parent=1 // pred_region
      _
    $region33: #{tpu_custom_call.1} parent=1 // pred_fallthru
      _
    %v34 = vld [vmem:[%s0] sm:$0xff]
    %v35 = vld [vmem:[%s0 + $0x8] sm:$0xff]
    %v36 = vld [vmem:[%s0 + $0x10] sm:$0xff]
    %v37 = vld [vmem:[%s0 + $0x18] sm:$0xff]
    %v38 = vld [vmem:[%s0 + $0x20] sm:$0xff]
    %v39 = vld [vmem:[%s0 + $0x28] sm:$0xff]
    %v40 = vld [vmem:[%s0 + $0x30] sm:$0xff]
    %v41 = vld [vmem:[%s0 + $0x38] sm:$0xff]
    %v42 = vld [vmem:[%s0 + $0x40] sm:$0xff]
    %v43 = vld [vmem:[%s0 + $0x48] sm:$0xff]
    %v44 = vld [vmem:[%s0 + $0x50] sm:$0xff]
    %v45 = vld [vmem:[%s0 + $0x58] sm:$0xff]
    %v46 = vld [vmem:[%s0 + $0x60] sm:$0xff]
    %v47 = vld [vmem:[%s0 + $0x68] sm:$0xff]
    %v48 = vld [vmem:[%s0 + $0x70] sm:$0xff]
    %v49 = vld [vmem:[%s0 + $0x78] sm:$0xff]
    %v50 = vld [vmem:[%s1] sm:$0xf]
    %v51 = vld [vmem:[%s1 + $0x4] sm:$0xf]
    %v52 = vld [vmem:[%s1 + $0x8] sm:$0xf]
    %v53 = vld [vmem:[%s1 + $0xc] sm:$0xf]
    %v54 = vld [vmem:[%s1 + $0x10] sm:$0xf]
    %v55 = vld [vmem:[%s1 + $0x14] sm:$0xf]
    %v56 = vld [vmem:[%s1 + $0x18] sm:$0xf]
    %v57 = vld [vmem:[%s1 + $0x1c] sm:$0xf]
    %v58 = vld [vmem:[%s1 + $0x20] sm:$0xf]
    %v59 = vld [vmem:[%s1 + $0x24] sm:$0xf]
    %v60 = vld [vmem:[%s1 + $0x28] sm:$0xf]
    %v61 = vld [vmem:[%s1 + $0x2c] sm:$0xf]
    %v62 = vld [vmem:[%s1 + $0x30] sm:$0xf]
    %v63 = vld [vmem:[%s1 + $0x34] sm:$0xf]
    %v64 = vld [vmem:[%s1 + $0x38] sm:$0xf]
    %v65 = vld [vmem:[%s1 + $0x3c] sm:$0xf]
    %v66 = vpack.c.bf16 %v35, %v34
    %v67 = vpack.c.bf16 %v37, %v36
    %v68 = vpack.c.bf16 %v39, %v38
    %v69 = vpack.c.bf16 %v41, %v40
    %v70 = vpack.c.bf16 %v43, %v42
    %v71 = vpack.c.bf16 %v45, %v44
    %v72 = vpack.c.bf16 %v47, %v46
    %v73 = vpack.c.bf16 %v49, %v48
    %v90 = vunpack.c.l.b16 %v50
    %v91 = vunpack.c.l.b16 %v51
    %v92 = vunpack.c.l.b16 %v52
    %v93 = vunpack.c.l.b16 %v53
    %v94 = vunpack.c.l.b16 %v54
    %v95 = vunpack.c.l.b16 %v55
    %v96 = vunpack.c.l.b16 %v56
    %v97 = vunpack.c.l.b16 %v57
    %v98 = vunpack.c.l.b16 %v58
    %v99 = vunpack.c.l.b16 %v59
    %v100 = vunpack.c.l.b16 %v60
    %v101 = vunpack.c.l.b16 %v61
    %v102 = vunpack.c.l.b16 %v62
    %v103 = vunpack.c.l.b16 %v63
    %v104 = vunpack.c.l.b16 %v64
    %v105 = vunpack.c.l.b16 %v65
    %v106 = vpack.c.b16 %v91, %v90
    %v107 = vpack.c.b16 %v93, %v92
    %v108 = vpack.c.b16 %v95, %v94
    %v109 = vpack.c.b16 %v97, %v96
    %v110 = vpack.c.b16 %v99, %v98
    %v111 = vpack.c.b16 %v101, %v100
    %v112 = vpack.c.b16 %v103, %v102
    %v113 = vpack.c.b16 %v105, %v104
    %122 = vmatpush.bf16.msra.mxu0 %v73
    %123 = vmatpush.bf16.msra.mxu0 %v72
    %124 = vmatpush.bf16.msra.mxu0 %v71
    %125 = vmatpush.bf16.msra.mxu0 %v70
    %126 = vmatpush.bf16.msra.mxu0 %v69
    %127 = vmatpush.bf16.msra.mxu0 %v68
    %128 = vmatpush.bf16.msra.mxu0 %v67
    %129 = vmatpush.bf16.msra.mxu0 %v66
    %130 = vmatmul.bf16.gmra.mxu0 %v106
    %v131 = vpop.f32.mrf.mxu0
    %v132 = vadd.f32 0.0, %v131
    %v133 = vpop.f32.mrf.mxu0
    %v134 = vadd.f32 0.0, %v133
    %135 = vmatmul.bf16.gmra.mxu0 %v107
    %v136 = vpop.f32.mrf.mxu0
    %v137 = vadd.f32 0.0, %v136
    %v138 = vpop.f32.mrf.mxu0
    %v139 = vadd.f32 0.0, %v138
    %140 = vmatmul.bf16.gmra.mxu0 %v108
    %v141 = vpop.f32.mrf.mxu0
    %v142 = vadd.f32 0.0, %v141
    %v143 = vpop.f32.mrf.mxu0
    %v144 = vadd.f32 0.0, %v143
    %145 = vmatmul.bf16.gmra.mxu0 %v109
    %v146 = vpop.f32.mrf.mxu0
    %v147 = vadd.f32 0.0, %v146
    %v148 = vpop.f32.mrf.mxu0
    %v149 = vadd.f32 0.0, %v148
    %150 = vmatmul.bf16.gmra.mxu0 %v110
    %v151 = vpop.f32.mrf.mxu0
    %v152 = vadd.f32 0.0, %v151
    %v153 = vpop.f32.mrf.mxu0
    %v154 = vadd.f32 0.0, %v153
    %155 = vmatmul.bf16.gmra.mxu0 %v111
    %v156 = vpop.f32.mrf.mxu0
    %v157 = vadd.f32 0.0, %v156
    %v158 = vpop.f32.mrf.mxu0
    %v159 = vadd.f32 0.0, %v158
    %160 = vmatmul.bf16.gmra.mxu0 %v112
    %v161 = vpop.f32.mrf.mxu0
    %v162 = vadd.f32 0.0, %v161
    %v163 = vpop.f32.mrf.mxu0
    %v164 = vadd.f32 0.0, %v163
    %165 = vmatmul.bf16.gmra.mxu0 %v113
    %v166 = vpop.f32.mrf.mxu0
    %v167 = vadd.f32 0.0, %v166
    %v168 = vpop.f32.mrf.mxu0
    %v169 = vadd.f32 0.0, %v168
    %170 = vdwg.mxu0
    %v171 = vadd.f32 %v34, %v132
    %v172 = vadd.f32 %v35, %v134
    %v173 = vadd.f32 %v36, %v137
    %v174 = vadd.f32 %v37, %v139
    %v175 = vadd.f32 %v38, %v142
    %v176 = vadd.f32 %v39, %v144
    %v177 = vadd.f32 %v40, %v147
    %v178 = vadd.f32 %v41, %v149
    %v179 = vadd.f32 %v42, %v152
    %v180 = vadd.f32 %v43, %v154
    %v181 = vadd.f32 %v44, %v157
    %v182 = vadd.f32 %v45, %v159
    %v183 = vadd.f32 %v46, %v162
    %v184 = vadd.f32 %v47, %v164
    %v185 = vadd.f32 %v48, %v167
    %v186 = vadd.f32 %v49, %v169
    %v187 = vpack.c.bf16 %v172, %v171
    %v188 = vpack.c.bf16 %v174, %v173
    %v189 = vpack.c.bf16 %v176, %v175
    %v190 = vpack.c.bf16 %v178, %v177
    %v191 = vpack.c.bf16 %v180, %v179
    %v192 = vpack.c.bf16 %v182, %v181
    %v193 = vpack.c.bf16 %v184, %v183
    %v194 = vpack.c.bf16 %v186, %v185
    %v195 = vld [vmem:[%s3] sm:$0xf]
    %v196 = vld [vmem:[%s3 + $0x4] sm:$0xf]
    %v197 = vld [vmem:[%s3 + $0x8] sm:$0xf]
    %v198 = vld [vmem:[%s3 + $0xc] sm:$0xf]
    %v199 = vld [vmem:[%s3 + $0x10] sm:$0xf]
    %v200 = vld [vmem:[%s3 + $0x14] sm:$0xf]
    %v201 = vld [vmem:[%s3 + $0x18] sm:$0xf]
    %v202 = vld [vmem:[%s3 + $0x1c] sm:$0xf]
    %v203 = vld [vmem:[%s3 + $0x20] sm:$0xf]
    %v204 = vld [vmem:[%s3 + $0x24] sm:$0xf]
    %v205 = vld [vmem:[%s3 + $0x28] sm:$0xf]
    %v206 = vld [vmem:[%s3 + $0x2c] sm:$0xf]
    %v207 = vld [vmem:[%s3 + $0x30] sm:$0xf]
    %v208 = vld [vmem:[%s3 + $0x34] sm:$0xf]
    %v209 = vld [vmem:[%s3 + $0x38] sm:$0xf]
    %v210 = vld [vmem:[%s3 + $0x3c] sm:$0xf]
    %v227 = vunpack.c.l.b16 %v195
    %v228 = vunpack.c.l.b16 %v196
    %v229 = vunpack.c.l.b16 %v197
    %v230 = vunpack.c.l.b16 %v198
    %v231 = vunpack.c.l.b16 %v199
    %v232 = vunpack.c.l.b16 %v200
    %v233 = vunpack.c.l.b16 %v201
    %v234 = vunpack.c.l.b16 %v202
    %v235 = vunpack.c.l.b16 %v203
    %v236 = vunpack.c.l.b16 %v204
    %v237 = vunpack.c.l.b16 %v205
    %v238 = vunpack.c.l.b16 %v206
    %v239 = vunpack.c.l.b16 %v207
    %v240 = vunpack.c.l.b16 %v208
    %v241 = vunpack.c.l.b16 %v209
    %v242 = vunpack.c.l.b16 %v210
    %v243 = vpack.c.b16 %v228, %v227
    %v244 = vpack.c.b16 %v230, %v229
    %v245 = vpack.c.b16 %v232, %v231
    %v246 = vpack.c.b16 %v234, %v233
    %v247 = vpack.c.b16 %v236, %v235
    %v248 = vpack.c.b16 %v238, %v237
    %v249 = vpack.c.b16 %v240, %v239
    %v250 = vpack.c.b16 %v242, %v241
    %259 = vmatpush.bf16.msra.mxu0 %v250
    %260 = vmatpush.bf16.msra.mxu0 %v249
    %261 = vmatpush.bf16.msra.mxu0 %v248
    %262 = vmatpush.bf16.msra.mxu0 %v247
    %263 = vmatpush.bf16.msra.mxu0 %v246
    %264 = vmatpush.bf16.msra.mxu0 %v245
    %265 = vmatpush.bf16.msra.mxu0 %v244
    %266 = vmatpush.bf16.msra.mxu0 %v243
    %267 = vmatmul.bf16.gmra.mxu0 %v187
    %v268 = vpop.f32.mrf.mxu0
    %v269 = vadd.f32 0.0, %v268
    %v270 = vpop.f32.mrf.mxu0
    %v271 = vadd.f32 0.0, %v270
    %272 = vmatmul.bf16.gmra.mxu0 %v188
    %v273 = vpop.f32.mrf.mxu0
    %v274 = vadd.f32 0.0, %v273
    %v275 = vpop.f32.mrf.mxu0
    %v276 = vadd.f32 0.0, %v275
    %277 = vmatmul.bf16.gmra.mxu0 %v189
    %v278 = vpop.f32.mrf.mxu0
    %v279 = vadd.f32 0.0, %v278
    %v280 = vpop.f32.mrf.mxu0
    %v281 = vadd.f32 0.0, %v280
    %282 = vmatmul.bf16.gmra.mxu0 %v190
    %v283 = vpop.f32.mrf.mxu0
    %v284 = vadd.f32 0.0, %v283
    %v285 = vpop.f32.mrf.mxu0
    %v286 = vadd.f32 0.0, %v285
    %287 = vmatmul.bf16.gmra.mxu0 %v191
    %v288 = vpop.f32.mrf.mxu0
    %v289 = vadd.f32 0.0, %v288
    %v290 = vpop.f32.mrf.mxu0
    %v291 = vadd.f32 0.0, %v290
    %292 = vmatmul.bf16.gmra.mxu0 %v192
    %v293 = vpop.f32.mrf.mxu0
    %v294 = vadd.f32 0.0, %v293
    %v295 = vpop.f32.mrf.mxu0
    %v296 = vadd.f32 0.0, %v295
    %297 = vmatmul.bf16.gmra.mxu0 %v193
    %v298 = vpop.f32.mrf.mxu0
    %v299 = vadd.f32 0.0, %v298
    %v300 = vpop.f32.mrf.mxu0
    %v301 = vadd.f32 0.0, %v300
    %302 = vmatmul.bf16.gmra.mxu0 %v194
    %v303 = vpop.f32.mrf.mxu0
    %v304 = vadd.f32 0.0, %v303
    %v305 = vpop.f32.mrf.mxu0
    %v306 = vadd.f32 0.0, %v305
    %307 = vdwg.mxu0
    %v308 = vpack.c.bf16 %v271, %v269
    %v309 = vpack.c.bf16 %v276, %v274
    %v310 = vpack.c.bf16 %v281, %v279
    %v311 = vpack.c.bf16 %v286, %v284
    %v312 = vpack.c.bf16 %v291, %v289
    %v313 = vpack.c.bf16 %v296, %v294
    %v314 = vpack.c.bf16 %v301, %v299
    %v315 = vpack.c.bf16 %v306, %v304
    %v316 = vld [vmem:[%s4] sm:$0xf]
    %v317 = vld [vmem:[%s4 + $0x4] sm:$0xf]
    %v318 = vld [vmem:[%s4 + $0x8] sm:$0xf]
    %v319 = vld [vmem:[%s4 + $0xc] sm:$0xf]
    %v320 = vld [vmem:[%s4 + $0x10] sm:$0xf]
    %v321 = vld [vmem:[%s4 + $0x14] sm:$0xf]
    %v322 = vld [vmem:[%s4 + $0x18] sm:$0xf]
    %v323 = vld [vmem:[%s4 + $0x1c] sm:$0xf]
    %v324 = vld [vmem:[%s4 + $0x20] sm:$0xf]
    %v325 = vld [vmem:[%s4 + $0x24] sm:$0xf]
    %v326 = vld [vmem:[%s4 + $0x28] sm:$0xf]
    %v327 = vld [vmem:[%s4 + $0x2c] sm:$0xf]
    %v328 = vld [vmem:[%s4 + $0x30] sm:$0xf]
    %v329 = vld [vmem:[%s4 + $0x34] sm:$0xf]
    %v330 = vld [vmem:[%s4 + $0x38] sm:$0xf]
    %v331 = vld [vmem:[%s4 + $0x3c] sm:$0xf]
    %v348 = vunpack.c.l.b16 %v316
    %v349 = vunpack.c.l.b16 %v317
    %v350 = vunpack.c.l.b16 %v318
    %v351 = vunpack.c.l.b16 %v319
    %v352 = vunpack.c.l.b16 %v320
    %v353 = vunpack.c.l.b16 %v321
    %v354 = vunpack.c.l.b16 %v322
    %v355 = vunpack.c.l.b16 %v323
    %v356 = vunpack.c.l.b16 %v324
    %v357 = vunpack.c.l.b16 %v325
    %v358 = vunpack.c.l.b16 %v326
    %v359 = vunpack.c.l.b16 %v327
    %v360 = vunpack.c.l.b16 %v328
    %v361 = vunpack.c.l.b16 %v329
    %v362 = vunpack.c.l.b16 %v330
    %v363 = vunpack.c.l.b16 %v331
    %v364 = vpack.c.b16 %v349, %v348
    %v365 = vpack.c.b16 %v351, %v350
    %v366 = vpack.c.b16 %v353, %v352
    %v367 = vpack.c.b16 %v355, %v354
    %v368 = vpack.c.b16 %v357, %v356
    %v369 = vpack.c.b16 %v359, %v358
    %v370 = vpack.c.b16 %v361, %v360
    %v371 = vpack.c.b16 %v363, %v362
    %380 = vmatpush.bf16.msra.mxu0 %v371
    %381 = vmatpush.bf16.msra.mxu0 %v370
    %382 = vmatpush.bf16.msra.mxu0 %v369
    %383 = vmatpush.bf16.msra.mxu0 %v368
    %384 = vmatpush.bf16.msra.mxu0 %v367
    %385 = vmatpush.bf16.msra.mxu0 %v366
    %386 = vmatpush.bf16.msra.mxu0 %v365
    %387 = vmatpush.bf16.msra.mxu0 %v364
    %388 = vmatmul.bf16.gmra.mxu0 %v187
    %v389 = vpop.f32.mrf.mxu0
    %v390 = vadd.f32 0.0, %v389
    %v391 = vpop.f32.mrf.mxu0
    %v392 = vadd.f32 0.0, %v391
    %393 = vmatmul.bf16.gmra.mxu0 %v188
    %v394 = vpop.f32.mrf.mxu0
    %v395 = vadd.f32 0.0, %v394
    %v396 = vpop.f32.mrf.mxu0
    %v397 = vadd.f32 0.0, %v396
    %398 = vmatmul.bf16.gmra.mxu0 %v189
    %v399 = vpop.f32.mrf.mxu0
    %v400 = vadd.f32 0.0, %v399
    %v401 = vpop.f32.mrf.mxu0
    %v402 = vadd.f32 0.0, %v401
    %403 = vmatmul.bf16.gmra.mxu0 %v190
    %v404 = vpop.f32.mrf.mxu0
    %v405 = vadd.f32 0.0, %v404
    %v406 = vpop.f32.mrf.mxu0
    %v407 = vadd.f32 0.0, %v406
    %408 = vmatmul.bf16.gmra.mxu0 %v191
    %v409 = vpop.f32.mrf.mxu0
    %v410 = vadd.f32 0.0, %v409
    %v411 = vpop.f32.mrf.mxu0
    %v412 = vadd.f32 0.0, %v411
    %413 = vmatmul.bf16.gmra.mxu0 %v192
    %v414 = vpop.f32.mrf.mxu0
    %v415 = vadd.f32 0.0, %v414
    %v416 = vpop.f32.mrf.mxu0
    %v417 = vadd.f32 0.0, %v416
    %418 = vmatmul.bf16.gmra.mxu0 %v193
    %v419 = vpop.f32.mrf.mxu0
    %v420 = vadd.f32 0.0, %v419
    %v421 = vpop.f32.mrf.mxu0
    %v422 = vadd.f32 0.0, %v421
    %423 = vmatmul.bf16.gmra.mxu0 %v194
    %v424 = vpop.f32.mrf.mxu0
    %v425 = vadd.f32 0.0, %v424
    %v426 = vpop.f32.mrf.mxu0
    %v427 = vadd.f32 0.0, %v426
    %428 = vdwg.mxu0
    %v429 = vpack.c.bf16 %v392, %v390
    %v430 = vpack.c.bf16 %v397, %v395
    %v431 = vpack.c.bf16 %v402, %v400
    %v432 = vpack.c.bf16 %v407, %v405
    %v433 = vpack.c.bf16 %v412, %v410
    %v434 = vpack.c.bf16 %v417, %v415
    %v435 = vpack.c.bf16 %v422, %v420
    %v436 = vpack.c.bf16 %v427, %v425
    %v437 = vld [vmem:[%s5] sm:$0xf]
    %v438 = vld [vmem:[%s5 + $0x4] sm:$0xf]
    %v439 = vld [vmem:[%s5 + $0x8] sm:$0xf]
    %v440 = vld [vmem:[%s5 + $0xc] sm:$0xf]
    %v441 = vld [vmem:[%s5 + $0x10] sm:$0xf]
    %v442 = vld [vmem:[%s5 + $0x14] sm:$0xf]
    %v443 = vld [vmem:[%s5 + $0x18] sm:$0xf]
    %v444 = vld [vmem:[%s5 + $0x1c] sm:$0xf]
    %v445 = vld [vmem:[%s5 + $0x20] sm:$0xf]
    %v446 = vld [vmem:[%s5 + $0x24] sm:$0xf]
    %v447 = vld [vmem:[%s5 + $0x28] sm:$0xf]
    %v448 = vld [vmem:[%s5 + $0x2c] sm:$0xf]
    %v449 = vld [vmem:[%s5 + $0x30] sm:$0xf]
    %v450 = vld [vmem:[%s5 + $0x34] sm:$0xf]
    %v451 = vld [vmem:[%s5 + $0x38] sm:$0xf]
    %v452 = vld [vmem:[%s5 + $0x3c] sm:$0xf]
    %v469 = vunpack.c.l.b16 %v437
    %v470 = vunpack.c.l.b16 %v438
    %v471 = vunpack.c.l.b16 %v439
    %v472 = vunpack.c.l.b16 %v440
    %v473 = vunpack.c.l.b16 %v441
    %v474 = vunpack.c.l.b16 %v442
    %v475 = vunpack.c.l.b16 %v443
    %v476 = vunpack.c.l.b16 %v444
    %v477 = vunpack.c.l.b16 %v445
    %v478 = vunpack.c.l.b16 %v446
    %v479 = vunpack.c.l.b16 %v447
    %v480 = vunpack.c.l.b16 %v448
    %v481 = vunpack.c.l.b16 %v449
    %v482 = vunpack.c.l.b16 %v450
    %v483 = vunpack.c.l.b16 %v451
    %v484 = vunpack.c.l.b16 %v452
    %v485 = vpack.c.b16 %v470, %v469
    %v486 = vpack.c.b16 %v472, %v471
    %v487 = vpack.c.b16 %v474, %v473
    %v488 = vpack.c.b16 %v476, %v475
    %v489 = vpack.c.b16 %v478, %v477
    %v490 = vpack.c.b16 %v480, %v479
    %v491 = vpack.c.b16 %v482, %v481
    %v492 = vpack.c.b16 %v484, %v483
    %501 = vmatpush.bf16.msra.mxu0 %v492
    %502 = vmatpush.bf16.msra.mxu0 %v491
    %503 = vmatpush.bf16.msra.mxu0 %v490
    %504 = vmatpush.bf16.msra.mxu0 %v489
    %505 = vmatpush.bf16.msra.mxu0 %v488
    %506 = vmatpush.bf16.msra.mxu0 %v487
    %507 = vmatpush.bf16.msra.mxu0 %v486
    %508 = vmatpush.bf16.msra.mxu0 %v485
    %509 = vmatmul.bf16.gmra.mxu0 %v187
    %v510 = vpop.f32.mrf.mxu0
    %v511 = vadd.f32 0.0, %v510
    %v512 = vpop.f32.mrf.mxu0
    %v513 = vadd.f32 0.0, %v512
    %514 = vmatmul.bf16.gmra.mxu0 %v188
    %v515 = vpop.f32.mrf.mxu0
    %v516 = vadd.f32 0.0, %v515
    %v517 = vpop.f32.mrf.mxu0
    %v518 = vadd.f32 0.0, %v517
    %519 = vmatmul.bf16.gmra.mxu0 %v189
    %v520 = vpop.f32.mrf.mxu0
    %v521 = vadd.f32 0.0, %v520
    %v522 = vpop.f32.mrf.mxu0
    %v523 = vadd.f32 0.0, %v522
    %524 = vmatmul.bf16.gmra.mxu0 %v190
    %v525 = vpop.f32.mrf.mxu0
    %v526 = vadd.f32 0.0, %v525
    %v527 = vpop.f32.mrf.mxu0
    %v528 = vadd.f32 0.0, %v527
    %529 = vmatmul.bf16.gmra.mxu0 %v191
    %v530 = vpop.f32.mrf.mxu0
    %v531 = vadd.f32 0.0, %v530
    %v532 = vpop.f32.mrf.mxu0
    %v533 = vadd.f32 0.0, %v532
    %534 = vmatmul.bf16.gmra.mxu0 %v192
    %v535 = vpop.f32.mrf.mxu0
    %v536 = vadd.f32 0.0, %v535
    %v537 = vpop.f32.mrf.mxu0
    %v538 = vadd.f32 0.0, %v537
    %539 = vmatmul.bf16.gmra.mxu0 %v193
    %v540 = vpop.f32.mrf.mxu0
    %v541 = vadd.f32 0.0, %v540
    %v542 = vpop.f32.mrf.mxu0
    %v543 = vadd.f32 0.0, %v542
    %544 = vmatmul.bf16.gmra.mxu0 %v194
    %v545 = vpop.f32.mrf.mxu0
    %v546 = vadd.f32 0.0, %v545
    %v547 = vpop.f32.mrf.mxu0
    %v548 = vadd.f32 0.0, %v547
    %549 = vdwg.mxu0
    %v550 = vpack.c.bf16 %v513, %v511
    %v551 = vpack.c.bf16 %v518, %v516
    %v552 = vpack.c.bf16 %v523, %v521
    %v553 = vpack.c.bf16 %v528, %v526
    %v554 = vpack.c.bf16 %v533, %v531
    %v555 = vpack.c.bf16 %v538, %v536
    %v556 = vpack.c.bf16 %v543, %v541
    %v557 = vpack.c.bf16 %v548, %v546
    %v558 = vld [vmem:[%s2] sm:$0xf]
    %v559 = vld [vmem:[%s2 + $0x4] sm:$0xf]
    %v560 = vld [vmem:[%s2 + $0x8] sm:$0xf]
    %v561 = vld [vmem:[%s2 + $0xc] sm:$0xf]
    %v562 = vld [vmem:[%s2 + $0x10] sm:$0xf]
    %v563 = vld [vmem:[%s2 + $0x14] sm:$0xf]
    %v564 = vld [vmem:[%s2 + $0x18] sm:$0xf]
    %v565 = vld [vmem:[%s2 + $0x1c] sm:$0xf]
    %v566 = vld [vmem:[%s2 + $0x20] sm:$0xf]
    %v567 = vld [vmem:[%s2 + $0x24] sm:$0xf]
    %v568 = vld [vmem:[%s2 + $0x28] sm:$0xf]
    %v569 = vld [vmem:[%s2 + $0x2c] sm:$0xf]
    %v570 = vld [vmem:[%s2 + $0x30] sm:$0xf]
    %v571 = vld [vmem:[%s2 + $0x34] sm:$0xf]
    %v572 = vld [vmem:[%s2 + $0x38] sm:$0xf]
    %v573 = vld [vmem:[%s2 + $0x3c] sm:$0xf]
    %v574 = vunpack.c.l.bf16 %v558
    %v575 = vunpack.c.l.bf16 %v559
    %v576 = vunpack.c.l.bf16 %v560
    %v577 = vunpack.c.l.bf16 %v561
    %v578 = vunpack.c.l.bf16 %v562
    %v579 = vunpack.c.l.bf16 %v563
    %v580 = vunpack.c.l.bf16 %v564
    %v581 = vunpack.c.l.bf16 %v565
    %v582 = vunpack.c.l.bf16 %v566
    %v583 = vunpack.c.l.bf16 %v567
    %v584 = vunpack.c.l.bf16 %v568
    %v585 = vunpack.c.l.bf16 %v569
    %v586 = vunpack.c.l.bf16 %v570
    %v587 = vunpack.c.l.bf16 %v571
    %v588 = vunpack.c.l.bf16 %v572
    %v589 = vunpack.c.l.bf16 %v573
    %vm590 = vcmask 64512
    %v592 = vsel %vm590, %v308, 0
    %v595 = vsel %vm590, %v309, 0
    %v598 = vsel %vm590, %v310, 0
    %v601 = vsel %vm590, %v311, 0
    %v604 = vsel %vm590, %v312, 0
    %v607 = vsel %vm590, %v313, 0
    %v610 = vsel %vm590, %v314, 0
    %v613 = vsel %vm590, %v315, 0
    %v616 = vsel %vm590, %v429, 0
    %v619 = vsel %vm590, %v430, 0
    %v622 = vsel %vm590, %v431, 0
    %v625 = vsel %vm590, %v432, 0
    %v628 = vsel %vm590, %v433, 0
    %v631 = vsel %vm590, %v434, 0
    %v634 = vsel %vm590, %v435, 0
    %v637 = vsel %vm590, %v436, 0
    %639 = vmatpush.bf16.xpose.msra.mxu0 %v637
    %640 = vmatpush.bf16.xpose.msra.mxu0 %v634
    %641 = vmatpush.bf16.xpose.msra.mxu0 %v631
    %642 = vmatpush.bf16.xpose.msra.mxu0 %v628
    %643 = vmatpush.bf16.xpose.msra.mxu0 %v625
    %644 = vmatpush.bf16.xpose.msra.mxu0 %v622
    %645 = vmatpush.bf16.xpose.msra.mxu0 %v619
    %646 = vmatpush.bf16.xpose.msra.mxu0 %v616
    %647 = vmatmul.bf16.gmra.mxu0 %v592
    %v648 = vpop.f32.mrf.mxu0
    %v649 = vadd.f32 %v574, %v648
    %v650 = vpop.f32.mrf.mxu0
    %v651 = vadd.f32 %v575, %v650
    %652 = vmatmul.bf16.gmra.mxu0 %v595
    %v653 = vpop.f32.mrf.mxu0
    %v654 = vadd.f32 %v576, %v653
    %v655 = vpop.f32.mrf.mxu0
    %v656 = vadd.f32 %v577, %v655
    %657 = vmatmul.bf16.gmra.mxu0 %v598
    %v658 = vpop.f32.mrf.mxu0
    %v659 = vadd.f32 %v578, %v658
    %v660 = vpop.f32.mrf.mxu0
    %v661 = vadd.f32 %v579, %v660
    %662 = vmatmul.bf16.gmra.mxu0 %v601
    %v663 = vpop.f32.mrf.mxu0
    %v664 = vadd.f32 %v580, %v663
    %v665 = vpop.f32.mrf.mxu0
    %v666 = vadd.f32 %v581, %v665
    %667 = vmatmul.bf16.gmra.mxu0 %v604
    %v668 = vpop.f32.mrf.mxu0
    %v669 = vadd.f32 %v582, %v668
    %v670 = vpop.f32.mrf.mxu0
    %v671 = vadd.f32 %v583, %v670
    %672 = vmatmul.bf16.gmra.mxu0 %v607
    %v673 = vpop.f32.mrf.mxu0
    %v674 = vadd.f32 %v584, %v673
    %v675 = vpop.f32.mrf.mxu0
    %v676 = vadd.f32 %v585, %v675
    %677 = vmatmul.bf16.gmra.mxu0 %v610
    %v678 = vpop.f32.mrf.mxu0
    %v679 = vadd.f32 %v586, %v678
    %v680 = vpop.f32.mrf.mxu0
    %v681 = vadd.f32 %v587, %v680
    %682 = vmatmul.bf16.gmra.mxu0 %v613
    %v683 = vpop.f32.mrf.mxu0
    %v684 = vadd.f32 %v588, %v683
    %v685 = vpop.f32.mrf.mxu0
    %v686 = vadd.f32 %v589, %v685
    %687 = vdwg.mxu0
    %688 = vmax.xlane.f32.xlu0 %v649
    %v689 = vpop.xlane.xlu0 %688
    %690 = vmax.xlane.f32.xlu0 %v651
    %v691 = vpop.xlane.xlu0 %690
    %692 = vmax.xlane.f32.xlu0 %v654
    %v693 = vpop.xlane.xlu0 %692
    %694 = vmax.xlane.f32.xlu0 %v656
    %v695 = vpop.xlane.xlu0 %694
    %696 = vmax.xlane.f32.xlu0 %v659
    %v697 = vpop.xlane.xlu0 %696
    %698 = vmax.xlane.f32.xlu0 %v661
    %v699 = vpop.xlane.xlu0 %698
    %700 = vmax.xlane.f32.xlu0 %v664
    %v701 = vpop.xlane.xlu0 %700
    %702 = vmax.xlane.f32.xlu0 %v666
    %v703 = vpop.xlane.xlu0 %702
    %704 = vmax.xlane.f32.xlu0 %v669
    %v705 = vpop.xlane.xlu0 %704
    %706 = vmax.xlane.f32.xlu0 %v671
    %v707 = vpop.xlane.xlu0 %706
    %708 = vmax.xlane.f32.xlu0 %v674
    %v709 = vpop.xlane.xlu0 %708
    %710 = vmax.xlane.f32.xlu0 %v676
    %v711 = vpop.xlane.xlu0 %710
    %712 = vmax.xlane.f32.xlu0 %v679
    %v713 = vpop.xlane.xlu0 %712
    %714 = vmax.xlane.f32.xlu0 %v681
    %v715 = vpop.xlane.xlu0 %714
    %716 = vmax.xlane.f32.xlu0 %v684
    %v717 = vpop.xlane.xlu0 %716
    %718 = vmax.xlane.f32.xlu0 %v686
    %v719 = vpop.xlane.xlu0 %718
    %v720 = vsub.f32 %v649, %v689
    %v721 = vsub.f32 %v651, %v691
    %v722 = vsub.f32 %v654, %v693
    %v723 = vsub.f32 %v656, %v695
    %v724 = vsub.f32 %v659, %v697
    %v725 = vsub.f32 %v661, %v699
    %v726 = vsub.f32 %v664, %v701
    %v727 = vsub.f32 %v666, %v703
    %v728 = vsub.f32 %v669, %v705
    %v729 = vsub.f32 %v671, %v707
    %v730 = vsub.f32 %v674, %v709
    %v731 = vsub.f32 %v676, %v711
    %v732 = vsub.f32 %v679, %v713
    %v733 = vsub.f32 %v681, %v715
    %v734 = vsub.f32 %v684, %v717
    %v735 = vsub.f32 %v686, %v719
    %v736 = vmul.f32 %v720, 1.442695
    %v737 = vpow.pop %v736
    %v738 = vmul.f32 %v721, 1.442695
    %v739 = vpow.pop %v738
    %v740 = vmul.f32 %v722, 1.442695
    %v741 = vpow.pop %v740
    %v742 = vmul.f32 %v723, 1.442695
    %v743 = vpow.pop %v742
    %v744 = vmul.f32 %v724, 1.442695
    %v745 = vpow.pop %v744
    %v746 = vmul.f32 %v725, 1.442695
    %v747 = vpow.pop %v746
    %v748 = vmul.f32 %v726, 1.442695
    %v749 = vpow.pop %v748
    %v750 = vmul.f32 %v727, 1.442695
    %v751 = vpow.pop %v750
    %v752 = vmul.f32 %v728, 1.442695
    %v753 = vpow.pop %v752
    %v754 = vmul.f32 %v729, 1.442695
    %v755 = vpow.pop %v754
    %v756 = vmul.f32 %v730, 1.442695
    %v757 = vpow.pop %v756
    %v758 = vmul.f32 %v731, 1.442695
    %v759 = vpow.pop %v758
    %v760 = vmul.f32 %v732, 1.442695
    %v761 = vpow.pop %v760
    %v762 = vmul.f32 %v733, 1.442695
    %v763 = vpow.pop %v762
    %v764 = vmul.f32 %v734, 1.442695
    %v765 = vpow.pop %v764
    %v766 = vmul.f32 %v735, 1.442695
    %v767 = vpow.pop %v766
    %768 = vadd.xlane.f32.xlu0 %v737
    %v769 = vpop.xlane.xlu0 %768
    %770 = vadd.xlane.f32.xlu0 %v739
    %v771 = vpop.xlane.xlu0 %770
    %772 = vadd.xlane.f32.xlu0 %v741
    %v773 = vpop.xlane.xlu0 %772
    %774 = vadd.xlane.f32.xlu0 %v743
    %v775 = vpop.xlane.xlu0 %774
    %776 = vadd.xlane.f32.xlu0 %v745
    %v777 = vpop.xlane.xlu0 %776
    %778 = vadd.xlane.f32.xlu0 %v747
    %v779 = vpop.xlane.xlu0 %778
    %780 = vadd.xlane.f32.xlu0 %v749
    %v781 = vpop.xlane.xlu0 %780
    %782 = vadd.xlane.f32.xlu0 %v751
    %v783 = vpop.xlane.xlu0 %782
    %784 = vadd.xlane.f32.xlu0 %v753
    %v785 = vpop.xlane.xlu0 %784
    %786 = vadd.xlane.f32.xlu0 %v755
    %v787 = vpop.xlane.xlu0 %786
    %788 = vadd.xlane.f32.xlu0 %v757
    %v789 = vpop.xlane.xlu0 %788
    %790 = vadd.xlane.f32.xlu0 %v759
    %v791 = vpop.xlane.xlu0 %790
    %792 = vadd.xlane.f32.xlu0 %v761
    %v793 = vpop.xlane.xlu0 %792
    %794 = vadd.xlane.f32.xlu0 %v763
    %v795 = vpop.xlane.xlu0 %794
    %796 = vadd.xlane.f32.xlu0 %v765
    %v797 = vpop.xlane.xlu0 %796
    %798 = vadd.xlane.f32.xlu0 %v767
    %v799 = vpop.xlane.xlu0 %798
    %v800 = vrcp.pop %v769
    %v801 = vrcp.pop %v771
    %v802 = vrcp.pop %v773
    %v803 = vrcp.pop %v775
    %v804 = vrcp.pop %v777
    %v805 = vrcp.pop %v779
    %v806 = vrcp.pop %v781
    %v807 = vrcp.pop %v783
    %v808 = vrcp.pop %v785
    %v809 = vrcp.pop %v787
    %v810 = vrcp.pop %v789
    %v811 = vrcp.pop %v791
    %v812 = vrcp.pop %v793
    %v813 = vrcp.pop %v795
    %v814 = vrcp.pop %v797
    %v815 = vrcp.pop %v799
    %v816 = vmul.f32 %v737, %v800
    %v817 = vmul.f32 %v739, %v801
    %v818 = vmul.f32 %v741, %v802
    %v819 = vmul.f32 %v743, %v803
    %v820 = vmul.f32 %v745, %v804
    %v821 = vmul.f32 %v747, %v805
    %v822 = vmul.f32 %v749, %v806
    %v823 = vmul.f32 %v751, %v807
    %v824 = vmul.f32 %v753, %v808
    %v825 = vmul.f32 %v755, %v809
    %v826 = vmul.f32 %v757, %v810
    %v827 = vmul.f32 %v759, %v811
    %v828 = vmul.f32 %v761, %v812
    %v829 = vmul.f32 %v763, %v813
    %v830 = vmul.f32 %v765, %v814
    %v831 = vmul.f32 %v767, %v815
    %v832 = vpack.c.bf16 %v817, %v816
    %v833 = vpack.c.bf16 %v819, %v818
    %v834 = vpack.c.bf16 %v821, %v820
    %v835 = vpack.c.bf16 %v823, %v822
    %v836 = vpack.c.bf16 %v825, %v824
    %v837 = vpack.c.bf16 %v827, %v826
    %v838 = vpack.c.bf16 %v829, %v828
    %v839 = vpack.c.bf16 %v831, %v830
    %840 = vmatpush.bf16.msra.mxu0 %v557
    %841 = vmatpush.bf16.msra.mxu0 %v556
    %842 = vmatpush.bf16.msra.mxu0 %v555
    %843 = vmatpush.bf16.msra.mxu0 %v554
    %844 = vmatpush.bf16.msra.mxu0 %v553
    %845 = vmatpush.bf16.msra.mxu0 %v552
    %846 = vmatpush.bf16.msra.mxu0 %v551
    %847 = vmatpush.bf16.msra.mxu0 %v550
    %848 = vmatmul.bf16.gmra.mxu0 %v832
    %v849 = vpop.f32.mrf.mxu0
    %v850 = vadd.f32 0.0, %v849
    %v851 = vpop.f32.mrf.mxu0
    %v852 = vadd.f32 0.0, %v851
    %853 = vmatmul.bf16.gmra.mxu0 %v833
    %v854 = vpop.f32.mrf.mxu0
    %v855 = vadd.f32 0.0, %v854
    %v856 = vpop.f32.mrf.mxu0
    %v857 = vadd.f32 0.0, %v856
    %858 = vmatmul.bf16.gmra.mxu0 %v834
    %v859 = vpop.f32.mrf.mxu0
    %v860 = vadd.f32 0.0, %v859
    %v861 = vpop.f32.mrf.mxu0
    %v862 = vadd.f32 0.0, %v861
    %863 = vmatmul.bf16.gmra.mxu0 %v835
    %v864 = vpop.f32.mrf.mxu0
    %v865 = vadd.f32 0.0, %v864
    %v866 = vpop.f32.mrf.mxu0
    %v867 = vadd.f32 0.0, %v866
    %868 = vmatmul.bf16.gmra.mxu0 %v836
    %v869 = vpop.f32.mrf.mxu0
    %v870 = vadd.f32 0.0, %v869
    %v871 = vpop.f32.mrf.mxu0
    %v872 = vadd.f32 0.0, %v871
    %873 = vmatmul.bf16.gmra.mxu0 %v837
    %v874 = vpop.f32.mrf.mxu0
    %v875 = vadd.f32 0.0, %v874
    %v876 = vpop.f32.mrf.mxu0
    %v877 = vadd.f32 0.0, %v876
    %878 = vmatmul.bf16.gmra.mxu0 %v838
    %v879 = vpop.f32.mrf.mxu0
    %v880 = vadd.f32 0.0, %v879
    %v881 = vpop.f32.mrf.mxu0
    %v882 = vadd.f32 0.0, %v881
    %883 = vmatmul.bf16.gmra.mxu0 %v839
    %v884 = vpop.f32.mrf.mxu0
    %v885 = vadd.f32 0.0, %v884
    %v886 = vpop.f32.mrf.mxu0
    %v887 = vadd.f32 0.0, %v886
    %888 = vdwg.mxu0
    %v889 = vpack.c.bf16 %v852, %v850
    %v890 = vpack.c.bf16 %v857, %v855
    %v891 = vpack.c.bf16 %v862, %v860
    %v892 = vpack.c.bf16 %v867, %v865
    %v893 = vpack.c.bf16 %v872, %v870
    %v894 = vpack.c.bf16 %v877, %v875
    %v895 = vpack.c.bf16 %v882, %v880
    %v896 = vpack.c.bf16 %v887, %v885
    %v897 = vld [vmem:[%s6] sm:$0xf]
    %s898 = scalar_lea.vmem %s3, 64
    %v899 = vld [vmem:[%s898] sm:$0xf]
    %v900 = vld [vmem:[%s898 + $0x4] sm:$0xf]
    %v901 = vld [vmem:[%s898 + $0x8] sm:$0xf]
    %v902 = vld [vmem:[%s898 + $0xc] sm:$0xf]
    %v903 = vld [vmem:[%s898 + $0x10] sm:$0xf]
    %v904 = vld [vmem:[%s898 + $0x14] sm:$0xf]
    %v905 = vld [vmem:[%s898 + $0x18] sm:$0xf]
    %v906 = vld [vmem:[%s898 + $0x1c] sm:$0xf]
    %v907 = vld [vmem:[%s898 + $0x20] sm:$0xf]
    %v908 = vld [vmem:[%s898 + $0x24] sm:$0xf]
    %v909 = vld [vmem:[%s898 + $0x28] sm:$0xf]
    %v910 = vld [vmem:[%s898 + $0x2c] sm:$0xf]
    %v911 = vld [vmem:[%s898 + $0x30] sm:$0xf]
    %v912 = vld [vmem:[%s898 + $0x34] sm:$0xf]
    %v913 = vld [vmem:[%s898 + $0x38] sm:$0xf]
    %v914 = vld [vmem:[%s898 + $0x3c] sm:$0xf]
    %v931 = vunpack.c.l.b16 %v899
    %v932 = vunpack.c.l.b16 %v900
    %v933 = vunpack.c.l.b16 %v901
    %v934 = vunpack.c.l.b16 %v902
    %v935 = vunpack.c.l.b16 %v903
    %v936 = vunpack.c.l.b16 %v904
    %v937 = vunpack.c.l.b16 %v905
    %v938 = vunpack.c.l.b16 %v906
    %v939 = vunpack.c.l.b16 %v907
    %v940 = vunpack.c.l.b16 %v908
    %v941 = vunpack.c.l.b16 %v909
    %v942 = vunpack.c.l.b16 %v910
    %v943 = vunpack.c.l.b16 %v911
    %v944 = vunpack.c.l.b16 %v912
    %v945 = vunpack.c.l.b16 %v913
    %v946 = vunpack.c.l.b16 %v914
    %v947 = vpack.c.b16 %v932, %v931
    %v948 = vpack.c.b16 %v934, %v933
    %v949 = vpack.c.b16 %v936, %v935
    %v950 = vpack.c.b16 %v938, %v937
    %v951 = vpack.c.b16 %v940, %v939
    %v952 = vpack.c.b16 %v942, %v941
    %v953 = vpack.c.b16 %v944, %v943
    %v954 = vpack.c.b16 %v946, %v945
    %963 = vmatpush.bf16.msra.mxu0 %v954
    %964 = vmatpush.bf16.msra.mxu0 %v953
    %965 = vmatpush.bf16.msra.mxu0 %v952
    %966 = vmatpush.bf16.msra.mxu0 %v951
    %967 = vmatpush.bf16.msra.mxu0 %v950
    %968 = vmatpush.bf16.msra.mxu0 %v949
    %969 = vmatpush.bf16.msra.mxu0 %v948
    %970 = vmatpush.bf16.msra.mxu0 %v947
    %971 = vmatmul.bf16.gmra.mxu0 %v187
    %v972 = vpop.f32.mrf.mxu0
    %v973 = vadd.f32 0.0, %v972
    %v974 = vpop.f32.mrf.mxu0
    %v975 = vadd.f32 0.0, %v974
    %976 = vmatmul.bf16.gmra.mxu0 %v188
    %v977 = vpop.f32.mrf.mxu0
    %v978 = vadd.f32 0.0, %v977
    %v979 = vpop.f32.mrf.mxu0
    %v980 = vadd.f32 0.0, %v979
    %981 = vmatmul.bf16.gmra.mxu0 %v189
    %v982 = vpop.f32.mrf.mxu0
    %v983 = vadd.f32 0.0, %v982
    %v984 = vpop.f32.mrf.mxu0
    %v985 = vadd.f32 0.0, %v984
    %986 = vmatmul.bf16.gmra.mxu0 %v190
    %v987 = vpop.f32.mrf.mxu0
    %v988 = vadd.f32 0.0, %v987
    %v989 = vpop.f32.mrf.mxu0
    %v990 = vadd.f32 0.0, %v989
    %991 = vmatmul.bf16.gmra.mxu0 %v191
    %v992 = vpop.f32.mrf.mxu0
    %v993 = vadd.f32 0.0, %v992
    %v994 = vpop.f32.mrf.mxu0
    %v995 = vadd.f32 0.0, %v994
    %996 = vmatmul.bf16.gmra.mxu0 %v192
    %v997 = vpop.f32.mrf.mxu0
    %v998 = vadd.f32 0.0, %v997
    %v999 = vpop.f32.mrf.mxu0
    %v1000 = vadd.f32 0.0, %v999
    %1001 = vmatmul.bf16.gmra.mxu0 %v193
    %v1002 = vpop.f32.mrf.mxu0
    %v1003 = vadd.f32 0.0, %v1002
    %v1004 = vpop.f32.mrf.mxu0
    %v1005 = vadd.f32 0.0, %v1004
    %1006 = vmatmul.bf16.gmra.mxu0 %v194
    %v1007 = vpop.f32.mrf.mxu0
    %v1008 = vadd.f32 0.0, %v1007
    %v1009 = vpop.f32.mrf.mxu0
    %v1010 = vadd.f32 0.0, %v1009
    %1011 = vdwg.mxu0
    %v1012 = vpack.c.bf16 %v975, %v973
    %v1013 = vpack.c.bf16 %v980, %v978
    %v1014 = vpack.c.bf16 %v985, %v983
    %v1015 = vpack.c.bf16 %v990, %v988
    %v1016 = vpack.c.bf16 %v995, %v993
    %v1017 = vpack.c.bf16 %v1000, %v998
    %v1018 = vpack.c.bf16 %v1005, %v1003
    %v1019 = vpack.c.bf16 %v1010, %v1008
    %s1020 = scalar_lea.vmem %s4, 64
    %v1021 = vld [vmem:[%s1020] sm:$0xf]
    %v1022 = vld [vmem:[%s1020 + $0x4] sm:$0xf]
    %v1023 = vld [vmem:[%s1020 + $0x8] sm:$0xf]
    %v1024 = vld [vmem:[%s1020 + $0xc] sm:$0xf]
    %v1025 = vld [vmem:[%s1020 + $0x10] sm:$0xf]
    %v1026 = vld [vmem:[%s1020 + $0x14] sm:$0xf]
    %v1027 = vld [vmem:[%s1020 + $0x18] sm:$0xf]
    %v1028 = vld [vmem:[%s1020 + $0x1c] sm:$0xf]
    %v1029 = vld [vmem:[%s1020 + $0x20] sm:$0xf]
    %v1030 = vld [vmem:[%s1020 + $0x24] sm:$0xf]
    %v1031 = vld [vmem:[%s1020 + $0x28] sm:$0xf]
    %v1032 = vld [vmem:[%s1020 + $0x2c] sm:$0xf]
    %v1033 = vld [vmem:[%s1020 + $0x30] sm:$0xf]
    %v1034 = vld [vmem:[%s1020 + $0x34] sm:$0xf]
    %v1035 = vld [vmem:[%s1020 + $0x38] sm:$0xf]
    %v1036 = vld [vmem:[%s1020 + $0x3c] sm:$0xf]
    %v1053 = vunpack.c.l.b16 %v1021
    %v1054 = vunpack.c.l.b16 %v1022
    %v1055 = vunpack.c.l.b16 %v1023
    %v1056 = vunpack.c.l.b16 %v1024
    %v1057 = vunpack.c.l.b16 %v1025
    %v1058 = vunpack.c.l.b16 %v1026
    %v1059 = vunpack.c.l.b16 %v1027
    %v1060 = vunpack.c.l.b16 %v1028
    %v1061 = vunpack.c.l.b16 %v1029
    %v1062 = vunpack.c.l.b16 %v1030
    %v1063 = vunpack.c.l.b16 %v1031
    %v1064 = vunpack.c.l.b16 %v1032
    %v1065 = vunpack.c.l.b16 %v1033
    %v1066 = vunpack.c.l.b16 %v1034
    %v1067 = vunpack.c.l.b16 %v1035
    %v1068 = vunpack.c.l.b16 %v1036
    %v1069 = vpack.c.b16 %v1054, %v1053
    %v1070 = vpack.c.b16 %v1056, %v1055
    %v1071 = vpack.c.b16 %v1058, %v1057
    %v1072 = vpack.c.b16 %v1060, %v1059
    %v1073 = vpack.c.b16 %v1062, %v1061
    %v1074 = vpack.c.b16 %v1064, %v1063
    %v1075 = vpack.c.b16 %v1066, %v1065
    %v1076 = vpack.c.b16 %v1068, %v1067
    %1085 = vmatpush.bf16.msra.mxu0 %v1076
    %1086 = vmatpush.bf16.msra.mxu0 %v1075
    %1087 = vmatpush.bf16.msra.mxu0 %v1074
    %1088 = vmatpush.bf16.msra.mxu0 %v1073
    %1089 = vmatpush.bf16.msra.mxu0 %v1072
    %1090 = vmatpush.bf16.msra.mxu0 %v1071
    %1091 = vmatpush.bf16.msra.mxu0 %v1070
    %1092 = vmatpush.bf16.msra.mxu0 %v1069
    %1093 = vmatmul.bf16.gmra.mxu0 %v187
    %v1094 = vpop.f32.mrf.mxu0
    %v1095 = vadd.f32 0.0, %v1094
    %v1096 = vpop.f32.mrf.mxu0
    %v1097 = vadd.f32 0.0, %v1096
    %1098 = vmatmul.bf16.gmra.mxu0 %v188
    %v1099 = vpop.f32.mrf.mxu0
    %v1100 = vadd.f32 0.0, %v1099
    %v1101 = vpop.f32.mrf.mxu0
    %v1102 = vadd.f32 0.0, %v1101
    %1103 = vmatmul.bf16.gmra.mxu0 %v189
    %v1104 = vpop.f32.mrf.mxu0
    %v1105 = vadd.f32 0.0, %v1104
    %v1106 = vpop.f32.mrf.mxu0
    %v1107 = vadd.f32 0.0, %v1106
    %1108 = vmatmul.bf16.gmra.mxu0 %v190
    %v1109 = vpop.f32.mrf.mxu0
    %v1110 = vadd.f32 0.0, %v1109
    %v1111 = vpop.f32.mrf.mxu0
    %v1112 = vadd.f32 0.0, %v1111
    %1113 = vmatmul.bf16.gmra.mxu0 %v191
    %v1114 = vpop.f32.mrf.mxu0
    %v1115 = vadd.f32 0.0, %v1114
    %v1116 = vpop.f32.mrf.mxu0
    %v1117 = vadd.f32 0.0, %v1116
    %1118 = vmatmul.bf16.gmra.mxu0 %v192
    %v1119 = vpop.f32.mrf.mxu0
    %v1120 = vadd.f32 0.0, %v1119
    %v1121 = vpop.f32.mrf.mxu0
    %v1122 = vadd.f32 0.0, %v1121
    %1123 = vmatmul.bf16.gmra.mxu0 %v193
    %v1124 = vpop.f32.mrf.mxu0
    %v1125 = vadd.f32 0.0, %v1124
    %v1126 = vpop.f32.mrf.mxu0
    %v1127 = vadd.f32 0.0, %v1126
    %1128 = vmatmul.bf16.gmra.mxu0 %v194
    %v1129 = vpop.f32.mrf.mxu0
    %v1130 = vadd.f32 0.0, %v1129
    %v1131 = vpop.f32.mrf.mxu0
    %v1132 = vadd.f32 0.0, %v1131
    %1133 = vdwg.mxu0
    %v1134 = vpack.c.bf16 %v1097, %v1095
    %v1135 = vpack.c.bf16 %v1102, %v1100
    %v1136 = vpack.c.bf16 %v1107, %v1105
    %v1137 = vpack.c.bf16 %v1112, %v1110
    %v1138 = vpack.c.bf16 %v1117, %v1115
    %v1139 = vpack.c.bf16 %v1122, %v1120
    %v1140 = vpack.c.bf16 %v1127, %v1125
    %v1141 = vpack.c.bf16 %v1132, %v1130
    %s1142 = scalar_lea.vmem %s5, 64
    %v1143 = vld [vmem:[%s1142] sm:$0xf]
    %v1144 = vld [vmem:[%s1142 + $0x4] sm:$0xf]
    %v1145 = vld [vmem:[%s1142 + $0x8] sm:$0xf]
    %v1146 = vld [vmem:[%s1142 + $0xc] sm:$0xf]
    %v1147 = vld [vmem:[%s1142 + $0x10] sm:$0xf]
    %v1148 = vld [vmem:[%s1142 + $0x14] sm:$0xf]
    %v1149 = vld [vmem:[%s1142 + $0x18] sm:$0xf]
    %v1150 = vld [vmem:[%s1142 + $0x1c] sm:$0xf]
    %v1151 = vld [vmem:[%s1142 + $0x20] sm:$0xf]
    %v1152 = vld [vmem:[%s1142 + $0x24] sm:$0xf]
    %v1153 = vld [vmem:[%s1142 + $0x28] sm:$0xf]
    %v1154 = vld [vmem:[%s1142 + $0x2c] sm:$0xf]
    %v1155 = vld [vmem:[%s1142 + $0x30] sm:$0xf]
    %v1156 = vld [vmem:[%s1142 + $0x34] sm:$0xf]
    %v1157 = vld [vmem:[%s1142 + $0x38] sm:$0xf]
    %v1158 = vld [vmem:[%s1142 + $0x3c] sm:$0xf]
    %v1175 = vunpack.c.l.b16 %v1143
    %v1176 = vunpack.c.l.b16 %v1144
    %v1177 = vunpack.c.l.b16 %v1145
    %v1178 = vunpack.c.l.b16 %v1146
    %v1179 = vunpack.c.l.b16 %v1147
    %v1180 = vunpack.c.l.b16 %v1148
    %v1181 = vunpack.c.l.b16 %v1149
    %v1182 = vunpack.c.l.b16 %v1150
    %v1183 = vunpack.c.l.b16 %v1151
    %v1184 = vunpack.c.l.b16 %v1152
    %v1185 = vunpack.c.l.b16 %v1153
    %v1186 = vunpack.c.l.b16 %v1154
    %v1187 = vunpack.c.l.b16 %v1155
    %v1188 = vunpack.c.l.b16 %v1156
    %v1189 = vunpack.c.l.b16 %v1157
    %v1190 = vunpack.c.l.b16 %v1158
    %v1191 = vpack.c.b16 %v1176, %v1175
    %v1192 = vpack.c.b16 %v1178, %v1177
    %v1193 = vpack.c.b16 %v1180, %v1179
    %v1194 = vpack.c.b16 %v1182, %v1181
    %v1195 = vpack.c.b16 %v1184, %v1183
    %v1196 = vpack.c.b16 %v1186, %v1185
    %v1197 = vpack.c.b16 %v1188, %v1187
    %v1198 = vpack.c.b16 %v1190, %v1189
    %1207 = vmatpush.bf16.msra.mxu0 %v1198
    %1208 = vmatpush.bf16.msra.mxu0 %v1197
    %1209 = vmatpush.bf16.msra.mxu0 %v1196
    %1210 = vmatpush.bf16.msra.mxu0 %v1195
    %1211 = vmatpush.bf16.msra.mxu0 %v1194
    %1212 = vmatpush.bf16.msra.mxu0 %v1193
    %1213 = vmatpush.bf16.msra.mxu0 %v1192
    %1214 = vmatpush.bf16.msra.mxu0 %v1191
    %1215 = vmatmul.bf16.gmra.mxu0 %v187
    %v1216 = vpop.f32.mrf.mxu0
    %v1217 = vadd.f32 0.0, %v1216
    %v1218 = vpop.f32.mrf.mxu0
    %v1219 = vadd.f32 0.0, %v1218
    %1220 = vmatmul.bf16.gmra.mxu0 %v188
    %v1221 = vpop.f32.mrf.mxu0
    %v1222 = vadd.f32 0.0, %v1221
    %v1223 = vpop.f32.mrf.mxu0
    %v1224 = vadd.f32 0.0, %v1223
    %1225 = vmatmul.bf16.gmra.mxu0 %v189
    %v1226 = vpop.f32.mrf.mxu0
    %v1227 = vadd.f32 0.0, %v1226
    %v1228 = vpop.f32.mrf.mxu0
    %v1229 = vadd.f32 0.0, %v1228
    %1230 = vmatmul.bf16.gmra.mxu0 %v190
    %v1231 = vpop.f32.mrf.mxu0
    %v1232 = vadd.f32 0.0, %v1231
    %v1233 = vpop.f32.mrf.mxu0
    %v1234 = vadd.f32 0.0, %v1233
    %1235 = vmatmul.bf16.gmra.mxu0 %v191
    %v1236 = vpop.f32.mrf.mxu0
    %v1237 = vadd.f32 0.0, %v1236
    %v1238 = vpop.f32.mrf.mxu0
    %v1239 = vadd.f32 0.0, %v1238
    %1240 = vmatmul.bf16.gmra.mxu0 %v192
    %v1241 = vpop.f32.mrf.mxu0
    %v1242 = vadd.f32 0.0, %v1241
    %v1243 = vpop.f32.mrf.mxu0
    %v1244 = vadd.f32 0.0, %v1243
    %1245 = vmatmul.bf16.gmra.mxu0 %v193
    %v1246 = vpop.f32.mrf.mxu0
    %v1247 = vadd.f32 0.0, %v1246
    %v1248 = vpop.f32.mrf.mxu0
    %v1249 = vadd.f32 0.0, %v1248
    %1250 = vmatmul.bf16.gmra.mxu0 %v194
    %v1251 = vpop.f32.mrf.mxu0
    %v1252 = vadd.f32 0.0, %v1251
    %v1253 = vpop.f32.mrf.mxu0
    %v1254 = vadd.f32 0.0, %v1253
    %1255 = vdwg.mxu0
    %v1256 = vpack.c.bf16 %v1219, %v1217
    %v1257 = vpack.c.bf16 %v1224, %v1222
    %v1258 = vpack.c.bf16 %v1229, %v1227
    %v1259 = vpack.c.bf16 %v1234, %v1232
    %v1260 = vpack.c.bf16 %v1239, %v1237
    %v1261 = vpack.c.bf16 %v1244, %v1242
    %v1262 = vpack.c.bf16 %v1249, %v1247
    %v1263 = vpack.c.bf16 %v1254, %v1252
    %s1264 = scalar_lea.vmem %s2, 64
    %v1265 = vld [vmem:[%s1264] sm:$0xf]
    %v1266 = vld [vmem:[%s1264 + $0x4] sm:$0xf]
    %v1267 = vld [vmem:[%s1264 + $0x8] sm:$0xf]
    %v1268 = vld [vmem:[%s1264 + $0xc] sm:$0xf]
    %v1269 = vld [vmem:[%s1264 + $0x10] sm:$0xf]
    %v1270 = vld [vmem:[%s1264 + $0x14] sm:$0xf]
    %v1271 = vld [vmem:[%s1264 + $0x18] sm:$0xf]
    %v1272 = vld [vmem:[%s1264 + $0x1c] sm:$0xf]
    %v1273 = vld [vmem:[%s1264 + $0x20] sm:$0xf]
    %v1274 = vld [vmem:[%s1264 + $0x24] sm:$0xf]
    %v1275 = vld [vmem:[%s1264 + $0x28] sm:$0xf]
    %v1276 = vld [vmem:[%s1264 + $0x2c] sm:$0xf]
    %v1277 = vld [vmem:[%s1264 + $0x30] sm:$0xf]
    %v1278 = vld [vmem:[%s1264 + $0x34] sm:$0xf]
    %v1279 = vld [vmem:[%s1264 + $0x38] sm:$0xf]
    %v1280 = vld [vmem:[%s1264 + $0x3c] sm:$0xf]
    %v1281 = vunpack.c.l.bf16 %v1265
    %v1282 = vunpack.c.l.bf16 %v1266
    %v1283 = vunpack.c.l.bf16 %v1267
    %v1284 = vunpack.c.l.bf16 %v1268
    %v1285 = vunpack.c.l.bf16 %v1269
    %v1286 = vunpack.c.l.bf16 %v1270
    %v1287 = vunpack.c.l.bf16 %v1271
    %v1288 = vunpack.c.l.bf16 %v1272
    %v1289 = vunpack.c.l.bf16 %v1273
    %v1290 = vunpack.c.l.bf16 %v1274
    %v1291 = vunpack.c.l.bf16 %v1275
    %v1292 = vunpack.c.l.bf16 %v1276
    %v1293 = vunpack.c.l.bf16 %v1277
    %v1294 = vunpack.c.l.bf16 %v1278
    %v1295 = vunpack.c.l.bf16 %v1279
    %v1296 = vunpack.c.l.bf16 %v1280
    %v1298 = vsel %vm590, %v1012, 0
    %v1301 = vsel %vm590, %v1013, 0
    %v1304 = vsel %vm590, %v1014, 0
    %v1307 = vsel %vm590, %v1015, 0
    %v1310 = vsel %vm590, %v1016, 0
    %v1313 = vsel %vm590, %v1017, 0
    %v1316 = vsel %vm590, %v1018, 0
    %v1319 = vsel %vm590, %v1019, 0
    %v1322 = vsel %vm590, %v1134, 0
    %v1325 = vsel %vm590, %v1135, 0
    %v1328 = vsel %vm590, %v1136, 0
    %v1331 = vsel %vm590, %v1137, 0
    %v1334 = vsel %vm590, %v1138, 0
    %v1337 = vsel %vm590, %v1139, 0
    %v1340 = vsel %vm590, %v1140, 0
    %v1343 = vsel %vm590, %v1141, 0
    %1345 = vmatpush.bf16.xpose.msra.mxu0 %v1343
    %1346 = vmatpush.bf16.xpose.msra.mxu0 %v1340
    %1347 = vmatpush.bf16.xpose.msra.mxu0 %v1337
    %1348 = vmatpush.bf16.xpose.msra.mxu0 %v1334
    %1349 = vmatpush.bf16.xpose.msra.mxu0 %v1331
    %1350 = vmatpush.bf16.xpose.msra.mxu0 %v1328
    %1351 = vmatpush.bf16.xpose.msra.mxu0 %v1325
    %1352 = vmatpush.bf16.xpose.msra.mxu0 %v1322
    %1353 = vmatmul.bf16.gmra.mxu0 %v1298
    %v1354 = vpop.f32.mrf.mxu0
    %v1355 = vadd.f32 %v1281, %v1354
    %v1356 = vpop.f32.mrf.mxu0
    %v1357 = vadd.f32 %v1282, %v1356
    %1358 = vmatmul.bf16.gmra.mxu0 %v1301
    %v1359 = vpop.f32.mrf.mxu0
    %v1360 = vadd.f32 %v1283, %v1359
    %v1361 = vpop.f32.mrf.mxu0
    %v1362 = vadd.f32 %v1284, %v1361
    %1363 = vmatmul.bf16.gmra.mxu0 %v1304
    %v1364 = vpop.f32.mrf.mxu0
    %v1365 = vadd.f32 %v1285, %v1364
    %v1366 = vpop.f32.mrf.mxu0
    %v1367 = vadd.f32 %v1286, %v1366
    %1368 = vmatmul.bf16.gmra.mxu0 %v1307
    %v1369 = vpop.f32.mrf.mxu0
    %v1370 = vadd.f32 %v1287, %v1369
    %v1371 = vpop.f32.mrf.mxu0
    %v1372 = vadd.f32 %v1288, %v1371
    %1373 = vmatmul.bf16.gmra.mxu0 %v1310
    %v1374 = vpop.f32.mrf.mxu0
    %v1375 = vadd.f32 %v1289, %v1374
    %v1376 = vpop.f32.mrf.mxu0
    %v1377 = vadd.f32 %v1290, %v1376
    %1378 = vmatmul.bf16.gmra.mxu0 %v1313
    %v1379 = vpop.f32.mrf.mxu0
    %v1380 = vadd.f32 %v1291, %v1379
    %v1381 = vpop.f32.mrf.mxu0
    %v1382 = vadd.f32 %v1292, %v1381
    %1383 = vmatmul.bf16.gmra.mxu0 %v1316
    %v1384 = vpop.f32.mrf.mxu0
    %v1385 = vadd.f32 %v1293, %v1384
    %v1386 = vpop.f32.mrf.mxu0
    %v1387 = vadd.f32 %v1294, %v1386
    %1388 = vmatmul.bf16.gmra.mxu0 %v1319
    %v1389 = vpop.f32.mrf.mxu0
    %v1390 = vadd.f32 %v1295, %v1389
    %v1391 = vpop.f32.mrf.mxu0
    %v1392 = vadd.f32 %v1296, %v1391
    %1393 = vdwg.mxu0
    %1394 = vmax.xlane.f32.xlu0 %v1355
    %v1395 = vpop.xlane.xlu0 %1394
    %1396 = vmax.xlane.f32.xlu0 %v1357
    %v1397 = vpop.xlane.xlu0 %1396
    %1398 = vmax.xlane.f32.xlu0 %v1360
    %v1399 = vpop.xlane.xlu0 %1398
    %1400 = vmax.xlane.f32.xlu0 %v1362
    %v1401 = vpop.xlane.xlu0 %1400
    %1402 = vmax.xlane.f32.xlu0 %v1365
    %v1403 = vpop.xlane.xlu0 %1402
    %1404 = vmax.xlane.f32.xlu0 %v1367
    %v1405 = vpop.xlane.xlu0 %1404
    %1406 = vmax.xlane.f32.xlu0 %v1370
    %v1407 = vpop.xlane.xlu0 %1406
    %1408 = vmax.xlane.f32.xlu0 %v1372
    %v1409 = vpop.xlane.xlu0 %1408
    %1410 = vmax.xlane.f32.xlu0 %v1375
    %v1411 = vpop.xlane.xlu0 %1410
    %1412 = vmax.xlane.f32.xlu0 %v1377
    %v1413 = vpop.xlane.xlu0 %1412
    %1414 = vmax.xlane.f32.xlu0 %v1380
    %v1415 = vpop.xlane.xlu0 %1414
    %1416 = vmax.xlane.f32.xlu0 %v1382
    %v1417 = vpop.xlane.xlu0 %1416
    %1418 = vmax.xlane.f32.xlu0 %v1385
    %v1419 = vpop.xlane.xlu0 %1418
    %1420 = vmax.xlane.f32.xlu0 %v1387
    %v1421 = vpop.xlane.xlu0 %1420
    %1422 = vmax.xlane.f32.xlu0 %v1390
    %v1423 = vpop.xlane.xlu0 %1422
    %1424 = vmax.xlane.f32.xlu0 %v1392
    %v1425 = vpop.xlane.xlu0 %1424
    %v1426 = vsub.f32 %v1355, %v1395
    %v1427 = vsub.f32 %v1357, %v1397
    %v1428 = vsub.f32 %v1360, %v1399
    %v1429 = vsub.f32 %v1362, %v1401
    %v1430 = vsub.f32 %v1365, %v1403
    %v1431 = vsub.f32 %v1367, %v1405
    %v1432 = vsub.f32 %v1370, %v1407
    %v1433 = vsub.f32 %v1372, %v1409
    %v1434 = vsub.f32 %v1375, %v1411
    %v1435 = vsub.f32 %v1377, %v1413
    %v1436 = vsub.f32 %v1380, %v1415
    %v1437 = vsub.f32 %v1382, %v1417
    %v1438 = vsub.f32 %v1385, %v1419
    %v1439 = vsub.f32 %v1387, %v1421
    %v1440 = vsub.f32 %v1390, %v1423
    %v1441 = vsub.f32 %v1392, %v1425
    %v1442 = vmul.f32 %v1426, 1.442695
    %v1443 = vpow.pop %v1442
    %v1444 = vmul.f32 %v1427, 1.442695
    %v1445 = vpow.pop %v1444
    %v1446 = vmul.f32 %v1428, 1.442695
    %v1447 = vpow.pop %v1446
    %v1448 = vmul.f32 %v1429, 1.442695
    %v1449 = vpow.pop %v1448
    %v1450 = vmul.f32 %v1430, 1.442695
    %v1451 = vpow.pop %v1450
    %v1452 = vmul.f32 %v1431, 1.442695
    %v1453 = vpow.pop %v1452
    %v1454 = vmul.f32 %v1432, 1.442695
    %v1455 = vpow.pop %v1454
    %v1456 = vmul.f32 %v1433, 1.442695
    %v1457 = vpow.pop %v1456
    %v1458 = vmul.f32 %v1434, 1.442695
    %v1459 = vpow.pop %v1458
    %v1460 = vmul.f32 %v1435, 1.442695
    %v1461 = vpow.pop %v1460
    %v1462 = vmul.f32 %v1436, 1.442695
    %v1463 = vpow.pop %v1462
    %v1464 = vmul.f32 %v1437, 1.442695
    %v1465 = vpow.pop %v1464
    %v1466 = vmul.f32 %v1438, 1.442695
    %v1467 = vpow.pop %v1466
    %v1468 = vmul.f32 %v1439, 1.442695
    %v1469 = vpow.pop %v1468
    %v1470 = vmul.f32 %v1440, 1.442695
    %v1471 = vpow.pop %v1470
    %v1472 = vmul.f32 %v1441, 1.442695
    %v1473 = vpow.pop %v1472
    %1474 = vadd.xlane.f32.xlu0 %v1443
    %v1475 = vpop.xlane.xlu0 %1474
    %1476 = vadd.xlane.f32.xlu0 %v1445
    %v1477 = vpop.xlane.xlu0 %1476
    %1478 = vadd.xlane.f32.xlu0 %v1447
    %v1479 = vpop.xlane.xlu0 %1478
    %1480 = vadd.xlane.f32.xlu0 %v1449
    %v1481 = vpop.xlane.xlu0 %1480
    %1482 = vadd.xlane.f32.xlu0 %v1451
    %v1483 = vpop.xlane.xlu0 %1482
    %1484 = vadd.xlane.f32.xlu0 %v1453
    %v1485 = vpop.xlane.xlu0 %1484
    %1486 = vadd.xlane.f32.xlu0 %v1455
    %v1487 = vpop.xlane.xlu0 %1486
    %1488 = vadd.xlane.f32.xlu0 %v1457
    %v1489 = vpop.xlane.xlu0 %1488
    %1490 = vadd.xlane.f32.xlu0 %v1459
    %v1491 = vpop.xlane.xlu0 %1490
    %1492 = vadd.xlane.f32.xlu0 %v1461
    %v1493 = vpop.xlane.xlu0 %1492
    %1494 = vadd.xlane.f32.xlu0 %v1463
    %v1495 = vpop.xlane.xlu0 %1494
    %1496 = vadd.xlane.f32.xlu0 %v1465
    %v1497 = vpop.xlane.xlu0 %1496
    %1498 = vadd.xlane.f32.xlu0 %v1467
    %v1499 = vpop.xlane.xlu0 %1498
    %1500 = vadd.xlane.f32.xlu0 %v1469
    %v1501 = vpop.xlane.xlu0 %1500
    %1502 = vadd.xlane.f32.xlu0 %v1471
    %v1503 = vpop.xlane.xlu0 %1502
    %1504 = vadd.xlane.f32.xlu0 %v1473
    %v1505 = vpop.xlane.xlu0 %1504
    %v1506 = vrcp.pop %v1475
    %v1507 = vrcp.pop %v1477
    %v1508 = vrcp.pop %v1479
    %v1509 = vrcp.pop %v1481
    %v1510 = vrcp.pop %v1483
    %v1511 = vrcp.pop %v1485
    %v1512 = vrcp.pop %v1487
    %v1513 = vrcp.pop %v1489
    %v1514 = vrcp.pop %v1491
    %v1515 = vrcp.pop %v1493
    %v1516 = vrcp.pop %v1495
    %v1517 = vrcp.pop %v1497
    %v1518 = vrcp.pop %v1499
    %v1519 = vrcp.pop %v1501
    %v1520 = vrcp.pop %v1503
    %v1521 = vrcp.pop %v1505
    %v1522 = vmul.f32 %v1443, %v1506
    %v1523 = vmul.f32 %v1445, %v1507
    %v1524 = vmul.f32 %v1447, %v1508
    %v1525 = vmul.f32 %v1449, %v1509
    %v1526 = vmul.f32 %v1451, %v1510
    %v1527 = vmul.f32 %v1453, %v1511
    %v1528 = vmul.f32 %v1455, %v1512
    %v1529 = vmul.f32 %v1457, %v1513
    %v1530 = vmul.f32 %v1459, %v1514
    %v1531 = vmul.f32 %v1461, %v1515
    %v1532 = vmul.f32 %v1463, %v1516
    %v1533 = vmul.f32 %v1465, %v1517
    %v1534 = vmul.f32 %v1467, %v1518
    %v1535 = vmul.f32 %v1469, %v1519
    %v1536 = vmul.f32 %v1471, %v1520
    %v1537 = vmul.f32 %v1473, %v1521
    %v1538 = vpack.c.bf16 %v1523, %v1522
    %v1539 = vpack.c.bf16 %v1525, %v1524
    %v1540 = vpack.c.bf16 %v1527, %v1526
    %v1541 = vpack.c.bf16 %v1529, %v1528
    %v1542 = vpack.c.bf16 %v1531, %v1530
    %v1543 = vpack.c.bf16 %v1533, %v1532
    %v1544 = vpack.c.bf16 %v1535, %v1534
    %v1545 = vpack.c.bf16 %v1537, %v1536
    %1546 = vmatpush.bf16.msra.mxu0 %v1263
    %1547 = vmatpush.bf16.msra.mxu0 %v1262
    %1548 = vmatpush.bf16.msra.mxu0 %v1261
    %1549 = vmatpush.bf16.msra.mxu0 %v1260
    %1550 = vmatpush.bf16.msra.mxu0 %v1259
    %1551 = vmatpush.bf16.msra.mxu0 %v1258
    %1552 = vmatpush.bf16.msra.mxu0 %v1257
    %1553 = vmatpush.bf16.msra.mxu0 %v1256
    %1554 = vmatmul.bf16.gmra.mxu0 %v1538
    %v1555 = vpop.f32.mrf.mxu0
    %v1556 = vadd.f32 0.0, %v1555
    %v1557 = vpop.f32.mrf.mxu0
    %v1558 = vadd.f32 0.0, %v1557
    %1559 = vmatmul.bf16.gmra.mxu0 %v1539
    %v1560 = vpop.f32.mrf.mxu0
    %v1561 = vadd.f32 0.0, %v1560
    %v1562 = vpop.f32.mrf.mxu0
    %v1563 = vadd.f32 0.0, %v1562
    %1564 = vmatmul.bf16.gmra.mxu0 %v1540
    %v1565 = vpop.f32.mrf.mxu0
    %v1566 = vadd.f32 0.0, %v1565
    %v1567 = vpop.f32.mrf.mxu0
    %v1568 = vadd.f32 0.0, %v1567
    %1569 = vmatmul.bf16.gmra.mxu0 %v1541
    %v1570 = vpop.f32.mrf.mxu0
    %v1571 = vadd.f32 0.0, %v1570
    %v1572 = vpop.f32.mrf.mxu0
    %v1573 = vadd.f32 0.0, %v1572
    %1574 = vmatmul.bf16.gmra.mxu0 %v1542
    %v1575 = vpop.f32.mrf.mxu0
    %v1576 = vadd.f32 0.0, %v1575
    %v1577 = vpop.f32.mrf.mxu0
    %v1578 = vadd.f32 0.0, %v1577
    %1579 = vmatmul.bf16.gmra.mxu0 %v1543
    %v1580 = vpop.f32.mrf.mxu0
    %v1581 = vadd.f32 0.0, %v1580
    %v1582 = vpop.f32.mrf.mxu0
    %v1583 = vadd.f32 0.0, %v1582
    %1584 = vmatmul.bf16.gmra.mxu0 %v1544
    %v1585 = vpop.f32.mrf.mxu0
    %v1586 = vadd.f32 0.0, %v1585
    %v1587 = vpop.f32.mrf.mxu0
    %v1588 = vadd.f32 0.0, %v1587
    %1589 = vmatmul.bf16.gmra.mxu0 %v1545
    %v1590 = vpop.f32.mrf.mxu0
    %v1591 = vadd.f32 0.0, %v1590
    %v1592 = vpop.f32.mrf.mxu0
    %v1593 = vadd.f32 0.0, %v1592
    %1594 = vdwg.mxu0
    %v1595 = vpack.c.bf16 %v1558, %v1556
    %v1596 = vpack.c.bf16 %v1563, %v1561
    %v1597 = vpack.c.bf16 %v1568, %v1566
    %v1598 = vpack.c.bf16 %v1573, %v1571
    %v1599 = vpack.c.bf16 %v1578, %v1576
    %v1600 = vpack.c.bf16 %v1583, %v1581
    %v1601 = vpack.c.bf16 %v1588, %v1586
    %v1602 = vpack.c.bf16 %v1593, %v1591
    %s1603 = scalar_lea.vmem %s6, 4
    %v1604 = vld [vmem:[%s1603] sm:$0xf]
    %v1606 = vsel %vm590, %v1595, 0
    %v1609 = vsel %vm590, %v1596, 0
    %v1612 = vsel %vm590, %v1597, 0
    %v1615 = vsel %vm590, %v1598, 0
    %v1618 = vsel %vm590, %v1599, 0
    %v1621 = vsel %vm590, %v1600, 0
    %v1624 = vsel %vm590, %v1601, 0
    %v1627 = vsel %vm590, %v1602, 0
    %vm1629 = vcmask 1043456
    %v1631 = vsel %vm1629, %v1604, 0
    %1633 = vmatpush.bf16.msra.mxu0 0
    %1634 = vmatpush.bf16.msra.mxu0 0
    %1635 = vmatpush.bf16.msra.mxu0 0
    %1636 = vmatpush.bf16.msra.mxu0 0
    %1637 = vmatpush.bf16.msra.mxu0 0
    %1638 = vmatpush.bf16.msra.mxu0 0
    %1639 = vmatpush.bf16.msra.mxu0 0
    %1640 = vmatpush.bf16.msra.mxu0 %v1631
    %1641 = vmatmul.bf16.gmra.mxu0 %v1606
    %v1642 = vpop.f32.mrf.mxu0
    %v1643 = vadd.f32 0.0, %v1642
    %v1644 = vpop.f32.mrf.mxu0
    %v1645 = vadd.f32 0.0, %v1644
    %1646 = vmatmul.bf16.gmra.mxu0 %v1609
    %v1647 = vpop.f32.mrf.mxu0
    %v1648 = vadd.f32 0.0, %v1647
    %v1649 = vpop.f32.mrf.mxu0
    %v1650 = vadd.f32 0.0, %v1649
    %1651 = vmatmul.bf16.gmra.mxu0 %v1612
    %v1652 = vpop.f32.mrf.mxu0
    %v1653 = vadd.f32 0.0, %v1652
    %v1654 = vpop.f32.mrf.mxu0
    %v1655 = vadd.f32 0.0, %v1654
    %1656 = vmatmul.bf16.gmra.mxu0 %v1615
    %v1657 = vpop.f32.mrf.mxu0
    %v1658 = vadd.f32 0.0, %v1657
    %v1659 = vpop.f32.mrf.mxu0
    %v1660 = vadd.f32 0.0, %v1659
    %1661 = vmatmul.bf16.gmra.mxu0 %v1618
    %v1662 = vpop.f32.mrf.mxu0
    %v1663 = vadd.f32 0.0, %v1662
    %v1664 = vpop.f32.mrf.mxu0
    %v1665 = vadd.f32 0.0, %v1664
    %1666 = vmatmul.bf16.gmra.mxu0 %v1621
    %v1667 = vpop.f32.mrf.mxu0
    %v1668 = vadd.f32 0.0, %v1667
    %v1669 = vpop.f32.mrf.mxu0
    %v1670 = vadd.f32 0.0, %v1669
    %1671 = vmatmul.bf16.gmra.mxu0 %v1624
    %v1672 = vpop.f32.mrf.mxu0
    %v1673 = vadd.f32 0.0, %v1672
    %v1674 = vpop.f32.mrf.mxu0
    %v1675 = vadd.f32 0.0, %v1674
    %1676 = vmatmul.bf16.gmra.mxu0 %v1627
    %v1677 = vpop.f32.mrf.mxu0
    %v1678 = vadd.f32 0.0, %v1677
    %v1679 = vpop.f32.mrf.mxu0
    %v1680 = vadd.f32 0.0, %v1679
    %1681 = vdwg.mxu0
    %v1683 = vsel %vm590, %v889, 0
    %v1686 = vsel %vm590, %v890, 0
    %v1689 = vsel %vm590, %v891, 0
    %v1692 = vsel %vm590, %v892, 0
    %v1695 = vsel %vm590, %v893, 0
    %v1698 = vsel %vm590, %v894, 0
    %v1701 = vsel %vm590, %v895, 0
    %v1704 = vsel %vm590, %v896, 0
    %v1707 = vsel %vm1629, %v897, 0
    %1709 = vmatpush.bf16.msra.mxu0 0
    %1710 = vmatpush.bf16.msra.mxu0 0
    %1711 = vmatpush.bf16.msra.mxu0 0
    %1712 = vmatpush.bf16.msra.mxu0 0
    %1713 = vmatpush.bf16.msra.mxu0 0
    %1714 = vmatpush.bf16.msra.mxu0 0
    %1715 = vmatpush.bf16.msra.mxu0 0
    %1716 = vmatpush.bf16.msra.mxu0 %v1707
    %1717 = vmatmul.bf16.gmra.mxu0 %v1683
    %v1718 = vpop.f32.mrf.mxu0
    %v1719 = vadd.f32 %v1643, %v1718
    %v1720 = vpop.f32.mrf.mxu0
    %v1721 = vadd.f32 %v1645, %v1720
    %1722 = vmatmul.bf16.gmra.mxu0 %v1686
    %v1723 = vpop.f32.mrf.mxu0
    %v1724 = vadd.f32 %v1648, %v1723
    %v1725 = vpop.f32.mrf.mxu0
    %v1726 = vadd.f32 %v1650, %v1725
    %1727 = vmatmul.bf16.gmra.mxu0 %v1689
    %v1728 = vpop.f32.mrf.mxu0
    %v1729 = vadd.f32 %v1653, %v1728
    %v1730 = vpop.f32.mrf.mxu0
    %v1731 = vadd.f32 %v1655, %v1730
    %1732 = vmatmul.bf16.gmra.mxu0 %v1692
    %v1733 = vpop.f32.mrf.mxu0
    %v1734 = vadd.f32 %v1658, %v1733
    %v1735 = vpop.f32.mrf.mxu0
    %v1736 = vadd.f32 %v1660, %v1735
    %1737 = vmatmul.bf16.gmra.mxu0 %v1695
    %v1738 = vpop.f32.mrf.mxu0
    %v1739 = vadd.f32 %v1663, %v1738
    %v1740 = vpop.f32.mrf.mxu0
    %v1741 = vadd.f32 %v1665, %v1740
    %1742 = vmatmul.bf16.gmra.mxu0 %v1698
    %v1743 = vpop.f32.mrf.mxu0
    %v1744 = vadd.f32 %v1668, %v1743
    %v1745 = vpop.f32.mrf.mxu0
    %v1746 = vadd.f32 %v1670, %v1745
    %1747 = vmatmul.bf16.gmra.mxu0 %v1701
    %v1748 = vpop.f32.mrf.mxu0
    %v1749 = vadd.f32 %v1673, %v1748
    %v1750 = vpop.f32.mrf.mxu0
    %v1751 = vadd.f32 %v1675, %v1750
    %1752 = vmatmul.bf16.gmra.mxu0 %v1704
    %v1753 = vpop.f32.mrf.mxu0
    %v1754 = vadd.f32 %v1678, %v1753
    %v1755 = vpop.f32.mrf.mxu0
    %v1756 = vadd.f32 %v1680, %v1755
    %1757 = vdwg.mxu0
    %s1758 = scalar_lea.vmem %s3, 128
    %v1759 = vld [vmem:[%s1758] sm:$0xf]
    %v1760 = vld [vmem:[%s1758 + $0x4] sm:$0xf]
    %v1761 = vld [vmem:[%s1758 + $0x8] sm:$0xf]
    %v1762 = vld [vmem:[%s1758 + $0xc] sm:$0xf]
    %v1763 = vld [vmem:[%s1758 + $0x10] sm:$0xf]
    %v1764 = vld [vmem:[%s1758 + $0x14] sm:$0xf]
    %v1765 = vld [vmem:[%s1758 + $0x18] sm:$0xf]
    %v1766 = vld [vmem:[%s1758 + $0x1c] sm:$0xf]
    %v1767 = vld [vmem:[%s1758 + $0x20] sm:$0xf]
    %v1768 = vld [vmem:[%s1758 + $0x24] sm:$0xf]
    %v1769 = vld [vmem:[%s1758 + $0x28] sm:$0xf]
    %v1770 = vld [vmem:[%s1758 + $0x2c] sm:$0xf]
    %v1771 = vld [vmem:[%s1758 + $0x30] sm:$0xf]
    %v1772 = vld [vmem:[%s1758 + $0x34] sm:$0xf]
    %v1773 = vld [vmem:[%s1758 + $0x38] sm:$0xf]
    %v1774 = vld [vmem:[%s1758 + $0x3c] sm:$0xf]
    %v1791 = vunpack.c.l.b16 %v1759
    %v1792 = vunpack.c.l.b16 %v1760
    %v1793 = vunpack.c.l.b16 %v1761
    %v1794 = vunpack.c.l.b16 %v1762
    %v1795 = vunpack.c.l.b16 %v1763
    %v1796 = vunpack.c.l.b16 %v1764
    %v1797 = vunpack.c.l.b16 %v1765
    %v1798 = vunpack.c.l.b16 %v1766
    %v1799 = vunpack.c.l.b16 %v1767
    %v1800 = vunpack.c.l.b16 %v1768
    %v1801 = vunpack.c.l.b16 %v1769
    %v1802 = vunpack.c.l.b16 %v1770
    %v1803 = vunpack.c.l.b16 %v1771
    %v1804 = vunpack.c.l.b16 %v1772
    %v1805 = vunpack.c.l.b16 %v1773
    %v1806 = vunpack.c.l.b16 %v1774
    %v1807 = vpack.c.b16 %v1792, %v1791
    %v1808 = vpack.c.b16 %v1794, %v1793
    %v1809 = vpack.c.b16 %v1796, %v1795
    %v1810 = vpack.c.b16 %v1798, %v1797
    %v1811 = vpack.c.b16 %v1800, %v1799
    %v1812 = vpack.c.b16 %v1802, %v1801
    %v1813 = vpack.c.b16 %v1804, %v1803
    %v1814 = vpack.c.b16 %v1806, %v1805
    %1823 = vmatpush.bf16.msra.mxu0 %v1814
    %1824 = vmatpush.bf16.msra.mxu0 %v1813
    %1825 = vmatpush.bf16.msra.mxu0 %v1812
    %1826 = vmatpush.bf16.msra.mxu0 %v1811
    %1827 = vmatpush.bf16.msra.mxu0 %v1810
    %1828 = vmatpush.bf16.msra.mxu0 %v1809
    %1829 = vmatpush.bf16.msra.mxu0 %v1808
    %1830 = vmatpush.bf16.msra.mxu0 %v1807
    %1831 = vmatmul.bf16.gmra.mxu0 %v187
    %v1832 = vpop.f32.mrf.mxu0
    %v1833 = vadd.f32 0.0, %v1832
    %v1834 = vpop.f32.mrf.mxu0
    %v1835 = vadd.f32 0.0, %v1834
    %1836 = vmatmul.bf16.gmra.mxu0 %v188
    %v1837 = vpop.f32.mrf.mxu0
    %v1838 = vadd.f32 0.0, %v1837
    %v1839 = vpop.f32.mrf.mxu0
    %v1840 = vadd.f32 0.0, %v1839
    %1841 = vmatmul.bf16.gmra.mxu0 %v189
    %v1842 = vpop.f32.mrf.mxu0
    %v1843 = vadd.f32 0.0, %v1842
    %v1844 = vpop.f32.mrf.mxu0
    %v1845 = vadd.f32 0.0, %v1844
    %1846 = vmatmul.bf16.gmra.mxu0 %v190
    %v1847 = vpop.f32.mrf.mxu0
    %v1848 = vadd.f32 0.0, %v1847
    %v1849 = vpop.f32.mrf.mxu0
    %v1850 = vadd.f32 0.0, %v1849
    %1851 = vmatmul.bf16.gmra.mxu0 %v191
    %v1852 = vpop.f32.mrf.mxu0
    %v1853 = vadd.f32 0.0, %v1852
    %v1854 = vpop.f32.mrf.mxu0
    %v1855 = vadd.f32 0.0, %v1854
    %1856 = vmatmul.bf16.gmra.mxu0 %v192
    %v1857 = vpop.f32.mrf.mxu0
    %v1858 = vadd.f32 0.0, %v1857
    %v1859 = vpop.f32.mrf.mxu0
    %v1860 = vadd.f32 0.0, %v1859
    %1861 = vmatmul.bf16.gmra.mxu0 %v193
    %v1862 = vpop.f32.mrf.mxu0
    %v1863 = vadd.f32 0.0, %v1862
    %v1864 = vpop.f32.mrf.mxu0
    %v1865 = vadd.f32 0.0, %v1864
    %1866 = vmatmul.bf16.gmra.mxu0 %v194
    %v1867 = vpop.f32.mrf.mxu0
    %v1868 = vadd.f32 0.0, %v1867
    %v1869 = vpop.f32.mrf.mxu0
    %v1870 = vadd.f32 0.0, %v1869
    %1871 = vdwg.mxu0
    %v1872 = vpack.c.bf16 %v1835, %v1833
    %v1873 = vpack.c.bf16 %v1840, %v1838
    %v1874 = vpack.c.bf16 %v1845, %v1843
    %v1875 = vpack.c.bf16 %v1850, %v1848
    %v1876 = vpack.c.bf16 %v1855, %v1853
    %v1877 = vpack.c.bf16 %v1860, %v1858
    %v1878 = vpack.c.bf16 %v1865, %v1863
    %v1879 = vpack.c.bf16 %v1870, %v1868
    %s1880 = scalar_lea.vmem %s4, 128
    %v1881 = vld [vmem:[%s1880] sm:$0xf]
    %v1882 = vld [vmem:[%s1880 + $0x4] sm:$0xf]
    %v1883 = vld [vmem:[%s1880 + $0x8] sm:$0xf]
    %v1884 = vld [vmem:[%s1880 + $0xc] sm:$0xf]
    %v1885 = vld [vmem:[%s1880 + $0x10] sm:$0xf]
    %v1886 = vld [vmem:[%s1880 + $0x14] sm:$0xf]
    %v1887 = vld [vmem:[%s1880 + $0x18] sm:$0xf]
    %v1888 = vld [vmem:[%s1880 + $0x1c] sm:$0xf]
    %v1889 = vld [vmem:[%s1880 + $0x20] sm:$0xf]
    %v1890 = vld [vmem:[%s1880 + $0x24] sm:$0xf]
    %v1891 = vld [vmem:[%s1880 + $0x28] sm:$0xf]
    %v1892 = vld [vmem:[%s1880 + $0x2c] sm:$0xf]
    %v1893 = vld [vmem:[%s1880 + $0x30] sm:$0xf]
    %v1894 = vld [vmem:[%s1880 + $0x34] sm:$0xf]
    %v1895 = vld [vmem:[%s1880 + $0x38] sm:$0xf]
    %v1896 = vld [vmem:[%s1880 + $0x3c] sm:$0xf]
    %v1913 = vunpack.c.l.b16 %v1881
    %v1914 = vunpack.c.l.b16 %v1882
    %v1915 = vunpack.c.l.b16 %v1883
    %v1916 = vunpack.c.l.b16 %v1884
    %v1917 = vunpack.c.l.b16 %v1885
    %v1918 = vunpack.c.l.b16 %v1886
    %v1919 = vunpack.c.l.b16 %v1887
    %v1920 = vunpack.c.l.b16 %v1888
    %v1921 = vunpack.c.l.b16 %v1889
    %v1922 = vunpack.c.l.b16 %v1890
    %v1923 = vunpack.c.l.b16 %v1891
    %v1924 = vunpack.c.l.b16 %v1892
    %v1925 = vunpack.c.l.b16 %v1893
    %v1926 = vunpack.c.l.b16 %v1894
    %v1927 = vunpack.c.l.b16 %v1895
    %v1928 = vunpack.c.l.b16 %v1896
    %v1929 = vpack.c.b16 %v1914, %v1913
    %v1930 = vpack.c.b16 %v1916, %v1915
    %v1931 = vpack.c.b16 %v1918, %v1917
    %v1932 = vpack.c.b16 %v1920, %v1919
    %v1933 = vpack.c.b16 %v1922, %v1921
    %v1934 = vpack.c.b16 %v1924, %v1923
    %v1935 = vpack.c.b16 %v1926, %v1925
    %v1936 = vpack.c.b16 %v1928, %v1927
    %1945 = vmatpush.bf16.msra.mxu0 %v1936
    %1946 = vmatpush.bf16.msra.mxu0 %v1935
    %1947 = vmatpush.bf16.msra.mxu0 %v1934
    %1948 = vmatpush.bf16.msra.mxu0 %v1933
    %1949 = vmatpush.bf16.msra.mxu0 %v1932
    %1950 = vmatpush.bf16.msra.mxu0 %v1931
    %1951 = vmatpush.bf16.msra.mxu0 %v1930
    %1952 = vmatpush.bf16.msra.mxu0 %v1929
    %1953 = vmatmul.bf16.gmra.mxu0 %v187
    %v1954 = vpop.f32.mrf.mxu0
    %v1955 = vadd.f32 0.0, %v1954
    %v1956 = vpop.f32.mrf.mxu0
    %v1957 = vadd.f32 0.0, %v1956
    %1958 = vmatmul.bf16.gmra.mxu0 %v188
    %v1959 = vpop.f32.mrf.mxu0
    %v1960 = vadd.f32 0.0, %v1959
    %v1961 = vpop.f32.mrf.mxu0
    %v1962 = vadd.f32 0.0, %v1961
    %1963 = vmatmul.bf16.gmra.mxu0 %v189
    %v1964 = vpop.f32.mrf.mxu0
    %v1965 = vadd.f32 0.0, %v1964
    %v1966 = vpop.f32.mrf.mxu0
    %v1967 = vadd.f32 0.0, %v1966
    %1968 = vmatmul.bf16.gmra.mxu0 %v190
    %v1969 = vpop.f32.mrf.mxu0
    %v1970 = vadd.f32 0.0, %v1969
    %v1971 = vpop.f32.mrf.mxu0
    %v1972 = vadd.f32 0.0, %v1971
    %1973 = vmatmul.bf16.gmra.mxu0 %v191
    %v1974 = vpop.f32.mrf.mxu0
    %v1975 = vadd.f32 0.0, %v1974
    %v1976 = vpop.f32.mrf.mxu0
    %v1977 = vadd.f32 0.0, %v1976
    %1978 = vmatmul.bf16.gmra.mxu0 %v192
    %v1979 = vpop.f32.mrf.mxu0
    %v1980 = vadd.f32 0.0, %v1979
    %v1981 = vpop.f32.mrf.mxu0
    %v1982 = vadd.f32 0.0, %v1981
    %1983 = vmatmul.bf16.gmra.mxu0 %v193
    %v1984 = vpop.f32.mrf.mxu0
    %v1985 = vadd.f32 0.0, %v1984
    %v1986 = vpop.f32.mrf.mxu0
    %v1987 = vadd.f32 0.0, %v1986
    %1988 = vmatmul.bf16.gmra.mxu0 %v194
    %v1989 = vpop.f32.mrf.mxu0
    %v1990 = vadd.f32 0.0, %v1989
    %v1991 = vpop.f32.mrf.mxu0
    %v1992 = vadd.f32 0.0, %v1991
    %1993 = vdwg.mxu0
    %v1994 = vpack.c.bf16 %v1957, %v1955
    %v1995 = vpack.c.bf16 %v1962, %v1960
    %v1996 = vpack.c.bf16 %v1967, %v1965
    %v1997 = vpack.c.bf16 %v1972, %v1970
    %v1998 = vpack.c.bf16 %v1977, %v1975
    %v1999 = vpack.c.bf16 %v1982, %v1980
    %v2000 = vpack.c.bf16 %v1987, %v1985
    %v2001 = vpack.c.bf16 %v1992, %v1990
    %s2002 = scalar_lea.vmem %s5, 128
    %v2003 = vld [vmem:[%s2002] sm:$0xf]
    %v2004 = vld [vmem:[%s2002 + $0x4] sm:$0xf]
    %v2005 = vld [vmem:[%s2002 + $0x8] sm:$0xf]
    %v2006 = vld [vmem:[%s2002 + $0xc] sm:$0xf]
    %v2007 = vld [vmem:[%s2002 + $0x10] sm:$0xf]
    %v2008 = vld [vmem:[%s2002 + $0x14] sm:$0xf]
    %v2009 = vld [vmem:[%s2002 + $0x18] sm:$0xf]
    %v2010 = vld [vmem:[%s2002 + $0x1c] sm:$0xf]
    %v2011 = vld [vmem:[%s2002 + $0x20] sm:$0xf]
    %v2012 = vld [vmem:[%s2002 + $0x24] sm:$0xf]
    %v2013 = vld [vmem:[%s2002 + $0x28] sm:$0xf]
    %v2014 = vld [vmem:[%s2002 + $0x2c] sm:$0xf]
    %v2015 = vld [vmem:[%s2002 + $0x30] sm:$0xf]
    %v2016 = vld [vmem:[%s2002 + $0x34] sm:$0xf]
    %v2017 = vld [vmem:[%s2002 + $0x38] sm:$0xf]
    %v2018 = vld [vmem:[%s2002 + $0x3c] sm:$0xf]
    %v2035 = vunpack.c.l.b16 %v2003
    %v2036 = vunpack.c.l.b16 %v2004
    %v2037 = vunpack.c.l.b16 %v2005
    %v2038 = vunpack.c.l.b16 %v2006
    %v2039 = vunpack.c.l.b16 %v2007
    %v2040 = vunpack.c.l.b16 %v2008
    %v2041 = vunpack.c.l.b16 %v2009
    %v2042 = vunpack.c.l.b16 %v2010
    %v2043 = vunpack.c.l.b16 %v2011
    %v2044 = vunpack.c.l.b16 %v2012
    %v2045 = vunpack.c.l.b16 %v2013
    %v2046 = vunpack.c.l.b16 %v2014
    %v2047 = vunpack.c.l.b16 %v2015
    %v2048 = vunpack.c.l.b16 %v2016
    %v2049 = vunpack.c.l.b16 %v2017
    %v2050 = vunpack.c.l.b16 %v2018
    %v2051 = vpack.c.b16 %v2036, %v2035
    %v2052 = vpack.c.b16 %v2038, %v2037
    %v2053 = vpack.c.b16 %v2040, %v2039
    %v2054 = vpack.c.b16 %v2042, %v2041
    %v2055 = vpack.c.b16 %v2044, %v2043
    %v2056 = vpack.c.b16 %v2046, %v2045
    %v2057 = vpack.c.b16 %v2048, %v2047
    %v2058 = vpack.c.b16 %v2050, %v2049
    %2067 = vmatpush.bf16.msra.mxu0 %v2058
    %2068 = vmatpush.bf16.msra.mxu0 %v2057
    %2069 = vmatpush.bf16.msra.mxu0 %v2056
    %2070 = vmatpush.bf16.msra.mxu0 %v2055
    %2071 = vmatpush.bf16.msra.mxu0 %v2054
    %2072 = vmatpush.bf16.msra.mxu0 %v2053
    %2073 = vmatpush.bf16.msra.mxu0 %v2052
    %2074 = vmatpush.bf16.msra.mxu0 %v2051
    %2075 = vmatmul.bf16.gmra.mxu0 %v187
    %v2076 = vpop.f32.mrf.mxu0
    %v2077 = vadd.f32 0.0, %v2076
    %v2078 = vpop.f32.mrf.mxu0
    %v2079 = vadd.f32 0.0, %v2078
    %2080 = vmatmul.bf16.gmra.mxu0 %v188
    %v2081 = vpop.f32.mrf.mxu0
    %v2082 = vadd.f32 0.0, %v2081
    %v2083 = vpop.f32.mrf.mxu0
    %v2084 = vadd.f32 0.0, %v2083
    %2085 = vmatmul.bf16.gmra.mxu0 %v189
    %v2086 = vpop.f32.mrf.mxu0
    %v2087 = vadd.f32 0.0, %v2086
    %v2088 = vpop.f32.mrf.mxu0
    %v2089 = vadd.f32 0.0, %v2088
    %2090 = vmatmul.bf16.gmra.mxu0 %v190
    %v2091 = vpop.f32.mrf.mxu0
    %v2092 = vadd.f32 0.0, %v2091
    %v2093 = vpop.f32.mrf.mxu0
    %v2094 = vadd.f32 0.0, %v2093
    %2095 = vmatmul.bf16.gmra.mxu0 %v191
    %v2096 = vpop.f32.mrf.mxu0
    %v2097 = vadd.f32 0.0, %v2096
    %v2098 = vpop.f32.mrf.mxu0
    %v2099 = vadd.f32 0.0, %v2098
    %2100 = vmatmul.bf16.gmra.mxu0 %v192
    %v2101 = vpop.f32.mrf.mxu0
    %v2102 = vadd.f32 0.0, %v2101
    %v2103 = vpop.f32.mrf.mxu0
    %v2104 = vadd.f32 0.0, %v2103
    %2105 = vmatmul.bf16.gmra.mxu0 %v193
    %v2106 = vpop.f32.mrf.mxu0
    %v2107 = vadd.f32 0.0, %v2106
    %v2108 = vpop.f32.mrf.mxu0
    %v2109 = vadd.f32 0.0, %v2108
    %2110 = vmatmul.bf16.gmra.mxu0 %v194
    %v2111 = vpop.f32.mrf.mxu0
    %v2112 = vadd.f32 0.0, %v2111
    %v2113 = vpop.f32.mrf.mxu0
    %v2114 = vadd.f32 0.0, %v2113
    %2115 = vdwg.mxu0
    %v2116 = vpack.c.bf16 %v2079, %v2077
    %v2117 = vpack.c.bf16 %v2084, %v2082
    %v2118 = vpack.c.bf16 %v2089, %v2087
    %v2119 = vpack.c.bf16 %v2094, %v2092
    %v2120 = vpack.c.bf16 %v2099, %v2097
    %v2121 = vpack.c.bf16 %v2104, %v2102
    %v2122 = vpack.c.bf16 %v2109, %v2107
    %v2123 = vpack.c.bf16 %v2114, %v2112
    %s2124 = scalar_lea.vmem %s2, 128
    %v2125 = vld [vmem:[%s2124] sm:$0xf]
    %v2126 = vld [vmem:[%s2124 + $0x4] sm:$0xf]
    %v2127 = vld [vmem:[%s2124 + $0x8] sm:$0xf]
    %v2128 = vld [vmem:[%s2124 + $0xc] sm:$0xf]
    %v2129 = vld [vmem:[%s2124 + $0x10] sm:$0xf]
    %v2130 = vld [vmem:[%s2124 + $0x14] sm:$0xf]
    %v2131 = vld [vmem:[%s2124 + $0x18] sm:$0xf]
    %v2132 = vld [vmem:[%s2124 + $0x1c] sm:$0xf]
    %v2133 = vld [vmem:[%s2124 + $0x20] sm:$0xf]
    %v2134 = vld [vmem:[%s2124 + $0x24] sm:$0xf]
    %v2135 = vld [vmem:[%s2124 + $0x28] sm:$0xf]
    %v2136 = vld [vmem:[%s2124 + $0x2c] sm:$0xf]
    %v2137 = vld [vmem:[%s2124 + $0x30] sm:$0xf]
    %v2138 = vld [vmem:[%s2124 + $0x34] sm:$0xf]
    %v2139 = vld [vmem:[%s2124 + $0x38] sm:$0xf]
    %v2140 = vld [vmem:[%s2124 + $0x3c] sm:$0xf]
    %v2141 = vunpack.c.l.bf16 %v2125
    %v2142 = vunpack.c.l.bf16 %v2126
    %v2143 = vunpack.c.l.bf16 %v2127
    %v2144 = vunpack.c.l.bf16 %v2128
    %v2145 = vunpack.c.l.bf16 %v2129
    %v2146 = vunpack.c.l.bf16 %v2130
    %v2147 = vunpack.c.l.bf16 %v2131
    %v2148 = vunpack.c.l.bf16 %v2132
    %v2149 = vunpack.c.l.bf16 %v2133
    %v2150 = vunpack.c.l.bf16 %v2134
    %v2151 = vunpack.c.l.bf16 %v2135
    %v2152 = vunpack.c.l.bf16 %v2136
    %v2153 = vunpack.c.l.bf16 %v2137
    %v2154 = vunpack.c.l.bf16 %v2138
    %v2155 = vunpack.c.l.bf16 %v2139
    %v2156 = vunpack.c.l.bf16 %v2140
    %v2158 = vsel %vm590, %v1872, 0
    %v2161 = vsel %vm590, %v1873, 0
    %v2164 = vsel %vm590, %v1874, 0
    %v2167 = vsel %vm590, %v1875, 0
    %v2170 = vsel %vm590, %v1876, 0
    %v2173 = vsel %vm590, %v1877, 0
    %v2176 = vsel %vm590, %v1878, 0
    %v2179 = vsel %vm590, %v1879, 0
    %v2182 = vsel %vm590, %v1994, 0
    %v2185 = vsel %vm590, %v1995, 0
    %v2188 = vsel %vm590, %v1996, 0
    %v2191 = vsel %vm590, %v1997, 0
    %v2194 = vsel %vm590, %v1998, 0
    %v2197 = vsel %vm590, %v1999, 0
    %v2200 = vsel %vm590, %v2000, 0
    %v2203 = vsel %vm590, %v2001, 0
    %2205 = vmatpush.bf16.xpose.msra.mxu0 %v2203
    %2206 = vmatpush.bf16.xpose.msra.mxu0 %v2200
    %2207 = vmatpush.bf16.xpose.msra.mxu0 %v2197
    %2208 = vmatpush.bf16.xpose.msra.mxu0 %v2194
    %2209 = vmatpush.bf16.xpose.msra.mxu0 %v2191
    %2210 = vmatpush.bf16.xpose.msra.mxu0 %v2188
    %2211 = vmatpush.bf16.xpose.msra.mxu0 %v2185
    %2212 = vmatpush.bf16.xpose.msra.mxu0 %v2182
    %2213 = vmatmul.bf16.gmra.mxu0 %v2158
    %v2214 = vpop.f32.mrf.mxu0
    %v2215 = vadd.f32 %v2141, %v2214
    %v2216 = vpop.f32.mrf.mxu0
    %v2217 = vadd.f32 %v2142, %v2216
    %2218 = vmatmul.bf16.gmra.mxu0 %v2161
    %v2219 = vpop.f32.mrf.mxu0
    %v2220 = vadd.f32 %v2143, %v2219
    %v2221 = vpop.f32.mrf.mxu0
    %v2222 = vadd.f32 %v2144, %v2221
    %2223 = vmatmul.bf16.gmra.mxu0 %v2164
    %v2224 = vpop.f32.mrf.mxu0
    %v2225 = vadd.f32 %v2145, %v2224
    %v2226 = vpop.f32.mrf.mxu0
    %v2227 = vadd.f32 %v2146, %v2226
    %2228 = vmatmul.bf16.gmra.mxu0 %v2167
    %v2229 = vpop.f32.mrf.mxu0
    %v2230 = vadd.f32 %v2147, %v2229
    %v2231 = vpop.f32.mrf.mxu0
    %v2232 = vadd.f32 %v2148, %v2231
    %2233 = vmatmul.bf16.gmra.mxu0 %v2170
    %v2234 = vpop.f32.mrf.mxu0
    %v2235 = vadd.f32 %v2149, %v2234
    %v2236 = vpop.f32.mrf.mxu0
    %v2237 = vadd.f32 %v2150, %v2236
    %2238 = vmatmul.bf16.gmra.mxu0 %v2173
    %v2239 = vpop.f32.mrf.mxu0
    %v2240 = vadd.f32 %v2151, %v2239
    %v2241 = vpop.f32.mrf.mxu0
    %v2242 = vadd.f32 %v2152, %v2241
    %2243 = vmatmul.bf16.gmra.mxu0 %v2176
    %v2244 = vpop.f32.mrf.mxu0
    %v2245 = vadd.f32 %v2153, %v2244
    %v2246 = vpop.f32.mrf.mxu0
    %v2247 = vadd.f32 %v2154, %v2246
    %2248 = vmatmul.bf16.gmra.mxu0 %v2179
    %v2249 = vpop.f32.mrf.mxu0
    %v2250 = vadd.f32 %v2155, %v2249
    %v2251 = vpop.f32.mrf.mxu0
    %v2252 = vadd.f32 %v2156, %v2251
    %2253 = vdwg.mxu0
    %2254 = vmax.xlane.f32.xlu0 %v2215
    %v2255 = vpop.xlane.xlu0 %2254
    %2256 = vmax.xlane.f32.xlu0 %v2217
    %v2257 = vpop.xlane.xlu0 %2256
    %2258 = vmax.xlane.f32.xlu0 %v2220
    %v2259 = vpop.xlane.xlu0 %2258
    %2260 = vmax.xlane.f32.xlu0 %v2222
    %v2261 = vpop.xlane.xlu0 %2260
    %2262 = vmax.xlane.f32.xlu0 %v2225
    %v2263 = vpop.xlane.xlu0 %2262
    %2264 = vmax.xlane.f32.xlu0 %v2227
    %v2265 = vpop.xlane.xlu0 %2264
    %2266 = vmax.xlane.f32.xlu0 %v2230
    %v2267 = vpop.xlane.xlu0 %2266
    %2268 = vmax.xlane.f32.xlu0 %v2232
    %v2269 = vpop.xlane.xlu0 %2268
    %2270 = vmax.xlane.f32.xlu0 %v2235
    %v2271 = vpop.xlane.xlu0 %2270
    %2272 = vmax.xlane.f32.xlu0 %v2237
    %v2273 = vpop.xlane.xlu0 %2272
    %2274 = vmax.xlane.f32.xlu0 %v2240
    %v2275 = vpop.xlane.xlu0 %2274
    %2276 = vmax.xlane.f32.xlu0 %v2242
    %v2277 = vpop.xlane.xlu0 %2276
    %2278 = vmax.xlane.f32.xlu0 %v2245
    %v2279 = vpop.xlane.xlu0 %2278
    %2280 = vmax.xlane.f32.xlu0 %v2247
    %v2281 = vpop.xlane.xlu0 %2280
    %2282 = vmax.xlane.f32.xlu0 %v2250
    %v2283 = vpop.xlane.xlu0 %2282
    %2284 = vmax.xlane.f32.xlu0 %v2252
    %v2285 = vpop.xlane.xlu0 %2284
    %v2286 = vsub.f32 %v2215, %v2255
    %v2287 = vsub.f32 %v2217, %v2257
    %v2288 = vsub.f32 %v2220, %v2259
    %v2289 = vsub.f32 %v2222, %v2261
    %v2290 = vsub.f32 %v2225, %v2263
    %v2291 = vsub.f32 %v2227, %v2265
    %v2292 = vsub.f32 %v2230, %v2267
    %v2293 = vsub.f32 %v2232, %v2269
    %v2294 = vsub.f32 %v2235, %v2271
    %v2295 = vsub.f32 %v2237, %v2273
    %v2296 = vsub.f32 %v2240, %v2275
    %v2297 = vsub.f32 %v2242, %v2277
    %v2298 = vsub.f32 %v2245, %v2279
    %v2299 = vsub.f32 %v2247, %v2281
    %v2300 = vsub.f32 %v2250, %v2283
    %v2301 = vsub.f32 %v2252, %v2285
    %v2302 = vmul.f32 %v2286, 1.442695
    %v2303 = vpow.pop %v2302
    %v2304 = vmul.f32 %v2287, 1.442695
    %v2305 = vpow.pop %v2304
    %v2306 = vmul.f32 %v2288, 1.442695
    %v2307 = vpow.pop %v2306
    %v2308 = vmul.f32 %v2289, 1.442695
    %v2309 = vpow.pop %v2308
    %v2310 = vmul.f32 %v2290, 1.442695
    %v2311 = vpow.pop %v2310
    %v2312 = vmul.f32 %v2291, 1.442695
    %v2313 = vpow.pop %v2312
    %v2314 = vmul.f32 %v2292, 1.442695
    %v2315 = vpow.pop %v2314
    %v2316 = vmul.f32 %v2293, 1.442695
    %v2317 = vpow.pop %v2316
    %v2318 = vmul.f32 %v2294, 1.442695
    %v2319 = vpow.pop %v2318
    %v2320 = vmul.f32 %v2295, 1.442695
    %v2321 = vpow.pop %v2320
    %v2322 = vmul.f32 %v2296, 1.442695
    %v2323 = vpow.pop %v2322
    %v2324 = vmul.f32 %v2297, 1.442695
    %v2325 = vpow.pop %v2324
    %v2326 = vmul.f32 %v2298, 1.442695
    %v2327 = vpow.pop %v2326
    %v2328 = vmul.f32 %v2299, 1.442695
    %v2329 = vpow.pop %v2328
    %v2330 = vmul.f32 %v2300, 1.442695
    %v2331 = vpow.pop %v2330
    %v2332 = vmul.f32 %v2301, 1.442695
    %v2333 = vpow.pop %v2332
    %2334 = vadd.xlane.f32.xlu0 %v2303
    %v2335 = vpop.xlane.xlu0 %2334
    %2336 = vadd.xlane.f32.xlu0 %v2305
    %v2337 = vpop.xlane.xlu0 %2336
    %2338 = vadd.xlane.f32.xlu0 %v2307
    %v2339 = vpop.xlane.xlu0 %2338
    %2340 = vadd.xlane.f32.xlu0 %v2309
    %v2341 = vpop.xlane.xlu0 %2340
    %2342 = vadd.xlane.f32.xlu0 %v2311
    %v2343 = vpop.xlane.xlu0 %2342
    %2344 = vadd.xlane.f32.xlu0 %v2313
    %v2345 = vpop.xlane.xlu0 %2344
    %2346 = vadd.xlane.f32.xlu0 %v2315
    %v2347 = vpop.xlane.xlu0 %2346
    %2348 = vadd.xlane.f32.xlu0 %v2317
    %v2349 = vpop.xlane.xlu0 %2348
    %2350 = vadd.xlane.f32.xlu0 %v2319
    %v2351 = vpop.xlane.xlu0 %2350
    %2352 = vadd.xlane.f32.xlu0 %v2321
    %v2353 = vpop.xlane.xlu0 %2352
    %2354 = vadd.xlane.f32.xlu0 %v2323
    %v2355 = vpop.xlane.xlu0 %2354
    %2356 = vadd.xlane.f32.xlu0 %v2325
    %v2357 = vpop.xlane.xlu0 %2356
    %2358 = vadd.xlane.f32.xlu0 %v2327
    %v2359 = vpop.xlane.xlu0 %2358
    %2360 = vadd.xlane.f32.xlu0 %v2329
    %v2361 = vpop.xlane.xlu0 %2360
    %2362 = vadd.xlane.f32.xlu0 %v2331
    %v2363 = vpop.xlane.xlu0 %2362
    %2364 = vadd.xlane.f32.xlu0 %v2333
    %v2365 = vpop.xlane.xlu0 %2364
    %v2366 = vrcp.pop %v2335
    %v2367 = vrcp.pop %v2337
    %v2368 = vrcp.pop %v2339
    %v2369 = vrcp.pop %v2341
    %v2370 = vrcp.pop %v2343
    %v2371 = vrcp.pop %v2345
    %v2372 = vrcp.pop %v2347
    %v2373 = vrcp.pop %v2349
    %v2374 = vrcp.pop %v2351
    %v2375 = vrcp.pop %v2353
    %v2376 = vrcp.pop %v2355
    %v2377 = vrcp.pop %v2357
    %v2378 = vrcp.pop %v2359
    %v2379 = vrcp.pop %v2361
    %v2380 = vrcp.pop %v2363
    %v2381 = vrcp.pop %v2365
    %v2382 = vmul.f32 %v2303, %v2366
    %v2383 = vmul.f32 %v2305, %v2367
    %v2384 = vmul.f32 %v2307, %v2368
    %v2385 = vmul.f32 %v2309, %v2369
    %v2386 = vmul.f32 %v2311, %v2370
    %v2387 = vmul.f32 %v2313, %v2371
    %v2388 = vmul.f32 %v2315, %v2372
    %v2389 = vmul.f32 %v2317, %v2373
    %v2390 = vmul.f32 %v2319, %v2374
    %v2391 = vmul.f32 %v2321, %v2375
    %v2392 = vmul.f32 %v2323, %v2376
    %v2393 = vmul.f32 %v2325, %v2377
    %v2394 = vmul.f32 %v2327, %v2378
    %v2395 = vmul.f32 %v2329, %v2379
    %v2396 = vmul.f32 %v2331, %v2380
    %v2397 = vmul.f32 %v2333, %v2381
    %v2398 = vpack.c.bf16 %v2383, %v2382
    %v2399 = vpack.c.bf16 %v2385, %v2384
    %v2400 = vpack.c.bf16 %v2387, %v2386
    %v2401 = vpack.c.bf16 %v2389, %v2388
    %v2402 = vpack.c.bf16 %v2391, %v2390
    %v2403 = vpack.c.bf16 %v2393, %v2392
    %v2404 = vpack.c.bf16 %v2395, %v2394
    %v2405 = vpack.c.bf16 %v2397, %v2396
    %2406 = vmatpush.bf16.msra.mxu0 %v2123
    %2407 = vmatpush.bf16.msra.mxu0 %v2122
    %2408 = vmatpush.bf16.msra.mxu0 %v2121
    %2409 = vmatpush.bf16.msra.mxu0 %v2120
    %2410 = vmatpush.bf16.msra.mxu0 %v2119
    %2411 = vmatpush.bf16.msra.mxu0 %v2118
    %2412 = vmatpush.bf16.msra.mxu0 %v2117
    %2413 = vmatpush.bf16.msra.mxu0 %v2116
    %2414 = vmatmul.bf16.gmra.mxu0 %v2398
    %v2415 = vpop.f32.mrf.mxu0
    %v2416 = vadd.f32 0.0, %v2415
    %v2417 = vpop.f32.mrf.mxu0
    %v2418 = vadd.f32 0.0, %v2417
    %2419 = vmatmul.bf16.gmra.mxu0 %v2399
    %v2420 = vpop.f32.mrf.mxu0
    %v2421 = vadd.f32 0.0, %v2420
    %v2422 = vpop.f32.mrf.mxu0
    %v2423 = vadd.f32 0.0, %v2422
    %2424 = vmatmul.bf16.gmra.mxu0 %v2400
    %v2425 = vpop.f32.mrf.mxu0
    %v2426 = vadd.f32 0.0, %v2425
    %v2427 = vpop.f32.mrf.mxu0
    %v2428 = vadd.f32 0.0, %v2427
    %2429 = vmatmul.bf16.gmra.mxu0 %v2401
    %v2430 = vpop.f32.mrf.mxu0
    %v2431 = vadd.f32 0.0, %v2430
    %v2432 = vpop.f32.mrf.mxu0
    %v2433 = vadd.f32 0.0, %v2432
    %2434 = vmatmul.bf16.gmra.mxu0 %v2402
    %v2435 = vpop.f32.mrf.mxu0
    %v2436 = vadd.f32 0.0, %v2435
    %v2437 = vpop.f32.mrf.mxu0
    %v2438 = vadd.f32 0.0, %v2437
    %2439 = vmatmul.bf16.gmra.mxu0 %v2403
    %v2440 = vpop.f32.mrf.mxu0
    %v2441 = vadd.f32 0.0, %v2440
    %v2442 = vpop.f32.mrf.mxu0
    %v2443 = vadd.f32 0.0, %v2442
    %2444 = vmatmul.bf16.gmra.mxu0 %v2404
    %v2445 = vpop.f32.mrf.mxu0
    %v2446 = vadd.f32 0.0, %v2445
    %v2447 = vpop.f32.mrf.mxu0
    %v2448 = vadd.f32 0.0, %v2447
    %2449 = vmatmul.bf16.gmra.mxu0 %v2405
    %v2450 = vpop.f32.mrf.mxu0
    %v2451 = vadd.f32 0.0, %v2450
    %v2452 = vpop.f32.mrf.mxu0
    %v2453 = vadd.f32 0.0, %v2452
    %2454 = vdwg.mxu0
    %v2455 = vpack.c.bf16 %v2418, %v2416
    %v2456 = vpack.c.bf16 %v2423, %v2421
    %v2457 = vpack.c.bf16 %v2428, %v2426
    %v2458 = vpack.c.bf16 %v2433, %v2431
    %v2459 = vpack.c.bf16 %v2438, %v2436
    %v2460 = vpack.c.bf16 %v2443, %v2441
    %v2461 = vpack.c.bf16 %v2448, %v2446
    %v2462 = vpack.c.bf16 %v2453, %v2451
    %s2463 = scalar_lea.vmem %s6, 8
    %v2464 = vld [vmem:[%s2463] sm:$0xf]
    %v2466 = vsel %vm590, %v2455, 0
    %v2469 = vsel %vm590, %v2456, 0
    %v2472 = vsel %vm590, %v2457, 0
    %v2475 = vsel %vm590, %v2458, 0
    %v2478 = vsel %vm590, %v2459, 0
    %v2481 = vsel %vm590, %v2460, 0
    %v2484 = vsel %vm590, %v2461, 0
    %v2487 = vsel %vm590, %v2462, 0
    %v2490 = vsel %vm1629, %v2464, 0
    %2492 = vmatpush.bf16.msra.mxu0 0
    %2493 = vmatpush.bf16.msra.mxu0 0
    %2494 = vmatpush.bf16.msra.mxu0 0
    %2495 = vmatpush.bf16.msra.mxu0 0
    %2496 = vmatpush.bf16.msra.mxu0 0
    %2497 = vmatpush.bf16.msra.mxu0 0
    %2498 = vmatpush.bf16.msra.mxu0 0
    %2499 = vmatpush.bf16.msra.mxu0 %v2490
    %2500 = vmatmul.bf16.gmra.mxu0 %v2466
    %v2501 = vpop.f32.mrf.mxu0
    %v2502 = vadd.f32 0.0, %v2501
    %v2503 = vpop.f32.mrf.mxu0
    %v2504 = vadd.f32 0.0, %v2503
    %2505 = vmatmul.bf16.gmra.mxu0 %v2469
    %v2506 = vpop.f32.mrf.mxu0
    %v2507 = vadd.f32 0.0, %v2506
    %v2508 = vpop.f32.mrf.mxu0
    %v2509 = vadd.f32 0.0, %v2508
    %2510 = vmatmul.bf16.gmra.mxu0 %v2472
    %v2511 = vpop.f32.mrf.mxu0
    %v2512 = vadd.f32 0.0, %v2511
    %v2513 = vpop.f32.mrf.mxu0
    %v2514 = vadd.f32 0.0, %v2513
    %2515 = vmatmul.bf16.gmra.mxu0 %v2475
    %v2516 = vpop.f32.mrf.mxu0
    %v2517 = vadd.f32 0.0, %v2516
    %v2518 = vpop.f32.mrf.mxu0
    %v2519 = vadd.f32 0.0, %v2518
    %2520 = vmatmul.bf16.gmra.mxu0 %v2478
    %v2521 = vpop.f32.mrf.mxu0
    %v2522 = vadd.f32 0.0, %v2521
    %v2523 = vpop.f32.mrf.mxu0
    %v2524 = vadd.f32 0.0, %v2523
    %2525 = vmatmul.bf16.gmra.mxu0 %v2481
    %v2526 = vpop.f32.mrf.mxu0
    %v2527 = vadd.f32 0.0, %v2526
    %v2528 = vpop.f32.mrf.mxu0
    %v2529 = vadd.f32 0.0, %v2528
    %2530 = vmatmul.bf16.gmra.mxu0 %v2484
    %v2531 = vpop.f32.mrf.mxu0
    %v2532 = vadd.f32 0.0, %v2531
    %v2533 = vpop.f32.mrf.mxu0
    %v2534 = vadd.f32 0.0, %v2533
    %2535 = vmatmul.bf16.gmra.mxu0 %v2487
    %v2536 = vpop.f32.mrf.mxu0
    %v2537 = vadd.f32 0.0, %v2536
    %v2538 = vpop.f32.mrf.mxu0
    %v2539 = vadd.f32 0.0, %v2538
    %2540 = vdwg.mxu0
    %v2541 = vadd.f32 %v1719, %v2502
    %v2542 = vadd.f32 %v1721, %v2504
    %v2543 = vadd.f32 %v1724, %v2507
    %v2544 = vadd.f32 %v1726, %v2509
    %v2545 = vadd.f32 %v1729, %v2512
    %v2546 = vadd.f32 %v1731, %v2514
    %v2547 = vadd.f32 %v1734, %v2517
    %v2548 = vadd.f32 %v1736, %v2519
    %v2549 = vadd.f32 %v1739, %v2522
    %v2550 = vadd.f32 %v1741, %v2524
    %v2551 = vadd.f32 %v1744, %v2527
    %v2552 = vadd.f32 %v1746, %v2529
    %v2553 = vadd.f32 %v1749, %v2532
    %v2554 = vadd.f32 %v1751, %v2534
    %v2555 = vadd.f32 %v1754, %v2537
    %v2556 = vadd.f32 %v1756, %v2539
    %s2557 = scalar_lea.vmem %s3, 192
    %v2558 = vld [vmem:[%s2557] sm:$0xf]
    %v2559 = vld [vmem:[%s2557 + $0x4] sm:$0xf]
    %v2560 = vld [vmem:[%s2557 + $0x8] sm:$0xf]
    %v2561 = vld [vmem:[%s2557 + $0xc] sm:$0xf]
    %v2562 = vld [vmem:[%s2557 + $0x10] sm:$0xf]
    %v2563 = vld [vmem:[%s2557 + $0x14] sm:$0xf]
    %v2564 = vld [vmem:[%s2557 + $0x18] sm:$0xf]
    %v2565 = vld [vmem:[%s2557 + $0x1c] sm:$0xf]
    %v2566 = vld [vmem:[%s2557 + $0x20] sm:$0xf]
    %v2567 = vld [vmem:[%s2557 + $0x24] sm:$0xf]
    %v2568 = vld [vmem:[%s2557 + $0x28] sm:$0xf]
    %v2569 = vld [vmem:[%s2557 + $0x2c] sm:$0xf]
    %v2570 = vld [vmem:[%s2557 + $0x30] sm:$0xf]
    %v2571 = vld [vmem:[%s2557 + $0x34] sm:$0xf]
    %v2572 = vld [vmem:[%s2557 + $0x38] sm:$0xf]
    %v2573 = vld [vmem:[%s2557 + $0x3c] sm:$0xf]
    %v2590 = vunpack.c.l.b16 %v2558
    %v2591 = vunpack.c.l.b16 %v2559
    %v2592 = vunpack.c.l.b16 %v2560
    %v2593 = vunpack.c.l.b16 %v2561
    %v2594 = vunpack.c.l.b16 %v2562
    %v2595 = vunpack.c.l.b16 %v2563
    %v2596 = vunpack.c.l.b16 %v2564
    %v2597 = vunpack.c.l.b16 %v2565
    %v2598 = vunpack.c.l.b16 %v2566
    %v2599 = vunpack.c.l.b16 %v2567
    %v2600 = vunpack.c.l.b16 %v2568
    %v2601 = vunpack.c.l.b16 %v2569
    %v2602 = vunpack.c.l.b16 %v2570
    %v2603 = vunpack.c.l.b16 %v2571
    %v2604 = vunpack.c.l.b16 %v2572
    %v2605 = vunpack.c.l.b16 %v2573
    %v2606 = vpack.c.b16 %v2591, %v2590
    %v2607 = vpack.c.b16 %v2593, %v2592
    %v2608 = vpack.c.b16 %v2595, %v2594
    %v2609 = vpack.c.b16 %v2597, %v2596
    %v2610 = vpack.c.b16 %v2599, %v2598
    %v2611 = vpack.c.b16 %v2601, %v2600
    %v2612 = vpack.c.b16 %v2603, %v2602
    %v2613 = vpack.c.b16 %v2605, %v2604
    %2622 = vmatpush.bf16.msra.mxu0 %v2613
    %2623 = vmatpush.bf16.msra.mxu0 %v2612
    %2624 = vmatpush.bf16.msra.mxu0 %v2611
    %2625 = vmatpush.bf16.msra.mxu0 %v2610
    %2626 = vmatpush.bf16.msra.mxu0 %v2609
    %2627 = vmatpush.bf16.msra.mxu0 %v2608
    %2628 = vmatpush.bf16.msra.mxu0 %v2607
    %2629 = vmatpush.bf16.msra.mxu0 %v2606
    %2630 = vmatmul.bf16.gmra.mxu0 %v187
    %v2631 = vpop.f32.mrf.mxu0
    %v2632 = vadd.f32 0.0, %v2631
    %v2633 = vpop.f32.mrf.mxu0
    %v2634 = vadd.f32 0.0, %v2633
    %2635 = vmatmul.bf16.gmra.mxu0 %v188
    %v2636 = vpop.f32.mrf.mxu0
    %v2637 = vadd.f32 0.0, %v2636
    %v2638 = vpop.f32.mrf.mxu0
    %v2639 = vadd.f32 0.0, %v2638
    %2640 = vmatmul.bf16.gmra.mxu0 %v189
    %v2641 = vpop.f32.mrf.mxu0
    %v2642 = vadd.f32 0.0, %v2641
    %v2643 = vpop.f32.mrf.mxu0
    %v2644 = vadd.f32 0.0, %v2643
    %2645 = vmatmul.bf16.gmra.mxu0 %v190
    %v2646 = vpop.f32.mrf.mxu0
    %v2647 = vadd.f32 0.0, %v2646
    %v2648 = vpop.f32.mrf.mxu0
    %v2649 = vadd.f32 0.0, %v2648
    %2650 = vmatmul.bf16.gmra.mxu0 %v191
    %v2651 = vpop.f32.mrf.mxu0
    %v2652 = vadd.f32 0.0, %v2651
    %v2653 = vpop.f32.mrf.mxu0
    %v2654 = vadd.f32 0.0, %v2653
    %2655 = vmatmul.bf16.gmra.mxu0 %v192
    %v2656 = vpop.f32.mrf.mxu0
    %v2657 = vadd.f32 0.0, %v2656
    %v2658 = vpop.f32.mrf.mxu0
    %v2659 = vadd.f32 0.0, %v2658
    %2660 = vmatmul.bf16.gmra.mxu0 %v193
    %v2661 = vpop.f32.mrf.mxu0
    %v2662 = vadd.f32 0.0, %v2661
    %v2663 = vpop.f32.mrf.mxu0
    %v2664 = vadd.f32 0.0, %v2663
    %2665 = vmatmul.bf16.gmra.mxu0 %v194
    %v2666 = vpop.f32.mrf.mxu0
    %v2667 = vadd.f32 0.0, %v2666
    %v2668 = vpop.f32.mrf.mxu0
    %v2669 = vadd.f32 0.0, %v2668
    %2670 = vdwg.mxu0
    %v2671 = vpack.c.bf16 %v2634, %v2632
    %v2672 = vpack.c.bf16 %v2639, %v2637
    %v2673 = vpack.c.bf16 %v2644, %v2642
    %v2674 = vpack.c.bf16 %v2649, %v2647
    %v2675 = vpack.c.bf16 %v2654, %v2652
    %v2676 = vpack.c.bf16 %v2659, %v2657
    %v2677 = vpack.c.bf16 %v2664, %v2662
    %v2678 = vpack.c.bf16 %v2669, %v2667
    %s2679 = scalar_lea.vmem %s4, 192
    %v2680 = vld [vmem:[%s2679] sm:$0xf]
    %v2681 = vld [vmem:[%s2679 + $0x4] sm:$0xf]
    %v2682 = vld [vmem:[%s2679 + $0x8] sm:$0xf]
    %v2683 = vld [vmem:[%s2679 + $0xc] sm:$0xf]
    %v2684 = vld [vmem:[%s2679 + $0x10] sm:$0xf]
    %v2685 = vld [vmem:[%s2679 + $0x14] sm:$0xf]
    %v2686 = vld [vmem:[%s2679 + $0x18] sm:$0xf]
    %v2687 = vld [vmem:[%s2679 + $0x1c] sm:$0xf]
    %v2688 = vld [vmem:[%s2679 + $0x20] sm:$0xf]
    %v2689 = vld [vmem:[%s2679 + $0x24] sm:$0xf]
    %v2690 = vld [vmem:[%s2679 + $0x28] sm:$0xf]
    %v2691 = vld [vmem:[%s2679 + $0x2c] sm:$0xf]
    %v2692 = vld [vmem:[%s2679 + $0x30] sm:$0xf]
    %v2693 = vld [vmem:[%s2679 + $0x34] sm:$0xf]
    %v2694 = vld [vmem:[%s2679 + $0x38] sm:$0xf]
    %v2695 = vld [vmem:[%s2679 + $0x3c] sm:$0xf]
    %v2712 = vunpack.c.l.b16 %v2680
    %v2713 = vunpack.c.l.b16 %v2681
    %v2714 = vunpack.c.l.b16 %v2682
    %v2715 = vunpack.c.l.b16 %v2683
    %v2716 = vunpack.c.l.b16 %v2684
    %v2717 = vunpack.c.l.b16 %v2685
    %v2718 = vunpack.c.l.b16 %v2686
    %v2719 = vunpack.c.l.b16 %v2687
    %v2720 = vunpack.c.l.b16 %v2688
    %v2721 = vunpack.c.l.b16 %v2689
    %v2722 = vunpack.c.l.b16 %v2690
    %v2723 = vunpack.c.l.b16 %v2691
    %v2724 = vunpack.c.l.b16 %v2692
    %v2725 = vunpack.c.l.b16 %v2693
    %v2726 = vunpack.c.l.b16 %v2694
    %v2727 = vunpack.c.l.b16 %v2695
    %v2728 = vpack.c.b16 %v2713, %v2712
    %v2729 = vpack.c.b16 %v2715, %v2714
    %v2730 = vpack.c.b16 %v2717, %v2716
    %v2731 = vpack.c.b16 %v2719, %v2718
    %v2732 = vpack.c.b16 %v2721, %v2720
    %v2733 = vpack.c.b16 %v2723, %v2722
    %v2734 = vpack.c.b16 %v2725, %v2724
    %v2735 = vpack.c.b16 %v2727, %v2726
    %2744 = vmatpush.bf16.msra.mxu0 %v2735
    %2745 = vmatpush.bf16.msra.mxu0 %v2734
    %2746 = vmatpush.bf16.msra.mxu0 %v2733
    %2747 = vmatpush.bf16.msra.mxu0 %v2732
    %2748 = vmatpush.bf16.msra.mxu0 %v2731
    %2749 = vmatpush.bf16.msra.mxu0 %v2730
    %2750 = vmatpush.bf16.msra.mxu0 %v2729
    %2751 = vmatpush.bf16.msra.mxu0 %v2728
    %2752 = vmatmul.bf16.gmra.mxu0 %v187
    %v2753 = vpop.f32.mrf.mxu0
    %v2754 = vadd.f32 0.0, %v2753
    %v2755 = vpop.f32.mrf.mxu0
    %v2756 = vadd.f32 0.0, %v2755
    %2757 = vmatmul.bf16.gmra.mxu0 %v188
    %v2758 = vpop.f32.mrf.mxu0
    %v2759 = vadd.f32 0.0, %v2758
    %v2760 = vpop.f32.mrf.mxu0
    %v2761 = vadd.f32 0.0, %v2760
    %2762 = vmatmul.bf16.gmra.mxu0 %v189
    %v2763 = vpop.f32.mrf.mxu0
    %v2764 = vadd.f32 0.0, %v2763
    %v2765 = vpop.f32.mrf.mxu0
    %v2766 = vadd.f32 0.0, %v2765
    %2767 = vmatmul.bf16.gmra.mxu0 %v190
    %v2768 = vpop.f32.mrf.mxu0
    %v2769 = vadd.f32 0.0, %v2768
    %v2770 = vpop.f32.mrf.mxu0
    %v2771 = vadd.f32 0.0, %v2770
    %2772 = vmatmul.bf16.gmra.mxu0 %v191
    %v2773 = vpop.f32.mrf.mxu0
    %v2774 = vadd.f32 0.0, %v2773
    %v2775 = vpop.f32.mrf.mxu0
    %v2776 = vadd.f32 0.0, %v2775
    %2777 = vmatmul.bf16.gmra.mxu0 %v192
    %v2778 = vpop.f32.mrf.mxu0
    %v2779 = vadd.f32 0.0, %v2778
    %v2780 = vpop.f32.mrf.mxu0
    %v2781 = vadd.f32 0.0, %v2780
    %2782 = vmatmul.bf16.gmra.mxu0 %v193
    %v2783 = vpop.f32.mrf.mxu0
    %v2784 = vadd.f32 0.0, %v2783
    %v2785 = vpop.f32.mrf.mxu0
    %v2786 = vadd.f32 0.0, %v2785
    %2787 = vmatmul.bf16.gmra.mxu0 %v194
    %v2788 = vpop.f32.mrf.mxu0
    %v2789 = vadd.f32 0.0, %v2788
    %v2790 = vpop.f32.mrf.mxu0
    %v2791 = vadd.f32 0.0, %v2790
    %2792 = vdwg.mxu0
    %v2793 = vpack.c.bf16 %v2756, %v2754
    %v2794 = vpack.c.bf16 %v2761, %v2759
    %v2795 = vpack.c.bf16 %v2766, %v2764
    %v2796 = vpack.c.bf16 %v2771, %v2769
    %v2797 = vpack.c.bf16 %v2776, %v2774
    %v2798 = vpack.c.bf16 %v2781, %v2779
    %v2799 = vpack.c.bf16 %v2786, %v2784
    %v2800 = vpack.c.bf16 %v2791, %v2789
    %s2801 = scalar_lea.vmem %s5, 192
    %v2802 = vld [vmem:[%s2801] sm:$0xf]
    %v2803 = vld [vmem:[%s2801 + $0x4] sm:$0xf]
    %v2804 = vld [vmem:[%s2801 + $0x8] sm:$0xf]
    %v2805 = vld [vmem:[%s2801 + $0xc] sm:$0xf]
    %v2806 = vld [vmem:[%s2801 + $0x10] sm:$0xf]
    %v2807 = vld [vmem:[%s2801 + $0x14] sm:$0xf]
    %v2808 = vld [vmem:[%s2801 + $0x18] sm:$0xf]
    %v2809 = vld [vmem:[%s2801 + $0x1c] sm:$0xf]
    %v2810 = vld [vmem:[%s2801 + $0x20] sm:$0xf]
    %v2811 = vld [vmem:[%s2801 + $0x24] sm:$0xf]
    %v2812 = vld [vmem:[%s2801 + $0x28] sm:$0xf]
    %v2813 = vld [vmem:[%s2801 + $0x2c] sm:$0xf]
    %v2814 = vld [vmem:[%s2801 + $0x30] sm:$0xf]
    %v2815 = vld [vmem:[%s2801 + $0x34] sm:$0xf]
    %v2816 = vld [vmem:[%s2801 + $0x38] sm:$0xf]
    %v2817 = vld [vmem:[%s2801 + $0x3c] sm:$0xf]
    %v2834 = vunpack.c.l.b16 %v2802
    %v2835 = vunpack.c.l.b16 %v2803
    %v2836 = vunpack.c.l.b16 %v2804
    %v2837 = vunpack.c.l.b16 %v2805
    %v2838 = vunpack.c.l.b16 %v2806
    %v2839 = vunpack.c.l.b16 %v2807
    %v2840 = vunpack.c.l.b16 %v2808
    %v2841 = vunpack.c.l.b16 %v2809
    %v2842 = vunpack.c.l.b16 %v2810
    %v2843 = vunpack.c.l.b16 %v2811
    %v2844 = vunpack.c.l.b16 %v2812
    %v2845 = vunpack.c.l.b16 %v2813
    %v2846 = vunpack.c.l.b16 %v2814
    %v2847 = vunpack.c.l.b16 %v2815
    %v2848 = vunpack.c.l.b16 %v2816
    %v2849 = vunpack.c.l.b16 %v2817
    %v2850 = vpack.c.b16 %v2835, %v2834
    %v2851 = vpack.c.b16 %v2837, %v2836
    %v2852 = vpack.c.b16 %v2839, %v2838
    %v2853 = vpack.c.b16 %v2841, %v2840
    %v2854 = vpack.c.b16 %v2843, %v2842
    %v2855 = vpack.c.b16 %v2845, %v2844
    %v2856 = vpack.c.b16 %v2847, %v2846
    %v2857 = vpack.c.b16 %v2849, %v2848
    %2866 = vmatpush.bf16.msra.mxu0 %v2857
    %2867 = vmatpush.bf16.msra.mxu0 %v2856
    %2868 = vmatpush.bf16.msra.mxu0 %v2855
    %2869 = vmatpush.bf16.msra.mxu0 %v2854
    %2870 = vmatpush.bf16.msra.mxu0 %v2853
    %2871 = vmatpush.bf16.msra.mxu0 %v2852
    %2872 = vmatpush.bf16.msra.mxu0 %v2851
    %2873 = vmatpush.bf16.msra.mxu0 %v2850
    %2874 = vmatmul.bf16.gmra.mxu0 %v187
    %v2875 = vpop.f32.mrf.mxu0
    %v2876 = vadd.f32 0.0, %v2875
    %v2877 = vpop.f32.mrf.mxu0
    %v2878 = vadd.f32 0.0, %v2877
    %2879 = vmatmul.bf16.gmra.mxu0 %v188
    %v2880 = vpop.f32.mrf.mxu0
    %v2881 = vadd.f32 0.0, %v2880
    %v2882 = vpop.f32.mrf.mxu0
    %v2883 = vadd.f32 0.0, %v2882
    %2884 = vmatmul.bf16.gmra.mxu0 %v189
    %v2885 = vpop.f32.mrf.mxu0
    %v2886 = vadd.f32 0.0, %v2885
    %v2887 = vpop.f32.mrf.mxu0
    %v2888 = vadd.f32 0.0, %v2887
    %2889 = vmatmul.bf16.gmra.mxu0 %v190
    %v2890 = vpop.f32.mrf.mxu0
    %v2891 = vadd.f32 0.0, %v2890
    %v2892 = vpop.f32.mrf.mxu0
    %v2893 = vadd.f32 0.0, %v2892
    %2894 = vmatmul.bf16.gmra.mxu0 %v191
    %v2895 = vpop.f32.mrf.mxu0
    %v2896 = vadd.f32 0.0, %v2895
    %v2897 = vpop.f32.mrf.mxu0
    %v2898 = vadd.f32 0.0, %v2897
    %2899 = vmatmul.bf16.gmra.mxu0 %v192
    %v2900 = vpop.f32.mrf.mxu0
    %v2901 = vadd.f32 0.0, %v2900
    %v2902 = vpop.f32.mrf.mxu0
    %v2903 = vadd.f32 0.0, %v2902
    %2904 = vmatmul.bf16.gmra.mxu0 %v193
    %v2905 = vpop.f32.mrf.mxu0
    %v2906 = vadd.f32 0.0, %v2905
    %v2907 = vpop.f32.mrf.mxu0
    %v2908 = vadd.f32 0.0, %v2907
    %2909 = vmatmul.bf16.gmra.mxu0 %v194
    %v2910 = vpop.f32.mrf.mxu0
    %v2911 = vadd.f32 0.0, %v2910
    %v2912 = vpop.f32.mrf.mxu0
    %v2913 = vadd.f32 0.0, %v2912
    %2914 = vdwg.mxu0
    %v2915 = vpack.c.bf16 %v2878, %v2876
    %v2916 = vpack.c.bf16 %v2883, %v2881
    %v2917 = vpack.c.bf16 %v2888, %v2886
    %v2918 = vpack.c.bf16 %v2893, %v2891
    %v2919 = vpack.c.bf16 %v2898, %v2896
    %v2920 = vpack.c.bf16 %v2903, %v2901
    %v2921 = vpack.c.bf16 %v2908, %v2906
    %v2922 = vpack.c.bf16 %v2913, %v2911
    %s2923 = scalar_lea.vmem %s2, 192
    %v2924 = vld [vmem:[%s2923] sm:$0xf]
    %v2925 = vld [vmem:[%s2923 + $0x4] sm:$0xf]
    %v2926 = vld [vmem:[%s2923 + $0x8] sm:$0xf]
    %v2927 = vld [vmem:[%s2923 + $0xc] sm:$0xf]
    %v2928 = vld [vmem:[%s2923 + $0x10] sm:$0xf]
    %v2929 = vld [vmem:[%s2923 + $0x14] sm:$0xf]
    %v2930 = vld [vmem:[%s2923 + $0x18] sm:$0xf]
    %v2931 = vld [vmem:[%s2923 + $0x1c] sm:$0xf]
    %v2932 = vld [vmem:[%s2923 + $0x20] sm:$0xf]
    %v2933 = vld [vmem:[%s2923 + $0x24] sm:$0xf]
    %v2934 = vld [vmem:[%s2923 + $0x28] sm:$0xf]
    %v2935 = vld [vmem:[%s2923 + $0x2c] sm:$0xf]
    %v2936 = vld [vmem:[%s2923 + $0x30] sm:$0xf]
    %v2937 = vld [vmem:[%s2923 + $0x34] sm:$0xf]
    %v2938 = vld [vmem:[%s2923 + $0x38] sm:$0xf]
    %v2939 = vld [vmem:[%s2923 + $0x3c] sm:$0xf]
    %v2940 = vunpack.c.l.bf16 %v2924
    %v2941 = vunpack.c.l.bf16 %v2925
    %v2942 = vunpack.c.l.bf16 %v2926
    %v2943 = vunpack.c.l.bf16 %v2927
    %v2944 = vunpack.c.l.bf16 %v2928
    %v2945 = vunpack.c.l.bf16 %v2929
    %v2946 = vunpack.c.l.bf16 %v2930
    %v2947 = vunpack.c.l.bf16 %v2931
    %v2948 = vunpack.c.l.bf16 %v2932
    %v2949 = vunpack.c.l.bf16 %v2933
    %v2950 = vunpack.c.l.bf16 %v2934
    %v2951 = vunpack.c.l.bf16 %v2935
    %v2952 = vunpack.c.l.bf16 %v2936
    %v2953 = vunpack.c.l.bf16 %v2937
    %v2954 = vunpack.c.l.bf16 %v2938
    %v2955 = vunpack.c.l.bf16 %v2939
    %v2957 = vsel %vm590, %v2671, 0
    %v2960 = vsel %vm590, %v2672, 0
    %v2963 = vsel %vm590, %v2673, 0
    %v2966 = vsel %vm590, %v2674, 0
    %v2969 = vsel %vm590, %v2675, 0
    %v2972 = vsel %vm590, %v2676, 0
    %v2975 = vsel %vm590, %v2677, 0
    %v2978 = vsel %vm590, %v2678, 0
    %v2981 = vsel %vm590, %v2793, 0
    %v2984 = vsel %vm590, %v2794, 0
    %v2987 = vsel %vm590, %v2795, 0
    %v2990 = vsel %vm590, %v2796, 0
    %v2993 = vsel %vm590, %v2797, 0
    %v2996 = vsel %vm590, %v2798, 0
    %v2999 = vsel %vm590, %v2799, 0
    %v3002 = vsel %vm590, %v2800, 0
    %3004 = vmatpush.bf16.xpose.msra.mxu0 %v3002
    %3005 = vmatpush.bf16.xpose.msra.mxu0 %v2999
    %3006 = vmatpush.bf16.xpose.msra.mxu0 %v2996
    %3007 = vmatpush.bf16.xpose.msra.mxu0 %v2993
    %3008 = vmatpush.bf16.xpose.msra.mxu0 %v2990
    %3009 = vmatpush.bf16.xpose.msra.mxu0 %v2987
    %3010 = vmatpush.bf16.xpose.msra.mxu0 %v2984
    %3011 = vmatpush.bf16.xpose.msra.mxu0 %v2981
    %3012 = vmatmul.bf16.gmra.mxu0 %v2957
    %v3013 = vpop.f32.mrf.mxu0
    %v3014 = vadd.f32 %v2940, %v3013
    %v3015 = vpop.f32.mrf.mxu0
    %v3016 = vadd.f32 %v2941, %v3015
    %3017 = vmatmul.bf16.gmra.mxu0 %v2960
    %v3018 = vpop.f32.mrf.mxu0
    %v3019 = vadd.f32 %v2942, %v3018
    %v3020 = vpop.f32.mrf.mxu0
    %v3021 = vadd.f32 %v2943, %v3020
    %3022 = vmatmul.bf16.gmra.mxu0 %v2963
    %v3023 = vpop.f32.mrf.mxu0
    %v3024 = vadd.f32 %v2944, %v3023
    %v3025 = vpop.f32.mrf.mxu0
    %v3026 = vadd.f32 %v2945, %v3025
    %3027 = vmatmul.bf16.gmra.mxu0 %v2966
    %v3028 = vpop.f32.mrf.mxu0
    %v3029 = vadd.f32 %v2946, %v3028
    %v3030 = vpop.f32.mrf.mxu0
    %v3031 = vadd.f32 %v2947, %v3030
    %3032 = vmatmul.bf16.gmra.mxu0 %v2969
    %v3033 = vpop.f32.mrf.mxu0
    %v3034 = vadd.f32 %v2948, %v3033
    %v3035 = vpop.f32.mrf.mxu0
    %v3036 = vadd.f32 %v2949, %v3035
    %3037 = vmatmul.bf16.gmra.mxu0 %v2972
    %v3038 = vpop.f32.mrf.mxu0
    %v3039 = vadd.f32 %v2950, %v3038
    %v3040 = vpop.f32.mrf.mxu0
    %v3041 = vadd.f32 %v2951, %v3040
    %3042 = vmatmul.bf16.gmra.mxu0 %v2975
    %v3043 = vpop.f32.mrf.mxu0
    %v3044 = vadd.f32 %v2952, %v3043
    %v3045 = vpop.f32.mrf.mxu0
    %v3046 = vadd.f32 %v2953, %v3045
    %3047 = vmatmul.bf16.gmra.mxu0 %v2978
    %v3048 = vpop.f32.mrf.mxu0
    %v3049 = vadd.f32 %v2954, %v3048
    %v3050 = vpop.f32.mrf.mxu0
    %v3051 = vadd.f32 %v2955, %v3050
    %3052 = vdwg.mxu0
    %3053 = vmax.xlane.f32.xlu0 %v3014
    %v3054 = vpop.xlane.xlu0 %3053
    %3055 = vmax.xlane.f32.xlu0 %v3016
    %v3056 = vpop.xlane.xlu0 %3055
    %3057 = vmax.xlane.f32.xlu0 %v3019
    %v3058 = vpop.xlane.xlu0 %3057
    %3059 = vmax.xlane.f32.xlu0 %v3021
    %v3060 = vpop.xlane.xlu0 %3059
    %3061 = vmax.xlane.f32.xlu0 %v3024
    %v3062 = vpop.xlane.xlu0 %3061
    %3063 = vmax.xlane.f32.xlu0 %v3026
    %v3064 = vpop.xlane.xlu0 %3063
    %3065 = vmax.xlane.f32.xlu0 %v3029
    %v3066 = vpop.xlane.xlu0 %3065
    %3067 = vmax.xlane.f32.xlu0 %v3031
    %v3068 = vpop.xlane.xlu0 %3067
    %3069 = vmax.xlane.f32.xlu0 %v3034
    %v3070 = vpop.xlane.xlu0 %3069
    %3071 = vmax.xlane.f32.xlu0 %v3036
    %v3072 = vpop.xlane.xlu0 %3071
    %3073 = vmax.xlane.f32.xlu0 %v3039
    %v3074 = vpop.xlane.xlu0 %3073
    %3075 = vmax.xlane.f32.xlu0 %v3041
    %v3076 = vpop.xlane.xlu0 %3075
    %3077 = vmax.xlane.f32.xlu0 %v3044
    %v3078 = vpop.xlane.xlu0 %3077
    %3079 = vmax.xlane.f32.xlu0 %v3046
    %v3080 = vpop.xlane.xlu0 %3079
    %3081 = vmax.xlane.f32.xlu0 %v3049
    %v3082 = vpop.xlane.xlu0 %3081
    %3083 = vmax.xlane.f32.xlu0 %v3051
    %v3084 = vpop.xlane.xlu0 %3083
    %v3085 = vsub.f32 %v3014, %v3054
    %v3086 = vsub.f32 %v3016, %v3056
    %v3087 = vsub.f32 %v3019, %v3058
    %v3088 = vsub.f32 %v3021, %v3060
    %v3089 = vsub.f32 %v3024, %v3062
    %v3090 = vsub.f32 %v3026, %v3064
    %v3091 = vsub.f32 %v3029, %v3066
    %v3092 = vsub.f32 %v3031, %v3068
    %v3093 = vsub.f32 %v3034, %v3070
    %v3094 = vsub.f32 %v3036, %v3072
    %v3095 = vsub.f32 %v3039, %v3074
    %v3096 = vsub.f32 %v3041, %v3076
    %v3097 = vsub.f32 %v3044, %v3078
    %v3098 = vsub.f32 %v3046, %v3080
    %v3099 = vsub.f32 %v3049, %v3082
    %v3100 = vsub.f32 %v3051, %v3084
    %v3101 = vmul.f32 %v3085, 1.442695
    %v3102 = vpow.pop %v3101
    %v3103 = vmul.f32 %v3086, 1.442695
    %v3104 = vpow.pop %v3103
    %v3105 = vmul.f32 %v3087, 1.442695
    %v3106 = vpow.pop %v3105
    %v3107 = vmul.f32 %v3088, 1.442695
    %v3108 = vpow.pop %v3107
    %v3109 = vmul.f32 %v3089, 1.442695
    %v3110 = vpow.pop %v3109
    %v3111 = vmul.f32 %v3090, 1.442695
    %v3112 = vpow.pop %v3111
    %v3113 = vmul.f32 %v3091, 1.442695
    %v3114 = vpow.pop %v3113
    %v3115 = vmul.f32 %v3092, 1.442695
    %v3116 = vpow.pop %v3115
    %v3117 = vmul.f32 %v3093, 1.442695
    %v3118 = vpow.pop %v3117
    %v3119 = vmul.f32 %v3094, 1.442695
    %v3120 = vpow.pop %v3119
    %v3121 = vmul.f32 %v3095, 1.442695
    %v3122 = vpow.pop %v3121
    %v3123 = vmul.f32 %v3096, 1.442695
    %v3124 = vpow.pop %v3123
    %v3125 = vmul.f32 %v3097, 1.442695
    %v3126 = vpow.pop %v3125
    %v3127 = vmul.f32 %v3098, 1.442695
    %v3128 = vpow.pop %v3127
    %v3129 = vmul.f32 %v3099, 1.442695
    %v3130 = vpow.pop %v3129
    %v3131 = vmul.f32 %v3100, 1.442695
    %v3132 = vpow.pop %v3131
    %3133 = vadd.xlane.f32.xlu0 %v3102
    %v3134 = vpop.xlane.xlu0 %3133
    %3135 = vadd.xlane.f32.xlu0 %v3104
    %v3136 = vpop.xlane.xlu0 %3135
    %3137 = vadd.xlane.f32.xlu0 %v3106
    %v3138 = vpop.xlane.xlu0 %3137
    %3139 = vadd.xlane.f32.xlu0 %v3108
    %v3140 = vpop.xlane.xlu0 %3139
    %3141 = vadd.xlane.f32.xlu0 %v3110
    %v3142 = vpop.xlane.xlu0 %3141
    %3143 = vadd.xlane.f32.xlu0 %v3112
    %v3144 = vpop.xlane.xlu0 %3143
    %3145 = vadd.xlane.f32.xlu0 %v3114
    %v3146 = vpop.xlane.xlu0 %3145
    %3147 = vadd.xlane.f32.xlu0 %v3116
    %v3148 = vpop.xlane.xlu0 %3147
    %3149 = vadd.xlane.f32.xlu0 %v3118
    %v3150 = vpop.xlane.xlu0 %3149
    %3151 = vadd.xlane.f32.xlu0 %v3120
    %v3152 = vpop.xlane.xlu0 %3151
    %3153 = vadd.xlane.f32.xlu0 %v3122
    %v3154 = vpop.xlane.xlu0 %3153
    %3155 = vadd.xlane.f32.xlu0 %v3124
    %v3156 = vpop.xlane.xlu0 %3155
    %3157 = vadd.xlane.f32.xlu0 %v3126
    %v3158 = vpop.xlane.xlu0 %3157
    %3159 = vadd.xlane.f32.xlu0 %v3128
    %v3160 = vpop.xlane.xlu0 %3159
    %3161 = vadd.xlane.f32.xlu0 %v3130
    %v3162 = vpop.xlane.xlu0 %3161
    %3163 = vadd.xlane.f32.xlu0 %v3132
    %v3164 = vpop.xlane.xlu0 %3163
    %v3165 = vrcp.pop %v3134
    %v3166 = vrcp.pop %v3136
    %v3167 = vrcp.pop %v3138
    %v3168 = vrcp.pop %v3140
    %v3169 = vrcp.pop %v3142
    %v3170 = vrcp.pop %v3144
    %v3171 = vrcp.pop %v3146
    %v3172 = vrcp.pop %v3148
    %v3173 = vrcp.pop %v3150
    %v3174 = vrcp.pop %v3152
    %v3175 = vrcp.pop %v3154
    %v3176 = vrcp.pop %v3156
    %v3177 = vrcp.pop %v3158
    %v3178 = vrcp.pop %v3160
    %v3179 = vrcp.pop %v3162
    %v3180 = vrcp.pop %v3164
    %v3181 = vmul.f32 %v3102, %v3165
    %v3182 = vmul.f32 %v3104, %v3166
    %v3183 = vmul.f32 %v3106, %v3167
    %v3184 = vmul.f32 %v3108, %v3168
    %v3185 = vmul.f32 %v3110, %v3169
    %v3186 = vmul.f32 %v3112, %v3170
    %v3187 = vmul.f32 %v3114, %v3171
    %v3188 = vmul.f32 %v3116, %v3172
    %v3189 = vmul.f32 %v3118, %v3173
    %v3190 = vmul.f32 %v3120, %v3174
    %v3191 = vmul.f32 %v3122, %v3175
    %v3192 = vmul.f32 %v3124, %v3176
    %v3193 = vmul.f32 %v3126, %v3177
    %v3194 = vmul.f32 %v3128, %v3178
    %v3195 = vmul.f32 %v3130, %v3179
    %v3196 = vmul.f32 %v3132, %v3180
    %v3197 = vpack.c.bf16 %v3182, %v3181
    %v3198 = vpack.c.bf16 %v3184, %v3183
    %v3199 = vpack.c.bf16 %v3186, %v3185
    %v3200 = vpack.c.bf16 %v3188, %v3187
    %v3201 = vpack.c.bf16 %v3190, %v3189
    %v3202 = vpack.c.bf16 %v3192, %v3191
    %v3203 = vpack.c.bf16 %v3194, %v3193
    %v3204 = vpack.c.bf16 %v3196, %v3195
    %3205 = vmatpush.bf16.msra.mxu0 %v2922
    %3206 = vmatpush.bf16.msra.mxu0 %v2921
    %3207 = vmatpush.bf16.msra.mxu0 %v2920
    %3208 = vmatpush.bf16.msra.mxu0 %v2919
    %3209 = vmatpush.bf16.msra.mxu0 %v2918
    %3210 = vmatpush.bf16.msra.mxu0 %v2917
    %3211 = vmatpush.bf16.msra.mxu0 %v2916
    %3212 = vmatpush.bf16.msra.mxu0 %v2915
    %3213 = vmatmul.bf16.gmra.mxu0 %v3197
    %v3214 = vpop.f32.mrf.mxu0
    %v3215 = vadd.f32 0.0, %v3214
    %v3216 = vpop.f32.mrf.mxu0
    %v3217 = vadd.f32 0.0, %v3216
    %3218 = vmatmul.bf16.gmra.mxu0 %v3198
    %v3219 = vpop.f32.mrf.mxu0
    %v3220 = vadd.f32 0.0, %v3219
    %v3221 = vpop.f32.mrf.mxu0
    %v3222 = vadd.f32 0.0, %v3221
    %3223 = vmatmul.bf16.gmra.mxu0 %v3199
    %v3224 = vpop.f32.mrf.mxu0
    %v3225 = vadd.f32 0.0, %v3224
    %v3226 = vpop.f32.mrf.mxu0
    %v3227 = vadd.f32 0.0, %v3226
    %3228 = vmatmul.bf16.gmra.mxu0 %v3200
    %v3229 = vpop.f32.mrf.mxu0
    %v3230 = vadd.f32 0.0, %v3229
    %v3231 = vpop.f32.mrf.mxu0
    %v3232 = vadd.f32 0.0, %v3231
    %3233 = vmatmul.bf16.gmra.mxu0 %v3201
    %v3234 = vpop.f32.mrf.mxu0
    %v3235 = vadd.f32 0.0, %v3234
    %v3236 = vpop.f32.mrf.mxu0
    %v3237 = vadd.f32 0.0, %v3236
    %3238 = vmatmul.bf16.gmra.mxu0 %v3202
    %v3239 = vpop.f32.mrf.mxu0
    %v3240 = vadd.f32 0.0, %v3239
    %v3241 = vpop.f32.mrf.mxu0
    %v3242 = vadd.f32 0.0, %v3241
    %3243 = vmatmul.bf16.gmra.mxu0 %v3203
    %v3244 = vpop.f32.mrf.mxu0
    %v3245 = vadd.f32 0.0, %v3244
    %v3246 = vpop.f32.mrf.mxu0
    %v3247 = vadd.f32 0.0, %v3246
    %3248 = vmatmul.bf16.gmra.mxu0 %v3204
    %v3249 = vpop.f32.mrf.mxu0
    %v3250 = vadd.f32 0.0, %v3249
    %v3251 = vpop.f32.mrf.mxu0
    %v3252 = vadd.f32 0.0, %v3251
    %3253 = vdwg.mxu0
    %v3254 = vpack.c.bf16 %v3217, %v3215
    %v3255 = vpack.c.bf16 %v3222, %v3220
    %v3256 = vpack.c.bf16 %v3227, %v3225
    %v3257 = vpack.c.bf16 %v3232, %v3230
    %v3258 = vpack.c.bf16 %v3237, %v3235
    %v3259 = vpack.c.bf16 %v3242, %v3240
    %v3260 = vpack.c.bf16 %v3247, %v3245
    %v3261 = vpack.c.bf16 %v3252, %v3250
    %s3262 = scalar_lea.vmem %s6, 12
    %v3263 = vld [vmem:[%s3262] sm:$0xf]
    %v3265 = vsel %vm590, %v3254, 0
    %v3268 = vsel %vm590, %v3255, 0
    %v3271 = vsel %vm590, %v3256, 0
    %v3274 = vsel %vm590, %v3257, 0
    %v3277 = vsel %vm590, %v3258, 0
    %v3280 = vsel %vm590, %v3259, 0
    %v3283 = vsel %vm590, %v3260, 0
    %v3286 = vsel %vm590, %v3261, 0
    %v3289 = vsel %vm1629, %v3263, 0
    %3291 = vmatpush.bf16.msra.mxu0 0
    %3292 = vmatpush.bf16.msra.mxu0 0
    %3293 = vmatpush.bf16.msra.mxu0 0
    %3294 = vmatpush.bf16.msra.mxu0 0
    %3295 = vmatpush.bf16.msra.mxu0 0
    %3296 = vmatpush.bf16.msra.mxu0 0
    %3297 = vmatpush.bf16.msra.mxu0 0
    %3298 = vmatpush.bf16.msra.mxu0 %v3289
    %3299 = vmatmul.bf16.gmra.mxu0 %v3265
    %v3300 = vpop.f32.mrf.mxu0
    %v3301 = vadd.f32 0.0, %v3300
    %v3302 = vpop.f32.mrf.mxu0
    %v3303 = vadd.f32 0.0, %v3302
    %3304 = vmatmul.bf16.gmra.mxu0 %v3268
    %v3305 = vpop.f32.mrf.mxu0
    %v3306 = vadd.f32 0.0, %v3305
    %v3307 = vpop.f32.mrf.mxu0
    %v3308 = vadd.f32 0.0, %v3307
    %3309 = vmatmul.bf16.gmra.mxu0 %v3271
    %v3310 = vpop.f32.mrf.mxu0
    %v3311 = vadd.f32 0.0, %v3310
    %v3312 = vpop.f32.mrf.mxu0
    %v3313 = vadd.f32 0.0, %v3312
    %3314 = vmatmul.bf16.gmra.mxu0 %v3274
    %v3315 = vpop.f32.mrf.mxu0
    %v3316 = vadd.f32 0.0, %v3315
    %v3317 = vpop.f32.mrf.mxu0
    %v3318 = vadd.f32 0.0, %v3317
    %3319 = vmatmul.bf16.gmra.mxu0 %v3277
    %v3320 = vpop.f32.mrf.mxu0
    %v3321 = vadd.f32 0.0, %v3320
    %v3322 = vpop.f32.mrf.mxu0
    %v3323 = vadd.f32 0.0, %v3322
    %3324 = vmatmul.bf16.gmra.mxu0 %v3280
    %v3325 = vpop.f32.mrf.mxu0
    %v3326 = vadd.f32 0.0, %v3325
    %v3327 = vpop.f32.mrf.mxu0
    %v3328 = vadd.f32 0.0, %v3327
    %3329 = vmatmul.bf16.gmra.mxu0 %v3283
    %v3330 = vpop.f32.mrf.mxu0
    %v3331 = vadd.f32 0.0, %v3330
    %v3332 = vpop.f32.mrf.mxu0
    %v3333 = vadd.f32 0.0, %v3332
    %3334 = vmatmul.bf16.gmra.mxu0 %v3286
    %v3335 = vpop.f32.mrf.mxu0
    %v3336 = vadd.f32 0.0, %v3335
    %v3337 = vpop.f32.mrf.mxu0
    %v3338 = vadd.f32 0.0, %v3337
    %3339 = vdwg.mxu0
    %v3340 = vadd.f32 %v2541, %v3301
    %v3341 = vadd.f32 %v2542, %v3303
    %v3342 = vadd.f32 %v2543, %v3306
    %v3343 = vadd.f32 %v2544, %v3308
    %v3344 = vadd.f32 %v2545, %v3311
    %v3345 = vadd.f32 %v2546, %v3313
    %v3346 = vadd.f32 %v2547, %v3316
    %v3347 = vadd.f32 %v2548, %v3318
    %v3348 = vadd.f32 %v2549, %v3321
    %v3349 = vadd.f32 %v2550, %v3323
    %v3350 = vadd.f32 %v2551, %v3326
    %v3351 = vadd.f32 %v2552, %v3328
    %v3352 = vadd.f32 %v2553, %v3331
    %v3353 = vadd.f32 %v2554, %v3333
    %v3354 = vadd.f32 %v2555, %v3336
    %v3355 = vadd.f32 %v2556, %v3338
    %v3356 = vadd.f32 %v3340, %v132
    %v3357 = vadd.f32 %v3341, %v134
    %v3358 = vadd.f32 %v3342, %v137
    %v3359 = vadd.f32 %v3343, %v139
    %v3360 = vadd.f32 %v3344, %v142
    %v3361 = vadd.f32 %v3345, %v144
    %v3362 = vadd.f32 %v3346, %v147
    %v3363 = vadd.f32 %v3347, %v149
    %v3364 = vadd.f32 %v3348, %v152
    %v3365 = vadd.f32 %v3349, %v154
    %v3366 = vadd.f32 %v3350, %v157
    %v3367 = vadd.f32 %v3351, %v159
    %v3368 = vadd.f32 %v3352, %v162
    %v3369 = vadd.f32 %v3353, %v164
    %v3370 = vadd.f32 %v3354, %v167
    %v3371 = vadd.f32 %v3355, %v169
    %v3372 = vpack.c.bf16 %v3357, %v3356
    %v3373 = vpack.c.bf16 %v3359, %v3358
    %v3374 = vpack.c.bf16 %v3361, %v3360
    %v3375 = vpack.c.bf16 %v3363, %v3362
    %v3376 = vpack.c.bf16 %v3365, %v3364
    %v3377 = vpack.c.bf16 %v3367, %v3366
    %v3378 = vpack.c.bf16 %v3369, %v3368
    %v3379 = vpack.c.bf16 %v3371, %v3370
    %s3380 = scalar_lea.vmem %s3, 256
    %v3381 = vld [vmem:[%s3380] sm:$0xf]
    %v3382 = vld [vmem:[%s3380 + $0x4] sm:$0xf]
    %v3383 = vld [vmem:[%s3380 + $0x8] sm:$0xf]
    %v3384 = vld [vmem:[%s3380 + $0xc] sm:$0xf]
    %v3385 = vld [vmem:[%s3380 + $0x10] sm:$0xf]
    %v3386 = vld [vmem:[%s3380 + $0x14] sm:$0xf]
    %v3387 = vld [vmem:[%s3380 + $0x18] sm:$0xf]
    %v3388 = vld [vmem:[%s3380 + $0x1c] sm:$0xf]
    %v3389 = vld [vmem:[%s3380 + $0x20] sm:$0xf]
    %v3390 = vld [vmem:[%s3380 + $0x24] sm:$0xf]
    %v3391 = vld [vmem:[%s3380 + $0x28] sm:$0xf]
    %v3392 = vld [vmem:[%s3380 + $0x2c] sm:$0xf]
    %v3393 = vld [vmem:[%s3380 + $0x30] sm:$0xf]
    %v3394 = vld [vmem:[%s3380 + $0x34] sm:$0xf]
    %v3395 = vld [vmem:[%s3380 + $0x38] sm:$0xf]
    %v3396 = vld [vmem:[%s3380 + $0x3c] sm:$0xf]
    %v3413 = vunpack.c.l.b16 %v3381
    %v3414 = vunpack.c.l.b16 %v3382
    %v3415 = vunpack.c.l.b16 %v3383
    %v3416 = vunpack.c.l.b16 %v3384
    %v3417 = vunpack.c.l.b16 %v3385
    %v3418 = vunpack.c.l.b16 %v3386
    %v3419 = vunpack.c.l.b16 %v3387
    %v3420 = vunpack.c.l.b16 %v3388
    %v3421 = vunpack.c.l.b16 %v3389
    %v3422 = vunpack.c.l.b16 %v3390
    %v3423 = vunpack.c.l.b16 %v3391
    %v3424 = vunpack.c.l.b16 %v3392
    %v3425 = vunpack.c.l.b16 %v3393
    %v3426 = vunpack.c.l.b16 %v3394
    %v3427 = vunpack.c.l.b16 %v3395
    %v3428 = vunpack.c.l.b16 %v3396
    %v3429 = vpack.c.b16 %v3414, %v3413
    %v3430 = vpack.c.b16 %v3416, %v3415
    %v3431 = vpack.c.b16 %v3418, %v3417
    %v3432 = vpack.c.b16 %v3420, %v3419
    %v3433 = vpack.c.b16 %v3422, %v3421
    %v3434 = vpack.c.b16 %v3424, %v3423
    %v3435 = vpack.c.b16 %v3426, %v3425
    %v3436 = vpack.c.b16 %v3428, %v3427
    %3445 = vmatpush.bf16.msra.mxu0 %v3436
    %3446 = vmatpush.bf16.msra.mxu0 %v3435
    %3447 = vmatpush.bf16.msra.mxu0 %v3434
    %3448 = vmatpush.bf16.msra.mxu0 %v3433
    %3449 = vmatpush.bf16.msra.mxu0 %v3432
    %3450 = vmatpush.bf16.msra.mxu0 %v3431
    %3451 = vmatpush.bf16.msra.mxu0 %v3430
    %3452 = vmatpush.bf16.msra.mxu0 %v3429
    %3453 = vmatmul.bf16.gmra.mxu0 %v3372
    %v3454 = vpop.f32.mrf.mxu0
    %v3455 = vadd.f32 0.0, %v3454
    %v3456 = vpop.f32.mrf.mxu0
    %v3457 = vadd.f32 0.0, %v3456
    %3458 = vmatmul.bf16.gmra.mxu0 %v3373
    %v3459 = vpop.f32.mrf.mxu0
    %v3460 = vadd.f32 0.0, %v3459
    %v3461 = vpop.f32.mrf.mxu0
    %v3462 = vadd.f32 0.0, %v3461
    %3463 = vmatmul.bf16.gmra.mxu0 %v3374
    %v3464 = vpop.f32.mrf.mxu0
    %v3465 = vadd.f32 0.0, %v3464
    %v3466 = vpop.f32.mrf.mxu0
    %v3467 = vadd.f32 0.0, %v3466
    %3468 = vmatmul.bf16.gmra.mxu0 %v3375
    %v3469 = vpop.f32.mrf.mxu0
    %v3470 = vadd.f32 0.0, %v3469
    %v3471 = vpop.f32.mrf.mxu0
    %v3472 = vadd.f32 0.0, %v3471
    %3473 = vmatmul.bf16.gmra.mxu0 %v3376
    %v3474 = vpop.f32.mrf.mxu0
    %v3475 = vadd.f32 0.0, %v3474
    %v3476 = vpop.f32.mrf.mxu0
    %v3477 = vadd.f32 0.0, %v3476
    %3478 = vmatmul.bf16.gmra.mxu0 %v3377
    %v3479 = vpop.f32.mrf.mxu0
    %v3480 = vadd.f32 0.0, %v3479
    %v3481 = vpop.f32.mrf.mxu0
    %v3482 = vadd.f32 0.0, %v3481
    %3483 = vmatmul.bf16.gmra.mxu0 %v3378
    %v3484 = vpop.f32.mrf.mxu0
    %v3485 = vadd.f32 0.0, %v3484
    %v3486 = vpop.f32.mrf.mxu0
    %v3487 = vadd.f32 0.0, %v3486
    %3488 = vmatmul.bf16.gmra.mxu0 %v3379
    %v3489 = vpop.f32.mrf.mxu0
    %v3490 = vadd.f32 0.0, %v3489
    %v3491 = vpop.f32.mrf.mxu0
    %v3492 = vadd.f32 0.0, %v3491
    %3493 = vdwg.mxu0
    %v3494 = vpack.c.bf16 %v3457, %v3455
    %v3495 = vpack.c.bf16 %v3462, %v3460
    %v3496 = vpack.c.bf16 %v3467, %v3465
    %v3497 = vpack.c.bf16 %v3472, %v3470
    %v3498 = vpack.c.bf16 %v3477, %v3475
    %v3499 = vpack.c.bf16 %v3482, %v3480
    %v3500 = vpack.c.bf16 %v3487, %v3485
    %v3501 = vpack.c.bf16 %v3492, %v3490
    %s3502 = scalar_lea.vmem %s4, 256
    %v3503 = vld [vmem:[%s3502] sm:$0xf]
    %v3504 = vld [vmem:[%s3502 + $0x4] sm:$0xf]
    %v3505 = vld [vmem:[%s3502 + $0x8] sm:$0xf]
    %v3506 = vld [vmem:[%s3502 + $0xc] sm:$0xf]
    %v3507 = vld [vmem:[%s3502 + $0x10] sm:$0xf]
    %v3508 = vld [vmem:[%s3502 + $0x14] sm:$0xf]
    %v3509 = vld [vmem:[%s3502 + $0x18] sm:$0xf]
    %v3510 = vld [vmem:[%s3502 + $0x1c] sm:$0xf]
    %v3511 = vld [vmem:[%s3502 + $0x20] sm:$0xf]
    %v3512 = vld [vmem:[%s3502 + $0x24] sm:$0xf]
    %v3513 = vld [vmem:[%s3502 + $0x28] sm:$0xf]
    %v3514 = vld [vmem:[%s3502 + $0x2c] sm:$0xf]
    %v3515 = vld [vmem:[%s3502 + $0x30] sm:$0xf]
    %v3516 = vld [vmem:[%s3502 + $0x34] sm:$0xf]
    %v3517 = vld [vmem:[%s3502 + $0x38] sm:$0xf]
    %v3518 = vld [vmem:[%s3502 + $0x3c] sm:$0xf]
    %v3535 = vunpack.c.l.b16 %v3503
    %v3536 = vunpack.c.l.b16 %v3504
    %v3537 = vunpack.c.l.b16 %v3505
    %v3538 = vunpack.c.l.b16 %v3506
    %v3539 = vunpack.c.l.b16 %v3507
    %v3540 = vunpack.c.l.b16 %v3508
    %v3541 = vunpack.c.l.b16 %v3509
    %v3542 = vunpack.c.l.b16 %v3510
    %v3543 = vunpack.c.l.b16 %v3511
    %v3544 = vunpack.c.l.b16 %v3512
    %v3545 = vunpack.c.l.b16 %v3513
    %v3546 = vunpack.c.l.b16 %v3514
    %v3547 = vunpack.c.l.b16 %v3515
    %v3548 = vunpack.c.l.b16 %v3516
    %v3549 = vunpack.c.l.b16 %v3517
    %v3550 = vunpack.c.l.b16 %v3518
    %v3551 = vpack.c.b16 %v3536, %v3535
    %v3552 = vpack.c.b16 %v3538, %v3537
    %v3553 = vpack.c.b16 %v3540, %v3539
    %v3554 = vpack.c.b16 %v3542, %v3541
    %v3555 = vpack.c.b16 %v3544, %v3543
    %v3556 = vpack.c.b16 %v3546, %v3545
    %v3557 = vpack.c.b16 %v3548, %v3547
    %v3558 = vpack.c.b16 %v3550, %v3549
    %3567 = vmatpush.bf16.msra.mxu0 %v3558
    %3568 = vmatpush.bf16.msra.mxu0 %v3557
    %3569 = vmatpush.bf16.msra.mxu0 %v3556
    %3570 = vmatpush.bf16.msra.mxu0 %v3555
    %3571 = vmatpush.bf16.msra.mxu0 %v3554
    %3572 = vmatpush.bf16.msra.mxu0 %v3553
    %3573 = vmatpush.bf16.msra.mxu0 %v3552
    %3574 = vmatpush.bf16.msra.mxu0 %v3551
    %3575 = vmatmul.bf16.gmra.mxu0 %v3372
    %v3576 = vpop.f32.mrf.mxu0
    %v3577 = vadd.f32 0.0, %v3576
    %v3578 = vpop.f32.mrf.mxu0
    %v3579 = vadd.f32 0.0, %v3578
    %3580 = vmatmul.bf16.gmra.mxu0 %v3373
    %v3581 = vpop.f32.mrf.mxu0
    %v3582 = vadd.f32 0.0, %v3581
    %v3583 = vpop.f32.mrf.mxu0
    %v3584 = vadd.f32 0.0, %v3583
    %3585 = vmatmul.bf16.gmra.mxu0 %v3374
    %v3586 = vpop.f32.mrf.mxu0
    %v3587 = vadd.f32 0.0, %v3586
    %v3588 = vpop.f32.mrf.mxu0
    %v3589 = vadd.f32 0.0, %v3588
    %3590 = vmatmul.bf16.gmra.mxu0 %v3375
    %v3591 = vpop.f32.mrf.mxu0
    %v3592 = vadd.f32 0.0, %v3591
    %v3593 = vpop.f32.mrf.mxu0
    %v3594 = vadd.f32 0.0, %v3593
    %3595 = vmatmul.bf16.gmra.mxu0 %v3376
    %v3596 = vpop.f32.mrf.mxu0
    %v3597 = vadd.f32 0.0, %v3596
    %v3598 = vpop.f32.mrf.mxu0
    %v3599 = vadd.f32 0.0, %v3598
    %3600 = vmatmul.bf16.gmra.mxu0 %v3377
    %v3601 = vpop.f32.mrf.mxu0
    %v3602 = vadd.f32 0.0, %v3601
    %v3603 = vpop.f32.mrf.mxu0
    %v3604 = vadd.f32 0.0, %v3603
    %3605 = vmatmul.bf16.gmra.mxu0 %v3378
    %v3606 = vpop.f32.mrf.mxu0
    %v3607 = vadd.f32 0.0, %v3606
    %v3608 = vpop.f32.mrf.mxu0
    %v3609 = vadd.f32 0.0, %v3608
    %3610 = vmatmul.bf16.gmra.mxu0 %v3379
    %v3611 = vpop.f32.mrf.mxu0
    %v3612 = vadd.f32 0.0, %v3611
    %v3613 = vpop.f32.mrf.mxu0
    %v3614 = vadd.f32 0.0, %v3613
    %3615 = vdwg.mxu0
    %v3616 = vpack.c.bf16 %v3579, %v3577
    %v3617 = vpack.c.bf16 %v3584, %v3582
    %v3618 = vpack.c.bf16 %v3589, %v3587
    %v3619 = vpack.c.bf16 %v3594, %v3592
    %v3620 = vpack.c.bf16 %v3599, %v3597
    %v3621 = vpack.c.bf16 %v3604, %v3602
    %v3622 = vpack.c.bf16 %v3609, %v3607
    %v3623 = vpack.c.bf16 %v3614, %v3612
    %s3624 = scalar_lea.vmem %s5, 256
    %v3625 = vld [vmem:[%s3624] sm:$0xf]
    %v3626 = vld [vmem:[%s3624 + $0x4] sm:$0xf]
    %v3627 = vld [vmem:[%s3624 + $0x8] sm:$0xf]
    %v3628 = vld [vmem:[%s3624 + $0xc] sm:$0xf]
    %v3629 = vld [vmem:[%s3624 + $0x10] sm:$0xf]
    %v3630 = vld [vmem:[%s3624 + $0x14] sm:$0xf]
    %v3631 = vld [vmem:[%s3624 + $0x18] sm:$0xf]
    %v3632 = vld [vmem:[%s3624 + $0x1c] sm:$0xf]
    %v3633 = vld [vmem:[%s3624 + $0x20] sm:$0xf]
    %v3634 = vld [vmem:[%s3624 + $0x24] sm:$0xf]
    %v3635 = vld [vmem:[%s3624 + $0x28] sm:$0xf]
    %v3636 = vld [vmem:[%s3624 + $0x2c] sm:$0xf]
    %v3637 = vld [vmem:[%s3624 + $0x30] sm:$0xf]
    %v3638 = vld [vmem:[%s3624 + $0x34] sm:$0xf]
    %v3639 = vld [vmem:[%s3624 + $0x38] sm:$0xf]
    %v3640 = vld [vmem:[%s3624 + $0x3c] sm:$0xf]
    %v3657 = vunpack.c.l.b16 %v3625
    %v3658 = vunpack.c.l.b16 %v3626
    %v3659 = vunpack.c.l.b16 %v3627
    %v3660 = vunpack.c.l.b16 %v3628
    %v3661 = vunpack.c.l.b16 %v3629
    %v3662 = vunpack.c.l.b16 %v3630
    %v3663 = vunpack.c.l.b16 %v3631
    %v3664 = vunpack.c.l.b16 %v3632
    %v3665 = vunpack.c.l.b16 %v3633
    %v3666 = vunpack.c.l.b16 %v3634
    %v3667 = vunpack.c.l.b16 %v3635
    %v3668 = vunpack.c.l.b16 %v3636
    %v3669 = vunpack.c.l.b16 %v3637
    %v3670 = vunpack.c.l.b16 %v3638
    %v3671 = vunpack.c.l.b16 %v3639
    %v3672 = vunpack.c.l.b16 %v3640
    %v3673 = vpack.c.b16 %v3658, %v3657
    %v3674 = vpack.c.b16 %v3660, %v3659
    %v3675 = vpack.c.b16 %v3662, %v3661
    %v3676 = vpack.c.b16 %v3664, %v3663
    %v3677 = vpack.c.b16 %v3666, %v3665
    %v3678 = vpack.c.b16 %v3668, %v3667
    %v3679 = vpack.c.b16 %v3670, %v3669
    %v3680 = vpack.c.b16 %v3672, %v3671
    %3689 = vmatpush.bf16.msra.mxu0 %v3680
    %3690 = vmatpush.bf16.msra.mxu0 %v3679
    %3691 = vmatpush.bf16.msra.mxu0 %v3678
    %3692 = vmatpush.bf16.msra.mxu0 %v3677
    %3693 = vmatpush.bf16.msra.mxu0 %v3676
    %3694 = vmatpush.bf16.msra.mxu0 %v3675
    %3695 = vmatpush.bf16.msra.mxu0 %v3674
    %3696 = vmatpush.bf16.msra.mxu0 %v3673
    %3697 = vmatmul.bf16.gmra.mxu0 %v3372
    %v3698 = vpop.f32.mrf.mxu0
    %v3699 = vadd.f32 0.0, %v3698
    %v3700 = vpop.f32.mrf.mxu0
    %v3701 = vadd.f32 0.0, %v3700
    %3702 = vmatmul.bf16.gmra.mxu0 %v3373
    %v3703 = vpop.f32.mrf.mxu0
    %v3704 = vadd.f32 0.0, %v3703
    %v3705 = vpop.f32.mrf.mxu0
    %v3706 = vadd.f32 0.0, %v3705
    %3707 = vmatmul.bf16.gmra.mxu0 %v3374
    %v3708 = vpop.f32.mrf.mxu0
    %v3709 = vadd.f32 0.0, %v3708
    %v3710 = vpop.f32.mrf.mxu0
    %v3711 = vadd.f32 0.0, %v3710
    %3712 = vmatmul.bf16.gmra.mxu0 %v3375
    %v3713 = vpop.f32.mrf.mxu0
    %v3714 = vadd.f32 0.0, %v3713
    %v3715 = vpop.f32.mrf.mxu0
    %v3716 = vadd.f32 0.0, %v3715
    %3717 = vmatmul.bf16.gmra.mxu0 %v3376
    %v3718 = vpop.f32.mrf.mxu0
    %v3719 = vadd.f32 0.0, %v3718
    %v3720 = vpop.f32.mrf.mxu0
    %v3721 = vadd.f32 0.0, %v3720
    %3722 = vmatmul.bf16.gmra.mxu0 %v3377
    %v3723 = vpop.f32.mrf.mxu0
    %v3724 = vadd.f32 0.0, %v3723
    %v3725 = vpop.f32.mrf.mxu0
    %v3726 = vadd.f32 0.0, %v3725
    %3727 = vmatmul.bf16.gmra.mxu0 %v3378
    %v3728 = vpop.f32.mrf.mxu0
    %v3729 = vadd.f32 0.0, %v3728
    %v3730 = vpop.f32.mrf.mxu0
    %v3731 = vadd.f32 0.0, %v3730
    %3732 = vmatmul.bf16.gmra.mxu0 %v3379
    %v3733 = vpop.f32.mrf.mxu0
    %v3734 = vadd.f32 0.0, %v3733
    %v3735 = vpop.f32.mrf.mxu0
    %v3736 = vadd.f32 0.0, %v3735
    %3737 = vdwg.mxu0
    %v3738 = vpack.c.bf16 %v3701, %v3699
    %v3739 = vpack.c.bf16 %v3706, %v3704
    %v3740 = vpack.c.bf16 %v3711, %v3709
    %v3741 = vpack.c.bf16 %v3716, %v3714
    %v3742 = vpack.c.bf16 %v3721, %v3719
    %v3743 = vpack.c.bf16 %v3726, %v3724
    %v3744 = vpack.c.bf16 %v3731, %v3729
    %v3745 = vpack.c.bf16 %v3736, %v3734
    %s3746 = scalar_lea.vmem %s2, 256
    %v3747 = vld [vmem:[%s3746] sm:$0xf]
    %v3748 = vld [vmem:[%s3746 + $0x4] sm:$0xf]
    %v3749 = vld [vmem:[%s3746 + $0x8] sm:$0xf]
    %v3750 = vld [vmem:[%s3746 + $0xc] sm:$0xf]
    %v3751 = vld [vmem:[%s3746 + $0x10] sm:$0xf]
    %v3752 = vld [vmem:[%s3746 + $0x14] sm:$0xf]
    %v3753 = vld [vmem:[%s3746 + $0x18] sm:$0xf]
    %v3754 = vld [vmem:[%s3746 + $0x1c] sm:$0xf]
    %v3755 = vld [vmem:[%s3746 + $0x20] sm:$0xf]
    %v3756 = vld [vmem:[%s3746 + $0x24] sm:$0xf]
    %v3757 = vld [vmem:[%s3746 + $0x28] sm:$0xf]
    %v3758 = vld [vmem:[%s3746 + $0x2c] sm:$0xf]
    %v3759 = vld [vmem:[%s3746 + $0x30] sm:$0xf]
    %v3760 = vld [vmem:[%s3746 + $0x34] sm:$0xf]
    %v3761 = vld [vmem:[%s3746 + $0x38] sm:$0xf]
    %v3762 = vld [vmem:[%s3746 + $0x3c] sm:$0xf]
    %v3763 = vunpack.c.l.bf16 %v3747
    %v3764 = vunpack.c.l.bf16 %v3748
    %v3765 = vunpack.c.l.bf16 %v3749
    %v3766 = vunpack.c.l.bf16 %v3750
    %v3767 = vunpack.c.l.bf16 %v3751
    %v3768 = vunpack.c.l.bf16 %v3752
    %v3769 = vunpack.c.l.bf16 %v3753
    %v3770 = vunpack.c.l.bf16 %v3754
    %v3771 = vunpack.c.l.bf16 %v3755
    %v3772 = vunpack.c.l.bf16 %v3756
    %v3773 = vunpack.c.l.bf16 %v3757
    %v3774 = vunpack.c.l.bf16 %v3758
    %v3775 = vunpack.c.l.bf16 %v3759
    %v3776 = vunpack.c.l.bf16 %v3760
    %v3777 = vunpack.c.l.bf16 %v3761
    %v3778 = vunpack.c.l.bf16 %v3762
    %v3780 = vsel %vm590, %v3494, 0
    %v3783 = vsel %vm590, %v3495, 0
    %v3786 = vsel %vm590, %v3496, 0
    %v3789 = vsel %vm590, %v3497, 0
    %v3792 = vsel %vm590, %v3498, 0
    %v3795 = vsel %vm590, %v3499, 0
    %v3798 = vsel %vm590, %v3500, 0
    %v3801 = vsel %vm590, %v3501, 0
    %v3804 = vsel %vm590, %v3616, 0
    %v3807 = vsel %vm590, %v3617, 0
    %v3810 = vsel %vm590, %v3618, 0
    %v3813 = vsel %vm590, %v3619, 0
    %v3816 = vsel %vm590, %v3620, 0
    %v3819 = vsel %vm590, %v3621, 0
    %v3822 = vsel %vm590, %v3622, 0
    %v3825 = vsel %vm590, %v3623, 0
    %3827 = vmatpush.bf16.xpose.msra.mxu0 %v3825
    %3828 = vmatpush.bf16.xpose.msra.mxu0 %v3822
    %3829 = vmatpush.bf16.xpose.msra.mxu0 %v3819
    %3830 = vmatpush.bf16.xpose.msra.mxu0 %v3816
    %3831 = vmatpush.bf16.xpose.msra.mxu0 %v3813
    %3832 = vmatpush.bf16.xpose.msra.mxu0 %v3810
    %3833 = vmatpush.bf16.xpose.msra.mxu0 %v3807
    %3834 = vmatpush.bf16.xpose.msra.mxu0 %v3804
    %3835 = vmatmul.bf16.gmra.mxu0 %v3780
    %v3836 = vpop.f32.mrf.mxu0
    %v3837 = vadd.f32 %v3763, %v3836
    %v3838 = vpop.f32.mrf.mxu0
    %v3839 = vadd.f32 %v3764, %v3838
    %3840 = vmatmul.bf16.gmra.mxu0 %v3783
    %v3841 = vpop.f32.mrf.mxu0
    %v3842 = vadd.f32 %v3765, %v3841
    %v3843 = vpop.f32.mrf.mxu0
    %v3844 = vadd.f32 %v3766, %v3843
    %3845 = vmatmul.bf16.gmra.mxu0 %v3786
    %v3846 = vpop.f32.mrf.mxu0
    %v3847 = vadd.f32 %v3767, %v3846
    %v3848 = vpop.f32.mrf.mxu0
    %v3849 = vadd.f32 %v3768, %v3848
    %3850 = vmatmul.bf16.gmra.mxu0 %v3789
    %v3851 = vpop.f32.mrf.mxu0
    %v3852 = vadd.f32 %v3769, %v3851
    %v3853 = vpop.f32.mrf.mxu0
    %v3854 = vadd.f32 %v3770, %v3853
    %3855 = vmatmul.bf16.gmra.mxu0 %v3792
    %v3856 = vpop.f32.mrf.mxu0
    %v3857 = vadd.f32 %v3771, %v3856
    %v3858 = vpop.f32.mrf.mxu0
    %v3859 = vadd.f32 %v3772, %v3858
    %3860 = vmatmul.bf16.gmra.mxu0 %v3795
    %v3861 = vpop.f32.mrf.mxu0
    %v3862 = vadd.f32 %v3773, %v3861
    %v3863 = vpop.f32.mrf.mxu0
    %v3864 = vadd.f32 %v3774, %v3863
    %3865 = vmatmul.bf16.gmra.mxu0 %v3798
    %v3866 = vpop.f32.mrf.mxu0
    %v3867 = vadd.f32 %v3775, %v3866
    %v3868 = vpop.f32.mrf.mxu0
    %v3869 = vadd.f32 %v3776, %v3868
    %3870 = vmatmul.bf16.gmra.mxu0 %v3801
    %v3871 = vpop.f32.mrf.mxu0
    %v3872 = vadd.f32 %v3777, %v3871
    %v3873 = vpop.f32.mrf.mxu0
    %v3874 = vadd.f32 %v3778, %v3873
    %3875 = vdwg.mxu0
    %3876 = vmax.xlane.f32.xlu0 %v3837
    %v3877 = vpop.xlane.xlu0 %3876
    %3878 = vmax.xlane.f32.xlu0 %v3839
    %v3879 = vpop.xlane.xlu0 %3878
    %3880 = vmax.xlane.f32.xlu0 %v3842
    %v3881 = vpop.xlane.xlu0 %3880
    %3882 = vmax.xlane.f32.xlu0 %v3844
    %v3883 = vpop.xlane.xlu0 %3882
    %3884 = vmax.xlane.f32.xlu0 %v3847
    %v3885 = vpop.xlane.xlu0 %3884
    %3886 = vmax.xlane.f32.xlu0 %v3849
    %v3887 = vpop.xlane.xlu0 %3886
    %3888 = vmax.xlane.f32.xlu0 %v3852
    %v3889 = vpop.xlane.xlu0 %3888
    %3890 = vmax.xlane.f32.xlu0 %v3854
    %v3891 = vpop.xlane.xlu0 %3890
    %3892 = vmax.xlane.f32.xlu0 %v3857
    %v3893 = vpop.xlane.xlu0 %3892
    %3894 = vmax.xlane.f32.xlu0 %v3859
    %v3895 = vpop.xlane.xlu0 %3894
    %3896 = vmax.xlane.f32.xlu0 %v3862
    %v3897 = vpop.xlane.xlu0 %3896
    %3898 = vmax.xlane.f32.xlu0 %v3864
    %v3899 = vpop.xlane.xlu0 %3898
    %3900 = vmax.xlane.f32.xlu0 %v3867
    %v3901 = vpop.xlane.xlu0 %3900
    %3902 = vmax.xlane.f32.xlu0 %v3869
    %v3903 = vpop.xlane.xlu0 %3902
    %3904 = vmax.xlane.f32.xlu0 %v3872
    %v3905 = vpop.xlane.xlu0 %3904
    %3906 = vmax.xlane.f32.xlu0 %v3874
    %v3907 = vpop.xlane.xlu0 %3906
    %v3908 = vsub.f32 %v3837, %v3877
    %v3909 = vsub.f32 %v3839, %v3879
    %v3910 = vsub.f32 %v3842, %v3881
    %v3911 = vsub.f32 %v3844, %v3883
    %v3912 = vsub.f32 %v3847, %v3885
    %v3913 = vsub.f32 %v3849, %v3887
    %v3914 = vsub.f32 %v3852, %v3889
    %v3915 = vsub.f32 %v3854, %v3891
    %v3916 = vsub.f32 %v3857, %v3893
    %v3917 = vsub.f32 %v3859, %v3895
    %v3918 = vsub.f32 %v3862, %v3897
    %v3919 = vsub.f32 %v3864, %v3899
    %v3920 = vsub.f32 %v3867, %v3901
    %v3921 = vsub.f32 %v3869, %v3903
    %v3922 = vsub.f32 %v3872, %v3905
    %v3923 = vsub.f32 %v3874, %v3907
    %v3924 = vmul.f32 %v3908, 1.442695
    %v3925 = vpow.pop %v3924
    %v3926 = vmul.f32 %v3909, 1.442695
    %v3927 = vpow.pop %v3926
    %v3928 = vmul.f32 %v3910, 1.442695
    %v3929 = vpow.pop %v3928
    %v3930 = vmul.f32 %v3911, 1.442695
    %v3931 = vpow.pop %v3930
    %v3932 = vmul.f32 %v3912, 1.442695
    %v3933 = vpow.pop %v3932
    %v3934 = vmul.f32 %v3913, 1.442695
    %v3935 = vpow.pop %v3934
    %v3936 = vmul.f32 %v3914, 1.442695
    %v3937 = vpow.pop %v3936
    %v3938 = vmul.f32 %v3915, 1.442695
    %v3939 = vpow.pop %v3938
    %v3940 = vmul.f32 %v3916, 1.442695
    %v3941 = vpow.pop %v3940
    %v3942 = vmul.f32 %v3917, 1.442695
    %v3943 = vpow.pop %v3942
    %v3944 = vmul.f32 %v3918, 1.442695
    %v3945 = vpow.pop %v3944
    %v3946 = vmul.f32 %v3919, 1.442695
    %v3947 = vpow.pop %v3946
    %v3948 = vmul.f32 %v3920, 1.442695
    %v3949 = vpow.pop %v3948
    %v3950 = vmul.f32 %v3921, 1.442695
    %v3951 = vpow.pop %v3950
    %v3952 = vmul.f32 %v3922, 1.442695
    %v3953 = vpow.pop %v3952
    %v3954 = vmul.f32 %v3923, 1.442695
    %v3955 = vpow.pop %v3954
    %3956 = vadd.xlane.f32.xlu0 %v3925
    %v3957 = vpop.xlane.xlu0 %3956
    %3958 = vadd.xlane.f32.xlu0 %v3927
    %v3959 = vpop.xlane.xlu0 %3958
    %3960 = vadd.xlane.f32.xlu0 %v3929
    %v3961 = vpop.xlane.xlu0 %3960
    %3962 = vadd.xlane.f32.xlu0 %v3931
    %v3963 = vpop.xlane.xlu0 %3962
    %3964 = vadd.xlane.f32.xlu0 %v3933
    %v3965 = vpop.xlane.xlu0 %3964
    %3966 = vadd.xlane.f32.xlu0 %v3935
    %v3967 = vpop.xlane.xlu0 %3966
    %3968 = vadd.xlane.f32.xlu0 %v3937
    %v3969 = vpop.xlane.xlu0 %3968
    %3970 = vadd.xlane.f32.xlu0 %v3939
    %v3971 = vpop.xlane.xlu0 %3970
    %3972 = vadd.xlane.f32.xlu0 %v3941
    %v3973 = vpop.xlane.xlu0 %3972
    %3974 = vadd.xlane.f32.xlu0 %v3943
    %v3975 = vpop.xlane.xlu0 %3974
    %3976 = vadd.xlane.f32.xlu0 %v3945
    %v3977 = vpop.xlane.xlu0 %3976
    %3978 = vadd.xlane.f32.xlu0 %v3947
    %v3979 = vpop.xlane.xlu0 %3978
    %3980 = vadd.xlane.f32.xlu0 %v3949
    %v3981 = vpop.xlane.xlu0 %3980
    %3982 = vadd.xlane.f32.xlu0 %v3951
    %v3983 = vpop.xlane.xlu0 %3982
    %3984 = vadd.xlane.f32.xlu0 %v3953
    %v3985 = vpop.xlane.xlu0 %3984
    %3986 = vadd.xlane.f32.xlu0 %v3955
    %v3987 = vpop.xlane.xlu0 %3986
    %v3988 = vrcp.pop %v3957
    %v3989 = vrcp.pop %v3959
    %v3990 = vrcp.pop %v3961
    %v3991 = vrcp.pop %v3963
    %v3992 = vrcp.pop %v3965
    %v3993 = vrcp.pop %v3967
    %v3994 = vrcp.pop %v3969
    %v3995 = vrcp.pop %v3971
    %v3996 = vrcp.pop %v3973
    %v3997 = vrcp.pop %v3975
    %v3998 = vrcp.pop %v3977
    %v3999 = vrcp.pop %v3979
    %v4000 = vrcp.pop %v3981
    %v4001 = vrcp.pop %v3983
    %v4002 = vrcp.pop %v3985
    %v4003 = vrcp.pop %v3987
    %v4004 = vmul.f32 %v3925, %v3988
    %v4005 = vmul.f32 %v3927, %v3989
    %v4006 = vmul.f32 %v3929, %v3990
    %v4007 = vmul.f32 %v3931, %v3991
    %v4008 = vmul.f32 %v3933, %v3992
    %v4009 = vmul.f32 %v3935, %v3993
    %v4010 = vmul.f32 %v3937, %v3994
    %v4011 = vmul.f32 %v3939, %v3995
    %v4012 = vmul.f32 %v3941, %v3996
    %v4013 = vmul.f32 %v3943, %v3997
    %v4014 = vmul.f32 %v3945, %v3998
    %v4015 = vmul.f32 %v3947, %v3999
    %v4016 = vmul.f32 %v3949, %v4000
    %v4017 = vmul.f32 %v3951, %v4001
    %v4018 = vmul.f32 %v3953, %v4002
    %v4019 = vmul.f32 %v3955, %v4003
    %v4020 = vpack.c.bf16 %v4005, %v4004
    %v4021 = vpack.c.bf16 %v4007, %v4006
    %v4022 = vpack.c.bf16 %v4009, %v4008
    %v4023 = vpack.c.bf16 %v4011, %v4010
    %v4024 = vpack.c.bf16 %v4013, %v4012
    %v4025 = vpack.c.bf16 %v4015, %v4014
    %v4026 = vpack.c.bf16 %v4017, %v4016
    %v4027 = vpack.c.bf16 %v4019, %v4018
    %4028 = vmatpush.bf16.msra.mxu0 %v3745
    %4029 = vmatpush.bf16.msra.mxu0 %v3744
    %4030 = vmatpush.bf16.msra.mxu0 %v3743
    %4031 = vmatpush.bf16.msra.mxu0 %v3742
    %4032 = vmatpush.bf16.msra.mxu0 %v3741
    %4033 = vmatpush.bf16.msra.mxu0 %v3740
    %4034 = vmatpush.bf16.msra.mxu0 %v3739
    %4035 = vmatpush.bf16.msra.mxu0 %v3738
    %4036 = vmatmul.bf16.gmra.mxu0 %v4020
    %v4037 = vpop.f32.mrf.mxu0
    %v4038 = vadd.f32 0.0, %v4037
    %v4039 = vpop.f32.mrf.mxu0
    %v4040 = vadd.f32 0.0, %v4039
    %4041 = vmatmul.bf16.gmra.mxu0 %v4021
    %v4042 = vpop.f32.mrf.mxu0
    %v4043 = vadd.f32 0.0, %v4042
    %v4044 = vpop.f32.mrf.mxu0
    %v4045 = vadd.f32 0.0, %v4044
    %4046 = vmatmul.bf16.gmra.mxu0 %v4022
    %v4047 = vpop.f32.mrf.mxu0
    %v4048 = vadd.f32 0.0, %v4047
    %v4049 = vpop.f32.mrf.mxu0
    %v4050 = vadd.f32 0.0, %v4049
    %4051 = vmatmul.bf16.gmra.mxu0 %v4023
    %v4052 = vpop.f32.mrf.mxu0
    %v4053 = vadd.f32 0.0, %v4052
    %v4054 = vpop.f32.mrf.mxu0
    %v4055 = vadd.f32 0.0, %v4054
    %4056 = vmatmul.bf16.gmra.mxu0 %v4024
    %v4057 = vpop.f32.mrf.mxu0
    %v4058 = vadd.f32 0.0, %v4057
    %v4059 = vpop.f32.mrf.mxu0
    %v4060 = vadd.f32 0.0, %v4059
    %4061 = vmatmul.bf16.gmra.mxu0 %v4025
    %v4062 = vpop.f32.mrf.mxu0
    %v4063 = vadd.f32 0.0, %v4062
    %v4064 = vpop.f32.mrf.mxu0
    %v4065 = vadd.f32 0.0, %v4064
    %4066 = vmatmul.bf16.gmra.mxu0 %v4026
    %v4067 = vpop.f32.mrf.mxu0
    %v4068 = vadd.f32 0.0, %v4067
    %v4069 = vpop.f32.mrf.mxu0
    %v4070 = vadd.f32 0.0, %v4069
    %4071 = vmatmul.bf16.gmra.mxu0 %v4027
    %v4072 = vpop.f32.mrf.mxu0
    %v4073 = vadd.f32 0.0, %v4072
    %v4074 = vpop.f32.mrf.mxu0
    %v4075 = vadd.f32 0.0, %v4074
    %4076 = vdwg.mxu0
    %v4077 = vpack.c.bf16 %v4040, %v4038
    %v4078 = vpack.c.bf16 %v4045, %v4043
    %v4079 = vpack.c.bf16 %v4050, %v4048
    %v4080 = vpack.c.bf16 %v4055, %v4053
    %v4081 = vpack.c.bf16 %v4060, %v4058
    %v4082 = vpack.c.bf16 %v4065, %v4063
    %v4083 = vpack.c.bf16 %v4070, %v4068
    %v4084 = vpack.c.bf16 %v4075, %v4073
    %s4085 = scalar_lea.vmem %s6, 16
    %v4086 = vld [vmem:[%s4085] sm:$0xf]
    %s4087 = scalar_lea.vmem %s3, 320
    %v4088 = vld [vmem:[%s4087] sm:$0xf]
    %v4089 = vld [vmem:[%s4087 + $0x4] sm:$0xf]
    %v4090 = vld [vmem:[%s4087 + $0x8] sm:$0xf]
    %v4091 = vld [vmem:[%s4087 + $0xc] sm:$0xf]
    %v4092 = vld [vmem:[%s4087 + $0x10] sm:$0xf]
    %v4093 = vld [vmem:[%s4087 + $0x14] sm:$0xf]
    %v4094 = vld [vmem:[%s4087 + $0x18] sm:$0xf]
    %v4095 = vld [vmem:[%s4087 + $0x1c] sm:$0xf]
    %v4096 = vld [vmem:[%s4087 + $0x20] sm:$0xf]
    %v4097 = vld [vmem:[%s4087 + $0x24] sm:$0xf]
    %v4098 = vld [vmem:[%s4087 + $0x28] sm:$0xf]
    %v4099 = vld [vmem:[%s4087 + $0x2c] sm:$0xf]
    %v4100 = vld [vmem:[%s4087 + $0x30] sm:$0xf]
    %v4101 = vld [vmem:[%s4087 + $0x34] sm:$0xf]
    %v4102 = vld [vmem:[%s4087 + $0x38] sm:$0xf]
    %v4103 = vld [vmem:[%s4087 + $0x3c] sm:$0xf]
    %v4120 = vunpack.c.l.b16 %v4088
    %v4121 = vunpack.c.l.b16 %v4089
    %v4122 = vunpack.c.l.b16 %v4090
    %v4123 = vunpack.c.l.b16 %v4091
    %v4124 = vunpack.c.l.b16 %v4092
    %v4125 = vunpack.c.l.b16 %v4093
    %v4126 = vunpack.c.l.b16 %v4094
    %v4127 = vunpack.c.l.b16 %v4095
    %v4128 = vunpack.c.l.b16 %v4096
    %v4129 = vunpack.c.l.b16 %v4097
    %v4130 = vunpack.c.l.b16 %v4098
    %v4131 = vunpack.c.l.b16 %v4099
    %v4132 = vunpack.c.l.b16 %v4100
    %v4133 = vunpack.c.l.b16 %v4101
    %v4134 = vunpack.c.l.b16 %v4102
    %v4135 = vunpack.c.l.b16 %v4103
    %v4136 = vpack.c.b16 %v4121, %v4120
    %v4137 = vpack.c.b16 %v4123, %v4122
    %v4138 = vpack.c.b16 %v4125, %v4124
    %v4139 = vpack.c.b16 %v4127, %v4126
    %v4140 = vpack.c.b16 %v4129, %v4128
    %v4141 = vpack.c.b16 %v4131, %v4130
    %v4142 = vpack.c.b16 %v4133, %v4132
    %v4143 = vpack.c.b16 %v4135, %v4134
    %4152 = vmatpush.bf16.msra.mxu0 %v4143
    %4153 = vmatpush.bf16.msra.mxu0 %v4142
    %4154 = vmatpush.bf16.msra.mxu0 %v4141
    %4155 = vmatpush.bf16.msra.mxu0 %v4140
    %4156 = vmatpush.bf16.msra.mxu0 %v4139
    %4157 = vmatpush.bf16.msra.mxu0 %v4138
    %4158 = vmatpush.bf16.msra.mxu0 %v4137
    %4159 = vmatpush.bf16.msra.mxu0 %v4136
    %4160 = vmatmul.bf16.gmra.mxu0 %v3372
    %v4161 = vpop.f32.mrf.mxu0
    %v4162 = vadd.f32 0.0, %v4161
    %v4163 = vpop.f32.mrf.mxu0
    %v4164 = vadd.f32 0.0, %v4163
    %4165 = vmatmul.bf16.gmra.mxu0 %v3373
    %v4166 = vpop.f32.mrf.mxu0
    %v4167 = vadd.f32 0.0, %v4166
    %v4168 = vpop.f32.mrf.mxu0
    %v4169 = vadd.f32 0.0, %v4168
    %4170 = vmatmul.bf16.gmra.mxu0 %v3374
    %v4171 = vpop.f32.mrf.mxu0
    %v4172 = vadd.f32 0.0, %v4171
    %v4173 = vpop.f32.mrf.mxu0
    %v4174 = vadd.f32 0.0, %v4173
    %4175 = vmatmul.bf16.gmra.mxu0 %v3375
    %v4176 = vpop.f32.mrf.mxu0
    %v4177 = vadd.f32 0.0, %v4176
    %v4178 = vpop.f32.mrf.mxu0
    %v4179 = vadd.f32 0.0, %v4178
    %4180 = vmatmul.bf16.gmra.mxu0 %v3376
    %v4181 = vpop.f32.mrf.mxu0
    %v4182 = vadd.f32 0.0, %v4181
    %v4183 = vpop.f32.mrf.mxu0
    %v4184 = vadd.f32 0.0, %v4183
    %4185 = vmatmul.bf16.gmra.mxu0 %v3377
    %v4186 = vpop.f32.mrf.mxu0
    %v4187 = vadd.f32 0.0, %v4186
    %v4188 = vpop.f32.mrf.mxu0
    %v4189 = vadd.f32 0.0, %v4188
    %4190 = vmatmul.bf16.gmra.mxu0 %v3378
    %v4191 = vpop.f32.mrf.mxu0
    %v4192 = vadd.f32 0.0, %v4191
    %v4193 = vpop.f32.mrf.mxu0
    %v4194 = vadd.f32 0.0, %v4193
    %4195 = vmatmul.bf16.gmra.mxu0 %v3379
    %v4196 = vpop.f32.mrf.mxu0
    %v4197 = vadd.f32 0.0, %v4196
    %v4198 = vpop.f32.mrf.mxu0
    %v4199 = vadd.f32 0.0, %v4198
    %4200 = vdwg.mxu0
    %v4201 = vpack.c.bf16 %v4164, %v4162
    %v4202 = vpack.c.bf16 %v4169, %v4167
    %v4203 = vpack.c.bf16 %v4174, %v4172
    %v4204 = vpack.c.bf16 %v4179, %v4177
    %v4205 = vpack.c.bf16 %v4184, %v4182
    %v4206 = vpack.c.bf16 %v4189, %v4187
    %v4207 = vpack.c.bf16 %v4194, %v4192
    %v4208 = vpack.c.bf16 %v4199, %v4197
    %s4209 = scalar_lea.vmem %s4, 320
    %v4210 = vld [vmem:[%s4209] sm:$0xf]
    %v4211 = vld [vmem:[%s4209 + $0x4] sm:$0xf]
    %v4212 = vld [vmem:[%s4209 + $0x8] sm:$0xf]
    %v4213 = vld [vmem:[%s4209 + $0xc] sm:$0xf]
    %v4214 = vld [vmem:[%s4209 + $0x10] sm:$0xf]
    %v4215 = vld [vmem:[%s4209 + $0x14] sm:$0xf]
    %v4216 = vld [vmem:[%s4209 + $0x18] sm:$0xf]
    %v4217 = vld [vmem:[%s4209 + $0x1c] sm:$0xf]
    %v4218 = vld [vmem:[%s4209 + $0x20] sm:$0xf]
    %v4219 = vld [vmem:[%s4209 + $0x24] sm:$0xf]
    %v4220 = vld [vmem:[%s4209 + $0x28] sm:$0xf]
    %v4221 = vld [vmem:[%s4209 + $0x2c] sm:$0xf]
    %v4222 = vld [vmem:[%s4209 + $0x30] sm:$0xf]
    %v4223 = vld [vmem:[%s4209 + $0x34] sm:$0xf]
    %v4224 = vld [vmem:[%s4209 + $0x38] sm:$0xf]
    %v4225 = vld [vmem:[%s4209 + $0x3c] sm:$0xf]
    %v4242 = vunpack.c.l.b16 %v4210
    %v4243 = vunpack.c.l.b16 %v4211
    %v4244 = vunpack.c.l.b16 %v4212
    %v4245 = vunpack.c.l.b16 %v4213
    %v4246 = vunpack.c.l.b16 %v4214
    %v4247 = vunpack.c.l.b16 %v4215
    %v4248 = vunpack.c.l.b16 %v4216
    %v4249 = vunpack.c.l.b16 %v4217
    %v4250 = vunpack.c.l.b16 %v4218
    %v4251 = vunpack.c.l.b16 %v4219
    %v4252 = vunpack.c.l.b16 %v4220
    %v4253 = vunpack.c.l.b16 %v4221
    %v4254 = vunpack.c.l.b16 %v4222
    %v4255 = vunpack.c.l.b16 %v4223
    %v4256 = vunpack.c.l.b16 %v4224
    %v4257 = vunpack.c.l.b16 %v4225
    %v4258 = vpack.c.b16 %v4243, %v4242
    %v4259 = vpack.c.b16 %v4245, %v4244
    %v4260 = vpack.c.b16 %v4247, %v4246
    %v4261 = vpack.c.b16 %v4249, %v4248
    %v4262 = vpack.c.b16 %v4251, %v4250
    %v4263 = vpack.c.b16 %v4253, %v4252
    %v4264 = vpack.c.b16 %v4255, %v4254
    %v4265 = vpack.c.b16 %v4257, %v4256
    %4274 = vmatpush.bf16.msra.mxu0 %v4265
    %4275 = vmatpush.bf16.msra.mxu0 %v4264
    %4276 = vmatpush.bf16.msra.mxu0 %v4263
    %4277 = vmatpush.bf16.msra.mxu0 %v4262
    %4278 = vmatpush.bf16.msra.mxu0 %v4261
    %4279 = vmatpush.bf16.msra.mxu0 %v4260
    %4280 = vmatpush.bf16.msra.mxu0 %v4259
    %4281 = vmatpush.bf16.msra.mxu0 %v4258
    %4282 = vmatmul.bf16.gmra.mxu0 %v3372
    %v4283 = vpop.f32.mrf.mxu0
    %v4284 = vadd.f32 0.0, %v4283
    %v4285 = vpop.f32.mrf.mxu0
    %v4286 = vadd.f32 0.0, %v4285
    %4287 = vmatmul.bf16.gmra.mxu0 %v3373
    %v4288 = vpop.f32.mrf.mxu0
    %v4289 = vadd.f32 0.0, %v4288
    %v4290 = vpop.f32.mrf.mxu0
    %v4291 = vadd.f32 0.0, %v4290
    %4292 = vmatmul.bf16.gmra.mxu0 %v3374
    %v4293 = vpop.f32.mrf.mxu0
    %v4294 = vadd.f32 0.0, %v4293
    %v4295 = vpop.f32.mrf.mxu0
    %v4296 = vadd.f32 0.0, %v4295
    %4297 = vmatmul.bf16.gmra.mxu0 %v3375
    %v4298 = vpop.f32.mrf.mxu0
    %v4299 = vadd.f32 0.0, %v4298
    %v4300 = vpop.f32.mrf.mxu0
    %v4301 = vadd.f32 0.0, %v4300
    %4302 = vmatmul.bf16.gmra.mxu0 %v3376
    %v4303 = vpop.f32.mrf.mxu0
    %v4304 = vadd.f32 0.0, %v4303
    %v4305 = vpop.f32.mrf.mxu0
    %v4306 = vadd.f32 0.0, %v4305
    %4307 = vmatmul.bf16.gmra.mxu0 %v3377
    %v4308 = vpop.f32.mrf.mxu0
    %v4309 = vadd.f32 0.0, %v4308
    %v4310 = vpop.f32.mrf.mxu0
    %v4311 = vadd.f32 0.0, %v4310
    %4312 = vmatmul.bf16.gmra.mxu0 %v3378
    %v4313 = vpop.f32.mrf.mxu0
    %v4314 = vadd.f32 0.0, %v4313
    %v4315 = vpop.f32.mrf.mxu0
    %v4316 = vadd.f32 0.0, %v4315
    %4317 = vmatmul.bf16.gmra.mxu0 %v3379
    %v4318 = vpop.f32.mrf.mxu0
    %v4319 = vadd.f32 0.0, %v4318
    %v4320 = vpop.f32.mrf.mxu0
    %v4321 = vadd.f32 0.0, %v4320
    %4322 = vdwg.mxu0
    %v4323 = vpack.c.bf16 %v4286, %v4284
    %v4324 = vpack.c.bf16 %v4291, %v4289
    %v4325 = vpack.c.bf16 %v4296, %v4294
    %v4326 = vpack.c.bf16 %v4301, %v4299
    %v4327 = vpack.c.bf16 %v4306, %v4304
    %v4328 = vpack.c.bf16 %v4311, %v4309
    %v4329 = vpack.c.bf16 %v4316, %v4314
    %v4330 = vpack.c.bf16 %v4321, %v4319
    %s4331 = scalar_lea.vmem %s5, 320
    %v4332 = vld [vmem:[%s4331] sm:$0xf]
    %v4333 = vld [vmem:[%s4331 + $0x4] sm:$0xf]
    %v4334 = vld [vmem:[%s4331 + $0x8] sm:$0xf]
    %v4335 = vld [vmem:[%s4331 + $0xc] sm:$0xf]
    %v4336 = vld [vmem:[%s4331 + $0x10] sm:$0xf]
    %v4337 = vld [vmem:[%s4331 + $0x14] sm:$0xf]
    %v4338 = vld [vmem:[%s4331 + $0x18] sm:$0xf]
    %v4339 = vld [vmem:[%s4331 + $0x1c] sm:$0xf]
    %v4340 = vld [vmem:[%s4331 + $0x20] sm:$0xf]
    %v4341 = vld [vmem:[%s4331 + $0x24] sm:$0xf]
    %v4342 = vld [vmem:[%s4331 + $0x28] sm:$0xf]
    %v4343 = vld [vmem:[%s4331 + $0x2c] sm:$0xf]
    %v4344 = vld [vmem:[%s4331 + $0x30] sm:$0xf]
    %v4345 = vld [vmem:[%s4331 + $0x34] sm:$0xf]
    %v4346 = vld [vmem:[%s4331 + $0x38] sm:$0xf]
    %v4347 = vld [vmem:[%s4331 + $0x3c] sm:$0xf]
    %v4364 = vunpack.c.l.b16 %v4332
    %v4365 = vunpack.c.l.b16 %v4333
    %v4366 = vunpack.c.l.b16 %v4334
    %v4367 = vunpack.c.l.b16 %v4335
    %v4368 = vunpack.c.l.b16 %v4336
    %v4369 = vunpack.c.l.b16 %v4337
    %v4370 = vunpack.c.l.b16 %v4338
    %v4371 = vunpack.c.l.b16 %v4339
    %v4372 = vunpack.c.l.b16 %v4340
    %v4373 = vunpack.c.l.b16 %v4341
    %v4374 = vunpack.c.l.b16 %v4342
    %v4375 = vunpack.c.l.b16 %v4343
    %v4376 = vunpack.c.l.b16 %v4344
    %v4377 = vunpack.c.l.b16 %v4345
    %v4378 = vunpack.c.l.b16 %v4346
    %v4379 = vunpack.c.l.b16 %v4347
    %v4380 = vpack.c.b16 %v4365, %v4364
    %v4381 = vpack.c.b16 %v4367, %v4366
    %v4382 = vpack.c.b16 %v4369, %v4368
    %v4383 = vpack.c.b16 %v4371, %v4370
    %v4384 = vpack.c.b16 %v4373, %v4372
    %v4385 = vpack.c.b16 %v4375, %v4374
    %v4386 = vpack.c.b16 %v4377, %v4376
    %v4387 = vpack.c.b16 %v4379, %v4378
    %4396 = vmatpush.bf16.msra.mxu0 %v4387
    %4397 = vmatpush.bf16.msra.mxu0 %v4386
    %4398 = vmatpush.bf16.msra.mxu0 %v4385
    %4399 = vmatpush.bf16.msra.mxu0 %v4384
    %4400 = vmatpush.bf16.msra.mxu0 %v4383
    %4401 = vmatpush.bf16.msra.mxu0 %v4382
    %4402 = vmatpush.bf16.msra.mxu0 %v4381
    %4403 = vmatpush.bf16.msra.mxu0 %v4380
    %4404 = vmatmul.bf16.gmra.mxu0 %v3372
    %v4405 = vpop.f32.mrf.mxu0
    %v4406 = vadd.f32 0.0, %v4405
    %v4407 = vpop.f32.mrf.mxu0
    %v4408 = vadd.f32 0.0, %v4407
    %4409 = vmatmul.bf16.gmra.mxu0 %v3373
    %v4410 = vpop.f32.mrf.mxu0
    %v4411 = vadd.f32 0.0, %v4410
    %v4412 = vpop.f32.mrf.mxu0
    %v4413 = vadd.f32 0.0, %v4412
    %4414 = vmatmul.bf16.gmra.mxu0 %v3374
    %v4415 = vpop.f32.mrf.mxu0
    %v4416 = vadd.f32 0.0, %v4415
    %v4417 = vpop.f32.mrf.mxu0
    %v4418 = vadd.f32 0.0, %v4417
    %4419 = vmatmul.bf16.gmra.mxu0 %v3375
    %v4420 = vpop.f32.mrf.mxu0
    %v4421 = vadd.f32 0.0, %v4420
    %v4422 = vpop.f32.mrf.mxu0
    %v4423 = vadd.f32 0.0, %v4422
    %4424 = vmatmul.bf16.gmra.mxu0 %v3376
    %v4425 = vpop.f32.mrf.mxu0
    %v4426 = vadd.f32 0.0, %v4425
    %v4427 = vpop.f32.mrf.mxu0
    %v4428 = vadd.f32 0.0, %v4427
    %4429 = vmatmul.bf16.gmra.mxu0 %v3377
    %v4430 = vpop.f32.mrf.mxu0
    %v4431 = vadd.f32 0.0, %v4430
    %v4432 = vpop.f32.mrf.mxu0
    %v4433 = vadd.f32 0.0, %v4432
    %4434 = vmatmul.bf16.gmra.mxu0 %v3378
    %v4435 = vpop.f32.mrf.mxu0
    %v4436 = vadd.f32 0.0, %v4435
    %v4437 = vpop.f32.mrf.mxu0
    %v4438 = vadd.f32 0.0, %v4437
    %4439 = vmatmul.bf16.gmra.mxu0 %v3379
    %v4440 = vpop.f32.mrf.mxu0
    %v4441 = vadd.f32 0.0, %v4440
    %v4442 = vpop.f32.mrf.mxu0
    %v4443 = vadd.f32 0.0, %v4442
    %4444 = vdwg.mxu0
    %v4445 = vpack.c.bf16 %v4408, %v4406
    %v4446 = vpack.c.bf16 %v4413, %v4411
    %v4447 = vpack.c.bf16 %v4418, %v4416
    %v4448 = vpack.c.bf16 %v4423, %v4421
    %v4449 = vpack.c.bf16 %v4428, %v4426
    %v4450 = vpack.c.bf16 %v4433, %v4431
    %v4451 = vpack.c.bf16 %v4438, %v4436
    %v4452 = vpack.c.bf16 %v4443, %v4441
    %s4453 = scalar_lea.vmem %s2, 320
    %v4454 = vld [vmem:[%s4453] sm:$0xf]
    %v4455 = vld [vmem:[%s4453 + $0x4] sm:$0xf]
    %v4456 = vld [vmem:[%s4453 + $0x8] sm:$0xf]
    %v4457 = vld [vmem:[%s4453 + $0xc] sm:$0xf]
    %v4458 = vld [vmem:[%s4453 + $0x10] sm:$0xf]
    %v4459 = vld [vmem:[%s4453 + $0x14] sm:$0xf]
    %v4460 = vld [vmem:[%s4453 + $0x18] sm:$0xf]
    %v4461 = vld [vmem:[%s4453 + $0x1c] sm:$0xf]
    %v4462 = vld [vmem:[%s4453 + $0x20] sm:$0xf]
    %v4463 = vld [vmem:[%s4453 + $0x24] sm:$0xf]
    %v4464 = vld [vmem:[%s4453 + $0x28] sm:$0xf]
    %v4465 = vld [vmem:[%s4453 + $0x2c] sm:$0xf]
    %v4466 = vld [vmem:[%s4453 + $0x30] sm:$0xf]
    %v4467 = vld [vmem:[%s4453 + $0x34] sm:$0xf]
    %v4468 = vld [vmem:[%s4453 + $0x38] sm:$0xf]
    %v4469 = vld [vmem:[%s4453 + $0x3c] sm:$0xf]
    %v4470 = vunpack.c.l.bf16 %v4454
    %v4471 = vunpack.c.l.bf16 %v4455
    %v4472 = vunpack.c.l.bf16 %v4456
    %v4473 = vunpack.c.l.bf16 %v4457
    %v4474 = vunpack.c.l.bf16 %v4458
    %v4475 = vunpack.c.l.bf16 %v4459
    %v4476 = vunpack.c.l.bf16 %v4460
    %v4477 = vunpack.c.l.bf16 %v4461
    %v4478 = vunpack.c.l.bf16 %v4462
    %v4479 = vunpack.c.l.bf16 %v4463
    %v4480 = vunpack.c.l.bf16 %v4464
    %v4481 = vunpack.c.l.bf16 %v4465
    %v4482 = vunpack.c.l.bf16 %v4466
    %v4483 = vunpack.c.l.bf16 %v4467
    %v4484 = vunpack.c.l.bf16 %v4468
    %v4485 = vunpack.c.l.bf16 %v4469
    %v4487 = vsel %vm590, %v4201, 0
    %v4490 = vsel %vm590, %v4202, 0
    %v4493 = vsel %vm590, %v4203, 0
    %v4496 = vsel %vm590, %v4204, 0
    %v4499 = vsel %vm590, %v4205, 0
    %v4502 = vsel %vm590, %v4206, 0
    %v4505 = vsel %vm590, %v4207, 0
    %v4508 = vsel %vm590, %v4208, 0
    %v4511 = vsel %vm590, %v4323, 0
    %v4514 = vsel %vm590, %v4324, 0
    %v4517 = vsel %vm590, %v4325, 0
    %v4520 = vsel %vm590, %v4326, 0
    %v4523 = vsel %vm590, %v4327, 0
    %v4526 = vsel %vm590, %v4328, 0
    %v4529 = vsel %vm590, %v4329, 0
    %v4532 = vsel %vm590, %v4330, 0
    %4534 = vmatpush.bf16.xpose.msra.mxu0 %v4532
    %4535 = vmatpush.bf16.xpose.msra.mxu0 %v4529
    %4536 = vmatpush.bf16.xpose.msra.mxu0 %v4526
    %4537 = vmatpush.bf16.xpose.msra.mxu0 %v4523
    %4538 = vmatpush.bf16.xpose.msra.mxu0 %v4520
    %4539 = vmatpush.bf16.xpose.msra.mxu0 %v4517
    %4540 = vmatpush.bf16.xpose.msra.mxu0 %v4514
    %4541 = vmatpush.bf16.xpose.msra.mxu0 %v4511
    %4542 = vmatmul.bf16.gmra.mxu0 %v4487
    %v4543 = vpop.f32.mrf.mxu0
    %v4544 = vadd.f32 %v4470, %v4543
    %v4545 = vpop.f32.mrf.mxu0
    %v4546 = vadd.f32 %v4471, %v4545
    %4547 = vmatmul.bf16.gmra.mxu0 %v4490
    %v4548 = vpop.f32.mrf.mxu0
    %v4549 = vadd.f32 %v4472, %v4548
    %v4550 = vpop.f32.mrf.mxu0
    %v4551 = vadd.f32 %v4473, %v4550
    %4552 = vmatmul.bf16.gmra.mxu0 %v4493
    %v4553 = vpop.f32.mrf.mxu0
    %v4554 = vadd.f32 %v4474, %v4553
    %v4555 = vpop.f32.mrf.mxu0
    %v4556 = vadd.f32 %v4475, %v4555
    %4557 = vmatmul.bf16.gmra.mxu0 %v4496
    %v4558 = vpop.f32.mrf.mxu0
    %v4559 = vadd.f32 %v4476, %v4558
    %v4560 = vpop.f32.mrf.mxu0
    %v4561 = vadd.f32 %v4477, %v4560
    %4562 = vmatmul.bf16.gmra.mxu0 %v4499
    %v4563 = vpop.f32.mrf.mxu0
    %v4564 = vadd.f32 %v4478, %v4563
    %v4565 = vpop.f32.mrf.mxu0
    %v4566 = vadd.f32 %v4479, %v4565
    %4567 = vmatmul.bf16.gmra.mxu0 %v4502
    %v4568 = vpop.f32.mrf.mxu0
    %v4569 = vadd.f32 %v4480, %v4568
    %v4570 = vpop.f32.mrf.mxu0
    %v4571 = vadd.f32 %v4481, %v4570
    %4572 = vmatmul.bf16.gmra.mxu0 %v4505
    %v4573 = vpop.f32.mrf.mxu0
    %v4574 = vadd.f32 %v4482, %v4573
    %v4575 = vpop.f32.mrf.mxu0
    %v4576 = vadd.f32 %v4483, %v4575
    %4577 = vmatmul.bf16.gmra.mxu0 %v4508
    %v4578 = vpop.f32.mrf.mxu0
    %v4579 = vadd.f32 %v4484, %v4578
    %v4580 = vpop.f32.mrf.mxu0
    %v4581 = vadd.f32 %v4485, %v4580
    %4582 = vdwg.mxu0
    %4583 = vmax.xlane.f32.xlu0 %v4544
    %v4584 = vpop.xlane.xlu0 %4583
    %4585 = vmax.xlane.f32.xlu0 %v4546
    %v4586 = vpop.xlane.xlu0 %4585
    %4587 = vmax.xlane.f32.xlu0 %v4549
    %v4588 = vpop.xlane.xlu0 %4587
    %4589 = vmax.xlane.f32.xlu0 %v4551
    %v4590 = vpop.xlane.xlu0 %4589
    %4591 = vmax.xlane.f32.xlu0 %v4554
    %v4592 = vpop.xlane.xlu0 %4591
    %4593 = vmax.xlane.f32.xlu0 %v4556
    %v4594 = vpop.xlane.xlu0 %4593
    %4595 = vmax.xlane.f32.xlu0 %v4559
    %v4596 = vpop.xlane.xlu0 %4595
    %4597 = vmax.xlane.f32.xlu0 %v4561
    %v4598 = vpop.xlane.xlu0 %4597
    %4599 = vmax.xlane.f32.xlu0 %v4564
    %v4600 = vpop.xlane.xlu0 %4599
    %4601 = vmax.xlane.f32.xlu0 %v4566
    %v4602 = vpop.xlane.xlu0 %4601
    %4603 = vmax.xlane.f32.xlu0 %v4569
    %v4604 = vpop.xlane.xlu0 %4603
    %4605 = vmax.xlane.f32.xlu0 %v4571
    %v4606 = vpop.xlane.xlu0 %4605
    %4607 = vmax.xlane.f32.xlu0 %v4574
    %v4608 = vpop.xlane.xlu0 %4607
    %4609 = vmax.xlane.f32.xlu0 %v4576
    %v4610 = vpop.xlane.xlu0 %4609
    %4611 = vmax.xlane.f32.xlu0 %v4579
    %v4612 = vpop.xlane.xlu0 %4611
    %4613 = vmax.xlane.f32.xlu0 %v4581
    %v4614 = vpop.xlane.xlu0 %4613
    %v4615 = vsub.f32 %v4544, %v4584
    %v4616 = vsub.f32 %v4546, %v4586
    %v4617 = vsub.f32 %v4549, %v4588
    %v4618 = vsub.f32 %v4551, %v4590
    %v4619 = vsub.f32 %v4554, %v4592
    %v4620 = vsub.f32 %v4556, %v4594
    %v4621 = vsub.f32 %v4559, %v4596
    %v4622 = vsub.f32 %v4561, %v4598
    %v4623 = vsub.f32 %v4564, %v4600
    %v4624 = vsub.f32 %v4566, %v4602
    %v4625 = vsub.f32 %v4569, %v4604
    %v4626 = vsub.f32 %v4571, %v4606
    %v4627 = vsub.f32 %v4574, %v4608
    %v4628 = vsub.f32 %v4576, %v4610
    %v4629 = vsub.f32 %v4579, %v4612
    %v4630 = vsub.f32 %v4581, %v4614
    %v4631 = vmul.f32 %v4615, 1.442695
    %v4632 = vpow.pop %v4631
    %v4633 = vmul.f32 %v4616, 1.442695
    %v4634 = vpow.pop %v4633
    %v4635 = vmul.f32 %v4617, 1.442695
    %v4636 = vpow.pop %v4635
    %v4637 = vmul.f32 %v4618, 1.442695
    %v4638 = vpow.pop %v4637
    %v4639 = vmul.f32 %v4619, 1.442695
    %v4640 = vpow.pop %v4639
    %v4641 = vmul.f32 %v4620, 1.442695
    %v4642 = vpow.pop %v4641
    %v4643 = vmul.f32 %v4621, 1.442695
    %v4644 = vpow.pop %v4643
    %v4645 = vmul.f32 %v4622, 1.442695
    %v4646 = vpow.pop %v4645
    %v4647 = vmul.f32 %v4623, 1.442695
    %v4648 = vpow.pop %v4647
    %v4649 = vmul.f32 %v4624, 1.442695
    %v4650 = vpow.pop %v4649
    %v4651 = vmul.f32 %v4625, 1.442695
    %v4652 = vpow.pop %v4651
    %v4653 = vmul.f32 %v4626, 1.442695
    %v4654 = vpow.pop %v4653
    %v4655 = vmul.f32 %v4627, 1.442695
    %v4656 = vpow.pop %v4655
    %v4657 = vmul.f32 %v4628, 1.442695
    %v4658 = vpow.pop %v4657
    %v4659 = vmul.f32 %v4629, 1.442695
    %v4660 = vpow.pop %v4659
    %v4661 = vmul.f32 %v4630, 1.442695
    %v4662 = vpow.pop %v4661
    %4663 = vadd.xlane.f32.xlu0 %v4632
    %v4664 = vpop.xlane.xlu0 %4663
    %4665 = vadd.xlane.f32.xlu0 %v4634
    %v4666 = vpop.xlane.xlu0 %4665
    %4667 = vadd.xlane.f32.xlu0 %v4636
    %v4668 = vpop.xlane.xlu0 %4667
    %4669 = vadd.xlane.f32.xlu0 %v4638
    %v4670 = vpop.xlane.xlu0 %4669
    %4671 = vadd.xlane.f32.xlu0 %v4640
    %v4672 = vpop.xlane.xlu0 %4671
    %4673 = vadd.xlane.f32.xlu0 %v4642
    %v4674 = vpop.xlane.xlu0 %4673
    %4675 = vadd.xlane.f32.xlu0 %v4644
    %v4676 = vpop.xlane.xlu0 %4675
    %4677 = vadd.xlane.f32.xlu0 %v4646
    %v4678 = vpop.xlane.xlu0 %4677
    %4679 = vadd.xlane.f32.xlu0 %v4648
    %v4680 = vpop.xlane.xlu0 %4679
    %4681 = vadd.xlane.f32.xlu0 %v4650
    %v4682 = vpop.xlane.xlu0 %4681
    %4683 = vadd.xlane.f32.xlu0 %v4652
    %v4684 = vpop.xlane.xlu0 %4683
    %4685 = vadd.xlane.f32.xlu0 %v4654
    %v4686 = vpop.xlane.xlu0 %4685
    %4687 = vadd.xlane.f32.xlu0 %v4656
    %v4688 = vpop.xlane.xlu0 %4687
    %4689 = vadd.xlane.f32.xlu0 %v4658
    %v4690 = vpop.xlane.xlu0 %4689
    %4691 = vadd.xlane.f32.xlu0 %v4660
    %v4692 = vpop.xlane.xlu0 %4691
    %4693 = vadd.xlane.f32.xlu0 %v4662
    %v4694 = vpop.xlane.xlu0 %4693
    %v4695 = vrcp.pop %v4664
    %v4696 = vrcp.pop %v4666
    %v4697 = vrcp.pop %v4668
    %v4698 = vrcp.pop %v4670
    %v4699 = vrcp.pop %v4672
    %v4700 = vrcp.pop %v4674
    %v4701 = vrcp.pop %v4676
    %v4702 = vrcp.pop %v4678
    %v4703 = vrcp.pop %v4680
    %v4704 = vrcp.pop %v4682
    %v4705 = vrcp.pop %v4684
    %v4706 = vrcp.pop %v4686
    %v4707 = vrcp.pop %v4688
    %v4708 = vrcp.pop %v4690
    %v4709 = vrcp.pop %v4692
    %v4710 = vrcp.pop %v4694
    %v4711 = vmul.f32 %v4632, %v4695
    %v4712 = vmul.f32 %v4634, %v4696
    %v4713 = vmul.f32 %v4636, %v4697
    %v4714 = vmul.f32 %v4638, %v4698
    %v4715 = vmul.f32 %v4640, %v4699
    %v4716 = vmul.f32 %v4642, %v4700
    %v4717 = vmul.f32 %v4644, %v4701
    %v4718 = vmul.f32 %v4646, %v4702
    %v4719 = vmul.f32 %v4648, %v4703
    %v4720 = vmul.f32 %v4650, %v4704
    %v4721 = vmul.f32 %v4652, %v4705
    %v4722 = vmul.f32 %v4654, %v4706
    %v4723 = vmul.f32 %v4656, %v4707
    %v4724 = vmul.f32 %v4658, %v4708
    %v4725 = vmul.f32 %v4660, %v4709
    %v4726 = vmul.f32 %v4662, %v4710
    %v4727 = vpack.c.bf16 %v4712, %v4711
    %v4728 = vpack.c.bf16 %v4714, %v4713
    %v4729 = vpack.c.bf16 %v4716, %v4715
    %v4730 = vpack.c.bf16 %v4718, %v4717
    %v4731 = vpack.c.bf16 %v4720, %v4719
    %v4732 = vpack.c.bf16 %v4722, %v4721
    %v4733 = vpack.c.bf16 %v4724, %v4723
    %v4734 = vpack.c.bf16 %v4726, %v4725
    %4735 = vmatpush.bf16.msra.mxu0 %v4452
    %4736 = vmatpush.bf16.msra.mxu0 %v4451
    %4737 = vmatpush.bf16.msra.mxu0 %v4450
    %4738 = vmatpush.bf16.msra.mxu0 %v4449
    %4739 = vmatpush.bf16.msra.mxu0 %v4448
    %4740 = vmatpush.bf16.msra.mxu0 %v4447
    %4741 = vmatpush.bf16.msra.mxu0 %v4446
    %4742 = vmatpush.bf16.msra.mxu0 %v4445
    %4743 = vmatmul.bf16.gmra.mxu0 %v4727
    %v4744 = vpop.f32.mrf.mxu0
    %v4745 = vadd.f32 0.0, %v4744
    %v4746 = vpop.f32.mrf.mxu0
    %v4747 = vadd.f32 0.0, %v4746
    %4748 = vmatmul.bf16.gmra.mxu0 %v4728
    %v4749 = vpop.f32.mrf.mxu0
    %v4750 = vadd.f32 0.0, %v4749
    %v4751 = vpop.f32.mrf.mxu0
    %v4752 = vadd.f32 0.0, %v4751
    %4753 = vmatmul.bf16.gmra.mxu0 %v4729
    %v4754 = vpop.f32.mrf.mxu0
    %v4755 = vadd.f32 0.0, %v4754
    %v4756 = vpop.f32.mrf.mxu0
    %v4757 = vadd.f32 0.0, %v4756
    %4758 = vmatmul.bf16.gmra.mxu0 %v4730
    %v4759 = vpop.f32.mrf.mxu0
    %v4760 = vadd.f32 0.0, %v4759
    %v4761 = vpop.f32.mrf.mxu0
    %v4762 = vadd.f32 0.0, %v4761
    %4763 = vmatmul.bf16.gmra.mxu0 %v4731
    %v4764 = vpop.f32.mrf.mxu0
    %v4765 = vadd.f32 0.0, %v4764
    %v4766 = vpop.f32.mrf.mxu0
    %v4767 = vadd.f32 0.0, %v4766
    %4768 = vmatmul.bf16.gmra.mxu0 %v4732
    %v4769 = vpop.f32.mrf.mxu0
    %v4770 = vadd.f32 0.0, %v4769
    %v4771 = vpop.f32.mrf.mxu0
    %v4772 = vadd.f32 0.0, %v4771
    %4773 = vmatmul.bf16.gmra.mxu0 %v4733
    %v4774 = vpop.f32.mrf.mxu0
    %v4775 = vadd.f32 0.0, %v4774
    %v4776 = vpop.f32.mrf.mxu0
    %v4777 = vadd.f32 0.0, %v4776
    %4778 = vmatmul.bf16.gmra.mxu0 %v4734
    %v4779 = vpop.f32.mrf.mxu0
    %v4780 = vadd.f32 0.0, %v4779
    %v4781 = vpop.f32.mrf.mxu0
    %v4782 = vadd.f32 0.0, %v4781
    %4783 = vdwg.mxu0
    %v4784 = vpack.c.bf16 %v4747, %v4745
    %v4785 = vpack.c.bf16 %v4752, %v4750
    %v4786 = vpack.c.bf16 %v4757, %v4755
    %v4787 = vpack.c.bf16 %v4762, %v4760
    %v4788 = vpack.c.bf16 %v4767, %v4765
    %v4789 = vpack.c.bf16 %v4772, %v4770
    %v4790 = vpack.c.bf16 %v4777, %v4775
    %v4791 = vpack.c.bf16 %v4782, %v4780
    %s4792 = scalar_lea.vmem %s6, 20
    %v4793 = vld [vmem:[%s4792] sm:$0xf]
    %v4795 = vsel %vm590, %v4784, 0
    %v4798 = vsel %vm590, %v4785, 0
    %v4801 = vsel %vm590, %v4786, 0
    %v4804 = vsel %vm590, %v4787, 0
    %v4807 = vsel %vm590, %v4788, 0
    %v4810 = vsel %vm590, %v4789, 0
    %v4813 = vsel %vm590, %v4790, 0
    %v4816 = vsel %vm590, %v4791, 0
    %v4819 = vsel %vm1629, %v4793, 0
    %4821 = vmatpush.bf16.msra.mxu0 0
    %4822 = vmatpush.bf16.msra.mxu0 0
    %4823 = vmatpush.bf16.msra.mxu0 0
    %4824 = vmatpush.bf16.msra.mxu0 0
    %4825 = vmatpush.bf16.msra.mxu0 0
    %4826 = vmatpush.bf16.msra.mxu0 0
    %4827 = vmatpush.bf16.msra.mxu0 0
    %4828 = vmatpush.bf16.msra.mxu0 %v4819
    %4829 = vmatmul.bf16.gmra.mxu0 %v4795
    %v4830 = vpop.f32.mrf.mxu0
    %v4831 = vadd.f32 0.0, %v4830
    %v4832 = vpop.f32.mrf.mxu0
    %v4833 = vadd.f32 0.0, %v4832
    %4834 = vmatmul.bf16.gmra.mxu0 %v4798
    %v4835 = vpop.f32.mrf.mxu0
    %v4836 = vadd.f32 0.0, %v4835
    %v4837 = vpop.f32.mrf.mxu0
    %v4838 = vadd.f32 0.0, %v4837
    %4839 = vmatmul.bf16.gmra.mxu0 %v4801
    %v4840 = vpop.f32.mrf.mxu0
    %v4841 = vadd.f32 0.0, %v4840
    %v4842 = vpop.f32.mrf.mxu0
    %v4843 = vadd.f32 0.0, %v4842
    %4844 = vmatmul.bf16.gmra.mxu0 %v4804
    %v4845 = vpop.f32.mrf.mxu0
    %v4846 = vadd.f32 0.0, %v4845
    %v4847 = vpop.f32.mrf.mxu0
    %v4848 = vadd.f32 0.0, %v4847
    %4849 = vmatmul.bf16.gmra.mxu0 %v4807
    %v4850 = vpop.f32.mrf.mxu0
    %v4851 = vadd.f32 0.0, %v4850
    %v4852 = vpop.f32.mrf.mxu0
    %v4853 = vadd.f32 0.0, %v4852
    %4854 = vmatmul.bf16.gmra.mxu0 %v4810
    %v4855 = vpop.f32.mrf.mxu0
    %v4856 = vadd.f32 0.0, %v4855
    %v4857 = vpop.f32.mrf.mxu0
    %v4858 = vadd.f32 0.0, %v4857
    %4859 = vmatmul.bf16.gmra.mxu0 %v4813
    %v4860 = vpop.f32.mrf.mxu0
    %v4861 = vadd.f32 0.0, %v4860
    %v4862 = vpop.f32.mrf.mxu0
    %v4863 = vadd.f32 0.0, %v4862
    %4864 = vmatmul.bf16.gmra.mxu0 %v4816
    %v4865 = vpop.f32.mrf.mxu0
    %v4866 = vadd.f32 0.0, %v4865
    %v4867 = vpop.f32.mrf.mxu0
    %v4868 = vadd.f32 0.0, %v4867
    %4869 = vdwg.mxu0
    %v4871 = vsel %vm590, %v4077, 0
    %v4874 = vsel %vm590, %v4078, 0
    %v4877 = vsel %vm590, %v4079, 0
    %v4880 = vsel %vm590, %v4080, 0
    %v4883 = vsel %vm590, %v4081, 0
    %v4886 = vsel %vm590, %v4082, 0
    %v4889 = vsel %vm590, %v4083, 0
    %v4892 = vsel %vm590, %v4084, 0
    %v4895 = vsel %vm1629, %v4086, 0
    %4897 = vmatpush.bf16.msra.mxu0 0
    %4898 = vmatpush.bf16.msra.mxu0 0
    %4899 = vmatpush.bf16.msra.mxu0 0
    %4900 = vmatpush.bf16.msra.mxu0 0
    %4901 = vmatpush.bf16.msra.mxu0 0
    %4902 = vmatpush.bf16.msra.mxu0 0
    %4903 = vmatpush.bf16.msra.mxu0 0
    %4904 = vmatpush.bf16.msra.mxu0 %v4895
    %4905 = vmatmul.bf16.gmra.mxu0 %v4871
    %v4906 = vpop.f32.mrf.mxu0
    %v4907 = vadd.f32 %v4831, %v4906
    %v4908 = vpop.f32.mrf.mxu0
    %v4909 = vadd.f32 %v4833, %v4908
    %4910 = vmatmul.bf16.gmra.mxu0 %v4874
    %v4911 = vpop.f32.mrf.mxu0
    %v4912 = vadd.f32 %v4836, %v4911
    %v4913 = vpop.f32.mrf.mxu0
    %v4914 = vadd.f32 %v4838, %v4913
    %4915 = vmatmul.bf16.gmra.mxu0 %v4877
    %v4916 = vpop.f32.mrf.mxu0
    %v4917 = vadd.f32 %v4841, %v4916
    %v4918 = vpop.f32.mrf.mxu0
    %v4919 = vadd.f32 %v4843, %v4918
    %4920 = vmatmul.bf16.gmra.mxu0 %v4880
    %v4921 = vpop.f32.mrf.mxu0
    %v4922 = vadd.f32 %v4846, %v4921
    %v4923 = vpop.f32.mrf.mxu0
    %v4924 = vadd.f32 %v4848, %v4923
    %4925 = vmatmul.bf16.gmra.mxu0 %v4883
    %v4926 = vpop.f32.mrf.mxu0
    %v4927 = vadd.f32 %v4851, %v4926
    %v4928 = vpop.f32.mrf.mxu0
    %v4929 = vadd.f32 %v4853, %v4928
    %4930 = vmatmul.bf16.gmra.mxu0 %v4886
    %v4931 = vpop.f32.mrf.mxu0
    %v4932 = vadd.f32 %v4856, %v4931
    %v4933 = vpop.f32.mrf.mxu0
    %v4934 = vadd.f32 %v4858, %v4933
    %4935 = vmatmul.bf16.gmra.mxu0 %v4889
    %v4936 = vpop.f32.mrf.mxu0
    %v4937 = vadd.f32 %v4861, %v4936
    %v4938 = vpop.f32.mrf.mxu0
    %v4939 = vadd.f32 %v4863, %v4938
    %4940 = vmatmul.bf16.gmra.mxu0 %v4892
    %v4941 = vpop.f32.mrf.mxu0
    %v4942 = vadd.f32 %v4866, %v4941
    %v4943 = vpop.f32.mrf.mxu0
    %v4944 = vadd.f32 %v4868, %v4943
    %4945 = vdwg.mxu0
    %s4946 = scalar_lea.vmem %s3, 384
    %v4947 = vld [vmem:[%s4946] sm:$0xf]
    %v4948 = vld [vmem:[%s4946 + $0x4] sm:$0xf]
    %v4949 = vld [vmem:[%s4946 + $0x8] sm:$0xf]
    %v4950 = vld [vmem:[%s4946 + $0xc] sm:$0xf]
    %v4951 = vld [vmem:[%s4946 + $0x10] sm:$0xf]
    %v4952 = vld [vmem:[%s4946 + $0x14] sm:$0xf]
    %v4953 = vld [vmem:[%s4946 + $0x18] sm:$0xf]
    %v4954 = vld [vmem:[%s4946 + $0x1c] sm:$0xf]
    %v4955 = vld [vmem:[%s4946 + $0x20] sm:$0xf]
    %v4956 = vld [vmem:[%s4946 + $0x24] sm:$0xf]
    %v4957 = vld [vmem:[%s4946 + $0x28] sm:$0xf]
    %v4958 = vld [vmem:[%s4946 + $0x2c] sm:$0xf]
    %v4959 = vld [vmem:[%s4946 + $0x30] sm:$0xf]
    %v4960 = vld [vmem:[%s4946 + $0x34] sm:$0xf]
    %v4961 = vld [vmem:[%s4946 + $0x38] sm:$0xf]
    %v4962 = vld [vmem:[%s4946 + $0x3c] sm:$0xf]
    %v4979 = vunpack.c.l.b16 %v4947
    %v4980 = vunpack.c.l.b16 %v4948
    %v4981 = vunpack.c.l.b16 %v4949
    %v4982 = vunpack.c.l.b16 %v4950
    %v4983 = vunpack.c.l.b16 %v4951
    %v4984 = vunpack.c.l.b16 %v4952
    %v4985 = vunpack.c.l.b16 %v4953
    %v4986 = vunpack.c.l.b16 %v4954
    %v4987 = vunpack.c.l.b16 %v4955
    %v4988 = vunpack.c.l.b16 %v4956
    %v4989 = vunpack.c.l.b16 %v4957
    %v4990 = vunpack.c.l.b16 %v4958
    %v4991 = vunpack.c.l.b16 %v4959
    %v4992 = vunpack.c.l.b16 %v4960
    %v4993 = vunpack.c.l.b16 %v4961
    %v4994 = vunpack.c.l.b16 %v4962
    %v4995 = vpack.c.b16 %v4980, %v4979
    %v4996 = vpack.c.b16 %v4982, %v4981
    %v4997 = vpack.c.b16 %v4984, %v4983
    %v4998 = vpack.c.b16 %v4986, %v4985
    %v4999 = vpack.c.b16 %v4988, %v4987
    %v5000 = vpack.c.b16 %v4990, %v4989
    %v5001 = vpack.c.b16 %v4992, %v4991
    %v5002 = vpack.c.b16 %v4994, %v4993
    %5011 = vmatpush.bf16.msra.mxu0 %v5002
    %5012 = vmatpush.bf16.msra.mxu0 %v5001
    %5013 = vmatpush.bf16.msra.mxu0 %v5000
    %5014 = vmatpush.bf16.msra.mxu0 %v4999
    %5015 = vmatpush.bf16.msra.mxu0 %v4998
    %5016 = vmatpush.bf16.msra.mxu0 %v4997
    %5017 = vmatpush.bf16.msra.mxu0 %v4996
    %5018 = vmatpush.bf16.msra.mxu0 %v4995
    %5019 = vmatmul.bf16.gmra.mxu0 %v3372
    %v5020 = vpop.f32.mrf.mxu0
    %v5021 = vadd.f32 0.0, %v5020
    %v5022 = vpop.f32.mrf.mxu0
    %v5023 = vadd.f32 0.0, %v5022
    %5024 = vmatmul.bf16.gmra.mxu0 %v3373
    %v5025 = vpop.f32.mrf.mxu0
    %v5026 = vadd.f32 0.0, %v5025
    %v5027 = vpop.f32.mrf.mxu0
    %v5028 = vadd.f32 0.0, %v5027
    %5029 = vmatmul.bf16.gmra.mxu0 %v3374
    %v5030 = vpop.f32.mrf.mxu0
    %v5031 = vadd.f32 0.0, %v5030
    %v5032 = vpop.f32.mrf.mxu0
    %v5033 = vadd.f32 0.0, %v5032
    %5034 = vmatmul.bf16.gmra.mxu0 %v3375
    %v5035 = vpop.f32.mrf.mxu0
    %v5036 = vadd.f32 0.0, %v5035
    %v5037 = vpop.f32.mrf.mxu0
    %v5038 = vadd.f32 0.0, %v5037
    %5039 = vmatmul.bf16.gmra.mxu0 %v3376
    %v5040 = vpop.f32.mrf.mxu0
    %v5041 = vadd.f32 0.0, %v5040
    %v5042 = vpop.f32.mrf.mxu0
    %v5043 = vadd.f32 0.0, %v5042
    %5044 = vmatmul.bf16.gmra.mxu0 %v3377
    %v5045 = vpop.f32.mrf.mxu0
    %v5046 = vadd.f32 0.0, %v5045
    %v5047 = vpop.f32.mrf.mxu0
    %v5048 = vadd.f32 0.0, %v5047
    %5049 = vmatmul.bf16.gmra.mxu0 %v3378
    %v5050 = vpop.f32.mrf.mxu0
    %v5051 = vadd.f32 0.0, %v5050
    %v5052 = vpop.f32.mrf.mxu0
    %v5053 = vadd.f32 0.0, %v5052
    %5054 = vmatmul.bf16.gmra.mxu0 %v3379
    %v5055 = vpop.f32.mrf.mxu0
    %v5056 = vadd.f32 0.0, %v5055
    %v5057 = vpop.f32.mrf.mxu0
    %v5058 = vadd.f32 0.0, %v5057
    %5059 = vdwg.mxu0
    %v5060 = vpack.c.bf16 %v5023, %v5021
    %v5061 = vpack.c.bf16 %v5028, %v5026
    %v5062 = vpack.c.bf16 %v5033, %v5031
    %v5063 = vpack.c.bf16 %v5038, %v5036
    %v5064 = vpack.c.bf16 %v5043, %v5041
    %v5065 = vpack.c.bf16 %v5048, %v5046
    %v5066 = vpack.c.bf16 %v5053, %v5051
    %v5067 = vpack.c.bf16 %v5058, %v5056
    %s5068 = scalar_lea.vmem %s4, 384
    %v5069 = vld [vmem:[%s5068] sm:$0xf]
    %v5070 = vld [vmem:[%s5068 + $0x4] sm:$0xf]
    %v5071 = vld [vmem:[%s5068 + $0x8] sm:$0xf]
    %v5072 = vld [vmem:[%s5068 + $0xc] sm:$0xf]
    %v5073 = vld [vmem:[%s5068 + $0x10] sm:$0xf]
    %v5074 = vld [vmem:[%s5068 + $0x14] sm:$0xf]
    %v5075 = vld [vmem:[%s5068 + $0x18] sm:$0xf]
    %v5076 = vld [vmem:[%s5068 + $0x1c] sm:$0xf]
    %v5077 = vld [vmem:[%s5068 + $0x20] sm:$0xf]
    %v5078 = vld [vmem:[%s5068 + $0x24] sm:$0xf]
    %v5079 = vld [vmem:[%s5068 + $0x28] sm:$0xf]
    %v5080 = vld [vmem:[%s5068 + $0x2c] sm:$0xf]
    %v5081 = vld [vmem:[%s5068 + $0x30] sm:$0xf]
    %v5082 = vld [vmem:[%s5068 + $0x34] sm:$0xf]
    %v5083 = vld [vmem:[%s5068 + $0x38] sm:$0xf]
    %v5084 = vld [vmem:[%s5068 + $0x3c] sm:$0xf]
    %v5101 = vunpack.c.l.b16 %v5069
    %v5102 = vunpack.c.l.b16 %v5070
    %v5103 = vunpack.c.l.b16 %v5071
    %v5104 = vunpack.c.l.b16 %v5072
    %v5105 = vunpack.c.l.b16 %v5073
    %v5106 = vunpack.c.l.b16 %v5074
    %v5107 = vunpack.c.l.b16 %v5075
    %v5108 = vunpack.c.l.b16 %v5076
    %v5109 = vunpack.c.l.b16 %v5077
    %v5110 = vunpack.c.l.b16 %v5078
    %v5111 = vunpack.c.l.b16 %v5079
    %v5112 = vunpack.c.l.b16 %v5080
    %v5113 = vunpack.c.l.b16 %v5081
    %v5114 = vunpack.c.l.b16 %v5082
    %v5115 = vunpack.c.l.b16 %v5083
    %v5116 = vunpack.c.l.b16 %v5084
    %v5117 = vpack.c.b16 %v5102, %v5101
    %v5118 = vpack.c.b16 %v5104, %v5103
    %v5119 = vpack.c.b16 %v5106, %v5105
    %v5120 = vpack.c.b16 %v5108, %v5107
    %v5121 = vpack.c.b16 %v5110, %v5109
    %v5122 = vpack.c.b16 %v5112, %v5111
    %v5123 = vpack.c.b16 %v5114, %v5113
    %v5124 = vpack.c.b16 %v5116, %v5115
    %5133 = vmatpush.bf16.msra.mxu0 %v5124
    %5134 = vmatpush.bf16.msra.mxu0 %v5123
    %5135 = vmatpush.bf16.msra.mxu0 %v5122
    %5136 = vmatpush.bf16.msra.mxu0 %v5121
    %5137 = vmatpush.bf16.msra.mxu0 %v5120
    %5138 = vmatpush.bf16.msra.mxu0 %v5119
    %5139 = vmatpush.bf16.msra.mxu0 %v5118
    %5140 = vmatpush.bf16.msra.mxu0 %v5117
    %5141 = vmatmul.bf16.gmra.mxu0 %v3372
    %v5142 = vpop.f32.mrf.mxu0
    %v5143 = vadd.f32 0.0, %v5142
    %v5144 = vpop.f32.mrf.mxu0
    %v5145 = vadd.f32 0.0, %v5144
    %5146 = vmatmul.bf16.gmra.mxu0 %v3373
    %v5147 = vpop.f32.mrf.mxu0
    %v5148 = vadd.f32 0.0, %v5147
    %v5149 = vpop.f32.mrf.mxu0
    %v5150 = vadd.f32 0.0, %v5149
    %5151 = vmatmul.bf16.gmra.mxu0 %v3374
    %v5152 = vpop.f32.mrf.mxu0
    %v5153 = vadd.f32 0.0, %v5152
    %v5154 = vpop.f32.mrf.mxu0
    %v5155 = vadd.f32 0.0, %v5154
    %5156 = vmatmul.bf16.gmra.mxu0 %v3375
    %v5157 = vpop.f32.mrf.mxu0
    %v5158 = vadd.f32 0.0, %v5157
    %v5159 = vpop.f32.mrf.mxu0
    %v5160 = vadd.f32 0.0, %v5159
    %5161 = vmatmul.bf16.gmra.mxu0 %v3376
    %v5162 = vpop.f32.mrf.mxu0
    %v5163 = vadd.f32 0.0, %v5162
    %v5164 = vpop.f32.mrf.mxu0
    %v5165 = vadd.f32 0.0, %v5164
    %5166 = vmatmul.bf16.gmra.mxu0 %v3377
    %v5167 = vpop.f32.mrf.mxu0
    %v5168 = vadd.f32 0.0, %v5167
    %v5169 = vpop.f32.mrf.mxu0
    %v5170 = vadd.f32 0.0, %v5169
    %5171 = vmatmul.bf16.gmra.mxu0 %v3378
    %v5172 = vpop.f32.mrf.mxu0
    %v5173 = vadd.f32 0.0, %v5172
    %v5174 = vpop.f32.mrf.mxu0
    %v5175 = vadd.f32 0.0, %v5174
    %5176 = vmatmul.bf16.gmra.mxu0 %v3379
    %v5177 = vpop.f32.mrf.mxu0
    %v5178 = vadd.f32 0.0, %v5177
    %v5179 = vpop.f32.mrf.mxu0
    %v5180 = vadd.f32 0.0, %v5179
    %5181 = vdwg.mxu0
    %v5182 = vpack.c.bf16 %v5145, %v5143
    %v5183 = vpack.c.bf16 %v5150, %v5148
    %v5184 = vpack.c.bf16 %v5155, %v5153
    %v5185 = vpack.c.bf16 %v5160, %v5158
    %v5186 = vpack.c.bf16 %v5165, %v5163
    %v5187 = vpack.c.bf16 %v5170, %v5168
    %v5188 = vpack.c.bf16 %v5175, %v5173
    %v5189 = vpack.c.bf16 %v5180, %v5178
    %s5190 = scalar_lea.vmem %s5, 384
    %v5191 = vld [vmem:[%s5190] sm:$0xf]
    %v5192 = vld [vmem:[%s5190 + $0x4] sm:$0xf]
    %v5193 = vld [vmem:[%s5190 + $0x8] sm:$0xf]
    %v5194 = vld [vmem:[%s5190 + $0xc] sm:$0xf]
    %v5195 = vld [vmem:[%s5190 + $0x10] sm:$0xf]
    %v5196 = vld [vmem:[%s5190 + $0x14] sm:$0xf]
    %v5197 = vld [vmem:[%s5190 + $0x18] sm:$0xf]
    %v5198 = vld [vmem:[%s5190 + $0x1c] sm:$0xf]
    %v5199 = vld [vmem:[%s5190 + $0x20] sm:$0xf]
    %v5200 = vld [vmem:[%s5190 + $0x24] sm:$0xf]
    %v5201 = vld [vmem:[%s5190 + $0x28] sm:$0xf]
    %v5202 = vld [vmem:[%s5190 + $0x2c] sm:$0xf]
    %v5203 = vld [vmem:[%s5190 + $0x30] sm:$0xf]
    %v5204 = vld [vmem:[%s5190 + $0x34] sm:$0xf]
    %v5205 = vld [vmem:[%s5190 + $0x38] sm:$0xf]
    %v5206 = vld [vmem:[%s5190 + $0x3c] sm:$0xf]
    %v5223 = vunpack.c.l.b16 %v5191
    %v5224 = vunpack.c.l.b16 %v5192
    %v5225 = vunpack.c.l.b16 %v5193
    %v5226 = vunpack.c.l.b16 %v5194
    %v5227 = vunpack.c.l.b16 %v5195
    %v5228 = vunpack.c.l.b16 %v5196
    %v5229 = vunpack.c.l.b16 %v5197
    %v5230 = vunpack.c.l.b16 %v5198
    %v5231 = vunpack.c.l.b16 %v5199
    %v5232 = vunpack.c.l.b16 %v5200
    %v5233 = vunpack.c.l.b16 %v5201
    %v5234 = vunpack.c.l.b16 %v5202
    %v5235 = vunpack.c.l.b16 %v5203
    %v5236 = vunpack.c.l.b16 %v5204
    %v5237 = vunpack.c.l.b16 %v5205
    %v5238 = vunpack.c.l.b16 %v5206
    %v5239 = vpack.c.b16 %v5224, %v5223
    %v5240 = vpack.c.b16 %v5226, %v5225
    %v5241 = vpack.c.b16 %v5228, %v5227
    %v5242 = vpack.c.b16 %v5230, %v5229
    %v5243 = vpack.c.b16 %v5232, %v5231
    %v5244 = vpack.c.b16 %v5234, %v5233
    %v5245 = vpack.c.b16 %v5236, %v5235
    %v5246 = vpack.c.b16 %v5238, %v5237
    %5255 = vmatpush.bf16.msra.mxu0 %v5246
    %5256 = vmatpush.bf16.msra.mxu0 %v5245
    %5257 = vmatpush.bf16.msra.mxu0 %v5244
    %5258 = vmatpush.bf16.msra.mxu0 %v5243
    %5259 = vmatpush.bf16.msra.mxu0 %v5242
    %5260 = vmatpush.bf16.msra.mxu0 %v5241
    %5261 = vmatpush.bf16.msra.mxu0 %v5240
    %5262 = vmatpush.bf16.msra.mxu0 %v5239
    %5263 = vmatmul.bf16.gmra.mxu0 %v3372
    %v5264 = vpop.f32.mrf.mxu0
    %v5265 = vadd.f32 0.0, %v5264
    %v5266 = vpop.f32.mrf.mxu0
    %v5267 = vadd.f32 0.0, %v5266
    %5268 = vmatmul.bf16.gmra.mxu0 %v3373
    %v5269 = vpop.f32.mrf.mxu0
    %v5270 = vadd.f32 0.0, %v5269
    %v5271 = vpop.f32.mrf.mxu0
    %v5272 = vadd.f32 0.0, %v5271
    %5273 = vmatmul.bf16.gmra.mxu0 %v3374
    %v5274 = vpop.f32.mrf.mxu0
    %v5275 = vadd.f32 0.0, %v5274
    %v5276 = vpop.f32.mrf.mxu0
    %v5277 = vadd.f32 0.0, %v5276
    %5278 = vmatmul.bf16.gmra.mxu0 %v3375
    %v5279 = vpop.f32.mrf.mxu0
    %v5280 = vadd.f32 0.0, %v5279
    %v5281 = vpop.f32.mrf.mxu0
    %v5282 = vadd.f32 0.0, %v5281
    %5283 = vmatmul.bf16.gmra.mxu0 %v3376
    %v5284 = vpop.f32.mrf.mxu0
    %v5285 = vadd.f32 0.0, %v5284
    %v5286 = vpop.f32.mrf.mxu0
    %v5287 = vadd.f32 0.0, %v5286
    %5288 = vmatmul.bf16.gmra.mxu0 %v3377
    %v5289 = vpop.f32.mrf.mxu0
    %v5290 = vadd.f32 0.0, %v5289
    %v5291 = vpop.f32.mrf.mxu0
    %v5292 = vadd.f32 0.0, %v5291
    %5293 = vmatmul.bf16.gmra.mxu0 %v3378
    %v5294 = vpop.f32.mrf.mxu0
    %v5295 = vadd.f32 0.0, %v5294
    %v5296 = vpop.f32.mrf.mxu0
    %v5297 = vadd.f32 0.0, %v5296
    %5298 = vmatmul.bf16.gmra.mxu0 %v3379
    %v5299 = vpop.f32.mrf.mxu0
    %v5300 = vadd.f32 0.0, %v5299
    %v5301 = vpop.f32.mrf.mxu0
    %v5302 = vadd.f32 0.0, %v5301
    %5303 = vdwg.mxu0
    %v5304 = vpack.c.bf16 %v5267, %v5265
    %v5305 = vpack.c.bf16 %v5272, %v5270
    %v5306 = vpack.c.bf16 %v5277, %v5275
    %v5307 = vpack.c.bf16 %v5282, %v5280
    %v5308 = vpack.c.bf16 %v5287, %v5285
    %v5309 = vpack.c.bf16 %v5292, %v5290
    %v5310 = vpack.c.bf16 %v5297, %v5295
    %v5311 = vpack.c.bf16 %v5302, %v5300
    %s5312 = scalar_lea.vmem %s2, 384
    %v5313 = vld [vmem:[%s5312] sm:$0xf]
    %v5314 = vld [vmem:[%s5312 + $0x4] sm:$0xf]
    %v5315 = vld [vmem:[%s5312 + $0x8] sm:$0xf]
    %v5316 = vld [vmem:[%s5312 + $0xc] sm:$0xf]
    %v5317 = vld [vmem:[%s5312 + $0x10] sm:$0xf]
    %v5318 = vld [vmem:[%s5312 + $0x14] sm:$0xf]
    %v5319 = vld [vmem:[%s5312 + $0x18] sm:$0xf]
    %v5320 = vld [vmem:[%s5312 + $0x1c] sm:$0xf]
    %v5321 = vld [vmem:[%s5312 + $0x20] sm:$0xf]
    %v5322 = vld [vmem:[%s5312 + $0x24] sm:$0xf]
    %v5323 = vld [vmem:[%s5312 + $0x28] sm:$0xf]
    %v5324 = vld [vmem:[%s5312 + $0x2c] sm:$0xf]
    %v5325 = vld [vmem:[%s5312 + $0x30] sm:$0xf]
    %v5326 = vld [vmem:[%s5312 + $0x34] sm:$0xf]
    %v5327 = vld [vmem:[%s5312 + $0x38] sm:$0xf]
    %v5328 = vld [vmem:[%s5312 + $0x3c] sm:$0xf]
    %v5329 = vunpack.c.l.bf16 %v5313
    %v5330 = vunpack.c.l.bf16 %v5314
    %v5331 = vunpack.c.l.bf16 %v5315
    %v5332 = vunpack.c.l.bf16 %v5316
    %v5333 = vunpack.c.l.bf16 %v5317
    %v5334 = vunpack.c.l.bf16 %v5318
    %v5335 = vunpack.c.l.bf16 %v5319
    %v5336 = vunpack.c.l.bf16 %v5320
    %v5337 = vunpack.c.l.bf16 %v5321
    %v5338 = vunpack.c.l.bf16 %v5322
    %v5339 = vunpack.c.l.bf16 %v5323
    %v5340 = vunpack.c.l.bf16 %v5324
    %v5341 = vunpack.c.l.bf16 %v5325
    %v5342 = vunpack.c.l.bf16 %v5326
    %v5343 = vunpack.c.l.bf16 %v5327
    %v5344 = vunpack.c.l.bf16 %v5328
    %v5346 = vsel %vm590, %v5060, 0
    %v5349 = vsel %vm590, %v5061, 0
    %v5352 = vsel %vm590, %v5062, 0
    %v5355 = vsel %vm590, %v5063, 0
    %v5358 = vsel %vm590, %v5064, 0
    %v5361 = vsel %vm590, %v5065, 0
    %v5364 = vsel %vm590, %v5066, 0
    %v5367 = vsel %vm590, %v5067, 0
    %v5370 = vsel %vm590, %v5182, 0
    %v5373 = vsel %vm590, %v5183, 0
    %v5376 = vsel %vm590, %v5184, 0
    %v5379 = vsel %vm590, %v5185, 0
    %v5382 = vsel %vm590, %v5186, 0
    %v5385 = vsel %vm590, %v5187, 0
    %v5388 = vsel %vm590, %v5188, 0
    %v5391 = vsel %vm590, %v5189, 0
    %5393 = vmatpush.bf16.xpose.msra.mxu0 %v5391
    %5394 = vmatpush.bf16.xpose.msra.mxu0 %v5388
    %5395 = vmatpush.bf16.xpose.msra.mxu0 %v5385
    %5396 = vmatpush.bf16.xpose.msra.mxu0 %v5382
    %5397 = vmatpush.bf16.xpose.msra.mxu0 %v5379
    %5398 = vmatpush.bf16.xpose.msra.mxu0 %v5376
    %5399 = vmatpush.bf16.xpose.msra.mxu0 %v5373
    %5400 = vmatpush.bf16.xpose.msra.mxu0 %v5370
    %5401 = vmatmul.bf16.gmra.mxu0 %v5346
    %v5402 = vpop.f32.mrf.mxu0
    %v5403 = vadd.f32 %v5329, %v5402
    %v5404 = vpop.f32.mrf.mxu0
    %v5405 = vadd.f32 %v5330, %v5404
    %5406 = vmatmul.bf16.gmra.mxu0 %v5349
    %v5407 = vpop.f32.mrf.mxu0
    %v5408 = vadd.f32 %v5331, %v5407
    %v5409 = vpop.f32.mrf.mxu0
    %v5410 = vadd.f32 %v5332, %v5409
    %5411 = vmatmul.bf16.gmra.mxu0 %v5352
    %v5412 = vpop.f32.mrf.mxu0
    %v5413 = vadd.f32 %v5333, %v5412
    %v5414 = vpop.f32.mrf.mxu0
    %v5415 = vadd.f32 %v5334, %v5414
    %5416 = vmatmul.bf16.gmra.mxu0 %v5355
    %v5417 = vpop.f32.mrf.mxu0
    %v5418 = vadd.f32 %v5335, %v5417
    %v5419 = vpop.f32.mrf.mxu0
    %v5420 = vadd.f32 %v5336, %v5419
    %5421 = vmatmul.bf16.gmra.mxu0 %v5358
    %v5422 = vpop.f32.mrf.mxu0
    %v5423 = vadd.f32 %v5337, %v5422
    %v5424 = vpop.f32.mrf.mxu0
    %v5425 = vadd.f32 %v5338, %v5424
    %5426 = vmatmul.bf16.gmra.mxu0 %v5361
    %v5427 = vpop.f32.mrf.mxu0
    %v5428 = vadd.f32 %v5339, %v5427
    %v5429 = vpop.f32.mrf.mxu0
    %v5430 = vadd.f32 %v5340, %v5429
    %5431 = vmatmul.bf16.gmra.mxu0 %v5364
    %v5432 = vpop.f32.mrf.mxu0
    %v5433 = vadd.f32 %v5341, %v5432
    %v5434 = vpop.f32.mrf.mxu0
    %v5435 = vadd.f32 %v5342, %v5434
    %5436 = vmatmul.bf16.gmra.mxu0 %v5367
    %v5437 = vpop.f32.mrf.mxu0
    %v5438 = vadd.f32 %v5343, %v5437
    %v5439 = vpop.f32.mrf.mxu0
    %v5440 = vadd.f32 %v5344, %v5439
    %5441 = vdwg.mxu0
    %5442 = vmax.xlane.f32.xlu0 %v5403
    %v5443 = vpop.xlane.xlu0 %5442
    %5444 = vmax.xlane.f32.xlu0 %v5405
    %v5445 = vpop.xlane.xlu0 %5444
    %5446 = vmax.xlane.f32.xlu0 %v5408
    %v5447 = vpop.xlane.xlu0 %5446
    %5448 = vmax.xlane.f32.xlu0 %v5410
    %v5449 = vpop.xlane.xlu0 %5448
    %5450 = vmax.xlane.f32.xlu0 %v5413
    %v5451 = vpop.xlane.xlu0 %5450
    %5452 = vmax.xlane.f32.xlu0 %v5415
    %v5453 = vpop.xlane.xlu0 %5452
    %5454 = vmax.xlane.f32.xlu0 %v5418
    %v5455 = vpop.xlane.xlu0 %5454
    %5456 = vmax.xlane.f32.xlu0 %v5420
    %v5457 = vpop.xlane.xlu0 %5456
    %5458 = vmax.xlane.f32.xlu0 %v5423
    %v5459 = vpop.xlane.xlu0 %5458
    %5460 = vmax.xlane.f32.xlu0 %v5425
    %v5461 = vpop.xlane.xlu0 %5460
    %5462 = vmax.xlane.f32.xlu0 %v5428
    %v5463 = vpop.xlane.xlu0 %5462
    %5464 = vmax.xlane.f32.xlu0 %v5430
    %v5465 = vpop.xlane.xlu0 %5464
    %5466 = vmax.xlane.f32.xlu0 %v5433
    %v5467 = vpop.xlane.xlu0 %5466
    %5468 = vmax.xlane.f32.xlu0 %v5435
    %v5469 = vpop.xlane.xlu0 %5468
    %5470 = vmax.xlane.f32.xlu0 %v5438
    %v5471 = vpop.xlane.xlu0 %5470
    %5472 = vmax.xlane.f32.xlu0 %v5440
    %v5473 = vpop.xlane.xlu0 %5472
    %v5474 = vsub.f32 %v5403, %v5443
    %v5475 = vsub.f32 %v5405, %v5445
    %v5476 = vsub.f32 %v5408, %v5447
    %v5477 = vsub.f32 %v5410, %v5449
    %v5478 = vsub.f32 %v5413, %v5451
    %v5479 = vsub.f32 %v5415, %v5453
    %v5480 = vsub.f32 %v5418, %v5455
    %v5481 = vsub.f32 %v5420, %v5457
    %v5482 = vsub.f32 %v5423, %v5459
    %v5483 = vsub.f32 %v5425, %v5461
    %v5484 = vsub.f32 %v5428, %v5463
    %v5485 = vsub.f32 %v5430, %v5465
    %v5486 = vsub.f32 %v5433, %v5467
    %v5487 = vsub.f32 %v5435, %v5469
    %v5488 = vsub.f32 %v5438, %v5471
    %v5489 = vsub.f32 %v5440, %v5473
    %v5490 = vmul.f32 %v5474, 1.442695
    %v5491 = vpow.pop %v5490
    %v5492 = vmul.f32 %v5475, 1.442695
    %v5493 = vpow.pop %v5492
    %v5494 = vmul.f32 %v5476, 1.442695
    %v5495 = vpow.pop %v5494
    %v5496 = vmul.f32 %v5477, 1.442695
    %v5497 = vpow.pop %v5496
    %v5498 = vmul.f32 %v5478, 1.442695
    %v5499 = vpow.pop %v5498
    %v5500 = vmul.f32 %v5479, 1.442695
    %v5501 = vpow.pop %v5500
    %v5502 = vmul.f32 %v5480, 1.442695
    %v5503 = vpow.pop %v5502
    %v5504 = vmul.f32 %v5481, 1.442695
    %v5505 = vpow.pop %v5504
    %v5506 = vmul.f32 %v5482, 1.442695
    %v5507 = vpow.pop %v5506
    %v5508 = vmul.f32 %v5483, 1.442695
    %v5509 = vpow.pop %v5508
    %v5510 = vmul.f32 %v5484, 1.442695
    %v5511 = vpow.pop %v5510
    %v5512 = vmul.f32 %v5485, 1.442695
    %v5513 = vpow.pop %v5512
    %v5514 = vmul.f32 %v5486, 1.442695
    %v5515 = vpow.pop %v5514
    %v5516 = vmul.f32 %v5487, 1.442695
    %v5517 = vpow.pop %v5516
    %v5518 = vmul.f32 %v5488, 1.442695
    %v5519 = vpow.pop %v5518
    %v5520 = vmul.f32 %v5489, 1.442695
    %v5521 = vpow.pop %v5520
    %5522 = vadd.xlane.f32.xlu0 %v5491
    %v5523 = vpop.xlane.xlu0 %5522
    %5524 = vadd.xlane.f32.xlu0 %v5493
    %v5525 = vpop.xlane.xlu0 %5524
    %5526 = vadd.xlane.f32.xlu0 %v5495
    %v5527 = vpop.xlane.xlu0 %5526
    %5528 = vadd.xlane.f32.xlu0 %v5497
    %v5529 = vpop.xlane.xlu0 %5528
    %5530 = vadd.xlane.f32.xlu0 %v5499
    %v5531 = vpop.xlane.xlu0 %5530
    %5532 = vadd.xlane.f32.xlu0 %v5501
    %v5533 = vpop.xlane.xlu0 %5532
    %5534 = vadd.xlane.f32.xlu0 %v5503
    %v5535 = vpop.xlane.xlu0 %5534
    %5536 = vadd.xlane.f32.xlu0 %v5505
    %v5537 = vpop.xlane.xlu0 %5536
    %5538 = vadd.xlane.f32.xlu0 %v5507
    %v5539 = vpop.xlane.xlu0 %5538
    %5540 = vadd.xlane.f32.xlu0 %v5509
    %v5541 = vpop.xlane.xlu0 %5540
    %5542 = vadd.xlane.f32.xlu0 %v5511
    %v5543 = vpop.xlane.xlu0 %5542
    %5544 = vadd.xlane.f32.xlu0 %v5513
    %v5545 = vpop.xlane.xlu0 %5544
    %5546 = vadd.xlane.f32.xlu0 %v5515
    %v5547 = vpop.xlane.xlu0 %5546
    %5548 = vadd.xlane.f32.xlu0 %v5517
    %v5549 = vpop.xlane.xlu0 %5548
    %5550 = vadd.xlane.f32.xlu0 %v5519
    %v5551 = vpop.xlane.xlu0 %5550
    %5552 = vadd.xlane.f32.xlu0 %v5521
    %v5553 = vpop.xlane.xlu0 %5552
    %v5554 = vrcp.pop %v5523
    %v5555 = vrcp.pop %v5525
    %v5556 = vrcp.pop %v5527
    %v5557 = vrcp.pop %v5529
    %v5558 = vrcp.pop %v5531
    %v5559 = vrcp.pop %v5533
    %v5560 = vrcp.pop %v5535
    %v5561 = vrcp.pop %v5537
    %v5562 = vrcp.pop %v5539
    %v5563 = vrcp.pop %v5541
    %v5564 = vrcp.pop %v5543
    %v5565 = vrcp.pop %v5545
    %v5566 = vrcp.pop %v5547
    %v5567 = vrcp.pop %v5549
    %v5568 = vrcp.pop %v5551
    %v5569 = vrcp.pop %v5553
    %v5570 = vmul.f32 %v5491, %v5554
    %v5571 = vmul.f32 %v5493, %v5555
    %v5572 = vmul.f32 %v5495, %v5556
    %v5573 = vmul.f32 %v5497, %v5557
    %v5574 = vmul.f32 %v5499, %v5558
    %v5575 = vmul.f32 %v5501, %v5559
    %v5576 = vmul.f32 %v5503, %v5560
    %v5577 = vmul.f32 %v5505, %v5561
    %v5578 = vmul.f32 %v5507, %v5562
    %v5579 = vmul.f32 %v5509, %v5563
    %v5580 = vmul.f32 %v5511, %v5564
    %v5581 = vmul.f32 %v5513, %v5565
    %v5582 = vmul.f32 %v5515, %v5566
    %v5583 = vmul.f32 %v5517, %v5567
    %v5584 = vmul.f32 %v5519, %v5568
    %v5585 = vmul.f32 %v5521, %v5569
    %v5586 = vpack.c.bf16 %v5571, %v5570
    %v5587 = vpack.c.bf16 %v5573, %v5572
    %v5588 = vpack.c.bf16 %v5575, %v5574
    %v5589 = vpack.c.bf16 %v5577, %v5576
    %v5590 = vpack.c.bf16 %v5579, %v5578
    %v5591 = vpack.c.bf16 %v5581, %v5580
    %v5592 = vpack.c.bf16 %v5583, %v5582
    %v5593 = vpack.c.bf16 %v5585, %v5584
    %5594 = vmatpush.bf16.msra.mxu0 %v5311
    %5595 = vmatpush.bf16.msra.mxu0 %v5310
    %5596 = vmatpush.bf16.msra.mxu0 %v5309
    %5597 = vmatpush.bf16.msra.mxu0 %v5308
    %5598 = vmatpush.bf16.msra.mxu0 %v5307
    %5599 = vmatpush.bf16.msra.mxu0 %v5306
    %5600 = vmatpush.bf16.msra.mxu0 %v5305
    %5601 = vmatpush.bf16.msra.mxu0 %v5304
    %5602 = vmatmul.bf16.gmra.mxu0 %v5586
    %v5603 = vpop.f32.mrf.mxu0
    %v5604 = vadd.f32 0.0, %v5603
    %v5605 = vpop.f32.mrf.mxu0
    %v5606 = vadd.f32 0.0, %v5605
    %5607 = vmatmul.bf16.gmra.mxu0 %v5587
    %v5608 = vpop.f32.mrf.mxu0
    %v5609 = vadd.f32 0.0, %v5608
    %v5610 = vpop.f32.mrf.mxu0
    %v5611 = vadd.f32 0.0, %v5610
    %5612 = vmatmul.bf16.gmra.mxu0 %v5588
    %v5613 = vpop.f32.mrf.mxu0
    %v5614 = vadd.f32 0.0, %v5613
    %v5615 = vpop.f32.mrf.mxu0
    %v5616 = vadd.f32 0.0, %v5615
    %5617 = vmatmul.bf16.gmra.mxu0 %v5589
    %v5618 = vpop.f32.mrf.mxu0
    %v5619 = vadd.f32 0.0, %v5618
    %v5620 = vpop.f32.mrf.mxu0
    %v5621 = vadd.f32 0.0, %v5620
    %5622 = vmatmul.bf16.gmra.mxu0 %v5590
    %v5623 = vpop.f32.mrf.mxu0
    %v5624 = vadd.f32 0.0, %v5623
    %v5625 = vpop.f32.mrf.mxu0
    %v5626 = vadd.f32 0.0, %v5625
    %5627 = vmatmul.bf16.gmra.mxu0 %v5591
    %v5628 = vpop.f32.mrf.mxu0
    %v5629 = vadd.f32 0.0, %v5628
    %v5630 = vpop.f32.mrf.mxu0
    %v5631 = vadd.f32 0.0, %v5630
    %5632 = vmatmul.bf16.gmra.mxu0 %v5592
    %v5633 = vpop.f32.mrf.mxu0
    %v5634 = vadd.f32 0.0, %v5633
    %v5635 = vpop.f32.mrf.mxu0
    %v5636 = vadd.f32 0.0, %v5635
    %5637 = vmatmul.bf16.gmra.mxu0 %v5593
    %v5638 = vpop.f32.mrf.mxu0
    %v5639 = vadd.f32 0.0, %v5638
    %v5640 = vpop.f32.mrf.mxu0
    %v5641 = vadd.f32 0.0, %v5640
    %5642 = vdwg.mxu0
    %v5643 = vpack.c.bf16 %v5606, %v5604
    %v5644 = vpack.c.bf16 %v5611, %v5609
    %v5645 = vpack.c.bf16 %v5616, %v5614
    %v5646 = vpack.c.bf16 %v5621, %v5619
    %v5647 = vpack.c.bf16 %v5626, %v5624
    %v5648 = vpack.c.bf16 %v5631, %v5629
    %v5649 = vpack.c.bf16 %v5636, %v5634
    %v5650 = vpack.c.bf16 %v5641, %v5639
    %s5651 = scalar_lea.vmem %s6, 24
    %v5652 = vld [vmem:[%s5651] sm:$0xf]
    %v5654 = vsel %vm590, %v5643, 0
    %v5657 = vsel %vm590, %v5644, 0
    %v5660 = vsel %vm590, %v5645, 0
    %v5663 = vsel %vm590, %v5646, 0
    %v5666 = vsel %vm590, %v5647, 0
    %v5669 = vsel %vm590, %v5648, 0
    %v5672 = vsel %vm590, %v5649, 0
    %v5675 = vsel %vm590, %v5650, 0
    %v5678 = vsel %vm1629, %v5652, 0
    %5680 = vmatpush.bf16.msra.mxu0 0
    %5681 = vmatpush.bf16.msra.mxu0 0
    %5682 = vmatpush.bf16.msra.mxu0 0
    %5683 = vmatpush.bf16.msra.mxu0 0
    %5684 = vmatpush.bf16.msra.mxu0 0
    %5685 = vmatpush.bf16.msra.mxu0 0
    %5686 = vmatpush.bf16.msra.mxu0 0
    %5687 = vmatpush.bf16.msra.mxu0 %v5678
    %5688 = vmatmul.bf16.gmra.mxu0 %v5654
    %v5689 = vpop.f32.mrf.mxu0
    %v5690 = vadd.f32 0.0, %v5689
    %v5691 = vpop.f32.mrf.mxu0
    %v5692 = vadd.f32 0.0, %v5691
    %5693 = vmatmul.bf16.gmra.mxu0 %v5657
    %v5694 = vpop.f32.mrf.mxu0
    %v5695 = vadd.f32 0.0, %v5694
    %v5696 = vpop.f32.mrf.mxu0
    %v5697 = vadd.f32 0.0, %v5696
    %5698 = vmatmul.bf16.gmra.mxu0 %v5660
    %v5699 = vpop.f32.mrf.mxu0
    %v5700 = vadd.f32 0.0, %v5699
    %v5701 = vpop.f32.mrf.mxu0
    %v5702 = vadd.f32 0.0, %v5701
    %5703 = vmatmul.bf16.gmra.mxu0 %v5663
    %v5704 = vpop.f32.mrf.mxu0
    %v5705 = vadd.f32 0.0, %v5704
    %v5706 = vpop.f32.mrf.mxu0
    %v5707 = vadd.f32 0.0, %v5706
    %5708 = vmatmul.bf16.gmra.mxu0 %v5666
    %v5709 = vpop.f32.mrf.mxu0
    %v5710 = vadd.f32 0.0, %v5709
    %v5711 = vpop.f32.mrf.mxu0
    %v5712 = vadd.f32 0.0, %v5711
    %5713 = vmatmul.bf16.gmra.mxu0 %v5669
    %v5714 = vpop.f32.mrf.mxu0
    %v5715 = vadd.f32 0.0, %v5714
    %v5716 = vpop.f32.mrf.mxu0
    %v5717 = vadd.f32 0.0, %v5716
    %5718 = vmatmul.bf16.gmra.mxu0 %v5672
    %v5719 = vpop.f32.mrf.mxu0
    %v5720 = vadd.f32 0.0, %v5719
    %v5721 = vpop.f32.mrf.mxu0
    %v5722 = vadd.f32 0.0, %v5721
    %5723 = vmatmul.bf16.gmra.mxu0 %v5675
    %v5724 = vpop.f32.mrf.mxu0
    %v5725 = vadd.f32 0.0, %v5724
    %v5726 = vpop.f32.mrf.mxu0
    %v5727 = vadd.f32 0.0, %v5726
    %5728 = vdwg.mxu0
    %v5729 = vadd.f32 %v4907, %v5690
    %v5730 = vadd.f32 %v4909, %v5692
    %v5731 = vadd.f32 %v4912, %v5695
    %v5732 = vadd.f32 %v4914, %v5697
    %v5733 = vadd.f32 %v4917, %v5700
    %v5734 = vadd.f32 %v4919, %v5702
    %v5735 = vadd.f32 %v4922, %v5705
    %v5736 = vadd.f32 %v4924, %v5707
    %v5737 = vadd.f32 %v4927, %v5710
    %v5738 = vadd.f32 %v4929, %v5712
    %v5739 = vadd.f32 %v4932, %v5715
    %v5740 = vadd.f32 %v4934, %v5717
    %v5741 = vadd.f32 %v4937, %v5720
    %v5742 = vadd.f32 %v4939, %v5722
    %v5743 = vadd.f32 %v4942, %v5725
    %v5744 = vadd.f32 %v4944, %v5727
    %s5745 = scalar_lea.vmem %s3, 448
    %v5746 = vld [vmem:[%s5745] sm:$0xf]
    %v5747 = vld [vmem:[%s5745 + $0x4] sm:$0xf]
    %v5748 = vld [vmem:[%s5745 + $0x8] sm:$0xf]
    %v5749 = vld [vmem:[%s5745 + $0xc] sm:$0xf]
    %v5750 = vld [vmem:[%s5745 + $0x10] sm:$0xf]
    %v5751 = vld [vmem:[%s5745 + $0x14] sm:$0xf]
    %v5752 = vld [vmem:[%s5745 + $0x18] sm:$0xf]
    %v5753 = vld [vmem:[%s5745 + $0x1c] sm:$0xf]
    %v5754 = vld [vmem:[%s5745 + $0x20] sm:$0xf]
    %v5755 = vld [vmem:[%s5745 + $0x24] sm:$0xf]
    %v5756 = vld [vmem:[%s5745 + $0x28] sm:$0xf]
    %v5757 = vld [vmem:[%s5745 + $0x2c] sm:$0xf]
    %v5758 = vld [vmem:[%s5745 + $0x30] sm:$0xf]
    %v5759 = vld [vmem:[%s5745 + $0x34] sm:$0xf]
    %v5760 = vld [vmem:[%s5745 + $0x38] sm:$0xf]
    %v5761 = vld [vmem:[%s5745 + $0x3c] sm:$0xf]
    %v5778 = vunpack.c.l.b16 %v5746
    %v5779 = vunpack.c.l.b16 %v5747
    %v5780 = vunpack.c.l.b16 %v5748
    %v5781 = vunpack.c.l.b16 %v5749
    %v5782 = vunpack.c.l.b16 %v5750
    %v5783 = vunpack.c.l.b16 %v5751
    %v5784 = vunpack.c.l.b16 %v5752
    %v5785 = vunpack.c.l.b16 %v5753
    %v5786 = vunpack.c.l.b16 %v5754
    %v5787 = vunpack.c.l.b16 %v5755
    %v5788 = vunpack.c.l.b16 %v5756
    %v5789 = vunpack.c.l.b16 %v5757
    %v5790 = vunpack.c.l.b16 %v5758
    %v5791 = vunpack.c.l.b16 %v5759
    %v5792 = vunpack.c.l.b16 %v5760
    %v5793 = vunpack.c.l.b16 %v5761
    %v5794 = vpack.c.b16 %v5779, %v5778
    %v5795 = vpack.c.b16 %v5781, %v5780
    %v5796 = vpack.c.b16 %v5783, %v5782
    %v5797 = vpack.c.b16 %v5785, %v5784
    %v5798 = vpack.c.b16 %v5787, %v5786
    %v5799 = vpack.c.b16 %v5789, %v5788
    %v5800 = vpack.c.b16 %v5791, %v5790
    %v5801 = vpack.c.b16 %v5793, %v5792
    %5810 = vmatpush.bf16.msra.mxu0 %v5801
    %5811 = vmatpush.bf16.msra.mxu0 %v5800
    %5812 = vmatpush.bf16.msra.mxu0 %v5799
    %5813 = vmatpush.bf16.msra.mxu0 %v5798
    %5814 = vmatpush.bf16.msra.mxu0 %v5797
    %5815 = vmatpush.bf16.msra.mxu0 %v5796
    %5816 = vmatpush.bf16.msra.mxu0 %v5795
    %5817 = vmatpush.bf16.msra.mxu0 %v5794
    %5818 = vmatmul.bf16.gmra.mxu0 %v3372
    %v5819 = vpop.f32.mrf.mxu0
    %v5820 = vadd.f32 0.0, %v5819
    %v5821 = vpop.f32.mrf.mxu0
    %v5822 = vadd.f32 0.0, %v5821
    %5823 = vmatmul.bf16.gmra.mxu0 %v3373
    %v5824 = vpop.f32.mrf.mxu0
    %v5825 = vadd.f32 0.0, %v5824
    %v5826 = vpop.f32.mrf.mxu0
    %v5827 = vadd.f32 0.0, %v5826
    %5828 = vmatmul.bf16.gmra.mxu0 %v3374
    %v5829 = vpop.f32.mrf.mxu0
    %v5830 = vadd.f32 0.0, %v5829
    %v5831 = vpop.f32.mrf.mxu0
    %v5832 = vadd.f32 0.0, %v5831
    %5833 = vmatmul.bf16.gmra.mxu0 %v3375
    %v5834 = vpop.f32.mrf.mxu0
    %v5835 = vadd.f32 0.0, %v5834
    %v5836 = vpop.f32.mrf.mxu0
    %v5837 = vadd.f32 0.0, %v5836
    %5838 = vmatmul.bf16.gmra.mxu0 %v3376
    %v5839 = vpop.f32.mrf.mxu0
    %v5840 = vadd.f32 0.0, %v5839
    %v5841 = vpop.f32.mrf.mxu0
    %v5842 = vadd.f32 0.0, %v5841
    %5843 = vmatmul.bf16.gmra.mxu0 %v3377
    %v5844 = vpop.f32.mrf.mxu0
    %v5845 = vadd.f32 0.0, %v5844
    %v5846 = vpop.f32.mrf.mxu0
    %v5847 = vadd.f32 0.0, %v5846
    %5848 = vmatmul.bf16.gmra.mxu0 %v3378
    %v5849 = vpop.f32.mrf.mxu0
    %v5850 = vadd.f32 0.0, %v5849
    %v5851 = vpop.f32.mrf.mxu0
    %v5852 = vadd.f32 0.0, %v5851
    %5853 = vmatmul.bf16.gmra.mxu0 %v3379
    %v5854 = vpop.f32.mrf.mxu0
    %v5855 = vadd.f32 0.0, %v5854
    %v5856 = vpop.f32.mrf.mxu0
    %v5857 = vadd.f32 0.0, %v5856
    %5858 = vdwg.mxu0
    %v5859 = vpack.c.bf16 %v5822, %v5820
    %v5860 = vpack.c.bf16 %v5827, %v5825
    %v5861 = vpack.c.bf16 %v5832, %v5830
    %v5862 = vpack.c.bf16 %v5837, %v5835
    %v5863 = vpack.c.bf16 %v5842, %v5840
    %v5864 = vpack.c.bf16 %v5847, %v5845
    %v5865 = vpack.c.bf16 %v5852, %v5850
    %v5866 = vpack.c.bf16 %v5857, %v5855
    %s5867 = scalar_lea.vmem %s4, 448
    %v5868 = vld [vmem:[%s5867] sm:$0xf]
    %v5869 = vld [vmem:[%s5867 + $0x4] sm:$0xf]
    %v5870 = vld [vmem:[%s5867 + $0x8] sm:$0xf]
    %v5871 = vld [vmem:[%s5867 + $0xc] sm:$0xf]
    %v5872 = vld [vmem:[%s5867 + $0x10] sm:$0xf]
    %v5873 = vld [vmem:[%s5867 + $0x14] sm:$0xf]
    %v5874 = vld [vmem:[%s5867 + $0x18] sm:$0xf]
    %v5875 = vld [vmem:[%s5867 + $0x1c] sm:$0xf]
    %v5876 = vld [vmem:[%s5867 + $0x20] sm:$0xf]
    %v5877 = vld [vmem:[%s5867 + $0x24] sm:$0xf]
    %v5878 = vld [vmem:[%s5867 + $0x28] sm:$0xf]
    %v5879 = vld [vmem:[%s5867 + $0x2c] sm:$0xf]
    %v5880 = vld [vmem:[%s5867 + $0x30] sm:$0xf]
    %v5881 = vld [vmem:[%s5867 + $0x34] sm:$0xf]
    %v5882 = vld [vmem:[%s5867 + $0x38] sm:$0xf]
    %v5883 = vld [vmem:[%s5867 + $0x3c] sm:$0xf]
    %v5900 = vunpack.c.l.b16 %v5868
    %v5901 = vunpack.c.l.b16 %v5869
    %v5902 = vunpack.c.l.b16 %v5870
    %v5903 = vunpack.c.l.b16 %v5871
    %v5904 = vunpack.c.l.b16 %v5872
    %v5905 = vunpack.c.l.b16 %v5873
    %v5906 = vunpack.c.l.b16 %v5874
    %v5907 = vunpack.c.l.b16 %v5875
    %v5908 = vunpack.c.l.b16 %v5876
    %v5909 = vunpack.c.l.b16 %v5877
    %v5910 = vunpack.c.l.b16 %v5878
    %v5911 = vunpack.c.l.b16 %v5879
    %v5912 = vunpack.c.l.b16 %v5880
    %v5913 = vunpack.c.l.b16 %v5881
    %v5914 = vunpack.c.l.b16 %v5882
    %v5915 = vunpack.c.l.b16 %v5883
    %v5916 = vpack.c.b16 %v5901, %v5900
    %v5917 = vpack.c.b16 %v5903, %v5902
    %v5918 = vpack.c.b16 %v5905, %v5904
    %v5919 = vpack.c.b16 %v5907, %v5906
    %v5920 = vpack.c.b16 %v5909, %v5908
    %v5921 = vpack.c.b16 %v5911, %v5910
    %v5922 = vpack.c.b16 %v5913, %v5912
    %v5923 = vpack.c.b16 %v5915, %v5914
    %5932 = vmatpush.bf16.msra.mxu0 %v5923
    %5933 = vmatpush.bf16.msra.mxu0 %v5922
    %5934 = vmatpush.bf16.msra.mxu0 %v5921
    %5935 = vmatpush.bf16.msra.mxu0 %v5920
    %5936 = vmatpush.bf16.msra.mxu0 %v5919
    %5937 = vmatpush.bf16.msra.mxu0 %v5918
    %5938 = vmatpush.bf16.msra.mxu0 %v5917
    %5939 = vmatpush.bf16.msra.mxu0 %v5916
    %5940 = vmatmul.bf16.gmra.mxu0 %v3372
    %v5941 = vpop.f32.mrf.mxu0
    %v5942 = vadd.f32 0.0, %v5941
    %v5943 = vpop.f32.mrf.mxu0
    %v5944 = vadd.f32 0.0, %v5943
    %5945 = vmatmul.bf16.gmra.mxu0 %v3373
    %v5946 = vpop.f32.mrf.mxu0
    %v5947 = vadd.f32 0.0, %v5946
    %v5948 = vpop.f32.mrf.mxu0
    %v5949 = vadd.f32 0.0, %v5948
    %5950 = vmatmul.bf16.gmra.mxu0 %v3374
    %v5951 = vpop.f32.mrf.mxu0
    %v5952 = vadd.f32 0.0, %v5951
    %v5953 = vpop.f32.mrf.mxu0
    %v5954 = vadd.f32 0.0, %v5953
    %5955 = vmatmul.bf16.gmra.mxu0 %v3375
    %v5956 = vpop.f32.mrf.mxu0
    %v5957 = vadd.f32 0.0, %v5956
    %v5958 = vpop.f32.mrf.mxu0
    %v5959 = vadd.f32 0.0, %v5958
    %5960 = vmatmul.bf16.gmra.mxu0 %v3376
    %v5961 = vpop.f32.mrf.mxu0
    %v5962 = vadd.f32 0.0, %v5961
    %v5963 = vpop.f32.mrf.mxu0
    %v5964 = vadd.f32 0.0, %v5963
    %5965 = vmatmul.bf16.gmra.mxu0 %v3377
    %v5966 = vpop.f32.mrf.mxu0
    %v5967 = vadd.f32 0.0, %v5966
    %v5968 = vpop.f32.mrf.mxu0
    %v5969 = vadd.f32 0.0, %v5968
    %5970 = vmatmul.bf16.gmra.mxu0 %v3378
    %v5971 = vpop.f32.mrf.mxu0
    %v5972 = vadd.f32 0.0, %v5971
    %v5973 = vpop.f32.mrf.mxu0
    %v5974 = vadd.f32 0.0, %v5973
    %5975 = vmatmul.bf16.gmra.mxu0 %v3379
    %v5976 = vpop.f32.mrf.mxu0
    %v5977 = vadd.f32 0.0, %v5976
    %v5978 = vpop.f32.mrf.mxu0
    %v5979 = vadd.f32 0.0, %v5978
    %5980 = vdwg.mxu0
    %v5981 = vpack.c.bf16 %v5944, %v5942
    %v5982 = vpack.c.bf16 %v5949, %v5947
    %v5983 = vpack.c.bf16 %v5954, %v5952
    %v5984 = vpack.c.bf16 %v5959, %v5957
    %v5985 = vpack.c.bf16 %v5964, %v5962
    %v5986 = vpack.c.bf16 %v5969, %v5967
    %v5987 = vpack.c.bf16 %v5974, %v5972
    %v5988 = vpack.c.bf16 %v5979, %v5977
    %s5989 = scalar_lea.vmem %s5, 448
    %v5990 = vld [vmem:[%s5989] sm:$0xf]
    %v5991 = vld [vmem:[%s5989 + $0x4] sm:$0xf]
    %v5992 = vld [vmem:[%s5989 + $0x8] sm:$0xf]
    %v5993 = vld [vmem:[%s5989 + $0xc] sm:$0xf]
    %v5994 = vld [vmem:[%s5989 + $0x10] sm:$0xf]
    %v5995 = vld [vmem:[%s5989 + $0x14] sm:$0xf]
    %v5996 = vld [vmem:[%s5989 + $0x18] sm:$0xf]
    %v5997 = vld [vmem:[%s5989 + $0x1c] sm:$0xf]
    %v5998 = vld [vmem:[%s5989 + $0x20] sm:$0xf]
    %v5999 = vld [vmem:[%s5989 + $0x24] sm:$0xf]
    %v6000 = vld [vmem:[%s5989 + $0x28] sm:$0xf]
    %v6001 = vld [vmem:[%s5989 + $0x2c] sm:$0xf]
    %v6002 = vld [vmem:[%s5989 + $0x30] sm:$0xf]
    %v6003 = vld [vmem:[%s5989 + $0x34] sm:$0xf]
    %v6004 = vld [vmem:[%s5989 + $0x38] sm:$0xf]
    %v6005 = vld [vmem:[%s5989 + $0x3c] sm:$0xf]
    %v6022 = vunpack.c.l.b16 %v5990
    %v6023 = vunpack.c.l.b16 %v5991
    %v6024 = vunpack.c.l.b16 %v5992
    %v6025 = vunpack.c.l.b16 %v5993
    %v6026 = vunpack.c.l.b16 %v5994
    %v6027 = vunpack.c.l.b16 %v5995
    %v6028 = vunpack.c.l.b16 %v5996
    %v6029 = vunpack.c.l.b16 %v5997
    %v6030 = vunpack.c.l.b16 %v5998
    %v6031 = vunpack.c.l.b16 %v5999
    %v6032 = vunpack.c.l.b16 %v6000
    %v6033 = vunpack.c.l.b16 %v6001
    %v6034 = vunpack.c.l.b16 %v6002
    %v6035 = vunpack.c.l.b16 %v6003
    %v6036 = vunpack.c.l.b16 %v6004
    %v6037 = vunpack.c.l.b16 %v6005
    %v6038 = vpack.c.b16 %v6023, %v6022
    %v6039 = vpack.c.b16 %v6025, %v6024
    %v6040 = vpack.c.b16 %v6027, %v6026
    %v6041 = vpack.c.b16 %v6029, %v6028
    %v6042 = vpack.c.b16 %v6031, %v6030
    %v6043 = vpack.c.b16 %v6033, %v6032
    %v6044 = vpack.c.b16 %v6035, %v6034
    %v6045 = vpack.c.b16 %v6037, %v6036
    %6054 = vmatpush.bf16.msra.mxu0 %v6045
    %6055 = vmatpush.bf16.msra.mxu0 %v6044
    %6056 = vmatpush.bf16.msra.mxu0 %v6043
    %6057 = vmatpush.bf16.msra.mxu0 %v6042
    %6058 = vmatpush.bf16.msra.mxu0 %v6041
    %6059 = vmatpush.bf16.msra.mxu0 %v6040
    %6060 = vmatpush.bf16.msra.mxu0 %v6039
    %6061 = vmatpush.bf16.msra.mxu0 %v6038
    %6062 = vmatmul.bf16.gmra.mxu0 %v3372
    %v6063 = vpop.f32.mrf.mxu0
    %v6064 = vadd.f32 0.0, %v6063
    %v6065 = vpop.f32.mrf.mxu0
    %v6066 = vadd.f32 0.0, %v6065
    %6067 = vmatmul.bf16.gmra.mxu0 %v3373
    %v6068 = vpop.f32.mrf.mxu0
    %v6069 = vadd.f32 0.0, %v6068
    %v6070 = vpop.f32.mrf.mxu0
    %v6071 = vadd.f32 0.0, %v6070
    %6072 = vmatmul.bf16.gmra.mxu0 %v3374
    %v6073 = vpop.f32.mrf.mxu0
    %v6074 = vadd.f32 0.0, %v6073
    %v6075 = vpop.f32.mrf.mxu0
    %v6076 = vadd.f32 0.0, %v6075
    %6077 = vmatmul.bf16.gmra.mxu0 %v3375
    %v6078 = vpop.f32.mrf.mxu0
    %v6079 = vadd.f32 0.0, %v6078
    %v6080 = vpop.f32.mrf.mxu0
    %v6081 = vadd.f32 0.0, %v6080
    %6082 = vmatmul.bf16.gmra.mxu0 %v3376
    %v6083 = vpop.f32.mrf.mxu0
    %v6084 = vadd.f32 0.0, %v6083
    %v6085 = vpop.f32.mrf.mxu0
    %v6086 = vadd.f32 0.0, %v6085
    %6087 = vmatmul.bf16.gmra.mxu0 %v3377
    %v6088 = vpop.f32.mrf.mxu0
    %v6089 = vadd.f32 0.0, %v6088
    %v6090 = vpop.f32.mrf.mxu0
    %v6091 = vadd.f32 0.0, %v6090
    %6092 = vmatmul.bf16.gmra.mxu0 %v3378
    %v6093 = vpop.f32.mrf.mxu0
    %v6094 = vadd.f32 0.0, %v6093
    %v6095 = vpop.f32.mrf.mxu0
    %v6096 = vadd.f32 0.0, %v6095
    %6097 = vmatmul.bf16.gmra.mxu0 %v3379
    %v6098 = vpop.f32.mrf.mxu0
    %v6099 = vadd.f32 0.0, %v6098
    %v6100 = vpop.f32.mrf.mxu0
    %v6101 = vadd.f32 0.0, %v6100
    %6102 = vdwg.mxu0
    %v6103 = vpack.c.bf16 %v6066, %v6064
    %v6104 = vpack.c.bf16 %v6071, %v6069
    %v6105 = vpack.c.bf16 %v6076, %v6074
    %v6106 = vpack.c.bf16 %v6081, %v6079
    %v6107 = vpack.c.bf16 %v6086, %v6084
    %v6108 = vpack.c.bf16 %v6091, %v6089
    %v6109 = vpack.c.bf16 %v6096, %v6094
    %v6110 = vpack.c.bf16 %v6101, %v6099
    %s6111 = scalar_lea.vmem %s2, 448
    %v6112 = vld [vmem:[%s6111] sm:$0xf]
    %v6113 = vld [vmem:[%s6111 + $0x4] sm:$0xf]
    %v6114 = vld [vmem:[%s6111 + $0x8] sm:$0xf]
    %v6115 = vld [vmem:[%s6111 + $0xc] sm:$0xf]
    %v6116 = vld [vmem:[%s6111 + $0x10] sm:$0xf]
    %v6117 = vld [vmem:[%s6111 + $0x14] sm:$0xf]
    %v6118 = vld [vmem:[%s6111 + $0x18] sm:$0xf]
    %v6119 = vld [vmem:[%s6111 + $0x1c] sm:$0xf]
    %v6120 = vld [vmem:[%s6111 + $0x20] sm:$0xf]
    %v6121 = vld [vmem:[%s6111 + $0x24] sm:$0xf]
    %v6122 = vld [vmem:[%s6111 + $0x28] sm:$0xf]
    %v6123 = vld [vmem:[%s6111 + $0x2c] sm:$0xf]
    %v6124 = vld [vmem:[%s6111 + $0x30] sm:$0xf]
    %v6125 = vld [vmem:[%s6111 + $0x34] sm:$0xf]
    %v6126 = vld [vmem:[%s6111 + $0x38] sm:$0xf]
    %v6127 = vld [vmem:[%s6111 + $0x3c] sm:$0xf]
    %v6128 = vunpack.c.l.bf16 %v6112
    %v6129 = vunpack.c.l.bf16 %v6113
    %v6130 = vunpack.c.l.bf16 %v6114
    %v6131 = vunpack.c.l.bf16 %v6115
    %v6132 = vunpack.c.l.bf16 %v6116
    %v6133 = vunpack.c.l.bf16 %v6117
    %v6134 = vunpack.c.l.bf16 %v6118
    %v6135 = vunpack.c.l.bf16 %v6119
    %v6136 = vunpack.c.l.bf16 %v6120
    %v6137 = vunpack.c.l.bf16 %v6121
    %v6138 = vunpack.c.l.bf16 %v6122
    %v6139 = vunpack.c.l.bf16 %v6123
    %v6140 = vunpack.c.l.bf16 %v6124
    %v6141 = vunpack.c.l.bf16 %v6125
    %v6142 = vunpack.c.l.bf16 %v6126
    %v6143 = vunpack.c.l.bf16 %v6127
    %v6145 = vsel %vm590, %v5859, 0
    %v6148 = vsel %vm590, %v5860, 0
    %v6151 = vsel %vm590, %v5861, 0
    %v6154 = vsel %vm590, %v5862, 0
    %v6157 = vsel %vm590, %v5863, 0
    %v6160 = vsel %vm590, %v5864, 0
    %v6163 = vsel %vm590, %v5865, 0
    %v6166 = vsel %vm590, %v5866, 0
    %v6169 = vsel %vm590, %v5981, 0
    %v6172 = vsel %vm590, %v5982, 0
    %v6175 = vsel %vm590, %v5983, 0
    %v6178 = vsel %vm590, %v5984, 0
    %v6181 = vsel %vm590, %v5985, 0
    %v6184 = vsel %vm590, %v5986, 0
    %v6187 = vsel %vm590, %v5987, 0
    %v6190 = vsel %vm590, %v5988, 0
    %6192 = vmatpush.bf16.xpose.msra.mxu0 %v6190
    %6193 = vmatpush.bf16.xpose.msra.mxu0 %v6187
    %6194 = vmatpush.bf16.xpose.msra.mxu0 %v6184
    %6195 = vmatpush.bf16.xpose.msra.mxu0 %v6181
    %6196 = vmatpush.bf16.xpose.msra.mxu0 %v6178
    %6197 = vmatpush.bf16.xpose.msra.mxu0 %v6175
    %6198 = vmatpush.bf16.xpose.msra.mxu0 %v6172
    %6199 = vmatpush.bf16.xpose.msra.mxu0 %v6169
    %6200 = vmatmul.bf16.gmra.mxu0 %v6145
    %v6201 = vpop.f32.mrf.mxu0
    %v6202 = vadd.f32 %v6128, %v6201
    %v6203 = vpop.f32.mrf.mxu0
    %v6204 = vadd.f32 %v6129, %v6203
    %6205 = vmatmul.bf16.gmra.mxu0 %v6148
    %v6206 = vpop.f32.mrf.mxu0
    %v6207 = vadd.f32 %v6130, %v6206
    %v6208 = vpop.f32.mrf.mxu0
    %v6209 = vadd.f32 %v6131, %v6208
    %6210 = vmatmul.bf16.gmra.mxu0 %v6151
    %v6211 = vpop.f32.mrf.mxu0
    %v6212 = vadd.f32 %v6132, %v6211
    %v6213 = vpop.f32.mrf.mxu0
    %v6214 = vadd.f32 %v6133, %v6213
    %6215 = vmatmul.bf16.gmra.mxu0 %v6154
    %v6216 = vpop.f32.mrf.mxu0
    %v6217 = vadd.f32 %v6134, %v6216
    %v6218 = vpop.f32.mrf.mxu0
    %v6219 = vadd.f32 %v6135, %v6218
    %6220 = vmatmul.bf16.gmra.mxu0 %v6157
    %v6221 = vpop.f32.mrf.mxu0
    %v6222 = vadd.f32 %v6136, %v6221
    %v6223 = vpop.f32.mrf.mxu0
    %v6224 = vadd.f32 %v6137, %v6223
    %6225 = vmatmul.bf16.gmra.mxu0 %v6160
    %v6226 = vpop.f32.mrf.mxu0
    %v6227 = vadd.f32 %v6138, %v6226
    %v6228 = vpop.f32.mrf.mxu0
    %v6229 = vadd.f32 %v6139, %v6228
    %6230 = vmatmul.bf16.gmra.mxu0 %v6163
    %v6231 = vpop.f32.mrf.mxu0
    %v6232 = vadd.f32 %v6140, %v6231
    %v6233 = vpop.f32.mrf.mxu0
    %v6234 = vadd.f32 %v6141, %v6233
    %6235 = vmatmul.bf16.gmra.mxu0 %v6166
    %v6236 = vpop.f32.mrf.mxu0
    %v6237 = vadd.f32 %v6142, %v6236
    %v6238 = vpop.f32.mrf.mxu0
    %v6239 = vadd.f32 %v6143, %v6238
    %6240 = vdwg.mxu0
    %6241 = vmax.xlane.f32.xlu0 %v6202
    %v6242 = vpop.xlane.xlu0 %6241
    %6243 = vmax.xlane.f32.xlu0 %v6204
    %v6244 = vpop.xlane.xlu0 %6243
    %6245 = vmax.xlane.f32.xlu0 %v6207
    %v6246 = vpop.xlane.xlu0 %6245
    %6247 = vmax.xlane.f32.xlu0 %v6209
    %v6248 = vpop.xlane.xlu0 %6247
    %6249 = vmax.xlane.f32.xlu0 %v6212
    %v6250 = vpop.xlane.xlu0 %6249
    %6251 = vmax.xlane.f32.xlu0 %v6214
    %v6252 = vpop.xlane.xlu0 %6251
    %6253 = vmax.xlane.f32.xlu0 %v6217
    %v6254 = vpop.xlane.xlu0 %6253
    %6255 = vmax.xlane.f32.xlu0 %v6219
    %v6256 = vpop.xlane.xlu0 %6255
    %6257 = vmax.xlane.f32.xlu0 %v6222
    %v6258 = vpop.xlane.xlu0 %6257
    %6259 = vmax.xlane.f32.xlu0 %v6224
    %v6260 = vpop.xlane.xlu0 %6259
    %6261 = vmax.xlane.f32.xlu0 %v6227
    %v6262 = vpop.xlane.xlu0 %6261
    %6263 = vmax.xlane.f32.xlu0 %v6229
    %v6264 = vpop.xlane.xlu0 %6263
    %6265 = vmax.xlane.f32.xlu0 %v6232
    %v6266 = vpop.xlane.xlu0 %6265
    %6267 = vmax.xlane.f32.xlu0 %v6234
    %v6268 = vpop.xlane.xlu0 %6267
    %6269 = vmax.xlane.f32.xlu0 %v6237
    %v6270 = vpop.xlane.xlu0 %6269
    %6271 = vmax.xlane.f32.xlu0 %v6239
    %v6272 = vpop.xlane.xlu0 %6271
    %v6273 = vsub.f32 %v6202, %v6242
    %v6274 = vsub.f32 %v6204, %v6244
    %v6275 = vsub.f32 %v6207, %v6246
    %v6276 = vsub.f32 %v6209, %v6248
    %v6277 = vsub.f32 %v6212, %v6250
    %v6278 = vsub.f32 %v6214, %v6252
    %v6279 = vsub.f32 %v6217, %v6254
    %v6280 = vsub.f32 %v6219, %v6256
    %v6281 = vsub.f32 %v6222, %v6258
    %v6282 = vsub.f32 %v6224, %v6260
    %v6283 = vsub.f32 %v6227, %v6262
    %v6284 = vsub.f32 %v6229, %v6264
    %v6285 = vsub.f32 %v6232, %v6266
    %v6286 = vsub.f32 %v6234, %v6268
    %v6287 = vsub.f32 %v6237, %v6270
    %v6288 = vsub.f32 %v6239, %v6272
    %v6289 = vmul.f32 %v6273, 1.442695
    %v6290 = vpow.pop %v6289
    %v6291 = vmul.f32 %v6274, 1.442695
    %v6292 = vpow.pop %v6291
    %v6293 = vmul.f32 %v6275, 1.442695
    %v6294 = vpow.pop %v6293
    %v6295 = vmul.f32 %v6276, 1.442695
    %v6296 = vpow.pop %v6295
    %v6297 = vmul.f32 %v6277, 1.442695
    %v6298 = vpow.pop %v6297
    %v6299 = vmul.f32 %v6278, 1.442695
    %v6300 = vpow.pop %v6299
    %v6301 = vmul.f32 %v6279, 1.442695
    %v6302 = vpow.pop %v6301
    %v6303 = vmul.f32 %v6280, 1.442695
    %v6304 = vpow.pop %v6303
    %v6305 = vmul.f32 %v6281, 1.442695
    %v6306 = vpow.pop %v6305
    %v6307 = vmul.f32 %v6282, 1.442695
    %v6308 = vpow.pop %v6307
    %v6309 = vmul.f32 %v6283, 1.442695
    %v6310 = vpow.pop %v6309
    %v6311 = vmul.f32 %v6284, 1.442695
    %v6312 = vpow.pop %v6311
    %v6313 = vmul.f32 %v6285, 1.442695
    %v6314 = vpow.pop %v6313
    %v6315 = vmul.f32 %v6286, 1.442695
    %v6316 = vpow.pop %v6315
    %v6317 = vmul.f32 %v6287, 1.442695
    %v6318 = vpow.pop %v6317
    %v6319 = vmul.f32 %v6288, 1.442695
    %v6320 = vpow.pop %v6319
    %6321 = vadd.xlane.f32.xlu0 %v6290
    %v6322 = vpop.xlane.xlu0 %6321
    %6323 = vadd.xlane.f32.xlu0 %v6292
    %v6324 = vpop.xlane.xlu0 %6323
    %6325 = vadd.xlane.f32.xlu0 %v6294
    %v6326 = vpop.xlane.xlu0 %6325
    %6327 = vadd.xlane.f32.xlu0 %v6296
    %v6328 = vpop.xlane.xlu0 %6327
    %6329 = vadd.xlane.f32.xlu0 %v6298
    %v6330 = vpop.xlane.xlu0 %6329
    %6331 = vadd.xlane.f32.xlu0 %v6300
    %v6332 = vpop.xlane.xlu0 %6331
    %6333 = vadd.xlane.f32.xlu0 %v6302
    %v6334 = vpop.xlane.xlu0 %6333
    %6335 = vadd.xlane.f32.xlu0 %v6304
    %v6336 = vpop.xlane.xlu0 %6335
    %6337 = vadd.xlane.f32.xlu0 %v6306
    %v6338 = vpop.xlane.xlu0 %6337
    %6339 = vadd.xlane.f32.xlu0 %v6308
    %v6340 = vpop.xlane.xlu0 %6339
    %6341 = vadd.xlane.f32.xlu0 %v6310
    %v6342 = vpop.xlane.xlu0 %6341
    %6343 = vadd.xlane.f32.xlu0 %v6312
    %v6344 = vpop.xlane.xlu0 %6343
    %6345 = vadd.xlane.f32.xlu0 %v6314
    %v6346 = vpop.xlane.xlu0 %6345
    %6347 = vadd.xlane.f32.xlu0 %v6316
    %v6348 = vpop.xlane.xlu0 %6347
    %6349 = vadd.xlane.f32.xlu0 %v6318
    %v6350 = vpop.xlane.xlu0 %6349
    %6351 = vadd.xlane.f32.xlu0 %v6320
    %v6352 = vpop.xlane.xlu0 %6351
    %v6353 = vrcp.pop %v6322
    %v6354 = vrcp.pop %v6324
    %v6355 = vrcp.pop %v6326
    %v6356 = vrcp.pop %v6328
    %v6357 = vrcp.pop %v6330
    %v6358 = vrcp.pop %v6332
    %v6359 = vrcp.pop %v6334
    %v6360 = vrcp.pop %v6336
    %v6361 = vrcp.pop %v6338
    %v6362 = vrcp.pop %v6340
    %v6363 = vrcp.pop %v6342
    %v6364 = vrcp.pop %v6344
    %v6365 = vrcp.pop %v6346
    %v6366 = vrcp.pop %v6348
    %v6367 = vrcp.pop %v6350
    %v6368 = vrcp.pop %v6352
    %v6369 = vmul.f32 %v6290, %v6353
    %v6370 = vmul.f32 %v6292, %v6354
    %v6371 = vmul.f32 %v6294, %v6355
    %v6372 = vmul.f32 %v6296, %v6356
    %v6373 = vmul.f32 %v6298, %v6357
    %v6374 = vmul.f32 %v6300, %v6358
    %v6375 = vmul.f32 %v6302, %v6359
    %v6376 = vmul.f32 %v6304, %v6360
    %v6377 = vmul.f32 %v6306, %v6361
    %v6378 = vmul.f32 %v6308, %v6362
    %v6379 = vmul.f32 %v6310, %v6363
    %v6380 = vmul.f32 %v6312, %v6364
    %v6381 = vmul.f32 %v6314, %v6365
    %v6382 = vmul.f32 %v6316, %v6366
    %v6383 = vmul.f32 %v6318, %v6367
    %v6384 = vmul.f32 %v6320, %v6368
    %v6385 = vpack.c.bf16 %v6370, %v6369
    %v6386 = vpack.c.bf16 %v6372, %v6371
    %v6387 = vpack.c.bf16 %v6374, %v6373
    %v6388 = vpack.c.bf16 %v6376, %v6375
    %v6389 = vpack.c.bf16 %v6378, %v6377
    %v6390 = vpack.c.bf16 %v6380, %v6379
    %v6391 = vpack.c.bf16 %v6382, %v6381
    %v6392 = vpack.c.bf16 %v6384, %v6383
    %6393 = vmatpush.bf16.msra.mxu0 %v6110
    %6394 = vmatpush.bf16.msra.mxu0 %v6109
    %6395 = vmatpush.bf16.msra.mxu0 %v6108
    %6396 = vmatpush.bf16.msra.mxu0 %v6107
    %6397 = vmatpush.bf16.msra.mxu0 %v6106
    %6398 = vmatpush.bf16.msra.mxu0 %v6105
    %6399 = vmatpush.bf16.msra.mxu0 %v6104
    %6400 = vmatpush.bf16.msra.mxu0 %v6103
    %6401 = vmatmul.bf16.gmra.mxu0 %v6385
    %v6402 = vpop.f32.mrf.mxu0
    %v6403 = vadd.f32 0.0, %v6402
    %v6404 = vpop.f32.mrf.mxu0
    %v6405 = vadd.f32 0.0, %v6404
    %6406 = vmatmul.bf16.gmra.mxu0 %v6386
    %v6407 = vpop.f32.mrf.mxu0
    %v6408 = vadd.f32 0.0, %v6407
    %v6409 = vpop.f32.mrf.mxu0
    %v6410 = vadd.f32 0.0, %v6409
    %6411 = vmatmul.bf16.gmra.mxu0 %v6387
    %v6412 = vpop.f32.mrf.mxu0
    %v6413 = vadd.f32 0.0, %v6412
    %v6414 = vpop.f32.mrf.mxu0
    %v6415 = vadd.f32 0.0, %v6414
    %6416 = vmatmul.bf16.gmra.mxu0 %v6388
    %v6417 = vpop.f32.mrf.mxu0
    %v6418 = vadd.f32 0.0, %v6417
    %v6419 = vpop.f32.mrf.mxu0
    %v6420 = vadd.f32 0.0, %v6419
    %6421 = vmatmul.bf16.gmra.mxu0 %v6389
    %v6422 = vpop.f32.mrf.mxu0
    %v6423 = vadd.f32 0.0, %v6422
    %v6424 = vpop.f32.mrf.mxu0
    %v6425 = vadd.f32 0.0, %v6424
    %6426 = vmatmul.bf16.gmra.mxu0 %v6390
    %v6427 = vpop.f32.mrf.mxu0
    %v6428 = vadd.f32 0.0, %v6427
    %v6429 = vpop.f32.mrf.mxu0
    %v6430 = vadd.f32 0.0, %v6429
    %6431 = vmatmul.bf16.gmra.mxu0 %v6391
    %v6432 = vpop.f32.mrf.mxu0
    %v6433 = vadd.f32 0.0, %v6432
    %v6434 = vpop.f32.mrf.mxu0
    %v6435 = vadd.f32 0.0, %v6434
    %6436 = vmatmul.bf16.gmra.mxu0 %v6392
    %v6437 = vpop.f32.mrf.mxu0
    %v6438 = vadd.f32 0.0, %v6437
    %v6439 = vpop.f32.mrf.mxu0
    %v6440 = vadd.f32 0.0, %v6439
    %6441 = vdwg.mxu0
    %v6442 = vpack.c.bf16 %v6405, %v6403
    %v6443 = vpack.c.bf16 %v6410, %v6408
    %v6444 = vpack.c.bf16 %v6415, %v6413
    %v6445 = vpack.c.bf16 %v6420, %v6418
    %v6446 = vpack.c.bf16 %v6425, %v6423
    %v6447 = vpack.c.bf16 %v6430, %v6428
    %v6448 = vpack.c.bf16 %v6435, %v6433
    %v6449 = vpack.c.bf16 %v6440, %v6438
    %s6450 = scalar_lea.vmem %s6, 28
    %v6451 = vld [vmem:[%s6450] sm:$0xf]
    %v6453 = vsel %vm590, %v6442, 0
    %v6456 = vsel %vm590, %v6443, 0
    %v6459 = vsel %vm590, %v6444, 0
    %v6462 = vsel %vm590, %v6445, 0
    %v6465 = vsel %vm590, %v6446, 0
    %v6468 = vsel %vm590, %v6447, 0
    %v6471 = vsel %vm590, %v6448, 0
    %v6474 = vsel %vm590, %v6449, 0
    %v6477 = vsel %vm1629, %v6451, 0
    %6479 = vmatpush.bf16.msra.mxu0 0
    %6480 = vmatpush.bf16.msra.mxu0 0
    %6481 = vmatpush.bf16.msra.mxu0 0
    %6482 = vmatpush.bf16.msra.mxu0 0
    %6483 = vmatpush.bf16.msra.mxu0 0
    %6484 = vmatpush.bf16.msra.mxu0 0
    %6485 = vmatpush.bf16.msra.mxu0 0
    %6486 = vmatpush.bf16.msra.mxu0 %v6477
    %6487 = vmatmul.bf16.gmra.mxu0 %v6453
    %v6488 = vpop.f32.mrf.mxu0
    %v6489 = vadd.f32 0.0, %v6488
    %v6490 = vpop.f32.mrf.mxu0
    %v6491 = vadd.f32 0.0, %v6490
    %6492 = vmatmul.bf16.gmra.mxu0 %v6456
    %v6493 = vpop.f32.mrf.mxu0
    %v6494 = vadd.f32 0.0, %v6493
    %v6495 = vpop.f32.mrf.mxu0
    %v6496 = vadd.f32 0.0, %v6495
    %6497 = vmatmul.bf16.gmra.mxu0 %v6459
    %v6498 = vpop.f32.mrf.mxu0
    %v6499 = vadd.f32 0.0, %v6498
    %v6500 = vpop.f32.mrf.mxu0
    %v6501 = vadd.f32 0.0, %v6500
    %6502 = vmatmul.bf16.gmra.mxu0 %v6462
    %v6503 = vpop.f32.mrf.mxu0
    %v6504 = vadd.f32 0.0, %v6503
    %v6505 = vpop.f32.mrf.mxu0
    %v6506 = vadd.f32 0.0, %v6505
    %6507 = vmatmul.bf16.gmra.mxu0 %v6465
    %v6508 = vpop.f32.mrf.mxu0
    %v6509 = vadd.f32 0.0, %v6508
    %v6510 = vpop.f32.mrf.mxu0
    %v6511 = vadd.f32 0.0, %v6510
    %6512 = vmatmul.bf16.gmra.mxu0 %v6468
    %v6513 = vpop.f32.mrf.mxu0
    %v6514 = vadd.f32 0.0, %v6513
    %v6515 = vpop.f32.mrf.mxu0
    %v6516 = vadd.f32 0.0, %v6515
    %6517 = vmatmul.bf16.gmra.mxu0 %v6471
    %v6518 = vpop.f32.mrf.mxu0
    %v6519 = vadd.f32 0.0, %v6518
    %v6520 = vpop.f32.mrf.mxu0
    %v6521 = vadd.f32 0.0, %v6520
    %6522 = vmatmul.bf16.gmra.mxu0 %v6474
    %v6523 = vpop.f32.mrf.mxu0
    %v6524 = vadd.f32 0.0, %v6523
    %v6525 = vpop.f32.mrf.mxu0
    %v6526 = vadd.f32 0.0, %v6525
    %6527 = vdwg.mxu0
    %v6528 = vadd.f32 %v5729, %v6489
    %v6529 = vadd.f32 %v5730, %v6491
    %v6530 = vadd.f32 %v5731, %v6494
    %v6531 = vadd.f32 %v5732, %v6496
    %v6532 = vadd.f32 %v5733, %v6499
    %v6533 = vadd.f32 %v5734, %v6501
    %v6534 = vadd.f32 %v5735, %v6504
    %v6535 = vadd.f32 %v5736, %v6506
    %v6536 = vadd.f32 %v5737, %v6509
    %v6537 = vadd.f32 %v5738, %v6511
    %v6538 = vadd.f32 %v5739, %v6514
    %v6539 = vadd.f32 %v5740, %v6516
    %v6540 = vadd.f32 %v5741, %v6519
    %v6541 = vadd.f32 %v5742, %v6521
    %v6542 = vadd.f32 %v5743, %v6524
    %v6543 = vadd.f32 %v5744, %v6526
    %6544 = vst [vmem:[#allocation2] sm:$0xff] %v6528
    %6545 = vst [vmem:[#allocation2 + $0x8] sm:$0xff] %v6529
    %6546 = vst [vmem:[#allocation2 + $0x10] sm:$0xff] %v6530
    %6547 = vst [vmem:[#allocation2 + $0x18] sm:$0xff] %v6531
    %6548 = vst [vmem:[#allocation2 + $0x20] sm:$0xff] %v6532
    %6549 = vst [vmem:[#allocation2 + $0x28] sm:$0xff] %v6533
    %6550 = vst [vmem:[#allocation2 + $0x30] sm:$0xff] %v6534
    %6551 = vst [vmem:[#allocation2 + $0x38] sm:$0xff] %v6535
    %6552 = vst [vmem:[#allocation2 + $0x40] sm:$0xff] %v6536
    %6553 = vst [vmem:[#allocation2 + $0x48] sm:$0xff] %v6537
    %6554 = vst [vmem:[#allocation2 + $0x50] sm:$0xff] %v6538
    %6555 = vst [vmem:[#allocation2 + $0x58] sm:$0xff] %v6539
    %6556 = vst [vmem:[#allocation2 + $0x60] sm:$0xff] %v6540
    %6557 = vst [vmem:[#allocation2 + $0x68] sm:$0xff] %v6541
    %6558 = vst [vmem:[#allocation2 + $0x70] sm:$0xff] %v6542
    %6559 = vst [vmem:[#allocation2 + $0x78] sm:$0xff] %v6543
    %v6560 = vld [vmem:[%s7] sm:$0xf]
    %v6561 = vpack.c.bf16 %v6529, %v6528
    %v6562 = vpack.c.bf16 %v6531, %v6530
    %v6563 = vpack.c.bf16 %v6533, %v6532
    %v6564 = vpack.c.bf16 %v6535, %v6534
    %v6565 = vpack.c.bf16 %v6537, %v6536
    %v6566 = vpack.c.bf16 %v6539, %v6538
    %v6567 = vpack.c.bf16 %v6541, %v6540
    %v6568 = vpack.c.bf16 %v6543, %v6542
    %6569 = vmatpush.bf16.msra.mxu0 %v6568
    %6570 = vmatpush.bf16.msra.mxu0 %v6567
    %6571 = vmatpush.bf16.msra.mxu0 %v6566
    %6572 = vmatpush.bf16.msra.mxu0 %v6565
    %6573 = vmatpush.bf16.msra.mxu0 %v6564
    %6574 = vmatpush.bf16.msra.mxu0 %v6563
    %6575 = vmatpush.bf16.msra.mxu0 %v6562
    %6576 = vmatpush.bf16.msra.mxu0 %v6561
    %6577 = vmatmul.bf16.gmra.mxu0 %v6560
    %v6578 = vpop.f32.mrf.mxu0
    %v6579 = vadd.f32 0.0, %v6578
    %v6580 = vpop.f32.mrf.mxu0
    %6581 = vdwg.mxu0
    %6582 = vst [vmem:[#allocation4] sm:$0xff] %v6579
    // Predicated region
    $region34: #{tpu_custom_call.1} parent=1 // pred_check
      _
    $region35: #{tpu_custom_call.1} parent=1 // pred_check_branch
      %6584 = sbr.rel (0) target = $region37
    $region36: #{tpu_custom_call.1} parent=1 // pred_region
      %6586 = vsyncadd [#allocation3], 0
      %s6587 = sshll.u32 [#allocation2], 4
      %s6588 = int_to_ptr.vmem [resolvable:$true] %s6587
      %s6589 = sshll.u32 %s8, 4
      %s6590 = int_to_ptr.hbm [resolvable:$true] %s6589
      %6595 = dma.vmem_to_hbm [thread:$0]  %s6588, 2048, %s6590, [#allocation3], 128, 128, 8
    $region37: #{tpu_custom_call.1} parent=1 // pred_fallthru
      _
    // Predicated region
    $region38: #{tpu_custom_call.1} parent=1 // pred_check
      _
    $region39: #{tpu_custom_call.1} parent=1 // pred_check_branch
      %6597 = sbr.rel (0) target = $region41
    $region40: #{tpu_custom_call.1} parent=1 // pred_region
      %6599 = vsyncadd [#allocation5], 0
      %s6601 = sshll.u32 [#allocation4], 4
      %s6602 = int_to_ptr.vmem [resolvable:$true] %s6601
      %s6603 = sshll.u32 %s9, 4
      %s6604 = int_to_ptr.hbm [resolvable:$true] %s6603
      %6606 = dma.vmem_to_hbm [thread:$0]  %s6602, 128, %s6604, [#allocation5]
    $region41: #{tpu_custom_call.1} parent=1 // pred_fallthru
      _
    // Predicated region
    $region42: #{tpu_custom_call.1} parent=1 // pred_check
      _
    $region43: #{tpu_custom_call.1} parent=1 // pred_check_branch
      %6608 = sbr.rel (0) target = $region45
    $region44: #{tpu_custom_call.1} parent=1 // pred_region
      %6610 = dma.done [#allocation3], 2048
    $region45: #{tpu_custom_call.1} parent=1 // pred_fallthru
      _
    // Predicated region
    $region46: #{tpu_custom_call.1} parent=1 // pred_check
      _
    $region47: #{tpu_custom_call.1} parent=1 // pred_check_branch
      %6612 = sbr.rel (0) target = $region49
    $region48: #{tpu_custom_call.1} parent=1 // pred_region
      %6614 = dma.done [#allocation5], 128
    $region49: #{tpu_custom_call.1} parent=1 // pred_fallthru
      _
    %6615 = vsyncpa [#allocation3], 1
    %6616 = vsyncpa [#allocation5], 1

</llo_original>
